<compile_context>
chip_gen: v7x
topology: tpu7x:2x2x1
jax: 0.10.0
libtpu: 0.0.40
codegen_flags: <defaults>
</compile_context>

<pallas_src>
import functools

import numpy as np

import jax
import jax.numpy as jnp
from jax.experimental import pallas as pl
from jax.experimental.pallas import tpu as pltpu

IN_CH = 3          # RGB input
BASE_CH = 32       # encoder width
LATENT_CH = 4      # latent channels
GROUPS = 8         # GroupNorm groups
GN_EPS = 1e-6
SCALING_FACTOR = 0.18215


def _shift_cols(v, s):
    """Circular column shift: result[:, p] = v[:, (p + s) mod n].

    Implemented portably as two lane slices + concat (tiny bf16 blocks); the wrapped
    columns are zeroed by the caller's boundary mask.
    """
    if s == 0:
        return v
    n = v.shape[1]
    s = s % n
    return jnp.concatenate([v[:, s:], v[:, :s]], axis=1)


# -----------------------------------------------------------------------------
# The fused encoder kernel (one batch element per grid step, everything in VMEM)
# -----------------------------------------------------------------------------
def _encoder_kernel(x_ref, noise_ref,
                    w_in_ref, b_in_ref, w33_ref, b33_ref,
                    gn_g_ref, gn_b_ref, w_out_ref, b_out_ref,
                    wq_ref, bq_ref,
                    grp_ref, mhi_ref, mdn_ref, mlo_ref, sel_ref,
                    o_ref,
                    im_hi_ref, im_lo_ref,
                    *, eps, scaling, hh, ww):
    C = BASE_CH
    ho, wo = hh // 2, ww // 2
    pl_lo = ho * wo

    def conv3x3(val, w_cat, bias, width, im_ref, mask_ref, anchored):
        # val: (C, pts) f32 channel-major activation. One bf16 cast, then 9 shifted+masked
        # tap blocks stored at sublane-aligned offsets into the bf16 im2col scratch,
        # followed by a single K=9*C matmul (f32 accumulation) + bias.
        vb = val.astype(jnp.bfloat16)
        for k in range(9):
            dy, dx = k // 3, k % 3
            if anchored:
                s = dy * width + dx                 # asymmetric ((0,1),(0,1)) stride-2 pad
            else:
                s = (dy - 1) * width + (dx - 1)     # centered taps, pad 1 each side
            if s == 0:
                blk = vb                            # center tap: always valid, no shift/mask
            else:
                blk = _shift_cols(vb, s) * mask_ref[k]
            im_ref[k * C:(k + 1) * C, :] = blk
        acc = jnp.dot(w_cat, im_ref[...], preferred_element_type=jnp.float32)
        return acc + bias

    def gn_silu(val, idx):
        # Two-pass GroupNorm fused with SiLU on a (C, pts) activation.  The per-group
        # channel reduce uses a constant 0/1 group-membership matrix (no iota rebuilds).
        pts = val.shape[1]
        count = float(pts * (C // GROUPS))
        gamma = gn_g_ref[idx]                                   # (C, 1)
        beta = gn_b_ref[idx]
        gp = jnp.dot(grp_ref[...], val, preferred_element_type=jnp.float32)
        mean = jnp.sum(gp, axis=1, keepdims=True) / count       # (C, 1) per-channel group mean
        d = val - mean
        gd = jnp.dot(grp_ref[...], d * d, preferred_element_type=jnp.float32)
        var = jnp.sum(gd, axis=1, keepdims=True) / count
        y = d * jax.lax.rsqrt(var + eps) * gamma + beta
        return y * jax.nn.sigmoid(y)

    def resblock(hin, ci, gi, width, im_ref, mask_ref):
        t = gn_silu(hin, gi)
        t = conv3x3(t, w33_ref[ci], b33_ref[ci], width, im_ref, mask_ref, False)
        t = gn_silu(t, gi + 1)
        t = conv3x3(t, w33_ref[ci + 1], b33_ref[ci + 1], width, im_ref, mask_ref, False)
        return hin + t

    x0 = x_ref[0].astype(jnp.float32)                                        # (C, H*W)

    h1 = conv3x3(x0, w_in_ref[...], b_in_ref[...], ww, im_hi_ref, mhi_ref, False)   # conv_in
    h2 = resblock(h1, 0, 0, ww, im_hi_ref, mhi_ref)                          # ResnetBlock 1
    full = conv3x3(h2, w33_ref[2], b33_ref[2], ww, im_hi_ref, mdn_ref, True) # Downsample conv
    h3 = jnp.dot(full, sel_ref[...], preferred_element_type=jnp.float32)     # even-pixel pick
    h4 = resblock(h3, 3, 2, wo, im_lo_ref, mlo_ref)                          # ResnetBlock 2
    h5 = gn_silu(h4, 4)                                                      # norm_out + SiLU

    mom = conv3x3(h5, w_out_ref[...], b_out_ref[...], wo, im_lo_ref, mlo_ref, False)  # (8, Pl)
    q = jnp.dot(wq_ref[...], mom, preferred_element_type=jnp.float32) + bq_ref[...]   # quant 1x1
    mean = q[:LATENT_CH, :]
    logvar = jnp.clip(q[LATENT_CH:, :], -30.0, 20.0)
    std = jnp.exp(0.5 * logvar)
    z = (mean + std * noise_ref[0]) * scaling                                # (Lat, Pl)
    o_ref[...] = z.reshape(1, LATENT_CH, pl_lo)


# -----------------------------------------------------------------------------
# Precomputed spatial constants (boundary masks, even-pixel selector, group matrix)
# -----------------------------------------------------------------------------
def _spatial_consts(H, W):
    P = H * W
    Ho, Wo = H // 2, W // 2
    Pl = Ho * Wo

    def tap_masks(hh, ww, anchored):
        pts = hh * ww
        y, x = np.divmod(np.arange(pts), ww)
        rows = []
        for k in range(9):
            dy, dx = k // 3, k % 3
            if anchored:
                sy, sx = y + dy, x + dx
            else:
                sy, sx = y + dy - 1, x + dx - 1
            valid = (sy >= 0) & (sy < hh) & (sx >= 0) & (sx < ww)
            rows.append(np.broadcast_to(valid.astype(np.float32), (BASE_CH, pts)))
        return jnp.asarray(np.stack(rows), jnp.bfloat16)

    yl, xl = np.divmod(np.arange(Pl), Wo)
    sel = np.zeros((P, Pl), np.float32)
    sel[(2 * yl) * W + 2 * xl, np.arange(Pl)] = 1.0

    c = np.arange(BASE_CH)
    cg = BASE_CH // GROUPS
    grp = (c[:, None] // cg == c[None, :] // cg).astype(np.float32)

    return dict(mask_hi=tap_masks(H, W, False),
                mask_dn=tap_masks(H, W, True),
                mask_lo=tap_masks(Ho, Wo, False),
                sel=jnp.asarray(sel),
                grp=jnp.asarray(grp))


# -----------------------------------------------------------------------------
# pallas_call wrapper
# -----------------------------------------------------------------------------
def mini_vae_encode(params, x_ncp, noise_nlp, consts, scaling, H, W):
    N = x_ncp.shape[0]
    Ho, Wo = H // 2, W // 2
    P, Pl = H * W, Ho * Wo

    kernel = functools.partial(_encoder_kernel, eps=GN_EPS,
                               scaling=float(scaling), hh=H, ww=W)

    def const_spec(a):  # weights/constants: fetched once, resident across the batch grid
        nd = a.ndim
        return pl.BlockSpec(a.shape, lambda n, _nd=nd: (0,) * _nd)

    const_args = (params["w_in"], params["b_in"], params["w33"], params["b33"],
                  params["gn_g"], params["gn_b"], params["w_out"], params["b_out"],
                  params["wq"], params["bq"],
                  consts["grp"], consts["mask_hi"], consts["mask_dn"],
                  consts["mask_lo"], consts["sel"])

    flops = N * (4 * 2 * BASE_CH * 9 * BASE_CH * P          # hi-res im2col convs
                 + 2 * 2 * BASE_CH * 9 * BASE_CH * Pl       # lo-res res-block convs
                 + 2 * 2 * LATENT_CH * 9 * BASE_CH * Pl     # conv_out
                 + 2 * BASE_CH * P * Pl                     # even-pixel selection
                 + 10 * 2 * BASE_CH * BASE_CH * P)          # GroupNorm group reduces (approx)
    transcendentals = N * (2 * BASE_CH * P + 3 * BASE_CH * Pl + LATENT_CH * Pl)
    bytes_accessed = (x_ncp.size * 4 + noise_nlp.size * 4 + N * LATENT_CH * Pl * 4
                      + sum(int(a.size) * a.dtype.itemsize for a in const_args))

    return pl.pallas_call(
        kernel,
        out_shape=jax.ShapeDtypeStruct((N, LATENT_CH, Pl), jnp.float32),
        grid=(N,),
        in_specs=[pl.BlockSpec((1, BASE_CH, P), lambda n: (n, 0, 0)),
                  pl.BlockSpec((1, LATENT_CH, Pl), lambda n: (n, 0, 0)),
                  *[const_spec(a) for a in const_args]],
        out_specs=pl.BlockSpec((1, LATENT_CH, Pl), lambda n: (n, 0, 0)),
        scratch_shapes=[pltpu.VMEM((9 * BASE_CH, P), jnp.bfloat16),    # hi-res im2col scratch
                        pltpu.VMEM((9 * BASE_CH, Pl), jnp.bfloat16)],  # lo-res im2col scratch
        compiler_params=pltpu.CompilerParams(dimension_semantics=("parallel",)),
        cost_estimate=pl.CostEstimate(flops=int(flops),
                                      transcendentals=int(transcendentals),
                                      bytes_accessed=int(bytes_accessed)),
    )(x_ncp, noise_nlp, *const_args)


@functools.partial(jax.jit, static_argnames=("scaling",))
def _encode_jit(params, x_nchw, noise_nchw, *, scaling):
    N, cin, H, W = x_nchw.shape
    lat = noise_nchw.shape[1]
    Ho, Wo = H // 2, W // 2
    x = x_nchw
    if cin < BASE_CH:                                           # one-time channel pad 3 -> 32
        x = jnp.pad(x, ((0, 0), (0, BASE_CH - cin), (0, 0), (0, 0)))
    x = x.reshape(N, BASE_CH, H * W)                            # channel-major, lane-dense
    noise = noise_nchw.reshape(N, lat, Ho * Wo)
    consts = _spatial_consts(H, W)
    z = mini_vae_encode(params, x, noise, consts, scaling, H, W)
    return z.reshape(N, lat, Ho, Wo)                            # already NCHW order


# -----------------------------------------------------------------------------
# synthetic mini-VAE parameters
# -----------------------------------------------------------------------------
def _conv_taps(key, cin, cout, k=3):
    kw_, kb_ = jax.random.split(key)
    fan_in = k * k * cin
    bound = float(fan_in) ** -0.5
    w = jax.random.uniform(kw_, (k * k, cin, cout), jnp.float32, -bound, bound)
    b = jax.random.uniform(kb_, (cout,), jnp.float32, -bound, bound)
    return w, b


def _cat_weight(w_taps):
    """(k*k, cin, cout) tap weights -> (cout, k*k*cin) im2col weight (kernel layout)."""
    k2, cin, cout = w_taps.shape
    return jnp.transpose(w_taps, (2, 0, 1)).reshape(cout, k2 * cin)


def init_mini_vae(key):
    ks = jax.random.split(key, 8)
    w_in, b_in = _conv_taps(ks[0], IN_CH, BASE_CH)
    w_in = jnp.pad(w_in, ((0, 0), (0, BASE_CH - IN_CH), (0, 0)))   # cin 3 -> 32 (zero taps)
    convs, biases = [], []
    for i in range(5):          # res1.conv1, res1.conv2, down, res2.conv1, res2.conv2
        w, b = _conv_taps(ks[1 + i], BASE_CH, BASE_CH)
        convs.append(w)
        biases.append(b)
    w_out, b_out = _conv_taps(ks[6], BASE_CH, 2 * LATENT_CH)
    wq, bq = _conv_taps(ks[7], 2 * LATENT_CH, 2 * LATENT_CH, k=1)
    return dict(
        # raw tap-layout weights (f32) for the pure-JAX reference
        w_in_taps=w_in, b_in_raw=b_in,
        w33_taps=jnp.stack(convs), b33_raw=jnp.stack(biases),
        w_out_taps=w_out, b_out_raw=b_out,
        wq_raw=wq[0], bq_raw=bq,
        # kernel-layout weights (im2col (cout, 288), bf16 for the MXU)
        w_in=_cat_weight(w_in).astype(jnp.bfloat16),
        b_in=b_in.reshape(BASE_CH, 1),
        w33=jnp.stack([_cat_weight(w) for w in convs]).astype(jnp.bfloat16),
        b33=jnp.stack([b.reshape(BASE_CH, 1) for b in biases]),
        gn_g=jnp.ones((5, BASE_CH, 1), jnp.float32),
        gn_b=jnp.zeros((5, BASE_CH, 1), jnp.float32),
        w_out=_cat_weight(w_out).astype(jnp.bfloat16),
        b_out=b_out.reshape(2 * LATENT_CH, 1),
        wq=wq[0].T,                                                # (cout, cin) f32
        bq=bq.reshape(2 * LATENT_CH, 1),
        scaling_factor=SCALING_FACTOR,
    )


class VAEEncode:
    """Pallas equivalent of diffusion_ffpe's VAE_encode (a2b / b2a VAE selection)."""

    def __init__(self, vae_params, vae_b2a_params=None):
        self.vae = vae_params
        self.vae_b2a = vae_b2a_params

    def __call__(self, x_nchw, noise_nchw, direction="a2b"):
        assert direction in ("a2b", "b2a")
        params = self.vae if direction == "a2b" else self.vae_b2a
        return _encode_jit(params, x_nchw, noise_nchw,
                           scaling=float(params["scaling_factor"]))


# -----------------------------------------------------------------------------
# pure-JAX (XLA) reference with matching bf16 casts, for a correctness check
# -----------------------------------------------------------------------------
def _conv_ref(x, w_taps, b, stride=1, padding=((1, 1), (1, 1))):
    cin, cout = w_taps.shape[1], w_taps.shape[2]
    w = w_taps.reshape(3, 3, cin, cout).astype(jnp.bfloat16)
    y = jax.lax.conv_general_dilated(
        x.astype(jnp.bfloat16), w, window_strides=(stride, stride),
        padding=padding, dimension_numbers=("NHWC", "HWIO", "NHWC"),
        preferred_element_type=jnp.float32)
    return y + b.reshape(1, 1, 1, -1)


def _gn_silu_ref(x, gamma, beta):
    N, H, W, C = x.shape
    cg = C // GROUPS
    xg = x.reshape(N, H, W, GROUPS, cg)
    mean = xg.mean(axis=(1, 2, 4), keepdims=True)
    d = xg - mean
    var = (d * d).mean(axis=(1, 2, 4), keepdims=True)
    y = (d * jax.lax.rsqrt(var + GN_EPS)).reshape(N, H, W, C)
    y = y * gamma.reshape(1, 1, 1, -1) + beta.reshape(1, 1, 1, -1)
    return y * jax.nn.sigmoid(y)


def encode_ref(params, x_nchw, noise_nchw):
    x = jnp.transpose(x_nchw, (0, 2, 3, 1))
    x = jnp.pad(x, ((0, 0), (0, 0), (0, 0), (0, BASE_CH - x.shape[-1])))
    g, b = params["gn_g"], params["gn_b"]
    h1 = _conv_ref(x, params["w_in_taps"], params["b_in_raw"])
    t = _gn_silu_ref(h1, g[0], b[0])
    t = _conv_ref(t, params["w33_taps"][0], params["b33_raw"][0])
    t = _gn_silu_ref(t, g[1], b[1])
    t = _conv_ref(t, params["w33_taps"][1], params["b33_raw"][1])
    h2 = h1 + t
    h3 = _conv_ref(h2, params["w33_taps"][2], params["b33_raw"][2],
                   stride=2, padding=((0, 1), (0, 1)))
    t = _gn_silu_ref(h3, g[2], b[2])
    t = _conv_ref(t, params["w33_taps"][3], params["b33_raw"][3])
    t = _gn_silu_ref(t, g[3], b[3])
    t = _conv_ref(t, params["w33_taps"][4], params["b33_raw"][4])
    h4 = h3 + t
    h5 = _gn_silu_ref(h4, g[4], b[4])
    mom = _conv_ref(h5, params["w_out_taps"], params["b_out_raw"])
    q = jnp.einsum("nhwc,cd->nhwd", mom, params["wq_raw"]) \
        + params["bq_raw"].reshape(1, 1, 1, -1)
    mean = q[..., :LATENT_CH]
    logvar = jnp.clip(q[..., LATENT_CH:], -30.0, 20.0)
    noise = jnp.transpose(noise_nchw, (0, 2, 3, 1))
    z = (mean + jnp.exp(0.5 * logvar) * noise) * params["scaling_factor"]
    return jnp.transpose(z, (0, 3, 1, 2))


if __name__ == "__main__":
    key = jax.random.PRNGKey(0)
    k_vae, k_vae_b2a, k_x, k_noise = jax.random.split(key, 4)

    vae_params = init_mini_vae(k_vae)
    vae_b2a_params = init_mini_vae(k_vae_b2a)
    encoder = VAEEncode(vae_params, vae_b2a_params)

    N, C, H, W = 2, IN_CH, 16, 16
    x = jax.random.normal(k_x, (N, C, H, W), jnp.float32)                    # NCHW input
    noise = jax.random.normal(k_noise, (N, LATENT_CH, H // 2, W // 2),
                              jnp.float32)                                   # NCHW latent noise

    z_a2b = encoder(x, noise, direction="a2b")
    z_b2a = encoder(x, noise, direction="b2a")
    jax.block_until_ready((z_a2b, z_b2a))

    assert z_a2b.shape == (N, LATENT_CH, H // 2, W // 2)
    assert z_b2a.shape == (N, LATENT_CH, H // 2, W // 2)
    assert bool(jnp.all(jnp.isfinite(z_a2b))) and bool(jnp.all(jnp.isfinite(z_b2a)))

    # numerical check against the pure-JAX reference (same bf16 matmul casts)
    z_ref = encode_ref(vae_params, x, noise)
    max_err = float(jnp.max(jnp.abs(z_a2b - z_ref)))
    assert jnp.allclose(z_a2b, z_ref, atol=2e-3, rtol=2e-2), f"max abs err {max_err}"

    print("KERNEL_OK")
</pallas_src>

<mosaic_0001>
module attributes {stable_mosaic.version = 11 : i64} {
  func.func @_encoder_kernel(%arg0: i32, %arg1: memref<1x32x256xf32, #tpu.memory_space<vmem>>, %arg2: memref<1x4x64xf32, #tpu.memory_space<vmem>>, %arg3: memref<32x288xbf16, #tpu.memory_space<vmem>>, %arg4: memref<32x1xf32, #tpu.memory_space<vmem>>, %arg5: memref<5x32x288xbf16, #tpu.memory_space<vmem>>, %arg6: memref<5x32x1xf32, #tpu.memory_space<vmem>>, %arg7: memref<5x32x1xf32, #tpu.memory_space<vmem>>, %arg8: memref<5x32x1xf32, #tpu.memory_space<vmem>>, %arg9: memref<8x288xbf16, #tpu.memory_space<vmem>>, %arg10: memref<8x1xf32, #tpu.memory_space<vmem>>, %arg11: memref<8x8xf32, #tpu.memory_space<vmem>>, %arg12: memref<8x1xf32, #tpu.memory_space<vmem>>, %arg13: memref<32x32xf32, #tpu.memory_space<vmem>>, %arg14: memref<9x32x256xbf16, #tpu.memory_space<vmem>>, %arg15: memref<9x32x256xbf16, #tpu.memory_space<vmem>>, %arg16: memref<9x32x64xbf16, #tpu.memory_space<vmem>>, %arg17: memref<256x64xf32, #tpu.memory_space<vmem>>, %arg18: memref<1x4x64xf32, #tpu.memory_space<vmem>>, %arg19: memref<288x256xbf16, #tpu.memory_space<vmem>>, %arg20: memref<288x64xbf16, #tpu.memory_space<vmem>>) attributes {dimension_semantics = [#tpu.dimension_semantics<parallel>], iteration_bounds = array<i64: 2>, scalar_prefetch = 0 : i64, scratch_operands = 2 : i64, tpu.core_type = #tpu.core_type<tc>, window_params = [{transform_indices = @transform_0, window_bounds = array<i64: 1, 32, 256>}, {transform_indices = @transform_1, window_bounds = array<i64: 1, 4, 64>}, {pipeline_mode = #tpu.pipeline_mode<synchronous>, transform_indices = @transform_2, window_bounds = array<i64: 32, 288>}, {pipeline_mode = #tpu.pipeline_mode<synchronous>, transform_indices = @transform_3, window_bounds = array<i64: 32, 1>}, {pipeline_mode = #tpu.pipeline_mode<synchronous>, transform_indices = @transform_4, window_bounds = array<i64: 5, 32, 288>}, {pipeline_mode = #tpu.pipeline_mode<synchronous>, transform_indices = @transform_5, window_bounds = array<i64: 5, 32, 1>}, {pipeline_mode = #tpu.pipeline_mode<synchronous>, transform_indices = @transform_6, window_bounds = array<i64: 5, 32, 1>}, {pipeline_mode = #tpu.pipeline_mode<synchronous>, transform_indices = @transform_7, window_bounds = array<i64: 5, 32, 1>}, {pipeline_mode = #tpu.pipeline_mode<synchronous>, transform_indices = @transform_8, window_bounds = array<i64: 8, 288>}, {pipeline_mode = #tpu.pipeline_mode<synchronous>, transform_indices = @transform_9, window_bounds = array<i64: 8, 1>}, {pipeline_mode = #tpu.pipeline_mode<synchronous>, transform_indices = @transform_10, window_bounds = array<i64: 8, 8>}, {pipeline_mode = #tpu.pipeline_mode<synchronous>, transform_indices = @transform_11, window_bounds = array<i64: 8, 1>}, {pipeline_mode = #tpu.pipeline_mode<synchronous>, transform_indices = @transform_12, window_bounds = array<i64: 32, 32>}, {pipeline_mode = #tpu.pipeline_mode<synchronous>, transform_indices = @transform_13, window_bounds = array<i64: 9, 32, 256>}, {pipeline_mode = #tpu.pipeline_mode<synchronous>, transform_indices = @transform_14, window_bounds = array<i64: 9, 32, 256>}, {pipeline_mode = #tpu.pipeline_mode<synchronous>, transform_indices = @transform_15, window_bounds = array<i64: 9, 32, 64>}, {pipeline_mode = #tpu.pipeline_mode<synchronous>, transform_indices = @transform_16, window_bounds = array<i64: 256, 64>}, {transform_indices = @transform_17, window_bounds = array<i64: 1, 4, 64>}]} {
    %c0 = arith.constant 0 : index
    %c0_0 = arith.constant 0 : index
    %c0_1 = arith.constant 0 : index
    %0 = vector.load %arg1[%c0, %c0_0, %c0_1] : memref<1x32x256xf32, #tpu.memory_space<vmem>>, vector<1x32x256xf32>
    %1 = vector.shape_cast %0 : vector<1x32x256xf32> to vector<32x256xf32>
    %c0_2 = arith.constant 0 : index
    %c0_3 = arith.constant 0 : index
    %2 = vector.load %arg3[%c0_2, %c0_3] : memref<32x288xbf16, #tpu.memory_space<vmem>>, vector<32x288xbf16>
    %c0_4 = arith.constant 0 : index
    %c0_5 = arith.constant 0 : index
    %3 = vector.load %arg4[%c0_4, %c0_5] : memref<32x1xf32, #tpu.memory_space<vmem>>, vector<32x1xf32>
    %4 = arith.truncf %1 : vector<32x256xf32> to vector<32x256xbf16>
    %5 = vector.extract_strided_slice %4 {offsets = [0, 239], sizes = [32, 17], strides = [1, 1]} : vector<32x256xbf16> to vector<32x17xbf16>
    %6 = vector.extract_strided_slice %4 {offsets = [0, 0], sizes = [32, 239], strides = [1, 1]} : vector<32x256xbf16> to vector<32x239xbf16>
    %7 = tpu.concatenate %5, %6 in 1 : vector<32x17xbf16>, vector<32x239xbf16> -> vector<32x256xbf16>
    %c0_6 = arith.constant 0 : index
    %c0_7 = arith.constant 0 : index
    %c0_8 = arith.constant 0 : index
    %8 = vector.load %arg14[%c0_6, %c0_7, %c0_8] : memref<9x32x256xbf16, #tpu.memory_space<vmem>>, vector<1x32x256xbf16>
    %9 = vector.shape_cast %8 : vector<1x32x256xbf16> to vector<32x256xbf16>
    %10 = arith.mulf %7, %9 : vector<32x256xbf16>
    %c0_9 = arith.constant 0 : index
    %c0_10 = arith.constant 0 : index
    %11 = vector.load %arg19[%c0_9, %c0_10] : memref<288x256xbf16, #tpu.memory_space<vmem>>, vector<32x256xbf16>
    tpu.vector_store %arg19[%c0_9, %c0_10], %10 {strides = array<i32>} : memref<288x256xbf16, #tpu.memory_space<vmem>>, vector<32x256xbf16>,
    %12 = vector.extract_strided_slice %4 {offsets = [0, 240], sizes = [32, 16], strides = [1, 1]} : vector<32x256xbf16> to vector<32x16xbf16>
    %13 = vector.extract_strided_slice %4 {offsets = [0, 0], sizes = [32, 240], strides = [1, 1]} : vector<32x256xbf16> to vector<32x240xbf16>
    %14 = tpu.concatenate %12, %13 in 1 : vector<32x16xbf16>, vector<32x240xbf16> -> vector<32x256xbf16>
    %c1 = arith.constant 1 : index
    %c0_11 = arith.constant 0 : index
    %c0_12 = arith.constant 0 : index
    %15 = vector.load %arg14[%c1, %c0_11, %c0_12] : memref<9x32x256xbf16, #tpu.memory_space<vmem>>, vector<1x32x256xbf16>
    %16 = vector.shape_cast %15 : vector<1x32x256xbf16> to vector<32x256xbf16>
    %17 = arith.mulf %14, %16 : vector<32x256xbf16>
    %c32 = arith.constant 32 : index
    %c0_13 = arith.constant 0 : index
    %18 = vector.load %arg19[%c32, %c0_13] : memref<288x256xbf16, #tpu.memory_space<vmem>>, vector<32x256xbf16>
    tpu.vector_store %arg19[%c32, %c0_13], %17 {strides = array<i32>} : memref<288x256xbf16, #tpu.memory_space<vmem>>, vector<32x256xbf16>,
    %19 = vector.extract_strided_slice %4 {offsets = [0, 241], sizes = [32, 15], strides = [1, 1]} : vector<32x256xbf16> to vector<32x15xbf16>
    %20 = vector.extract_strided_slice %4 {offsets = [0, 0], sizes = [32, 241], strides = [1, 1]} : vector<32x256xbf16> to vector<32x241xbf16>
    %21 = tpu.concatenate %19, %20 in 1 : vector<32x15xbf16>, vector<32x241xbf16> -> vector<32x256xbf16>
    %c2 = arith.constant 2 : index
    %c0_14 = arith.constant 0 : index
    %c0_15 = arith.constant 0 : index
    %22 = vector.load %arg14[%c2, %c0_14, %c0_15] : memref<9x32x256xbf16, #tpu.memory_space<vmem>>, vector<1x32x256xbf16>
    %23 = vector.shape_cast %22 : vector<1x32x256xbf16> to vector<32x256xbf16>
    %24 = arith.mulf %21, %23 : vector<32x256xbf16>
    %c64 = arith.constant 64 : index
    %c0_16 = arith.constant 0 : index
    %25 = vector.load %arg19[%c64, %c0_16] : memref<288x256xbf16, #tpu.memory_space<vmem>>, vector<32x256xbf16>
    tpu.vector_store %arg19[%c64, %c0_16], %24 {strides = array<i32>} : memref<288x256xbf16, #tpu.memory_space<vmem>>, vector<32x256xbf16>,
    %26 = vector.extract_strided_slice %4 {offsets = [0, 255], sizes = [32, 1], strides = [1, 1]} : vector<32x256xbf16> to vector<32x1xbf16>
    %27 = vector.extract_strided_slice %4 {offsets = [0, 0], sizes = [32, 255], strides = [1, 1]} : vector<32x256xbf16> to vector<32x255xbf16>
    %28 = tpu.concatenate %26, %27 in 1 : vector<32x1xbf16>, vector<32x255xbf16> -> vector<32x256xbf16>
    %c3 = arith.constant 3 : index
    %c0_17 = arith.constant 0 : index
    %c0_18 = arith.constant 0 : index
    %29 = vector.load %arg14[%c3, %c0_17, %c0_18] : memref<9x32x256xbf16, #tpu.memory_space<vmem>>, vector<1x32x256xbf16>
    %30 = vector.shape_cast %29 : vector<1x32x256xbf16> to vector<32x256xbf16>
    %31 = arith.mulf %28, %30 : vector<32x256xbf16>
    %c96 = arith.constant 96 : index
    %c0_19 = arith.constant 0 : index
    %32 = vector.load %arg19[%c96, %c0_19] : memref<288x256xbf16, #tpu.memory_space<vmem>>, vector<32x256xbf16>
    tpu.vector_store %arg19[%c96, %c0_19], %31 {strides = array<i32>} : memref<288x256xbf16, #tpu.memory_space<vmem>>, vector<32x256xbf16>,
    %c128 = arith.constant 128 : index
    %c0_20 = arith.constant 0 : index
    %33 = vector.load %arg19[%c128, %c0_20] : memref<288x256xbf16, #tpu.memory_space<vmem>>, vector<32x256xbf16>
    tpu.vector_store %arg19[%c128, %c0_20], %4 {strides = array<i32>} : memref<288x256xbf16, #tpu.memory_space<vmem>>, vector<32x256xbf16>,
    %34 = vector.extract_strided_slice %4 {offsets = [0, 1], sizes = [32, 255], strides = [1, 1]} : vector<32x256xbf16> to vector<32x255xbf16>
    %35 = vector.extract_strided_slice %4 {offsets = [0, 0], sizes = [32, 1], strides = [1, 1]} : vector<32x256xbf16> to vector<32x1xbf16>
    %36 = tpu.concatenate %34, %35 in 1 : vector<32x255xbf16>, vector<32x1xbf16> -> vector<32x256xbf16>
    %c5 = arith.constant 5 : index
    %c0_21 = arith.constant 0 : index
    %c0_22 = arith.constant 0 : index
    %37 = vector.load %arg14[%c5, %c0_21, %c0_22] : memref<9x32x256xbf16, #tpu.memory_space<vmem>>, vector<1x32x256xbf16>
    %38 = vector.shape_cast %37 : vector<1x32x256xbf16> to vector<32x256xbf16>
    %39 = arith.mulf %36, %38 : vector<32x256xbf16>
    %c160 = arith.constant 160 : index
    %c0_23 = arith.constant 0 : index
    %40 = vector.load %arg19[%c160, %c0_23] : memref<288x256xbf16, #tpu.memory_space<vmem>>, vector<32x256xbf16>
    tpu.vector_store %arg19[%c160, %c0_23], %39 {strides = array<i32>} : memref<288x256xbf16, #tpu.memory_space<vmem>>, vector<32x256xbf16>,
    %41 = vector.extract_strided_slice %4 {offsets = [0, 15], sizes = [32, 241], strides = [1, 1]} : vector<32x256xbf16> to vector<32x241xbf16>
    %42 = vector.extract_strided_slice %4 {offsets = [0, 0], sizes = [32, 15], strides = [1, 1]} : vector<32x256xbf16> to vector<32x15xbf16>
    %43 = tpu.concatenate %41, %42 in 1 : vector<32x241xbf16>, vector<32x15xbf16> -> vector<32x256xbf16>
    %c6 = arith.constant 6 : index
    %c0_24 = arith.constant 0 : index
    %c0_25 = arith.constant 0 : index
    %44 = vector.load %arg14[%c6, %c0_24, %c0_25] : memref<9x32x256xbf16, #tpu.memory_space<vmem>>, vector<1x32x256xbf16>
    %45 = vector.shape_cast %44 : vector<1x32x256xbf16> to vector<32x256xbf16>
    %46 = arith.mulf %43, %45 : vector<32x256xbf16>
    %c192 = arith.constant 192 : index
    %c0_26 = arith.constant 0 : index
    %47 = vector.load %arg19[%c192, %c0_26] : memref<288x256xbf16, #tpu.memory_space<vmem>>, vector<32x256xbf16>
    tpu.vector_store %arg19[%c192, %c0_26], %46 {strides = array<i32>} : memref<288x256xbf16, #tpu.memory_space<vmem>>, vector<32x256xbf16>,
    %48 = vector.extract_strided_slice %4 {offsets = [0, 16], sizes = [32, 240], strides = [1, 1]} : vector<32x256xbf16> to vector<32x240xbf16>
    %49 = vector.extract_strided_slice %4 {offsets = [0, 0], sizes = [32, 16], strides = [1, 1]} : vector<32x256xbf16> to vector<32x16xbf16>
    %50 = tpu.concatenate %48, %49 in 1 : vector<32x240xbf16>, vector<32x16xbf16> -> vector<32x256xbf16>
    %c7 = arith.constant 7 : index
    %c0_27 = arith.constant 0 : index
    %c0_28 = arith.constant 0 : index
    %51 = vector.load %arg14[%c7, %c0_27, %c0_28] : memref<9x32x256xbf16, #tpu.memory_space<vmem>>, vector<1x32x256xbf16>
    %52 = vector.shape_cast %51 : vector<1x32x256xbf16> to vector<32x256xbf16>
    %53 = arith.mulf %50, %52 : vector<32x256xbf16>
    %c224 = arith.constant 224 : index
    %c0_29 = arith.constant 0 : index
    %54 = vector.load %arg19[%c224, %c0_29] : memref<288x256xbf16, #tpu.memory_space<vmem>>, vector<32x256xbf16>
    tpu.vector_store %arg19[%c224, %c0_29], %53 {strides = array<i32>} : memref<288x256xbf16, #tpu.memory_space<vmem>>, vector<32x256xbf16>,
    %55 = vector.extract_strided_slice %4 {offsets = [0, 17], sizes = [32, 239], strides = [1, 1]} : vector<32x256xbf16> to vector<32x239xbf16>
    %56 = vector.extract_strided_slice %4 {offsets = [0, 0], sizes = [32, 17], strides = [1, 1]} : vector<32x256xbf16> to vector<32x17xbf16>
    %57 = tpu.concatenate %55, %56 in 1 : vector<32x239xbf16>, vector<32x17xbf16> -> vector<32x256xbf16>
    %c8 = arith.constant 8 : index
    %c0_30 = arith.constant 0 : index
    %c0_31 = arith.constant 0 : index
    %58 = vector.load %arg14[%c8, %c0_30, %c0_31] : memref<9x32x256xbf16, #tpu.memory_space<vmem>>, vector<1x32x256xbf16>
    %59 = vector.shape_cast %58 : vector<1x32x256xbf16> to vector<32x256xbf16>
    %60 = arith.mulf %57, %59 : vector<32x256xbf16>
    %c256 = arith.constant 256 : index
    %c0_32 = arith.constant 0 : index
    %61 = vector.load %arg19[%c256, %c0_32] : memref<288x256xbf16, #tpu.memory_space<vmem>>, vector<32x256xbf16>
    tpu.vector_store %arg19[%c256, %c0_32], %60 {strides = array<i32>} : memref<288x256xbf16, #tpu.memory_space<vmem>>, vector<32x256xbf16>,
    %c0_33 = arith.constant 0 : index
    %c0_34 = arith.constant 0 : index
    %62 = vector.load %arg19[%c0_33, %c0_34] : memref<288x256xbf16, #tpu.memory_space<vmem>>, vector<288x256xbf16>
    %cst = arith.constant dense<0.000000e+00> : vector<32x256xf32>
    %63 = tpu.matmul %2, %62, %cst {dimension_numbers = #tpu.dot_dimension_numbers<[1], [0], [0], [1], [0, 0, 1, 1], [], []>} : vector<32x288xbf16>, vector<288x256xbf16>, vector<32x256xf32> -> vector<32x256xf32>
    %64 = vector.broadcast %3 : vector<32x1xf32> to vector<32x256xf32>
    %65 = arith.addf %63, %64 : vector<32x256xf32>
    %c0_35 = arith.constant 0 : index
    %c0_36 = arith.constant 0 : index
    %c0_37 = arith.constant 0 : index
    %66 = vector.load %arg7[%c0_35, %c0_36, %c0_37] : memref<5x32x1xf32, #tpu.memory_space<vmem>>, vector<1x32x1xf32>
    %67 = vector.shape_cast %66 : vector<1x32x1xf32> to vector<32x1xf32>
    %c0_38 = arith.constant 0 : index
    %c0_39 = arith.constant 0 : index
    %c0_40 = arith.constant 0 : index
    %68 = vector.load %arg8[%c0_38, %c0_39, %c0_40] : memref<5x32x1xf32, #tpu.memory_space<vmem>>, vector<1x32x1xf32>
    %69 = vector.shape_cast %68 : vector<1x32x1xf32> to vector<32x1xf32>
    %c0_41 = arith.constant 0 : index
    %c0_42 = arith.constant 0 : index
    %70 = vector.load %arg13[%c0_41, %c0_42] : memref<32x32xf32, #tpu.memory_space<vmem>>, vector<32x32xf32>
    %cst_43 = arith.constant dense<0.000000e+00> : vector<32x256xf32>
    %71 = tpu.matmul %70, %65, %cst_43 {dimension_numbers = #tpu.dot_dimension_numbers<[1], [0], [0], [1], [0, 0, 1, 1], [], []>} : vector<32x32xf32>, vector<32x256xf32>, vector<32x256xf32> -> vector<32x256xf32>
    %cst_44 = arith.constant dense<0.000000e+00> : vector<32xf32>
    %72 = vector.multi_reduction <add>, %71, %cst_44 [1] : vector<32x256xf32> to vector<32xf32>
    %73 = vector.shape_cast %72 : vector<32xf32> to vector<32x1xf32>
    %cst_45 = arith.constant 1.024000e+03 : f32
    %74 = vector.broadcast %cst_45 : f32 to vector<32x1xf32>
    %75 = arith.divf %73, %74 : vector<32x1xf32>
    %76 = vector.broadcast %75 : vector<32x1xf32> to vector<32x256xf32>
    %77 = arith.subf %65, %76 : vector<32x256xf32>
    %c0_46 = arith.constant 0 : index
    %c0_47 = arith.constant 0 : index
    %78 = vector.load %arg13[%c0_46, %c0_47] : memref<32x32xf32, #tpu.memory_space<vmem>>, vector<32x32xf32>
    %79 = arith.mulf %77, %77 : vector<32x256xf32>
    %cst_48 = arith.constant dense<0.000000e+00> : vector<32x256xf32>
    %80 = tpu.matmul %78, %79, %cst_48 {dimension_numbers = #tpu.dot_dimension_numbers<[1], [0], [0], [1], [0, 0, 1, 1], [], []>} : vector<32x32xf32>, vector<32x256xf32>, vector<32x256xf32> -> vector<32x256xf32>
    %cst_49 = arith.constant dense<0.000000e+00> : vector<32xf32>
    %81 = vector.multi_reduction <add>, %80, %cst_49 [1] : vector<32x256xf32> to vector<32xf32>
    %82 = vector.shape_cast %81 : vector<32xf32> to vector<32x1xf32>
    %cst_50 = arith.constant 1.024000e+03 : f32
    %83 = vector.broadcast %cst_50 : f32 to vector<32x1xf32>
    %84 = arith.divf %82, %83 : vector<32x1xf32>
    %cst_51 = arith.constant 9.99999997E-7 : f32
    %85 = vector.broadcast %cst_51 : f32 to vector<32x1xf32>
    %86 = arith.addf %84, %85 : vector<32x1xf32>
    %87 = math.rsqrt %86 : vector<32x1xf32>
    %88 = vector.broadcast %87 : vector<32x1xf32> to vector<32x256xf32>
    %89 = arith.mulf %77, %88 : vector<32x256xf32>
    %90 = vector.broadcast %67 : vector<32x1xf32> to vector<32x256xf32>
    %91 = arith.mulf %89, %90 : vector<32x256xf32>
    %92 = vector.broadcast %69 : vector<32x1xf32> to vector<32x256xf32>
    %93 = arith.addf %91, %92 : vector<32x256xf32>
    %94 = arith.negf %93 : vector<32x256xf32>
    %95 = math.exp %94 : vector<32x256xf32>
    %cst_52 = arith.constant 1.000000e+00 : f32
    %96 = vector.broadcast %cst_52 : f32 to vector<32x256xf32>
    %97 = arith.addf %96, %95 : vector<32x256xf32>
    %98 = arith.divf %96, %97 : vector<32x256xf32>
    %99 = arith.mulf %93, %98 : vector<32x256xf32>
    %c0_53 = arith.constant 0 : index
    %c0_54 = arith.constant 0 : index
    %c0_55 = arith.constant 0 : index
    %100 = vector.load %arg5[%c0_53, %c0_54, %c0_55] : memref<5x32x288xbf16, #tpu.memory_space<vmem>>, vector<1x32x288xbf16>
    %101 = vector.shape_cast %100 : vector<1x32x288xbf16> to vector<32x288xbf16>
    %c0_56 = arith.constant 0 : index
    %c0_57 = arith.constant 0 : index
    %c0_58 = arith.constant 0 : index
    %102 = vector.load %arg6[%c0_56, %c0_57, %c0_58] : memref<5x32x1xf32, #tpu.memory_space<vmem>>, vector<1x32x1xf32>
    %103 = vector.shape_cast %102 : vector<1x32x1xf32> to vector<32x1xf32>
    %104 = arith.truncf %99 : vector<32x256xf32> to vector<32x256xbf16>
    %105 = vector.extract_strided_slice %104 {offsets = [0, 239], sizes = [32, 17], strides = [1, 1]} : vector<32x256xbf16> to vector<32x17xbf16>
    %106 = vector.extract_strided_slice %104 {offsets = [0, 0], sizes = [32, 239], strides = [1, 1]} : vector<32x256xbf16> to vector<32x239xbf16>
    %107 = tpu.concatenate %105, %106 in 1 : vector<32x17xbf16>, vector<32x239xbf16> -> vector<32x256xbf16>
    %c0_59 = arith.constant 0 : index
    %c0_60 = arith.constant 0 : index
    %c0_61 = arith.constant 0 : index
    %108 = vector.load %arg14[%c0_59, %c0_60, %c0_61] : memref<9x32x256xbf16, #tpu.memory_space<vmem>>, vector<1x32x256xbf16>
    %109 = vector.shape_cast %108 : vector<1x32x256xbf16> to vector<32x256xbf16>
    %110 = arith.mulf %107, %109 : vector<32x256xbf16>
    %c0_62 = arith.constant 0 : index
    %c0_63 = arith.constant 0 : index
    %111 = vector.load %arg19[%c0_62, %c0_63] : memref<288x256xbf16, #tpu.memory_space<vmem>>, vector<32x256xbf16>
    tpu.vector_store %arg19[%c0_62, %c0_63], %110 {strides = array<i32>} : memref<288x256xbf16, #tpu.memory_space<vmem>>, vector<32x256xbf16>,
    %112 = vector.extract_strided_slice %104 {offsets = [0, 240], sizes = [32, 16], strides = [1, 1]} : vector<32x256xbf16> to vector<32x16xbf16>
    %113 = vector.extract_strided_slice %104 {offsets = [0, 0], sizes = [32, 240], strides = [1, 1]} : vector<32x256xbf16> to vector<32x240xbf16>
    %114 = tpu.concatenate %112, %113 in 1 : vector<32x16xbf16>, vector<32x240xbf16> -> vector<32x256xbf16>
    %c1_64 = arith.constant 1 : index
    %c0_65 = arith.constant 0 : index
    %c0_66 = arith.constant 0 : index
    %115 = vector.load %arg14[%c1_64, %c0_65, %c0_66] : memref<9x32x256xbf16, #tpu.memory_space<vmem>>, vector<1x32x256xbf16>
    %116 = vector.shape_cast %115 : vector<1x32x256xbf16> to vector<32x256xbf16>
    %117 = arith.mulf %114, %116 : vector<32x256xbf16>
    %c32_67 = arith.constant 32 : index
    %c0_68 = arith.constant 0 : index
    %118 = vector.load %arg19[%c32_67, %c0_68] : memref<288x256xbf16, #tpu.memory_space<vmem>>, vector<32x256xbf16>
    tpu.vector_store %arg19[%c32_67, %c0_68], %117 {strides = array<i32>} : memref<288x256xbf16, #tpu.memory_space<vmem>>, vector<32x256xbf16>,
    %119 = vector.extract_strided_slice %104 {offsets = [0, 241], sizes = [32, 15], strides = [1, 1]} : vector<32x256xbf16> to vector<32x15xbf16>
    %120 = vector.extract_strided_slice %104 {offsets = [0, 0], sizes = [32, 241], strides = [1, 1]} : vector<32x256xbf16> to vector<32x241xbf16>
    %121 = tpu.concatenate %119, %120 in 1 : vector<32x15xbf16>, vector<32x241xbf16> -> vector<32x256xbf16>
    %c2_69 = arith.constant 2 : index
    %c0_70 = arith.constant 0 : index
    %c0_71 = arith.constant 0 : index
    %122 = vector.load %arg14[%c2_69, %c0_70, %c0_71] : memref<9x32x256xbf16, #tpu.memory_space<vmem>>, vector<1x32x256xbf16>
    %123 = vector.shape_cast %122 : vector<1x32x256xbf16> to vector<32x256xbf16>
    %124 = arith.mulf %121, %123 : vector<32x256xbf16>
    %c64_72 = arith.constant 64 : index
    %c0_73 = arith.constant 0 : index
    %125 = vector.load %arg19[%c64_72, %c0_73] : memref<288x256xbf16, #tpu.memory_space<vmem>>, vector<32x256xbf16>
    tpu.vector_store %arg19[%c64_72, %c0_73], %124 {strides = array<i32>} : memref<288x256xbf16, #tpu.memory_space<vmem>>, vector<32x256xbf16>,
    %126 = vector.extract_strided_slice %104 {offsets = [0, 255], sizes = [32, 1], strides = [1, 1]} : vector<32x256xbf16> to vector<32x1xbf16>
    %127 = vector.extract_strided_slice %104 {offsets = [0, 0], sizes = [32, 255], strides = [1, 1]} : vector<32x256xbf16> to vector<32x255xbf16>
    %128 = tpu.concatenate %126, %127 in 1 : vector<32x1xbf16>, vector<32x255xbf16> -> vector<32x256xbf16>
    %c3_74 = arith.constant 3 : index
    %c0_75 = arith.constant 0 : index
    %c0_76 = arith.constant 0 : index
    %129 = vector.load %arg14[%c3_74, %c0_75, %c0_76] : memref<9x32x256xbf16, #tpu.memory_space<vmem>>, vector<1x32x256xbf16>
    %130 = vector.shape_cast %129 : vector<1x32x256xbf16> to vector<32x256xbf16>
    %131 = arith.mulf %128, %130 : vector<32x256xbf16>
    %c96_77 = arith.constant 96 : index
    %c0_78 = arith.constant 0 : index
    %132 = vector.load %arg19[%c96_77, %c0_78] : memref<288x256xbf16, #tpu.memory_space<vmem>>, vector<32x256xbf16>
    tpu.vector_store %arg19[%c96_77, %c0_78], %131 {strides = array<i32>} : memref<288x256xbf16, #tpu.memory_space<vmem>>, vector<32x256xbf16>,
    %c128_79 = arith.constant 128 : index
    %c0_80 = arith.constant 0 : index
    %133 = vector.load %arg19[%c128_79, %c0_80] : memref<288x256xbf16, #tpu.memory_space<vmem>>, vector<32x256xbf16>
    tpu.vector_store %arg19[%c128_79, %c0_80], %104 {strides = array<i32>} : memref<288x256xbf16, #tpu.memory_space<vmem>>, vector<32x256xbf16>,
    %134 = vector.extract_strided_slice %104 {offsets = [0, 1], sizes = [32, 255], strides = [1, 1]} : vector<32x256xbf16> to vector<32x255xbf16>
    %135 = vector.extract_strided_slice %104 {offsets = [0, 0], sizes = [32, 1], strides = [1, 1]} : vector<32x256xbf16> to vector<32x1xbf16>
    %136 = tpu.concatenate %134, %135 in 1 : vector<32x255xbf16>, vector<32x1xbf16> -> vector<32x256xbf16>
    %c5_81 = arith.constant 5 : index
    %c0_82 = arith.constant 0 : index
    %c0_83 = arith.constant 0 : index
    %137 = vector.load %arg14[%c5_81, %c0_82, %c0_83] : memref<9x32x256xbf16, #tpu.memory_space<vmem>>, vector<1x32x256xbf16>
    %138 = vector.shape_cast %137 : vector<1x32x256xbf16> to vector<32x256xbf16>
    %139 = arith.mulf %136, %138 : vector<32x256xbf16>
    %c160_84 = arith.constant 160 : index
    %c0_85 = arith.constant 0 : index
    %140 = vector.load %arg19[%c160_84, %c0_85] : memref<288x256xbf16, #tpu.memory_space<vmem>>, vector<32x256xbf16>
    tpu.vector_store %arg19[%c160_84, %c0_85], %139 {strides = array<i32>} : memref<288x256xbf16, #tpu.memory_space<vmem>>, vector<32x256xbf16>,
    %141 = vector.extract_strided_slice %104 {offsets = [0, 15], sizes = [32, 241], strides = [1, 1]} : vector<32x256xbf16> to vector<32x241xbf16>
    %142 = vector.extract_strided_slice %104 {offsets = [0, 0], sizes = [32, 15], strides = [1, 1]} : vector<32x256xbf16> to vector<32x15xbf16>
    %143 = tpu.concatenate %141, %142 in 1 : vector<32x241xbf16>, vector<32x15xbf16> -> vector<32x256xbf16>
    %c6_86 = arith.constant 6 : index
    %c0_87 = arith.constant 0 : index
    %c0_88 = arith.constant 0 : index
    %144 = vector.load %arg14[%c6_86, %c0_87, %c0_88] : memref<9x32x256xbf16, #tpu.memory_space<vmem>>, vector<1x32x256xbf16>
    %145 = vector.shape_cast %144 : vector<1x32x256xbf16> to vector<32x256xbf16>
    %146 = arith.mulf %143, %145 : vector<32x256xbf16>
    %c192_89 = arith.constant 192 : index
    %c0_90 = arith.constant 0 : index
    %147 = vector.load %arg19[%c192_89, %c0_90] : memref<288x256xbf16, #tpu.memory_space<vmem>>, vector<32x256xbf16>
    tpu.vector_store %arg19[%c192_89, %c0_90], %146 {strides = array<i32>} : memref<288x256xbf16, #tpu.memory_space<vmem>>, vector<32x256xbf16>,
    %148 = vector.extract_strided_slice %104 {offsets = [0, 16], sizes = [32, 240], strides = [1, 1]} : vector<32x256xbf16> to vector<32x240xbf16>
    %149 = vector.extract_strided_slice %104 {offsets = [0, 0], sizes = [32, 16], strides = [1, 1]} : vector<32x256xbf16> to vector<32x16xbf16>
    %150 = tpu.concatenate %148, %149 in 1 : vector<32x240xbf16>, vector<32x16xbf16> -> vector<32x256xbf16>
    %c7_91 = arith.constant 7 : index
    %c0_92 = arith.constant 0 : index
    %c0_93 = arith.constant 0 : index
    %151 = vector.load %arg14[%c7_91, %c0_92, %c0_93] : memref<9x32x256xbf16, #tpu.memory_space<vmem>>, vector<1x32x256xbf16>
    %152 = vector.shape_cast %151 : vector<1x32x256xbf16> to vector<32x256xbf16>
    %153 = arith.mulf %150, %152 : vector<32x256xbf16>
    %c224_94 = arith.constant 224 : index
    %c0_95 = arith.constant 0 : index
    %154 = vector.load %arg19[%c224_94, %c0_95] : memref<288x256xbf16, #tpu.memory_space<vmem>>, vector<32x256xbf16>
    tpu.vector_store %arg19[%c224_94, %c0_95], %153 {strides = array<i32>} : memref<288x256xbf16, #tpu.memory_space<vmem>>, vector<32x256xbf16>,
    %155 = vector.extract_strided_slice %104 {offsets = [0, 17], sizes = [32, 239], strides = [1, 1]} : vector<32x256xbf16> to vector<32x239xbf16>
    %156 = vector.extract_strided_slice %104 {offsets = [0, 0], sizes = [32, 17], strides = [1, 1]} : vector<32x256xbf16> to vector<32x17xbf16>
    %157 = tpu.concatenate %155, %156 in 1 : vector<32x239xbf16>, vector<32x17xbf16> -> vector<32x256xbf16>
    %c8_96 = arith.constant 8 : index
    %c0_97 = arith.constant 0 : index
    %c0_98 = arith.constant 0 : index
    %158 = vector.load %arg14[%c8_96, %c0_97, %c0_98] : memref<9x32x256xbf16, #tpu.memory_space<vmem>>, vector<1x32x256xbf16>
    %159 = vector.shape_cast %158 : vector<1x32x256xbf16> to vector<32x256xbf16>
    %160 = arith.mulf %157, %159 : vector<32x256xbf16>
    %c256_99 = arith.constant 256 : index
    %c0_100 = arith.constant 0 : index
    %161 = vector.load %arg19[%c256_99, %c0_100] : memref<288x256xbf16, #tpu.memory_space<vmem>>, vector<32x256xbf16>
    tpu.vector_store %arg19[%c256_99, %c0_100], %160 {strides = array<i32>} : memref<288x256xbf16, #tpu.memory_space<vmem>>, vector<32x256xbf16>,
    %c0_101 = arith.constant 0 : index
    %c0_102 = arith.constant 0 : index
    %162 = vector.load %arg19[%c0_101, %c0_102] : memref<288x256xbf16, #tpu.memory_space<vmem>>, vector<288x256xbf16>
    %cst_103 = arith.constant dense<0.000000e+00> : vector<32x256xf32>
    %163 = tpu.matmul %101, %162, %cst_103 {dimension_numbers = #tpu.dot_dimension_numbers<[1], [0], [0], [1], [0, 0, 1, 1], [], []>} : vector<32x288xbf16>, vector<288x256xbf16>, vector<32x256xf32> -> vector<32x256xf32>
    %164 = vector.broadcast %103 : vector<32x1xf32> to vector<32x256xf32>
    %165 = arith.addf %163, %164 : vector<32x256xf32>
    %c1_104 = arith.constant 1 : index
    %c0_105 = arith.constant 0 : index
    %c0_106 = arith.constant 0 : index
    %166 = vector.load %arg7[%c1_104, %c0_105, %c0_106] : memref<5x32x1xf32, #tpu.memory_space<vmem>>, vector<1x32x1xf32>
    %167 = vector.shape_cast %166 : vector<1x32x1xf32> to vector<32x1xf32>
    %c1_107 = arith.constant 1 : index
    %c0_108 = arith.constant 0 : index
    %c0_109 = arith.constant 0 : index
    %168 = vector.load %arg8[%c1_107, %c0_108, %c0_109] : memref<5x32x1xf32, #tpu.memory_space<vmem>>, vector<1x32x1xf32>
    %169 = vector.shape_cast %168 : vector<1x32x1xf32> to vector<32x1xf32>
    %c0_110 = arith.constant 0 : index
    %c0_111 = arith.constant 0 : index
    %170 = vector.load %arg13[%c0_110, %c0_111] : memref<32x32xf32, #tpu.memory_space<vmem>>, vector<32x32xf32>
    %cst_112 = arith.constant dense<0.000000e+00> : vector<32x256xf32>
    %171 = tpu.matmul %170, %165, %cst_112 {dimension_numbers = #tpu.dot_dimension_numbers<[1], [0], [0], [1], [0, 0, 1, 1], [], []>} : vector<32x32xf32>, vector<32x256xf32>, vector<32x256xf32> -> vector<32x256xf32>
    %cst_113 = arith.constant dense<0.000000e+00> : vector<32xf32>
    %172 = vector.multi_reduction <add>, %171, %cst_113 [1] : vector<32x256xf32> to vector<32xf32>
    %173 = vector.shape_cast %172 : vector<32xf32> to vector<32x1xf32>
    %cst_114 = arith.constant 1.024000e+03 : f32
    %174 = vector.broadcast %cst_114 : f32 to vector<32x1xf32>
    %175 = arith.divf %173, %174 : vector<32x1xf32>
    %176 = vector.broadcast %175 : vector<32x1xf32> to vector<32x256xf32>
    %177 = arith.subf %165, %176 : vector<32x256xf32>
    %c0_115 = arith.constant 0 : index
    %c0_116 = arith.constant 0 : index
    %178 = vector.load %arg13[%c0_115, %c0_116] : memref<32x32xf32, #tpu.memory_space<vmem>>, vector<32x32xf32>
    %179 = arith.mulf %177, %177 : vector<32x256xf32>
    %cst_117 = arith.constant dense<0.000000e+00> : vector<32x256xf32>
    %180 = tpu.matmul %178, %179, %cst_117 {dimension_numbers = #tpu.dot_dimension_numbers<[1], [0], [0], [1], [0, 0, 1, 1], [], []>} : vector<32x32xf32>, vector<32x256xf32>, vector<32x256xf32> -> vector<32x256xf32>
    %cst_118 = arith.constant dense<0.000000e+00> : vector<32xf32>
    %181 = vector.multi_reduction <add>, %180, %cst_118 [1] : vector<32x256xf32> to vector<32xf32>
    %182 = vector.shape_cast %181 : vector<32xf32> to vector<32x1xf32>
    %cst_119 = arith.constant 1.024000e+03 : f32
    %183 = vector.broadcast %cst_119 : f32 to vector<32x1xf32>
    %184 = arith.divf %182, %183 : vector<32x1xf32>
    %cst_120 = arith.constant 9.99999997E-7 : f32
    %185 = vector.broadcast %cst_120 : f32 to vector<32x1xf32>
    %186 = arith.addf %184, %185 : vector<32x1xf32>
    %187 = math.rsqrt %186 : vector<32x1xf32>
    %188 = vector.broadcast %187 : vector<32x1xf32> to vector<32x256xf32>
    %189 = arith.mulf %177, %188 : vector<32x256xf32>
    %190 = vector.broadcast %167 : vector<32x1xf32> to vector<32x256xf32>
    %191 = arith.mulf %189, %190 : vector<32x256xf32>
    %192 = vector.broadcast %169 : vector<32x1xf32> to vector<32x256xf32>
    %193 = arith.addf %191, %192 : vector<32x256xf32>
    %194 = arith.negf %193 : vector<32x256xf32>
    %195 = math.exp %194 : vector<32x256xf32>
    %cst_121 = arith.constant 1.000000e+00 : f32
    %196 = vector.broadcast %cst_121 : f32 to vector<32x256xf32>
    %197 = arith.addf %196, %195 : vector<32x256xf32>
    %198 = arith.divf %196, %197 : vector<32x256xf32>
    %199 = arith.mulf %193, %198 : vector<32x256xf32>
    %c1_122 = arith.constant 1 : index
    %c0_123 = arith.constant 0 : index
    %c0_124 = arith.constant 0 : index
    %200 = vector.load %arg5[%c1_122, %c0_123, %c0_124] : memref<5x32x288xbf16, #tpu.memory_space<vmem>>, vector<1x32x288xbf16>
    %201 = vector.shape_cast %200 : vector<1x32x288xbf16> to vector<32x288xbf16>
    %c1_125 = arith.constant 1 : index
    %c0_126 = arith.constant 0 : index
    %c0_127 = arith.constant 0 : index
    %202 = vector.load %arg6[%c1_125, %c0_126, %c0_127] : memref<5x32x1xf32, #tpu.memory_space<vmem>>, vector<1x32x1xf32>
    %203 = vector.shape_cast %202 : vector<1x32x1xf32> to vector<32x1xf32>
    %204 = arith.truncf %199 : vector<32x256xf32> to vector<32x256xbf16>
    %205 = vector.extract_strided_slice %204 {offsets = [0, 239], sizes = [32, 17], strides = [1, 1]} : vector<32x256xbf16> to vector<32x17xbf16>
    %206 = vector.extract_strided_slice %204 {offsets = [0, 0], sizes = [32, 239], strides = [1, 1]} : vector<32x256xbf16> to vector<32x239xbf16>
    %207 = tpu.concatenate %205, %206 in 1 : vector<32x17xbf16>, vector<32x239xbf16> -> vector<32x256xbf16>
    %c0_128 = arith.constant 0 : index
    %c0_129 = arith.constant 0 : index
    %c0_130 = arith.constant 0 : index
    %208 = vector.load %arg14[%c0_128, %c0_129, %c0_130] : memref<9x32x256xbf16, #tpu.memory_space<vmem>>, vector<1x32x256xbf16>
    %209 = vector.shape_cast %208 : vector<1x32x256xbf16> to vector<32x256xbf16>
    %210 = arith.mulf %207, %209 : vector<32x256xbf16>
    %c0_131 = arith.constant 0 : index
    %c0_132 = arith.constant 0 : index
    %211 = vector.load %arg19[%c0_131, %c0_132] : memref<288x256xbf16, #tpu.memory_space<vmem>>, vector<32x256xbf16>
    tpu.vector_store %arg19[%c0_131, %c0_132], %210 {strides = array<i32>} : memref<288x256xbf16, #tpu.memory_space<vmem>>, vector<32x256xbf16>,
    %212 = vector.extract_strided_slice %204 {offsets = [0, 240], sizes = [32, 16], strides = [1, 1]} : vector<32x256xbf16> to vector<32x16xbf16>
    %213 = vector.extract_strided_slice %204 {offsets = [0, 0], sizes = [32, 240], strides = [1, 1]} : vector<32x256xbf16> to vector<32x240xbf16>
    %214 = tpu.concatenate %212, %213 in 1 : vector<32x16xbf16>, vector<32x240xbf16> -> vector<32x256xbf16>
    %c1_133 = arith.constant 1 : index
    %c0_134 = arith.constant 0 : index
    %c0_135 = arith.constant 0 : index
    %215 = vector.load %arg14[%c1_133, %c0_134, %c0_135] : memref<9x32x256xbf16, #tpu.memory_space<vmem>>, vector<1x32x256xbf16>
    %216 = vector.shape_cast %215 : vector<1x32x256xbf16> to vector<32x256xbf16>
    %217 = arith.mulf %214, %216 : vector<32x256xbf16>
    %c32_136 = arith.constant 32 : index
    %c0_137 = arith.constant 0 : index
    %218 = vector.load %arg19[%c32_136, %c0_137] : memref<288x256xbf16, #tpu.memory_space<vmem>>, vector<32x256xbf16>
    tpu.vector_store %arg19[%c32_136, %c0_137], %217 {strides = array<i32>} : memref<288x256xbf16, #tpu.memory_space<vmem>>, vector<32x256xbf16>,
    %219 = vector.extract_strided_slice %204 {offsets = [0, 241], sizes = [32, 15], strides = [1, 1]} : vector<32x256xbf16> to vector<32x15xbf16>
    %220 = vector.extract_strided_slice %204 {offsets = [0, 0], sizes = [32, 241], strides = [1, 1]} : vector<32x256xbf16> to vector<32x241xbf16>
    %221 = tpu.concatenate %219, %220 in 1 : vector<32x15xbf16>, vector<32x241xbf16> -> vector<32x256xbf16>
    %c2_138 = arith.constant 2 : index
    %c0_139 = arith.constant 0 : index
    %c0_140 = arith.constant 0 : index
    %222 = vector.load %arg14[%c2_138, %c0_139, %c0_140] : memref<9x32x256xbf16, #tpu.memory_space<vmem>>, vector<1x32x256xbf16>
    %223 = vector.shape_cast %222 : vector<1x32x256xbf16> to vector<32x256xbf16>
    %224 = arith.mulf %221, %223 : vector<32x256xbf16>
    %c64_141 = arith.constant 64 : index
    %c0_142 = arith.constant 0 : index
    %225 = vector.load %arg19[%c64_141, %c0_142] : memref<288x256xbf16, #tpu.memory_space<vmem>>, vector<32x256xbf16>
    tpu.vector_store %arg19[%c64_141, %c0_142], %224 {strides = array<i32>} : memref<288x256xbf16, #tpu.memory_space<vmem>>, vector<32x256xbf16>,
    %226 = vector.extract_strided_slice %204 {offsets = [0, 255], sizes = [32, 1], strides = [1, 1]} : vector<32x256xbf16> to vector<32x1xbf16>
    %227 = vector.extract_strided_slice %204 {offsets = [0, 0], sizes = [32, 255], strides = [1, 1]} : vector<32x256xbf16> to vector<32x255xbf16>
    %228 = tpu.concatenate %226, %227 in 1 : vector<32x1xbf16>, vector<32x255xbf16> -> vector<32x256xbf16>
    %c3_143 = arith.constant 3 : index
    %c0_144 = arith.constant 0 : index
    %c0_145 = arith.constant 0 : index
    %229 = vector.load %arg14[%c3_143, %c0_144, %c0_145] : memref<9x32x256xbf16, #tpu.memory_space<vmem>>, vector<1x32x256xbf16>
    %230 = vector.shape_cast %229 : vector<1x32x256xbf16> to vector<32x256xbf16>
    %231 = arith.mulf %228, %230 : vector<32x256xbf16>
    %c96_146 = arith.constant 96 : index
    %c0_147 = arith.constant 0 : index
    %232 = vector.load %arg19[%c96_146, %c0_147] : memref<288x256xbf16, #tpu.memory_space<vmem>>, vector<32x256xbf16>
    tpu.vector_store %arg19[%c96_146, %c0_147], %231 {strides = array<i32>} : memref<288x256xbf16, #tpu.memory_space<vmem>>, vector<32x256xbf16>,
    %c128_148 = arith.constant 128 : index
    %c0_149 = arith.constant 0 : index
    %233 = vector.load %arg19[%c128_148, %c0_149] : memref<288x256xbf16, #tpu.memory_space<vmem>>, vector<32x256xbf16>
    tpu.vector_store %arg19[%c128_148, %c0_149], %204 {strides = array<i32>} : memref<288x256xbf16, #tpu.memory_space<vmem>>, vector<32x256xbf16>,
    %234 = vector.extract_strided_slice %204 {offsets = [0, 1], sizes = [32, 255], strides = [1, 1]} : vector<32x256xbf16> to vector<32x255xbf16>
    %235 = vector.extract_strided_slice %204 {offsets = [0, 0], sizes = [32, 1], strides = [1, 1]} : vector<32x256xbf16> to vector<32x1xbf16>
    %236 = tpu.concatenate %234, %235 in 1 : vector<32x255xbf16>, vector<32x1xbf16> -> vector<32x256xbf16>
    %c5_150 = arith.constant 5 : index
    %c0_151 = arith.constant 0 : index
    %c0_152 = arith.constant 0 : index
    %237 = vector.load %arg14[%c5_150, %c0_151, %c0_152] : memref<9x32x256xbf16, #tpu.memory_space<vmem>>, vector<1x32x256xbf16>
    %238 = vector.shape_cast %237 : vector<1x32x256xbf16> to vector<32x256xbf16>
    %239 = arith.mulf %236, %238 : vector<32x256xbf16>
    %c160_153 = arith.constant 160 : index
    %c0_154 = arith.constant 0 : index
    %240 = vector.load %arg19[%c160_153, %c0_154] : memref<288x256xbf16, #tpu.memory_space<vmem>>, vector<32x256xbf16>
    tpu.vector_store %arg19[%c160_153, %c0_154], %239 {strides = array<i32>} : memref<288x256xbf16, #tpu.memory_space<vmem>>, vector<32x256xbf16>,
    %241 = vector.extract_strided_slice %204 {offsets = [0, 15], sizes = [32, 241], strides = [1, 1]} : vector<32x256xbf16> to vector<32x241xbf16>
    %242 = vector.extract_strided_slice %204 {offsets = [0, 0], sizes = [32, 15], strides = [1, 1]} : vector<32x256xbf16> to vector<32x15xbf16>
    %243 = tpu.concatenate %241, %242 in 1 : vector<32x241xbf16>, vector<32x15xbf16> -> vector<32x256xbf16>
    %c6_155 = arith.constant 6 : index
    %c0_156 = arith.constant 0 : index
    %c0_157 = arith.constant 0 : index
    %244 = vector.load %arg14[%c6_155, %c0_156, %c0_157] : memref<9x32x256xbf16, #tpu.memory_space<vmem>>, vector<1x32x256xbf16>
    %245 = vector.shape_cast %244 : vector<1x32x256xbf16> to vector<32x256xbf16>
    %246 = arith.mulf %243, %245 : vector<32x256xbf16>
    %c192_158 = arith.constant 192 : index
    %c0_159 = arith.constant 0 : index
    %247 = vector.load %arg19[%c192_158, %c0_159] : memref<288x256xbf16, #tpu.memory_space<vmem>>, vector<32x256xbf16>
    tpu.vector_store %arg19[%c192_158, %c0_159], %246 {strides = array<i32>} : memref<288x256xbf16, #tpu.memory_space<vmem>>, vector<32x256xbf16>,
    %248 = vector.extract_strided_slice %204 {offsets = [0, 16], sizes = [32, 240], strides = [1, 1]} : vector<32x256xbf16> to vector<32x240xbf16>
    %249 = vector.extract_strided_slice %204 {offsets = [0, 0], sizes = [32, 16], strides = [1, 1]} : vector<32x256xbf16> to vector<32x16xbf16>
    %250 = tpu.concatenate %248, %249 in 1 : vector<32x240xbf16>, vector<32x16xbf16> -> vector<32x256xbf16>
    %c7_160 = arith.constant 7 : index
    %c0_161 = arith.constant 0 : index
    %c0_162 = arith.constant 0 : index
    %251 = vector.load %arg14[%c7_160, %c0_161, %c0_162] : memref<9x32x256xbf16, #tpu.memory_space<vmem>>, vector<1x32x256xbf16>
    %252 = vector.shape_cast %251 : vector<1x32x256xbf16> to vector<32x256xbf16>
    %253 = arith.mulf %250, %252 : vector<32x256xbf16>
    %c224_163 = arith.constant 224 : index
    %c0_164 = arith.constant 0 : index
    %254 = vector.load %arg19[%c224_163, %c0_164] : memref<288x256xbf16, #tpu.memory_space<vmem>>, vector<32x256xbf16>
    tpu.vector_store %arg19[%c224_163, %c0_164], %253 {strides = array<i32>} : memref<288x256xbf16, #tpu.memory_space<vmem>>, vector<32x256xbf16>,
    %255 = vector.extract_strided_slice %204 {offsets = [0, 17], sizes = [32, 239], strides = [1, 1]} : vector<32x256xbf16> to vector<32x239xbf16>
    %256 = vector.extract_strided_slice %204 {offsets = [0, 0], sizes = [32, 17], strides = [1, 1]} : vector<32x256xbf16> to vector<32x17xbf16>
    %257 = tpu.concatenate %255, %256 in 1 : vector<32x239xbf16>, vector<32x17xbf16> -> vector<32x256xbf16>
    %c8_165 = arith.constant 8 : index
    %c0_166 = arith.constant 0 : index
    %c0_167 = arith.constant 0 : index
    %258 = vector.load %arg14[%c8_165, %c0_166, %c0_167] : memref<9x32x256xbf16, #tpu.memory_space<vmem>>, vector<1x32x256xbf16>
    %259 = vector.shape_cast %258 : vector<1x32x256xbf16> to vector<32x256xbf16>
    %260 = arith.mulf %257, %259 : vector<32x256xbf16>
    %c256_168 = arith.constant 256 : index
    %c0_169 = arith.constant 0 : index
    %261 = vector.load %arg19[%c256_168, %c0_169] : memref<288x256xbf16, #tpu.memory_space<vmem>>, vector<32x256xbf16>
    tpu.vector_store %arg19[%c256_168, %c0_169], %260 {strides = array<i32>} : memref<288x256xbf16, #tpu.memory_space<vmem>>, vector<32x256xbf16>,
    %c0_170 = arith.constant 0 : index
    %c0_171 = arith.constant 0 : index
    %262 = vector.load %arg19[%c0_170, %c0_171] : memref<288x256xbf16, #tpu.memory_space<vmem>>, vector<288x256xbf16>
    %cst_172 = arith.constant dense<0.000000e+00> : vector<32x256xf32>
    %263 = tpu.matmul %201, %262, %cst_172 {dimension_numbers = #tpu.dot_dimension_numbers<[1], [0], [0], [1], [0, 0, 1, 1], [], []>} : vector<32x288xbf16>, vector<288x256xbf16>, vector<32x256xf32> -> vector<32x256xf32>
    %264 = vector.broadcast %203 : vector<32x1xf32> to vector<32x256xf32>
    %265 = arith.addf %263, %264 : vector<32x256xf32>
    %266 = arith.addf %65, %265 : vector<32x256xf32>
    %c2_173 = arith.constant 2 : index
    %c0_174 = arith.constant 0 : index
    %c0_175 = arith.constant 0 : index
    %267 = vector.load %arg5[%c2_173, %c0_174, %c0_175] : memref<5x32x288xbf16, #tpu.memory_space<vmem>>, vector<1x32x288xbf16>
    %268 = vector.shape_cast %267 : vector<1x32x288xbf16> to vector<32x288xbf16>
    %c2_176 = arith.constant 2 : index
    %c0_177 = arith.constant 0 : index
    %c0_178 = arith.constant 0 : index
    %269 = vector.load %arg6[%c2_176, %c0_177, %c0_178] : memref<5x32x1xf32, #tpu.memory_space<vmem>>, vector<1x32x1xf32>
    %270 = vector.shape_cast %269 : vector<1x32x1xf32> to vector<32x1xf32>
    %271 = arith.truncf %266 : vector<32x256xf32> to vector<32x256xbf16>
    %c0_179 = arith.constant 0 : index
    %c0_180 = arith.constant 0 : index
    %272 = vector.load %arg19[%c0_179, %c0_180] : memref<288x256xbf16, #tpu.memory_space<vmem>>, vector<32x256xbf16>
    tpu.vector_store %arg19[%c0_179, %c0_180], %271 {strides = array<i32>} : memref<288x256xbf16, #tpu.memory_space<vmem>>, vector<32x256xbf16>,
    %273 = vector.extract_strided_slice %271 {offsets = [0, 1], sizes = [32, 255], strides = [1, 1]} : vector<32x256xbf16> to vector<32x255xbf16>
    %274 = vector.extract_strided_slice %271 {offsets = [0, 0], sizes = [32, 1], strides = [1, 1]} : vector<32x256xbf16> to vector<32x1xbf16>
    %275 = tpu.concatenate %273, %274 in 1 : vector<32x255xbf16>, vector<32x1xbf16> -> vector<32x256xbf16>
    %c1_181 = arith.constant 1 : index
    %c0_182 = arith.constant 0 : index
    %c0_183 = arith.constant 0 : index
    %276 = vector.load %arg15[%c1_181, %c0_182, %c0_183] : memref<9x32x256xbf16, #tpu.memory_space<vmem>>, vector<1x32x256xbf16>
    %277 = vector.shape_cast %276 : vector<1x32x256xbf16> to vector<32x256xbf16>
    %278 = arith.mulf %275, %277 : vector<32x256xbf16>
    %c32_184 = arith.constant 32 : index
    %c0_185 = arith.constant 0 : index
    %279 = vector.load %arg19[%c32_184, %c0_185] : memref<288x256xbf16, #tpu.memory_space<vmem>>, vector<32x256xbf16>
    tpu.vector_store %arg19[%c32_184, %c0_185], %278 {strides = array<i32>} : memref<288x256xbf16, #tpu.memory_space<vmem>>, vector<32x256xbf16>,
    %280 = vector.extract_strided_slice %271 {offsets = [0, 2], sizes = [32, 254], strides = [1, 1]} : vector<32x256xbf16> to vector<32x254xbf16>
    %281 = vector.extract_strided_slice %271 {offsets = [0, 0], sizes = [32, 2], strides = [1, 1]} : vector<32x256xbf16> to vector<32x2xbf16>
    %282 = tpu.concatenate %280, %281 in 1 : vector<32x254xbf16>, vector<32x2xbf16> -> vector<32x256xbf16>
    %c2_186 = arith.constant 2 : index
    %c0_187 = arith.constant 0 : index
    %c0_188 = arith.constant 0 : index
    %283 = vector.load %arg15[%c2_186, %c0_187, %c0_188] : memref<9x32x256xbf16, #tpu.memory_space<vmem>>, vector<1x32x256xbf16>
    %284 = vector.shape_cast %283 : vector<1x32x256xbf16> to vector<32x256xbf16>
    %285 = arith.mulf %282, %284 : vector<32x256xbf16>
    %c64_189 = arith.constant 64 : index
    %c0_190 = arith.constant 0 : index
    %286 = vector.load %arg19[%c64_189, %c0_190] : memref<288x256xbf16, #tpu.memory_space<vmem>>, vector<32x256xbf16>
    tpu.vector_store %arg19[%c64_189, %c0_190], %285 {strides = array<i32>} : memref<288x256xbf16, #tpu.memory_space<vmem>>, vector<32x256xbf16>,
    %287 = vector.extract_strided_slice %271 {offsets = [0, 16], sizes = [32, 240], strides = [1, 1]} : vector<32x256xbf16> to vector<32x240xbf16>
    %288 = vector.extract_strided_slice %271 {offsets = [0, 0], sizes = [32, 16], strides = [1, 1]} : vector<32x256xbf16> to vector<32x16xbf16>
    %289 = tpu.concatenate %287, %288 in 1 : vector<32x240xbf16>, vector<32x16xbf16> -> vector<32x256xbf16>
    %c3_191 = arith.constant 3 : index
    %c0_192 = arith.constant 0 : index
    %c0_193 = arith.constant 0 : index
    %290 = vector.load %arg15[%c3_191, %c0_192, %c0_193] : memref<9x32x256xbf16, #tpu.memory_space<vmem>>, vector<1x32x256xbf16>
    %291 = vector.shape_cast %290 : vector<1x32x256xbf16> to vector<32x256xbf16>
    %292 = arith.mulf %289, %291 : vector<32x256xbf16>
    %c96_194 = arith.constant 96 : index
    %c0_195 = arith.constant 0 : index
    %293 = vector.load %arg19[%c96_194, %c0_195] : memref<288x256xbf16, #tpu.memory_space<vmem>>, vector<32x256xbf16>
    tpu.vector_store %arg19[%c96_194, %c0_195], %292 {strides = array<i32>} : memref<288x256xbf16, #tpu.memory_space<vmem>>, vector<32x256xbf16>,
    %294 = vector.extract_strided_slice %271 {offsets = [0, 17], sizes = [32, 239], strides = [1, 1]} : vector<32x256xbf16> to vector<32x239xbf16>
    %295 = vector.extract_strided_slice %271 {offsets = [0, 0], sizes = [32, 17], strides = [1, 1]} : vector<32x256xbf16> to vector<32x17xbf16>
    %296 = tpu.concatenate %294, %295 in 1 : vector<32x239xbf16>, vector<32x17xbf16> -> vector<32x256xbf16>
    %c4 = arith.constant 4 : index
    %c0_196 = arith.constant 0 : index
    %c0_197 = arith.constant 0 : index
    %297 = vector.load %arg15[%c4, %c0_196, %c0_197] : memref<9x32x256xbf16, #tpu.memory_space<vmem>>, vector<1x32x256xbf16>
    %298 = vector.shape_cast %297 : vector<1x32x256xbf16> to vector<32x256xbf16>
    %299 = arith.mulf %296, %298 : vector<32x256xbf16>
    %c128_198 = arith.constant 128 : index
    %c0_199 = arith.constant 0 : index
    %300 = vector.load %arg19[%c128_198, %c0_199] : memref<288x256xbf16, #tpu.memory_space<vmem>>, vector<32x256xbf16>
    tpu.vector_store %arg19[%c128_198, %c0_199], %299 {strides = array<i32>} : memref<288x256xbf16, #tpu.memory_space<vmem>>, vector<32x256xbf16>,
    %301 = vector.extract_strided_slice %271 {offsets = [0, 18], sizes = [32, 238], strides = [1, 1]} : vector<32x256xbf16> to vector<32x238xbf16>
    %302 = vector.extract_strided_slice %271 {offsets = [0, 0], sizes = [32, 18], strides = [1, 1]} : vector<32x256xbf16> to vector<32x18xbf16>
    %303 = tpu.concatenate %301, %302 in 1 : vector<32x238xbf16>, vector<32x18xbf16> -> vector<32x256xbf16>
    %c5_200 = arith.constant 5 : index
    %c0_201 = arith.constant 0 : index
    %c0_202 = arith.constant 0 : index
    %304 = vector.load %arg15[%c5_200, %c0_201, %c0_202] : memref<9x32x256xbf16, #tpu.memory_space<vmem>>, vector<1x32x256xbf16>
    %305 = vector.shape_cast %304 : vector<1x32x256xbf16> to vector<32x256xbf16>
    %306 = arith.mulf %303, %305 : vector<32x256xbf16>
    %c160_203 = arith.constant 160 : index
    %c0_204 = arith.constant 0 : index
    %307 = vector.load %arg19[%c160_203, %c0_204] : memref<288x256xbf16, #tpu.memory_space<vmem>>, vector<32x256xbf16>
    tpu.vector_store %arg19[%c160_203, %c0_204], %306 {strides = array<i32>} : memref<288x256xbf16, #tpu.memory_space<vmem>>, vector<32x256xbf16>,
    %308 = vector.extract_strided_slice %271 {offsets = [0, 32], sizes = [32, 224], strides = [1, 1]} : vector<32x256xbf16> to vector<32x224xbf16>
    %309 = vector.extract_strided_slice %271 {offsets = [0, 0], sizes = [32, 32], strides = [1, 1]} : vector<32x256xbf16> to vector<32x32xbf16>
    %310 = tpu.concatenate %308, %309 in 1 : vector<32x224xbf16>, vector<32x32xbf16> -> vector<32x256xbf16>
    %c6_205 = arith.constant 6 : index
    %c0_206 = arith.constant 0 : index
    %c0_207 = arith.constant 0 : index
    %311 = vector.load %arg15[%c6_205, %c0_206, %c0_207] : memref<9x32x256xbf16, #tpu.memory_space<vmem>>, vector<1x32x256xbf16>
    %312 = vector.shape_cast %311 : vector<1x32x256xbf16> to vector<32x256xbf16>
    %313 = arith.mulf %310, %312 : vector<32x256xbf16>
    %c192_208 = arith.constant 192 : index
    %c0_209 = arith.constant 0 : index
    %314 = vector.load %arg19[%c192_208, %c0_209] : memref<288x256xbf16, #tpu.memory_space<vmem>>, vector<32x256xbf16>
    tpu.vector_store %arg19[%c192_208, %c0_209], %313 {strides = array<i32>} : memref<288x256xbf16, #tpu.memory_space<vmem>>, vector<32x256xbf16>,
    %315 = vector.extract_strided_slice %271 {offsets = [0, 33], sizes = [32, 223], strides = [1, 1]} : vector<32x256xbf16> to vector<32x223xbf16>
    %316 = vector.extract_strided_slice %271 {offsets = [0, 0], sizes = [32, 33], strides = [1, 1]} : vector<32x256xbf16> to vector<32x33xbf16>
    %317 = tpu.concatenate %315, %316 in 1 : vector<32x223xbf16>, vector<32x33xbf16> -> vector<32x256xbf16>
    %c7_210 = arith.constant 7 : index
    %c0_211 = arith.constant 0 : index
    %c0_212 = arith.constant 0 : index
    %318 = vector.load %arg15[%c7_210, %c0_211, %c0_212] : memref<9x32x256xbf16, #tpu.memory_space<vmem>>, vector<1x32x256xbf16>
    %319 = vector.shape_cast %318 : vector<1x32x256xbf16> to vector<32x256xbf16>
    %320 = arith.mulf %317, %319 : vector<32x256xbf16>
    %c224_213 = arith.constant 224 : index
    %c0_214 = arith.constant 0 : index
    %321 = vector.load %arg19[%c224_213, %c0_214] : memref<288x256xbf16, #tpu.memory_space<vmem>>, vector<32x256xbf16>
    tpu.vector_store %arg19[%c224_213, %c0_214], %320 {strides = array<i32>} : memref<288x256xbf16, #tpu.memory_space<vmem>>, vector<32x256xbf16>,
    %322 = vector.extract_strided_slice %271 {offsets = [0, 34], sizes = [32, 222], strides = [1, 1]} : vector<32x256xbf16> to vector<32x222xbf16>
    %323 = vector.extract_strided_slice %271 {offsets = [0, 0], sizes = [32, 34], strides = [1, 1]} : vector<32x256xbf16> to vector<32x34xbf16>
    %324 = tpu.concatenate %322, %323 in 1 : vector<32x222xbf16>, vector<32x34xbf16> -> vector<32x256xbf16>
    %c8_215 = arith.constant 8 : index
    %c0_216 = arith.constant 0 : index
    %c0_217 = arith.constant 0 : index
    %325 = vector.load %arg15[%c8_215, %c0_216, %c0_217] : memref<9x32x256xbf16, #tpu.memory_space<vmem>>, vector<1x32x256xbf16>
    %326 = vector.shape_cast %325 : vector<1x32x256xbf16> to vector<32x256xbf16>
    %327 = arith.mulf %324, %326 : vector<32x256xbf16>
    %c256_218 = arith.constant 256 : index
    %c0_219 = arith.constant 0 : index
    %328 = vector.load %arg19[%c256_218, %c0_219] : memref<288x256xbf16, #tpu.memory_space<vmem>>, vector<32x256xbf16>
    tpu.vector_store %arg19[%c256_218, %c0_219], %327 {strides = array<i32>} : memref<288x256xbf16, #tpu.memory_space<vmem>>, vector<32x256xbf16>,
    %c0_220 = arith.constant 0 : index
    %c0_221 = arith.constant 0 : index
    %329 = vector.load %arg19[%c0_220, %c0_221] : memref<288x256xbf16, #tpu.memory_space<vmem>>, vector<288x256xbf16>
    %cst_222 = arith.constant dense<0.000000e+00> : vector<32x256xf32>
    %330 = tpu.matmul %268, %329, %cst_222 {dimension_numbers = #tpu.dot_dimension_numbers<[1], [0], [0], [1], [0, 0, 1, 1], [], []>} : vector<32x288xbf16>, vector<288x256xbf16>, vector<32x256xf32> -> vector<32x256xf32>
    %331 = vector.broadcast %270 : vector<32x1xf32> to vector<32x256xf32>
    %332 = arith.addf %330, %331 : vector<32x256xf32>
    %c0_223 = arith.constant 0 : index
    %c0_224 = arith.constant 0 : index
    %333 = vector.load %arg17[%c0_223, %c0_224] : memref<256x64xf32, #tpu.memory_space<vmem>>, vector<256x64xf32>
    %cst_225 = arith.constant dense<0.000000e+00> : vector<32x64xf32>
    %334 = tpu.matmul %332, %333, %cst_225 {dimension_numbers = #tpu.dot_dimension_numbers<[1], [0], [0], [1], [0, 0, 1, 1], [], []>} : vector<32x256xf32>, vector<256x64xf32>, vector<32x64xf32> -> vector<32x64xf32>
    %c2_226 = arith.constant 2 : index
    %c0_227 = arith.constant 0 : index
    %c0_228 = arith.constant 0 : index
    %335 = vector.load %arg7[%c2_226, %c0_227, %c0_228] : memref<5x32x1xf32, #tpu.memory_space<vmem>>, vector<1x32x1xf32>
    %336 = vector.shape_cast %335 : vector<1x32x1xf32> to vector<32x1xf32>
    %c2_229 = arith.constant 2 : index
    %c0_230 = arith.constant 0 : index
    %c0_231 = arith.constant 0 : index
    %337 = vector.load %arg8[%c2_229, %c0_230, %c0_231] : memref<5x32x1xf32, #tpu.memory_space<vmem>>, vector<1x32x1xf32>
    %338 = vector.shape_cast %337 : vector<1x32x1xf32> to vector<32x1xf32>
    %c0_232 = arith.constant 0 : index
    %c0_233 = arith.constant 0 : index
    %339 = vector.load %arg13[%c0_232, %c0_233] : memref<32x32xf32, #tpu.memory_space<vmem>>, vector<32x32xf32>
    %cst_234 = arith.constant dense<0.000000e+00> : vector<32x64xf32>
    %340 = tpu.matmul %339, %334, %cst_234 {dimension_numbers = #tpu.dot_dimension_numbers<[1], [0], [0], [1], [0, 0, 1, 1], [], []>} : vector<32x32xf32>, vector<32x64xf32>, vector<32x64xf32> -> vector<32x64xf32>
    %cst_235 = arith.constant dense<0.000000e+00> : vector<32xf32>
    %341 = vector.multi_reduction <add>, %340, %cst_235 [1] : vector<32x64xf32> to vector<32xf32>
    %342 = vector.shape_cast %341 : vector<32xf32> to vector<32x1xf32>
    %cst_236 = arith.constant 2.560000e+02 : f32
    %343 = vector.broadcast %cst_236 : f32 to vector<32x1xf32>
    %344 = arith.divf %342, %343 : vector<32x1xf32>
    %345 = vector.broadcast %344 : vector<32x1xf32> to vector<32x64xf32>
    %346 = arith.subf %334, %345 : vector<32x64xf32>
    %c0_237 = arith.constant 0 : index
    %c0_238 = arith.constant 0 : index
    %347 = vector.load %arg13[%c0_237, %c0_238] : memref<32x32xf32, #tpu.memory_space<vmem>>, vector<32x32xf32>
    %348 = arith.mulf %346, %346 : vector<32x64xf32>
    %cst_239 = arith.constant dense<0.000000e+00> : vector<32x64xf32>
    %349 = tpu.matmul %347, %348, %cst_239 {dimension_numbers = #tpu.dot_dimension_numbers<[1], [0], [0], [1], [0, 0, 1, 1], [], []>} : vector<32x32xf32>, vector<32x64xf32>, vector<32x64xf32> -> vector<32x64xf32>
    %cst_240 = arith.constant dense<0.000000e+00> : vector<32xf32>
    %350 = vector.multi_reduction <add>, %349, %cst_240 [1] : vector<32x64xf32> to vector<32xf32>
    %351 = vector.shape_cast %350 : vector<32xf32> to vector<32x1xf32>
    %cst_241 = arith.constant 2.560000e+02 : f32
    %352 = vector.broadcast %cst_241 : f32 to vector<32x1xf32>
    %353 = arith.divf %351, %352 : vector<32x1xf32>
    %cst_242 = arith.constant 9.99999997E-7 : f32
    %354 = vector.broadcast %cst_242 : f32 to vector<32x1xf32>
    %355 = arith.addf %353, %354 : vector<32x1xf32>
    %356 = math.rsqrt %355 : vector<32x1xf32>
    %357 = vector.broadcast %356 : vector<32x1xf32> to vector<32x64xf32>
    %358 = arith.mulf %346, %357 : vector<32x64xf32>
    %359 = vector.broadcast %336 : vector<32x1xf32> to vector<32x64xf32>
    %360 = arith.mulf %358, %359 : vector<32x64xf32>
    %361 = vector.broadcast %338 : vector<32x1xf32> to vector<32x64xf32>
    %362 = arith.addf %360, %361 : vector<32x64xf32>
    %363 = arith.negf %362 : vector<32x64xf32>
    %364 = math.exp %363 : vector<32x64xf32>
    %cst_243 = arith.constant 1.000000e+00 : f32
    %365 = vector.broadcast %cst_243 : f32 to vector<32x64xf32>
    %366 = arith.addf %365, %364 : vector<32x64xf32>
    %367 = arith.divf %365, %366 : vector<32x64xf32>
    %368 = arith.mulf %362, %367 : vector<32x64xf32>
    %c3_244 = arith.constant 3 : index
    %c0_245 = arith.constant 0 : index
    %c0_246 = arith.constant 0 : index
    %369 = vector.load %arg5[%c3_244, %c0_245, %c0_246] : memref<5x32x288xbf16, #tpu.memory_space<vmem>>, vector<1x32x288xbf16>
    %370 = vector.shape_cast %369 : vector<1x32x288xbf16> to vector<32x288xbf16>
    %c3_247 = arith.constant 3 : index
    %c0_248 = arith.constant 0 : index
    %c0_249 = arith.constant 0 : index
    %371 = vector.load %arg6[%c3_247, %c0_248, %c0_249] : memref<5x32x1xf32, #tpu.memory_space<vmem>>, vector<1x32x1xf32>
    %372 = vector.shape_cast %371 : vector<1x32x1xf32> to vector<32x1xf32>
    %373 = arith.truncf %368 : vector<32x64xf32> to vector<32x64xbf16>
    %374 = vector.extract_strided_slice %373 {offsets = [0, 55], sizes = [32, 9], strides = [1, 1]} : vector<32x64xbf16> to vector<32x9xbf16>
    %375 = vector.extract_strided_slice %373 {offsets = [0, 0], sizes = [32, 55], strides = [1, 1]} : vector<32x64xbf16> to vector<32x55xbf16>
    %376 = tpu.concatenate %374, %375 in 1 : vector<32x9xbf16>, vector<32x55xbf16> -> vector<32x64xbf16>
    %c0_250 = arith.constant 0 : index
    %c0_251 = arith.constant 0 : index
    %c0_252 = arith.constant 0 : index
    %377 = vector.load %arg16[%c0_250, %c0_251, %c0_252] : memref<9x32x64xbf16, #tpu.memory_space<vmem>>, vector<1x32x64xbf16>
    %378 = vector.shape_cast %377 : vector<1x32x64xbf16> to vector<32x64xbf16>
    %379 = arith.mulf %376, %378 : vector<32x64xbf16>
    %c0_253 = arith.constant 0 : index
    %c0_254 = arith.constant 0 : index
    %380 = vector.load %arg20[%c0_253, %c0_254] : memref<288x64xbf16, #tpu.memory_space<vmem>>, vector<32x64xbf16>
    tpu.vector_store %arg20[%c0_253, %c0_254], %379 {strides = array<i32>} : memref<288x64xbf16, #tpu.memory_space<vmem>>, vector<32x64xbf16>,
    %381 = vector.extract_strided_slice %373 {offsets = [0, 56], sizes = [32, 8], strides = [1, 1]} : vector<32x64xbf16> to vector<32x8xbf16>
    %382 = vector.extract_strided_slice %373 {offsets = [0, 0], sizes = [32, 56], strides = [1, 1]} : vector<32x64xbf16> to vector<32x56xbf16>
    %383 = tpu.concatenate %381, %382 in 1 : vector<32x8xbf16>, vector<32x56xbf16> -> vector<32x64xbf16>
    %c1_255 = arith.constant 1 : index
    %c0_256 = arith.constant 0 : index
    %c0_257 = arith.constant 0 : index
    %384 = vector.load %arg16[%c1_255, %c0_256, %c0_257] : memref<9x32x64xbf16, #tpu.memory_space<vmem>>, vector<1x32x64xbf16>
    %385 = vector.shape_cast %384 : vector<1x32x64xbf16> to vector<32x64xbf16>
    %386 = arith.mulf %383, %385 : vector<32x64xbf16>
    %c32_258 = arith.constant 32 : index
    %c0_259 = arith.constant 0 : index
    %387 = vector.load %arg20[%c32_258, %c0_259] : memref<288x64xbf16, #tpu.memory_space<vmem>>, vector<32x64xbf16>
    tpu.vector_store %arg20[%c32_258, %c0_259], %386 {strides = array<i32>} : memref<288x64xbf16, #tpu.memory_space<vmem>>, vector<32x64xbf16>,
    %388 = vector.extract_strided_slice %373 {offsets = [0, 57], sizes = [32, 7], strides = [1, 1]} : vector<32x64xbf16> to vector<32x7xbf16>
    %389 = vector.extract_strided_slice %373 {offsets = [0, 0], sizes = [32, 57], strides = [1, 1]} : vector<32x64xbf16> to vector<32x57xbf16>
    %390 = tpu.concatenate %388, %389 in 1 : vector<32x7xbf16>, vector<32x57xbf16> -> vector<32x64xbf16>
    %c2_260 = arith.constant 2 : index
    %c0_261 = arith.constant 0 : index
    %c0_262 = arith.constant 0 : index
    %391 = vector.load %arg16[%c2_260, %c0_261, %c0_262] : memref<9x32x64xbf16, #tpu.memory_space<vmem>>, vector<1x32x64xbf16>
    %392 = vector.shape_cast %391 : vector<1x32x64xbf16> to vector<32x64xbf16>
    %393 = arith.mulf %390, %392 : vector<32x64xbf16>
    %c64_263 = arith.constant 64 : index
    %c0_264 = arith.constant 0 : index
    %394 = vector.load %arg20[%c64_263, %c0_264] : memref<288x64xbf16, #tpu.memory_space<vmem>>, vector<32x64xbf16>
    tpu.vector_store %arg20[%c64_263, %c0_264], %393 {strides = array<i32>} : memref<288x64xbf16, #tpu.memory_space<vmem>>, vector<32x64xbf16>,
    %395 = vector.extract_strided_slice %373 {offsets = [0, 63], sizes = [32, 1], strides = [1, 1]} : vector<32x64xbf16> to vector<32x1xbf16>
    %396 = vector.extract_strided_slice %373 {offsets = [0, 0], sizes = [32, 63], strides = [1, 1]} : vector<32x64xbf16> to vector<32x63xbf16>
    %397 = tpu.concatenate %395, %396 in 1 : vector<32x1xbf16>, vector<32x63xbf16> -> vector<32x64xbf16>
    %c3_265 = arith.constant 3 : index
    %c0_266 = arith.constant 0 : index
    %c0_267 = arith.constant 0 : index
    %398 = vector.load %arg16[%c3_265, %c0_266, %c0_267] : memref<9x32x64xbf16, #tpu.memory_space<vmem>>, vector<1x32x64xbf16>
    %399 = vector.shape_cast %398 : vector<1x32x64xbf16> to vector<32x64xbf16>
    %400 = arith.mulf %397, %399 : vector<32x64xbf16>
    %c96_268 = arith.constant 96 : index
    %c0_269 = arith.constant 0 : index
    %401 = vector.load %arg20[%c96_268, %c0_269] : memref<288x64xbf16, #tpu.memory_space<vmem>>, vector<32x64xbf16>
    tpu.vector_store %arg20[%c96_268, %c0_269], %400 {strides = array<i32>} : memref<288x64xbf16, #tpu.memory_space<vmem>>, vector<32x64xbf16>,
    %c128_270 = arith.constant 128 : index
    %c0_271 = arith.constant 0 : index
    %402 = vector.load %arg20[%c128_270, %c0_271] : memref<288x64xbf16, #tpu.memory_space<vmem>>, vector<32x64xbf16>
    tpu.vector_store %arg20[%c128_270, %c0_271], %373 {strides = array<i32>} : memref<288x64xbf16, #tpu.memory_space<vmem>>, vector<32x64xbf16>,
    %403 = vector.extract_strided_slice %373 {offsets = [0, 1], sizes = [32, 63], strides = [1, 1]} : vector<32x64xbf16> to vector<32x63xbf16>
    %404 = vector.extract_strided_slice %373 {offsets = [0, 0], sizes = [32, 1], strides = [1, 1]} : vector<32x64xbf16> to vector<32x1xbf16>
    %405 = tpu.concatenate %403, %404 in 1 : vector<32x63xbf16>, vector<32x1xbf16> -> vector<32x64xbf16>
    %c5_272 = arith.constant 5 : index
    %c0_273 = arith.constant 0 : index
    %c0_274 = arith.constant 0 : index
    %406 = vector.load %arg16[%c5_272, %c0_273, %c0_274] : memref<9x32x64xbf16, #tpu.memory_space<vmem>>, vector<1x32x64xbf16>
    %407 = vector.shape_cast %406 : vector<1x32x64xbf16> to vector<32x64xbf16>
    %408 = arith.mulf %405, %407 : vector<32x64xbf16>
    %c160_275 = arith.constant 160 : index
    %c0_276 = arith.constant 0 : index
    %409 = vector.load %arg20[%c160_275, %c0_276] : memref<288x64xbf16, #tpu.memory_space<vmem>>, vector<32x64xbf16>
    tpu.vector_store %arg20[%c160_275, %c0_276], %408 {strides = array<i32>} : memref<288x64xbf16, #tpu.memory_space<vmem>>, vector<32x64xbf16>,
    %410 = vector.extract_strided_slice %373 {offsets = [0, 7], sizes = [32, 57], strides = [1, 1]} : vector<32x64xbf16> to vector<32x57xbf16>
    %411 = vector.extract_strided_slice %373 {offsets = [0, 0], sizes = [32, 7], strides = [1, 1]} : vector<32x64xbf16> to vector<32x7xbf16>
    %412 = tpu.concatenate %410, %411 in 1 : vector<32x57xbf16>, vector<32x7xbf16> -> vector<32x64xbf16>
    %c6_277 = arith.constant 6 : index
    %c0_278 = arith.constant 0 : index
    %c0_279 = arith.constant 0 : index
    %413 = vector.load %arg16[%c6_277, %c0_278, %c0_279] : memref<9x32x64xbf16, #tpu.memory_space<vmem>>, vector<1x32x64xbf16>
    %414 = vector.shape_cast %413 : vector<1x32x64xbf16> to vector<32x64xbf16>
    %415 = arith.mulf %412, %414 : vector<32x64xbf16>
    %c192_280 = arith.constant 192 : index
    %c0_281 = arith.constant 0 : index
    %416 = vector.load %arg20[%c192_280, %c0_281] : memref<288x64xbf16, #tpu.memory_space<vmem>>, vector<32x64xbf16>
    tpu.vector_store %arg20[%c192_280, %c0_281], %415 {strides = array<i32>} : memref<288x64xbf16, #tpu.memory_space<vmem>>, vector<32x64xbf16>,
    %417 = vector.extract_strided_slice %373 {offsets = [0, 8], sizes = [32, 56], strides = [1, 1]} : vector<32x64xbf16> to vector<32x56xbf16>
    %418 = vector.extract_strided_slice %373 {offsets = [0, 0], sizes = [32, 8], strides = [1, 1]} : vector<32x64xbf16> to vector<32x8xbf16>
    %419 = tpu.concatenate %417, %418 in 1 : vector<32x56xbf16>, vector<32x8xbf16> -> vector<32x64xbf16>
    %c7_282 = arith.constant 7 : index
    %c0_283 = arith.constant 0 : index
    %c0_284 = arith.constant 0 : index
    %420 = vector.load %arg16[%c7_282, %c0_283, %c0_284] : memref<9x32x64xbf16, #tpu.memory_space<vmem>>, vector<1x32x64xbf16>
    %421 = vector.shape_cast %420 : vector<1x32x64xbf16> to vector<32x64xbf16>
    %422 = arith.mulf %419, %421 : vector<32x64xbf16>
    %c224_285 = arith.constant 224 : index
    %c0_286 = arith.constant 0 : index
    %423 = vector.load %arg20[%c224_285, %c0_286] : memref<288x64xbf16, #tpu.memory_space<vmem>>, vector<32x64xbf16>
    tpu.vector_store %arg20[%c224_285, %c0_286], %422 {strides = array<i32>} : memref<288x64xbf16, #tpu.memory_space<vmem>>, vector<32x64xbf16>,
    %424 = vector.extract_strided_slice %373 {offsets = [0, 9], sizes = [32, 55], strides = [1, 1]} : vector<32x64xbf16> to vector<32x55xbf16>
    %425 = vector.extract_strided_slice %373 {offsets = [0, 0], sizes = [32, 9], strides = [1, 1]} : vector<32x64xbf16> to vector<32x9xbf16>
    %426 = tpu.concatenate %424, %425 in 1 : vector<32x55xbf16>, vector<32x9xbf16> -> vector<32x64xbf16>
    %c8_287 = arith.constant 8 : index
    %c0_288 = arith.constant 0 : index
    %c0_289 = arith.constant 0 : index
    %427 = vector.load %arg16[%c8_287, %c0_288, %c0_289] : memref<9x32x64xbf16, #tpu.memory_space<vmem>>, vector<1x32x64xbf16>
    %428 = vector.shape_cast %427 : vector<1x32x64xbf16> to vector<32x64xbf16>
    %429 = arith.mulf %426, %428 : vector<32x64xbf16>
    %c256_290 = arith.constant 256 : index
    %c0_291 = arith.constant 0 : index
    %430 = vector.load %arg20[%c256_290, %c0_291] : memref<288x64xbf16, #tpu.memory_space<vmem>>, vector<32x64xbf16>
    tpu.vector_store %arg20[%c256_290, %c0_291], %429 {strides = array<i32>} : memref<288x64xbf16, #tpu.memory_space<vmem>>, vector<32x64xbf16>,
    %c0_292 = arith.constant 0 : index
    %c0_293 = arith.constant 0 : index
    %431 = vector.load %arg20[%c0_292, %c0_293] : memref<288x64xbf16, #tpu.memory_space<vmem>>, vector<288x64xbf16>
    %cst_294 = arith.constant dense<0.000000e+00> : vector<32x64xf32>
    %432 = tpu.matmul %370, %431, %cst_294 {dimension_numbers = #tpu.dot_dimension_numbers<[1], [0], [0], [1], [0, 0, 1, 1], [], []>} : vector<32x288xbf16>, vector<288x64xbf16>, vector<32x64xf32> -> vector<32x64xf32>
    %433 = vector.broadcast %372 : vector<32x1xf32> to vector<32x64xf32>
    %434 = arith.addf %432, %433 : vector<32x64xf32>
    %c3_295 = arith.constant 3 : index
    %c0_296 = arith.constant 0 : index
    %c0_297 = arith.constant 0 : index
    %435 = vector.load %arg7[%c3_295, %c0_296, %c0_297] : memref<5x32x1xf32, #tpu.memory_space<vmem>>, vector<1x32x1xf32>
    %436 = vector.shape_cast %435 : vector<1x32x1xf32> to vector<32x1xf32>
    %c3_298 = arith.constant 3 : index
    %c0_299 = arith.constant 0 : index
    %c0_300 = arith.constant 0 : index
    %437 = vector.load %arg8[%c3_298, %c0_299, %c0_300] : memref<5x32x1xf32, #tpu.memory_space<vmem>>, vector<1x32x1xf32>
    %438 = vector.shape_cast %437 : vector<1x32x1xf32> to vector<32x1xf32>
    %c0_301 = arith.constant 0 : index
    %c0_302 = arith.constant 0 : index
    %439 = vector.load %arg13[%c0_301, %c0_302] : memref<32x32xf32, #tpu.memory_space<vmem>>, vector<32x32xf32>
    %cst_303 = arith.constant dense<0.000000e+00> : vector<32x64xf32>
    %440 = tpu.matmul %439, %434, %cst_303 {dimension_numbers = #tpu.dot_dimension_numbers<[1], [0], [0], [1], [0, 0, 1, 1], [], []>} : vector<32x32xf32>, vector<32x64xf32>, vector<32x64xf32> -> vector<32x64xf32>
    %cst_304 = arith.constant dense<0.000000e+00> : vector<32xf32>
    %441 = vector.multi_reduction <add>, %440, %cst_304 [1] : vector<32x64xf32> to vector<32xf32>
    %442 = vector.shape_cast %441 : vector<32xf32> to vector<32x1xf32>
    %cst_305 = arith.constant 2.560000e+02 : f32
    %443 = vector.broadcast %cst_305 : f32 to vector<32x1xf32>
    %444 = arith.divf %442, %443 : vector<32x1xf32>
    %445 = vector.broadcast %444 : vector<32x1xf32> to vector<32x64xf32>
    %446 = arith.subf %434, %445 : vector<32x64xf32>
    %c0_306 = arith.constant 0 : index
    %c0_307 = arith.constant 0 : index
    %447 = vector.load %arg13[%c0_306, %c0_307] : memref<32x32xf32, #tpu.memory_space<vmem>>, vector<32x32xf32>
    %448 = arith.mulf %446, %446 : vector<32x64xf32>
    %cst_308 = arith.constant dense<0.000000e+00> : vector<32x64xf32>
    %449 = tpu.matmul %447, %448, %cst_308 {dimension_numbers = #tpu.dot_dimension_numbers<[1], [0], [0], [1], [0, 0, 1, 1], [], []>} : vector<32x32xf32>, vector<32x64xf32>, vector<32x64xf32> -> vector<32x64xf32>
    %cst_309 = arith.constant dense<0.000000e+00> : vector<32xf32>
    %450 = vector.multi_reduction <add>, %449, %cst_309 [1] : vector<32x64xf32> to vector<32xf32>
    %451 = vector.shape_cast %450 : vector<32xf32> to vector<32x1xf32>
    %cst_310 = arith.constant 2.560000e+02 : f32
    %452 = vector.broadcast %cst_310 : f32 to vector<32x1xf32>
    %453 = arith.divf %451, %452 : vector<32x1xf32>
    %cst_311 = arith.constant 9.99999997E-7 : f32
    %454 = vector.broadcast %cst_311 : f32 to vector<32x1xf32>
    %455 = arith.addf %453, %454 : vector<32x1xf32>
    %456 = math.rsqrt %455 : vector<32x1xf32>
    %457 = vector.broadcast %456 : vector<32x1xf32> to vector<32x64xf32>
    %458 = arith.mulf %446, %457 : vector<32x64xf32>
    %459 = vector.broadcast %436 : vector<32x1xf32> to vector<32x64xf32>
    %460 = arith.mulf %458, %459 : vector<32x64xf32>
    %461 = vector.broadcast %438 : vector<32x1xf32> to vector<32x64xf32>
    %462 = arith.addf %460, %461 : vector<32x64xf32>
    %463 = arith.negf %462 : vector<32x64xf32>
    %464 = math.exp %463 : vector<32x64xf32>
    %cst_312 = arith.constant 1.000000e+00 : f32
    %465 = vector.broadcast %cst_312 : f32 to vector<32x64xf32>
    %466 = arith.addf %465, %464 : vector<32x64xf32>
    %467 = arith.divf %465, %466 : vector<32x64xf32>
    %468 = arith.mulf %462, %467 : vector<32x64xf32>
    %c4_313 = arith.constant 4 : index
    %c0_314 = arith.constant 0 : index
    %c0_315 = arith.constant 0 : index
    %469 = vector.load %arg5[%c4_313, %c0_314, %c0_315] : memref<5x32x288xbf16, #tpu.memory_space<vmem>>, vector<1x32x288xbf16>
    %470 = vector.shape_cast %469 : vector<1x32x288xbf16> to vector<32x288xbf16>
    %c4_316 = arith.constant 4 : index
    %c0_317 = arith.constant 0 : index
    %c0_318 = arith.constant 0 : index
    %471 = vector.load %arg6[%c4_316, %c0_317, %c0_318] : memref<5x32x1xf32, #tpu.memory_space<vmem>>, vector<1x32x1xf32>
    %472 = vector.shape_cast %471 : vector<1x32x1xf32> to vector<32x1xf32>
    %473 = arith.truncf %468 : vector<32x64xf32> to vector<32x64xbf16>
    %474 = vector.extract_strided_slice %473 {offsets = [0, 55], sizes = [32, 9], strides = [1, 1]} : vector<32x64xbf16> to vector<32x9xbf16>
    %475 = vector.extract_strided_slice %473 {offsets = [0, 0], sizes = [32, 55], strides = [1, 1]} : vector<32x64xbf16> to vector<32x55xbf16>
    %476 = tpu.concatenate %474, %475 in 1 : vector<32x9xbf16>, vector<32x55xbf16> -> vector<32x64xbf16>
    %c0_319 = arith.constant 0 : index
    %c0_320 = arith.constant 0 : index
    %c0_321 = arith.constant 0 : index
    %477 = vector.load %arg16[%c0_319, %c0_320, %c0_321] : memref<9x32x64xbf16, #tpu.memory_space<vmem>>, vector<1x32x64xbf16>
    %478 = vector.shape_cast %477 : vector<1x32x64xbf16> to vector<32x64xbf16>
    %479 = arith.mulf %476, %478 : vector<32x64xbf16>
    %c0_322 = arith.constant 0 : index
    %c0_323 = arith.constant 0 : index
    %480 = vector.load %arg20[%c0_322, %c0_323] : memref<288x64xbf16, #tpu.memory_space<vmem>>, vector<32x64xbf16>
    tpu.vector_store %arg20[%c0_322, %c0_323], %479 {strides = array<i32>} : memref<288x64xbf16, #tpu.memory_space<vmem>>, vector<32x64xbf16>,
    %481 = vector.extract_strided_slice %473 {offsets = [0, 56], sizes = [32, 8], strides = [1, 1]} : vector<32x64xbf16> to vector<32x8xbf16>
    %482 = vector.extract_strided_slice %473 {offsets = [0, 0], sizes = [32, 56], strides = [1, 1]} : vector<32x64xbf16> to vector<32x56xbf16>
    %483 = tpu.concatenate %481, %482 in 1 : vector<32x8xbf16>, vector<32x56xbf16> -> vector<32x64xbf16>
    %c1_324 = arith.constant 1 : index
    %c0_325 = arith.constant 0 : index
    %c0_326 = arith.constant 0 : index
    %484 = vector.load %arg16[%c1_324, %c0_325, %c0_326] : memref<9x32x64xbf16, #tpu.memory_space<vmem>>, vector<1x32x64xbf16>
    %485 = vector.shape_cast %484 : vector<1x32x64xbf16> to vector<32x64xbf16>
    %486 = arith.mulf %483, %485 : vector<32x64xbf16>
    %c32_327 = arith.constant 32 : index
    %c0_328 = arith.constant 0 : index
    %487 = vector.load %arg20[%c32_327, %c0_328] : memref<288x64xbf16, #tpu.memory_space<vmem>>, vector<32x64xbf16>
    tpu.vector_store %arg20[%c32_327, %c0_328], %486 {strides = array<i32>} : memref<288x64xbf16, #tpu.memory_space<vmem>>, vector<32x64xbf16>,
    %488 = vector.extract_strided_slice %473 {offsets = [0, 57], sizes = [32, 7], strides = [1, 1]} : vector<32x64xbf16> to vector<32x7xbf16>
    %489 = vector.extract_strided_slice %473 {offsets = [0, 0], sizes = [32, 57], strides = [1, 1]} : vector<32x64xbf16> to vector<32x57xbf16>
    %490 = tpu.concatenate %488, %489 in 1 : vector<32x7xbf16>, vector<32x57xbf16> -> vector<32x64xbf16>
    %c2_329 = arith.constant 2 : index
    %c0_330 = arith.constant 0 : index
    %c0_331 = arith.constant 0 : index
    %491 = vector.load %arg16[%c2_329, %c0_330, %c0_331] : memref<9x32x64xbf16, #tpu.memory_space<vmem>>, vector<1x32x64xbf16>
    %492 = vector.shape_cast %491 : vector<1x32x64xbf16> to vector<32x64xbf16>
    %493 = arith.mulf %490, %492 : vector<32x64xbf16>
    %c64_332 = arith.constant 64 : index
    %c0_333 = arith.constant 0 : index
    %494 = vector.load %arg20[%c64_332, %c0_333] : memref<288x64xbf16, #tpu.memory_space<vmem>>, vector<32x64xbf16>
    tpu.vector_store %arg20[%c64_332, %c0_333], %493 {strides = array<i32>} : memref<288x64xbf16, #tpu.memory_space<vmem>>, vector<32x64xbf16>,
    %495 = vector.extract_strided_slice %473 {offsets = [0, 63], sizes = [32, 1], strides = [1, 1]} : vector<32x64xbf16> to vector<32x1xbf16>
    %496 = vector.extract_strided_slice %473 {offsets = [0, 0], sizes = [32, 63], strides = [1, 1]} : vector<32x64xbf16> to vector<32x63xbf16>
    %497 = tpu.concatenate %495, %496 in 1 : vector<32x1xbf16>, vector<32x63xbf16> -> vector<32x64xbf16>
    %c3_334 = arith.constant 3 : index
    %c0_335 = arith.constant 0 : index
    %c0_336 = arith.constant 0 : index
    %498 = vector.load %arg16[%c3_334, %c0_335, %c0_336] : memref<9x32x64xbf16, #tpu.memory_space<vmem>>, vector<1x32x64xbf16>
    %499 = vector.shape_cast %498 : vector<1x32x64xbf16> to vector<32x64xbf16>
    %500 = arith.mulf %497, %499 : vector<32x64xbf16>
    %c96_337 = arith.constant 96 : index
    %c0_338 = arith.constant 0 : index
    %501 = vector.load %arg20[%c96_337, %c0_338] : memref<288x64xbf16, #tpu.memory_space<vmem>>, vector<32x64xbf16>
    tpu.vector_store %arg20[%c96_337, %c0_338], %500 {strides = array<i32>} : memref<288x64xbf16, #tpu.memory_space<vmem>>, vector<32x64xbf16>,
    %c128_339 = arith.constant 128 : index
    %c0_340 = arith.constant 0 : index
    %502 = vector.load %arg20[%c128_339, %c0_340] : memref<288x64xbf16, #tpu.memory_space<vmem>>, vector<32x64xbf16>
    tpu.vector_store %arg20[%c128_339, %c0_340], %473 {strides = array<i32>} : memref<288x64xbf16, #tpu.memory_space<vmem>>, vector<32x64xbf16>,
    %503 = vector.extract_strided_slice %473 {offsets = [0, 1], sizes = [32, 63], strides = [1, 1]} : vector<32x64xbf16> to vector<32x63xbf16>
    %504 = vector.extract_strided_slice %473 {offsets = [0, 0], sizes = [32, 1], strides = [1, 1]} : vector<32x64xbf16> to vector<32x1xbf16>
    %505 = tpu.concatenate %503, %504 in 1 : vector<32x63xbf16>, vector<32x1xbf16> -> vector<32x64xbf16>
    %c5_341 = arith.constant 5 : index
    %c0_342 = arith.constant 0 : index
    %c0_343 = arith.constant 0 : index
    %506 = vector.load %arg16[%c5_341, %c0_342, %c0_343] : memref<9x32x64xbf16, #tpu.memory_space<vmem>>, vector<1x32x64xbf16>
    %507 = vector.shape_cast %506 : vector<1x32x64xbf16> to vector<32x64xbf16>
    %508 = arith.mulf %505, %507 : vector<32x64xbf16>
    %c160_344 = arith.constant 160 : index
    %c0_345 = arith.constant 0 : index
    %509 = vector.load %arg20[%c160_344, %c0_345] : memref<288x64xbf16, #tpu.memory_space<vmem>>, vector<32x64xbf16>
    tpu.vector_store %arg20[%c160_344, %c0_345], %508 {strides = array<i32>} : memref<288x64xbf16, #tpu.memory_space<vmem>>, vector<32x64xbf16>,
    %510 = vector.extract_strided_slice %473 {offsets = [0, 7], sizes = [32, 57], strides = [1, 1]} : vector<32x64xbf16> to vector<32x57xbf16>
    %511 = vector.extract_strided_slice %473 {offsets = [0, 0], sizes = [32, 7], strides = [1, 1]} : vector<32x64xbf16> to vector<32x7xbf16>
    %512 = tpu.concatenate %510, %511 in 1 : vector<32x57xbf16>, vector<32x7xbf16> -> vector<32x64xbf16>
    %c6_346 = arith.constant 6 : index
    %c0_347 = arith.constant 0 : index
    %c0_348 = arith.constant 0 : index
    %513 = vector.load %arg16[%c6_346, %c0_347, %c0_348] : memref<9x32x64xbf16, #tpu.memory_space<vmem>>, vector<1x32x64xbf16>
    %514 = vector.shape_cast %513 : vector<1x32x64xbf16> to vector<32x64xbf16>
    %515 = arith.mulf %512, %514 : vector<32x64xbf16>
    %c192_349 = arith.constant 192 : index
    %c0_350 = arith.constant 0 : index
    %516 = vector.load %arg20[%c192_349, %c0_350] : memref<288x64xbf16, #tpu.memory_space<vmem>>, vector<32x64xbf16>
    tpu.vector_store %arg20[%c192_349, %c0_350], %515 {strides = array<i32>} : memref<288x64xbf16, #tpu.memory_space<vmem>>, vector<32x64xbf16>,
    %517 = vector.extract_strided_slice %473 {offsets = [0, 8], sizes = [32, 56], strides = [1, 1]} : vector<32x64xbf16> to vector<32x56xbf16>
    %518 = vector.extract_strided_slice %473 {offsets = [0, 0], sizes = [32, 8], strides = [1, 1]} : vector<32x64xbf16> to vector<32x8xbf16>
    %519 = tpu.concatenate %517, %518 in 1 : vector<32x56xbf16>, vector<32x8xbf16> -> vector<32x64xbf16>
    %c7_351 = arith.constant 7 : index
    %c0_352 = arith.constant 0 : index
    %c0_353 = arith.constant 0 : index
    %520 = vector.load %arg16[%c7_351, %c0_352, %c0_353] : memref<9x32x64xbf16, #tpu.memory_space<vmem>>, vector<1x32x64xbf16>
    %521 = vector.shape_cast %520 : vector<1x32x64xbf16> to vector<32x64xbf16>
    %522 = arith.mulf %519, %521 : vector<32x64xbf16>
    %c224_354 = arith.constant 224 : index
    %c0_355 = arith.constant 0 : index
    %523 = vector.load %arg20[%c224_354, %c0_355] : memref<288x64xbf16, #tpu.memory_space<vmem>>, vector<32x64xbf16>
    tpu.vector_store %arg20[%c224_354, %c0_355], %522 {strides = array<i32>} : memref<288x64xbf16, #tpu.memory_space<vmem>>, vector<32x64xbf16>,
    %524 = vector.extract_strided_slice %473 {offsets = [0, 9], sizes = [32, 55], strides = [1, 1]} : vector<32x64xbf16> to vector<32x55xbf16>
    %525 = vector.extract_strided_slice %473 {offsets = [0, 0], sizes = [32, 9], strides = [1, 1]} : vector<32x64xbf16> to vector<32x9xbf16>
    %526 = tpu.concatenate %524, %525 in 1 : vector<32x55xbf16>, vector<32x9xbf16> -> vector<32x64xbf16>
    %c8_356 = arith.constant 8 : index
    %c0_357 = arith.constant 0 : index
    %c0_358 = arith.constant 0 : index
    %527 = vector.load %arg16[%c8_356, %c0_357, %c0_358] : memref<9x32x64xbf16, #tpu.memory_space<vmem>>, vector<1x32x64xbf16>
    %528 = vector.shape_cast %527 : vector<1x32x64xbf16> to vector<32x64xbf16>
    %529 = arith.mulf %526, %528 : vector<32x64xbf16>
    %c256_359 = arith.constant 256 : index
    %c0_360 = arith.constant 0 : index
    %530 = vector.load %arg20[%c256_359, %c0_360] : memref<288x64xbf16, #tpu.memory_space<vmem>>, vector<32x64xbf16>
    tpu.vector_store %arg20[%c256_359, %c0_360], %529 {strides = array<i32>} : memref<288x64xbf16, #tpu.memory_space<vmem>>, vector<32x64xbf16>,
    %c0_361 = arith.constant 0 : index
    %c0_362 = arith.constant 0 : index
    %531 = vector.load %arg20[%c0_361, %c0_362] : memref<288x64xbf16, #tpu.memory_space<vmem>>, vector<288x64xbf16>
    %cst_363 = arith.constant dense<0.000000e+00> : vector<32x64xf32>
    %532 = tpu.matmul %470, %531, %cst_363 {dimension_numbers = #tpu.dot_dimension_numbers<[1], [0], [0], [1], [0, 0, 1, 1], [], []>} : vector<32x288xbf16>, vector<288x64xbf16>, vector<32x64xf32> -> vector<32x64xf32>
    %533 = vector.broadcast %472 : vector<32x1xf32> to vector<32x64xf32>
    %534 = arith.addf %532, %533 : vector<32x64xf32>
    %535 = arith.addf %334, %534 : vector<32x64xf32>
    %c4_364 = arith.constant 4 : index
    %c0_365 = arith.constant 0 : index
    %c0_366 = arith.constant 0 : index
    %536 = vector.load %arg7[%c4_364, %c0_365, %c0_366] : memref<5x32x1xf32, #tpu.memory_space<vmem>>, vector<1x32x1xf32>
    %537 = vector.shape_cast %536 : vector<1x32x1xf32> to vector<32x1xf32>
    %c4_367 = arith.constant 4 : index
    %c0_368 = arith.constant 0 : index
    %c0_369 = arith.constant 0 : index
    %538 = vector.load %arg8[%c4_367, %c0_368, %c0_369] : memref<5x32x1xf32, #tpu.memory_space<vmem>>, vector<1x32x1xf32>
    %539 = vector.shape_cast %538 : vector<1x32x1xf32> to vector<32x1xf32>
    %c0_370 = arith.constant 0 : index
    %c0_371 = arith.constant 0 : index
    %540 = vector.load %arg13[%c0_370, %c0_371] : memref<32x32xf32, #tpu.memory_space<vmem>>, vector<32x32xf32>
    %cst_372 = arith.constant dense<0.000000e+00> : vector<32x64xf32>
    %541 = tpu.matmul %540, %535, %cst_372 {dimension_numbers = #tpu.dot_dimension_numbers<[1], [0], [0], [1], [0, 0, 1, 1], [], []>} : vector<32x32xf32>, vector<32x64xf32>, vector<32x64xf32> -> vector<32x64xf32>
    %cst_373 = arith.constant dense<0.000000e+00> : vector<32xf32>
    %542 = vector.multi_reduction <add>, %541, %cst_373 [1] : vector<32x64xf32> to vector<32xf32>
    %543 = vector.shape_cast %542 : vector<32xf32> to vector<32x1xf32>
    %cst_374 = arith.constant 2.560000e+02 : f32
    %544 = vector.broadcast %cst_374 : f32 to vector<32x1xf32>
    %545 = arith.divf %543, %544 : vector<32x1xf32>
    %546 = vector.broadcast %545 : vector<32x1xf32> to vector<32x64xf32>
    %547 = arith.subf %535, %546 : vector<32x64xf32>
    %c0_375 = arith.constant 0 : index
    %c0_376 = arith.constant 0 : index
    %548 = vector.load %arg13[%c0_375, %c0_376] : memref<32x32xf32, #tpu.memory_space<vmem>>, vector<32x32xf32>
    %549 = arith.mulf %547, %547 : vector<32x64xf32>
    %cst_377 = arith.constant dense<0.000000e+00> : vector<32x64xf32>
    %550 = tpu.matmul %548, %549, %cst_377 {dimension_numbers = #tpu.dot_dimension_numbers<[1], [0], [0], [1], [0, 0, 1, 1], [], []>} : vector<32x32xf32>, vector<32x64xf32>, vector<32x64xf32> -> vector<32x64xf32>
    %cst_378 = arith.constant dense<0.000000e+00> : vector<32xf32>
    %551 = vector.multi_reduction <add>, %550, %cst_378 [1] : vector<32x64xf32> to vector<32xf32>
    %552 = vector.shape_cast %551 : vector<32xf32> to vector<32x1xf32>
    %cst_379 = arith.constant 2.560000e+02 : f32
    %553 = vector.broadcast %cst_379 : f32 to vector<32x1xf32>
    %554 = arith.divf %552, %553 : vector<32x1xf32>
    %cst_380 = arith.constant 9.99999997E-7 : f32
    %555 = vector.broadcast %cst_380 : f32 to vector<32x1xf32>
    %556 = arith.addf %554, %555 : vector<32x1xf32>
    %557 = math.rsqrt %556 : vector<32x1xf32>
    %558 = vector.broadcast %557 : vector<32x1xf32> to vector<32x64xf32>
    %559 = arith.mulf %547, %558 : vector<32x64xf32>
    %560 = vector.broadcast %537 : vector<32x1xf32> to vector<32x64xf32>
    %561 = arith.mulf %559, %560 : vector<32x64xf32>
    %562 = vector.broadcast %539 : vector<32x1xf32> to vector<32x64xf32>
    %563 = arith.addf %561, %562 : vector<32x64xf32>
    %564 = arith.negf %563 : vector<32x64xf32>
    %565 = math.exp %564 : vector<32x64xf32>
    %cst_381 = arith.constant 1.000000e+00 : f32
    %566 = vector.broadcast %cst_381 : f32 to vector<32x64xf32>
    %567 = arith.addf %566, %565 : vector<32x64xf32>
    %568 = arith.divf %566, %567 : vector<32x64xf32>
    %569 = arith.mulf %563, %568 : vector<32x64xf32>
    %c0_382 = arith.constant 0 : index
    %c0_383 = arith.constant 0 : index
    %570 = vector.load %arg9[%c0_382, %c0_383] : memref<8x288xbf16, #tpu.memory_space<vmem>>, vector<8x288xbf16>
    %c0_384 = arith.constant 0 : index
    %c0_385 = arith.constant 0 : index
    %571 = vector.load %arg10[%c0_384, %c0_385] : memref<8x1xf32, #tpu.memory_space<vmem>>, vector<8x1xf32>
    %572 = arith.truncf %569 : vector<32x64xf32> to vector<32x64xbf16>
    %573 = vector.extract_strided_slice %572 {offsets = [0, 55], sizes = [32, 9], strides = [1, 1]} : vector<32x64xbf16> to vector<32x9xbf16>
    %574 = vector.extract_strided_slice %572 {offsets = [0, 0], sizes = [32, 55], strides = [1, 1]} : vector<32x64xbf16> to vector<32x55xbf16>
    %575 = tpu.concatenate %573, %574 in 1 : vector<32x9xbf16>, vector<32x55xbf16> -> vector<32x64xbf16>
    %c0_386 = arith.constant 0 : index
    %c0_387 = arith.constant 0 : index
    %c0_388 = arith.constant 0 : index
    %576 = vector.load %arg16[%c0_386, %c0_387, %c0_388] : memref<9x32x64xbf16, #tpu.memory_space<vmem>>, vector<1x32x64xbf16>
    %577 = vector.shape_cast %576 : vector<1x32x64xbf16> to vector<32x64xbf16>
    %578 = arith.mulf %575, %577 : vector<32x64xbf16>
    %c0_389 = arith.constant 0 : index
    %c0_390 = arith.constant 0 : index
    %579 = vector.load %arg20[%c0_389, %c0_390] : memref<288x64xbf16, #tpu.memory_space<vmem>>, vector<32x64xbf16>
    tpu.vector_store %arg20[%c0_389, %c0_390], %578 {strides = array<i32>} : memref<288x64xbf16, #tpu.memory_space<vmem>>, vector<32x64xbf16>,
    %580 = vector.extract_strided_slice %572 {offsets = [0, 56], sizes = [32, 8], strides = [1, 1]} : vector<32x64xbf16> to vector<32x8xbf16>
    %581 = vector.extract_strided_slice %572 {offsets = [0, 0], sizes = [32, 56], strides = [1, 1]} : vector<32x64xbf16> to vector<32x56xbf16>
    %582 = tpu.concatenate %580, %581 in 1 : vector<32x8xbf16>, vector<32x56xbf16> -> vector<32x64xbf16>
    %c1_391 = arith.constant 1 : index
    %c0_392 = arith.constant 0 : index
    %c0_393 = arith.constant 0 : index
    %583 = vector.load %arg16[%c1_391, %c0_392, %c0_393] : memref<9x32x64xbf16, #tpu.memory_space<vmem>>, vector<1x32x64xbf16>
    %584 = vector.shape_cast %583 : vector<1x32x64xbf16> to vector<32x64xbf16>
    %585 = arith.mulf %582, %584 : vector<32x64xbf16>
    %c32_394 = arith.constant 32 : index
    %c0_395 = arith.constant 0 : index
    %586 = vector.load %arg20[%c32_394, %c0_395] : memref<288x64xbf16, #tpu.memory_space<vmem>>, vector<32x64xbf16>
    tpu.vector_store %arg20[%c32_394, %c0_395], %585 {strides = array<i32>} : memref<288x64xbf16, #tpu.memory_space<vmem>>, vector<32x64xbf16>,
    %587 = vector.extract_strided_slice %572 {offsets = [0, 57], sizes = [32, 7], strides = [1, 1]} : vector<32x64xbf16> to vector<32x7xbf16>
    %588 = vector.extract_strided_slice %572 {offsets = [0, 0], sizes = [32, 57], strides = [1, 1]} : vector<32x64xbf16> to vector<32x57xbf16>
    %589 = tpu.concatenate %587, %588 in 1 : vector<32x7xbf16>, vector<32x57xbf16> -> vector<32x64xbf16>
    %c2_396 = arith.constant 2 : index
    %c0_397 = arith.constant 0 : index
    %c0_398 = arith.constant 0 : index
    %590 = vector.load %arg16[%c2_396, %c0_397, %c0_398] : memref<9x32x64xbf16, #tpu.memory_space<vmem>>, vector<1x32x64xbf16>
    %591 = vector.shape_cast %590 : vector<1x32x64xbf16> to vector<32x64xbf16>
    %592 = arith.mulf %589, %591 : vector<32x64xbf16>
    %c64_399 = arith.constant 64 : index
    %c0_400 = arith.constant 0 : index
    %593 = vector.load %arg20[%c64_399, %c0_400] : memref<288x64xbf16, #tpu.memory_space<vmem>>, vector<32x64xbf16>
    tpu.vector_store %arg20[%c64_399, %c0_400], %592 {strides = array<i32>} : memref<288x64xbf16, #tpu.memory_space<vmem>>, vector<32x64xbf16>,
    %594 = vector.extract_strided_slice %572 {offsets = [0, 63], sizes = [32, 1], strides = [1, 1]} : vector<32x64xbf16> to vector<32x1xbf16>
    %595 = vector.extract_strided_slice %572 {offsets = [0, 0], sizes = [32, 63], strides = [1, 1]} : vector<32x64xbf16> to vector<32x63xbf16>
    %596 = tpu.concatenate %594, %595 in 1 : vector<32x1xbf16>, vector<32x63xbf16> -> vector<32x64xbf16>
    %c3_401 = arith.constant 3 : index
    %c0_402 = arith.constant 0 : index
    %c0_403 = arith.constant 0 : index
    %597 = vector.load %arg16[%c3_401, %c0_402, %c0_403] : memref<9x32x64xbf16, #tpu.memory_space<vmem>>, vector<1x32x64xbf16>
    %598 = vector.shape_cast %597 : vector<1x32x64xbf16> to vector<32x64xbf16>
    %599 = arith.mulf %596, %598 : vector<32x64xbf16>
    %c96_404 = arith.constant 96 : index
    %c0_405 = arith.constant 0 : index
    %600 = vector.load %arg20[%c96_404, %c0_405] : memref<288x64xbf16, #tpu.memory_space<vmem>>, vector<32x64xbf16>
    tpu.vector_store %arg20[%c96_404, %c0_405], %599 {strides = array<i32>} : memref<288x64xbf16, #tpu.memory_space<vmem>>, vector<32x64xbf16>,
    %c128_406 = arith.constant 128 : index
    %c0_407 = arith.constant 0 : index
    %601 = vector.load %arg20[%c128_406, %c0_407] : memref<288x64xbf16, #tpu.memory_space<vmem>>, vector<32x64xbf16>
    tpu.vector_store %arg20[%c128_406, %c0_407], %572 {strides = array<i32>} : memref<288x64xbf16, #tpu.memory_space<vmem>>, vector<32x64xbf16>,
    %602 = vector.extract_strided_slice %572 {offsets = [0, 1], sizes = [32, 63], strides = [1, 1]} : vector<32x64xbf16> to vector<32x63xbf16>
    %603 = vector.extract_strided_slice %572 {offsets = [0, 0], sizes = [32, 1], strides = [1, 1]} : vector<32x64xbf16> to vector<32x1xbf16>
    %604 = tpu.concatenate %602, %603 in 1 : vector<32x63xbf16>, vector<32x1xbf16> -> vector<32x64xbf16>
    %c5_408 = arith.constant 5 : index
    %c0_409 = arith.constant 0 : index
    %c0_410 = arith.constant 0 : index
    %605 = vector.load %arg16[%c5_408, %c0_409, %c0_410] : memref<9x32x64xbf16, #tpu.memory_space<vmem>>, vector<1x32x64xbf16>
    %606 = vector.shape_cast %605 : vector<1x32x64xbf16> to vector<32x64xbf16>
    %607 = arith.mulf %604, %606 : vector<32x64xbf16>
    %c160_411 = arith.constant 160 : index
    %c0_412 = arith.constant 0 : index
    %608 = vector.load %arg20[%c160_411, %c0_412] : memref<288x64xbf16, #tpu.memory_space<vmem>>, vector<32x64xbf16>
    tpu.vector_store %arg20[%c160_411, %c0_412], %607 {strides = array<i32>} : memref<288x64xbf16, #tpu.memory_space<vmem>>, vector<32x64xbf16>,
    %609 = vector.extract_strided_slice %572 {offsets = [0, 7], sizes = [32, 57], strides = [1, 1]} : vector<32x64xbf16> to vector<32x57xbf16>
    %610 = vector.extract_strided_slice %572 {offsets = [0, 0], sizes = [32, 7], strides = [1, 1]} : vector<32x64xbf16> to vector<32x7xbf16>
    %611 = tpu.concatenate %609, %610 in 1 : vector<32x57xbf16>, vector<32x7xbf16> -> vector<32x64xbf16>
    %c6_413 = arith.constant 6 : index
    %c0_414 = arith.constant 0 : index
    %c0_415 = arith.constant 0 : index
    %612 = vector.load %arg16[%c6_413, %c0_414, %c0_415] : memref<9x32x64xbf16, #tpu.memory_space<vmem>>, vector<1x32x64xbf16>
    %613 = vector.shape_cast %612 : vector<1x32x64xbf16> to vector<32x64xbf16>
    %614 = arith.mulf %611, %613 : vector<32x64xbf16>
    %c192_416 = arith.constant 192 : index
    %c0_417 = arith.constant 0 : index
    %615 = vector.load %arg20[%c192_416, %c0_417] : memref<288x64xbf16, #tpu.memory_space<vmem>>, vector<32x64xbf16>
    tpu.vector_store %arg20[%c192_416, %c0_417], %614 {strides = array<i32>} : memref<288x64xbf16, #tpu.memory_space<vmem>>, vector<32x64xbf16>,
    %616 = vector.extract_strided_slice %572 {offsets = [0, 8], sizes = [32, 56], strides = [1, 1]} : vector<32x64xbf16> to vector<32x56xbf16>
    %617 = vector.extract_strided_slice %572 {offsets = [0, 0], sizes = [32, 8], strides = [1, 1]} : vector<32x64xbf16> to vector<32x8xbf16>
    %618 = tpu.concatenate %616, %617 in 1 : vector<32x56xbf16>, vector<32x8xbf16> -> vector<32x64xbf16>
    %c7_418 = arith.constant 7 : index
    %c0_419 = arith.constant 0 : index
    %c0_420 = arith.constant 0 : index
    %619 = vector.load %arg16[%c7_418, %c0_419, %c0_420] : memref<9x32x64xbf16, #tpu.memory_space<vmem>>, vector<1x32x64xbf16>
    %620 = vector.shape_cast %619 : vector<1x32x64xbf16> to vector<32x64xbf16>
    %621 = arith.mulf %618, %620 : vector<32x64xbf16>
    %c224_421 = arith.constant 224 : index
    %c0_422 = arith.constant 0 : index
    %622 = vector.load %arg20[%c224_421, %c0_422] : memref<288x64xbf16, #tpu.memory_space<vmem>>, vector<32x64xbf16>
    tpu.vector_store %arg20[%c224_421, %c0_422], %621 {strides = array<i32>} : memref<288x64xbf16, #tpu.memory_space<vmem>>, vector<32x64xbf16>,
    %623 = vector.extract_strided_slice %572 {offsets = [0, 9], sizes = [32, 55], strides = [1, 1]} : vector<32x64xbf16> to vector<32x55xbf16>
    %624 = vector.extract_strided_slice %572 {offsets = [0, 0], sizes = [32, 9], strides = [1, 1]} : vector<32x64xbf16> to vector<32x9xbf16>
    %625 = tpu.concatenate %623, %624 in 1 : vector<32x55xbf16>, vector<32x9xbf16> -> vector<32x64xbf16>
    %c8_423 = arith.constant 8 : index
    %c0_424 = arith.constant 0 : index
    %c0_425 = arith.constant 0 : index
    %626 = vector.load %arg16[%c8_423, %c0_424, %c0_425] : memref<9x32x64xbf16, #tpu.memory_space<vmem>>, vector<1x32x64xbf16>
    %627 = vector.shape_cast %626 : vector<1x32x64xbf16> to vector<32x64xbf16>
    %628 = arith.mulf %625, %627 : vector<32x64xbf16>
    %c256_426 = arith.constant 256 : index
    %c0_427 = arith.constant 0 : index
    %629 = vector.load %arg20[%c256_426, %c0_427] : memref<288x64xbf16, #tpu.memory_space<vmem>>, vector<32x64xbf16>
    tpu.vector_store %arg20[%c256_426, %c0_427], %628 {strides = array<i32>} : memref<288x64xbf16, #tpu.memory_space<vmem>>, vector<32x64xbf16>,
    %c0_428 = arith.constant 0 : index
    %c0_429 = arith.constant 0 : index
    %630 = vector.load %arg20[%c0_428, %c0_429] : memref<288x64xbf16, #tpu.memory_space<vmem>>, vector<288x64xbf16>
    %cst_430 = arith.constant dense<0.000000e+00> : vector<8x64xf32>
    %631 = tpu.matmul %570, %630, %cst_430 {dimension_numbers = #tpu.dot_dimension_numbers<[1], [0], [0], [1], [0, 0, 1, 1], [], []>} : vector<8x288xbf16>, vector<288x64xbf16>, vector<8x64xf32> -> vector<8x64xf32>
    %632 = vector.broadcast %571 : vector<8x1xf32> to vector<8x64xf32>
    %633 = arith.addf %631, %632 : vector<8x64xf32>
    %c0_431 = arith.constant 0 : index
    %c0_432 = arith.constant 0 : index
    %634 = vector.load %arg11[%c0_431, %c0_432] : memref<8x8xf32, #tpu.memory_space<vmem>>, vector<8x8xf32>
    %cst_433 = arith.constant dense<0.000000e+00> : vector<8x64xf32>
    %635 = tpu.matmul %634, %633, %cst_433 {dimension_numbers = #tpu.dot_dimension_numbers<[1], [0], [0], [1], [0, 0, 1, 1], [], []>} : vector<8x8xf32>, vector<8x64xf32>, vector<8x64xf32> -> vector<8x64xf32>
    %c0_434 = arith.constant 0 : index
    %c0_435 = arith.constant 0 : index
    %636 = vector.load %arg12[%c0_434, %c0_435] : memref<8x1xf32, #tpu.memory_space<vmem>>, vector<8x1xf32>
    %637 = vector.broadcast %636 : vector<8x1xf32> to vector<8x64xf32>
    %638 = arith.addf %635, %637 : vector<8x64xf32>
    %639 = vector.extract_strided_slice %638 {offsets = [0, 0], sizes = [4, 64], strides = [1, 1]} : vector<8x64xf32> to vector<4x64xf32>
    %640 = vector.extract_strided_slice %638 {offsets = [4, 0], sizes = [4, 64], strides = [1, 1]} : vector<8x64xf32> to vector<4x64xf32>
    %cst_436 = arith.constant -3.000000e+01 : f32
    %cst_437 = arith.constant 2.000000e+01 : f32
    %641 = vector.broadcast %cst_436 : f32 to vector<4x64xf32>
    %642 = arith.maximumf %641, %640 : vector<4x64xf32>
    %643 = vector.broadcast %cst_437 : f32 to vector<4x64xf32>
    %644 = arith.minimumf %643, %642 : vector<4x64xf32>
    %cst_438 = arith.constant 5.000000e-01 : f32
    %645 = vector.broadcast %cst_438 : f32 to vector<4x64xf32>
    %646 = arith.mulf %645, %644 : vector<4x64xf32>
    %647 = math.exp %646 : vector<4x64xf32>
    %c0_439 = arith.constant 0 : index
    %c0_440 = arith.constant 0 : index
    %c0_441 = arith.constant 0 : index
    %648 = vector.load %arg2[%c0_439, %c0_440, %c0_441] : memref<1x4x64xf32, #tpu.memory_space<vmem>>, vector<1x4x64xf32>
    %649 = vector.shape_cast %648 : vector<1x4x64xf32> to vector<4x64xf32>
    %650 = arith.mulf %647, %649 : vector<4x64xf32>
    %651 = arith.addf %639, %650 : vector<4x64xf32>
    %cst_442 = arith.constant 1.821500e-01 : f32
    %652 = vector.broadcast %cst_442 : f32 to vector<4x64xf32>
    %653 = arith.mulf %651, %652 : vector<4x64xf32>
    %654 = vector.shape_cast %653 : vector<4x64xf32> to vector<1x4x64xf32>
    %c0_443 = arith.constant 0 : index
    %c0_444 = arith.constant 0 : index
    %c0_445 = arith.constant 0 : index
    %655 = vector.load %arg18[%c0_443, %c0_444, %c0_445] : memref<1x4x64xf32, #tpu.memory_space<vmem>>, vector<1x4x64xf32>
    tpu.vector_store %arg18[%c0_443, %c0_444, %c0_445], %654 {strides = array<i32>} : memref<1x4x64xf32, #tpu.memory_space<vmem>>, vector<1x4x64xf32>,
    return
  }
  func.func @transform_0(%arg0: i32) -> (i32, i32, i32) {
    %c0_i32 = arith.constant 0 : i32
    %c0_i32_0 = arith.constant 0 : i32
    %c0_i32_1 = arith.constant 0 : i32
    return %arg0, %c0_i32, %c0_i32_0 : i32, i32, i32
  }
  func.func @transform_1(%arg0: i32) -> (i32, i32, i32) {
    %c0_i32 = arith.constant 0 : i32
    %c0_i32_0 = arith.constant 0 : i32
    %c0_i32_1 = arith.constant 0 : i32
    return %arg0, %c0_i32, %c0_i32_0 : i32, i32, i32
  }
  func.func @transform_2(%arg0: i32) -> (i32, i32) {
    %c0_i32 = arith.constant 0 : i32
    %c0_i32_0 = arith.constant 0 : i32
    %c0_i32_1 = arith.constant 0 : i32
    return %c0_i32, %c0_i32_0 : i32, i32
  }
  func.func @transform_3(%arg0: i32) -> (i32, i32) {
    %c0_i32 = arith.constant 0 : i32
    %c0_i32_0 = arith.constant 0 : i32
    %c0_i32_1 = arith.constant 0 : i32
    return %c0_i32, %c0_i32_0 : i32, i32
  }
  func.func @transform_4(%arg0: i32) -> (i32, i32, i32) {
    %c0_i32 = arith.constant 0 : i32
    %c0_i32_0 = arith.constant 0 : i32
    %c0_i32_1 = arith.constant 0 : i32
    %c0_i32_2 = arith.constant 0 : i32
    return %c0_i32, %c0_i32_0, %c0_i32_1 : i32, i32, i32
  }
  func.func @transform_5(%arg0: i32) -> (i32, i32, i32) {
    %c0_i32 = arith.constant 0 : i32
    %c0_i32_0 = arith.constant 0 : i32
    %c0_i32_1 = arith.constant 0 : i32
    %c0_i32_2 = arith.constant 0 : i32
    return %c0_i32, %c0_i32_0, %c0_i32_1 : i32, i32, i32
  }
  func.func @transform_6(%arg0: i32) -> (i32, i32, i32) {
    %c0_i32 = arith.constant 0 : i32
    %c0_i32_0 = arith.constant 0 : i32
    %c0_i32_1 = arith.constant 0 : i32
    %c0_i32_2 = arith.constant 0 : i32
    return %c0_i32, %c0_i32_0, %c0_i32_1 : i32, i32, i32
  }
  func.func @transform_7(%arg0: i32) -> (i32, i32, i32) {
    %c0_i32 = arith.constant 0 : i32
    %c0_i32_0 = arith.constant 0 : i32
    %c0_i32_1 = arith.constant 0 : i32
    %c0_i32_2 = arith.constant 0 : i32
    return %c0_i32, %c0_i32_0, %c0_i32_1 : i32, i32, i32
  }
  func.func @transform_8(%arg0: i32) -> (i32, i32) {
    %c0_i32 = arith.constant 0 : i32
    %c0_i32_0 = arith.constant 0 : i32
    %c0_i32_1 = arith.constant 0 : i32
    return %c0_i32, %c0_i32_0 : i32, i32
  }
  func.func @transform_9(%arg0: i32) -> (i32, i32) {
    %c0_i32 = arith.constant 0 : i32
    %c0_i32_0 = arith.constant 0 : i32
    %c0_i32_1 = arith.constant 0 : i32
    return %c0_i32, %c0_i32_0 : i32, i32
  }
  func.func @transform_10(%arg0: i32) -> (i32, i32) {
    %c0_i32 = arith.constant 0 : i32
    %c0_i32_0 = arith.constant 0 : i32
    %c0_i32_1 = arith.constant 0 : i32
    return %c0_i32, %c0_i32_0 : i32, i32
  }
  func.func @transform_11(%arg0: i32) -> (i32, i32) {
    %c0_i32 = arith.constant 0 : i32
    %c0_i32_0 = arith.constant 0 : i32
    %c0_i32_1 = arith.constant 0 : i32
    return %c0_i32, %c0_i32_0 : i32, i32
  }
  func.func @transform_12(%arg0: i32) -> (i32, i32) {
    %c0_i32 = arith.constant 0 : i32
    %c0_i32_0 = arith.constant 0 : i32
    %c0_i32_1 = arith.constant 0 : i32
    return %c0_i32, %c0_i32_0 : i32, i32
  }
  func.func @transform_13(%arg0: i32) -> (i32, i32, i32) {
    %c0_i32 = arith.constant 0 : i32
    %c0_i32_0 = arith.constant 0 : i32
    %c0_i32_1 = arith.constant 0 : i32
    %c0_i32_2 = arith.constant 0 : i32
    return %c0_i32, %c0_i32_0, %c0_i32_1 : i32, i32, i32
  }
  func.func @transform_14(%arg0: i32) -> (i32, i32, i32) {
    %c0_i32 = arith.constant 0 : i32
    %c0_i32_0 = arith.constant 0 : i32
    %c0_i32_1 = arith.constant 0 : i32
    %c0_i32_2 = arith.constant 0 : i32
    return %c0_i32, %c0_i32_0, %c0_i32_1 : i32, i32, i32
  }
  func.func @transform_15(%arg0: i32) -> (i32, i32, i32) {
    %c0_i32 = arith.constant 0 : i32
    %c0_i32_0 = arith.constant 0 : i32
    %c0_i32_1 = arith.constant 0 : i32
    %c0_i32_2 = arith.constant 0 : i32
    return %c0_i32, %c0_i32_0, %c0_i32_1 : i32, i32, i32
  }
  func.func @transform_16(%arg0: i32) -> (i32, i32) {
    %c0_i32 = arith.constant 0 : i32
    %c0_i32_0 = arith.constant 0 : i32
    %c0_i32_1 = arith.constant 0 : i32
    return %c0_i32, %c0_i32_0 : i32, i32
  }
  func.func @transform_17(%arg0: i32) -> (i32, i32, i32) {
    %c0_i32 = arith.constant 0 : i32
    %c0_i32_0 = arith.constant 0 : i32
    %c0_i32_1 = arith.constant 0 : i32
    return %arg0, %c0_i32, %c0_i32_0 : i32, i32, i32
  }
}

</mosaic_0001>

<llo_original>
// kernel: _encode_jit.1
$region0: #{_encode_jit.1}
  #allocation0 [shape = 'u32[]', space=smem, size = 0x4, offset = 0x4, fixed_abs, tag = 'smem constant byte address 0x4 - core index']
  #allocation1 [shape = 'u32[144,128]{1,0:T(1,128)}', space=vmem, size = 0x12000, scoped, tag = 'internal scratch']
  #allocation2 [shape = 'bf16[288,256]{1,0:T(16,128)(2,1)}', space=vmem, size = 0x24000, scoped, tag = 'scratch operand']
  #allocation3 [shape = 'bf16[288,64]{1,0:T(16,128)(2,1)}', space=vmem, size = 0x12000, scoped, tag = 'scratch operand']
  %s0 = inlined_call_operand.vmem [shape: f32[2,32,256], index: 0, kind: input, shape index: {}]
  %s1 = inlined_call_operand.vmem [shape: f32[2,4,64], index: 1, kind: input, shape index: {}]
  %s2 = inlined_call_operand.vmem [shape: bf16[32,288], index: 2, kind: input, shape index: {}]
  %s3 = inlined_call_operand.vmem [shape: f32[32,1], index: 3, kind: input, shape index: {}]
  %s4 = inlined_call_operand.vmem [shape: bf16[5,32,288], index: 4, kind: input, shape index: {}]
  %s5 = inlined_call_operand.vmem [shape: f32[5,32,1], index: 5, kind: input, shape index: {}]
  %s6 = inlined_call_operand.vmem [shape: f32[5,32,1], index: 6, kind: input, shape index: {}]
  %s7 = inlined_call_operand.vmem [shape: f32[5,32,1], index: 7, kind: input, shape index: {}]
  %s8 = inlined_call_operand.vmem [shape: bf16[8,288], index: 8, kind: input, shape index: {}]
  %s9 = inlined_call_operand.vmem [shape: f32[8,1], index: 9, kind: input, shape index: {}]
  %s10 = inlined_call_operand.vmem [shape: f32[8,8], index: 10, kind: input, shape index: {}]
  %s11 = inlined_call_operand.vmem [shape: f32[8,1], index: 11, kind: input, shape index: {}]
  %s12 = inlined_call_operand.vmem [shape: f32[32,32], index: 12, kind: input, shape index: {}]
  %s13 = inlined_call_operand.vmem [shape: bf16[9,32,256], index: 13, kind: input, shape index: {}]
  %s14 = inlined_call_operand.vmem [shape: bf16[9,32,256], index: 14, kind: input, shape index: {}]
  %s15 = inlined_call_operand.vmem [shape: bf16[9,32,64], index: 15, kind: input, shape index: {}]
  %s16 = inlined_call_operand.vmem [shape: f32[256,64], index: 16, kind: input, shape index: {}]
  %s17 = inlined_call_operand.vmem [shape: f32[2,4,64], index: 17, kind: output, shape index: {}]
  %s18 = sld [smem:[#allocation0]]
  $region101: #{_encode_jit.1} parent=0
    _
  %s20 = ssub.s32 1, %s18
  %s21 = scalar_select 0, %s20, %s18
  loop: start=0, step=1, limit=4
  $region2: #{_encode_jit.1} parent=0 // loop_pre_header
    _
  $region3: #{_encode_jit.1} parent=0 // loop_header
    %s23 = sphi 0, %s27
    %p24 = scmp.ge.s32.totalorder %s23, 4
    %s33 = sphi 0, %s35
    %s36 = sphi 0, %s33
    %s37 = sphi 0, %s36
    %s53 = sphi 0, %s37
    %s59 = sphi 0, %s61
    %s62 = sphi 0, %s59
    %s63 = sphi 0, %s62
    %s79 = sphi 0, %s63
    %s83 = sphi 0, %s83
    %s85 = sphi 0, %s83
    %s86 = sphi 0, %s85
    %s100 = sphi 0, %s86
    %s104 = sphi 0, %s104
    %s106 = sphi 0, %s104
    %s107 = sphi 0, %s106
    %s121 = sphi 0, %s107
    %s125 = sphi 0, %s125
    %s127 = sphi 0, %s125
    %s128 = sphi 0, %s127
    %s142 = sphi 0, %s128
    %s146 = sphi 0, %s146
    %s148 = sphi 0, %s146
    %s149 = sphi 0, %s148
    %s163 = sphi 0, %s149
    %s167 = sphi 0, %s167
    %s169 = sphi 0, %s167
    %s170 = sphi 0, %s169
    %s184 = sphi 0, %s170
    %s188 = sphi 0, %s188
    %s190 = sphi 0, %s188
    %s191 = sphi 0, %s190
    %s205 = sphi 0, %s191
    %s209 = sphi 0, %s209
    %s211 = sphi 0, %s209
    %s212 = sphi 0, %s211
    %s226 = sphi 0, %s212
    %s230 = sphi 0, %s230
    %s232 = sphi 0, %s230
    %s233 = sphi 0, %s232
    %s247 = sphi 0, %s233
    %s251 = sphi 0, %s251
    %s253 = sphi 0, %s251
    %s254 = sphi 0, %s253
    %s268 = sphi 0, %s254
    %s272 = sphi 0, %s272
    %s274 = sphi 0, %s272
    %s275 = sphi 0, %s274
    %s289 = sphi 0, %s275
    %s293 = sphi 0, %s293
    %s295 = sphi 0, %s293
    %s296 = sphi 0, %s295
    %s310 = sphi 0, %s296
    %s314 = sphi 0, %s314
    %s316 = sphi 0, %s314
    %s317 = sphi 0, %s316
    %s331 = sphi 0, %s317
    %s335 = sphi 0, %s335
    %s337 = sphi 0, %s335
    %s338 = sphi 0, %s337
    %s352 = sphi 0, %s338
    %s356 = sphi 0, %s356
    %s358 = sphi 0, %s356
    %s359 = sphi 0, %s358
    %s373 = sphi 0, %s359
    %s377 = sphi 0, %s377
    %s379 = sphi 0, %s377
    %s380 = sphi 0, %s379
    %s394 = sphi 0, %s380
    %s400 = sphi 0, %s402
    %s403 = sphi 0, %s400
    %s404 = sphi 0, %s403
    %s420 = sphi 0, %s404
  $region4: #{_encode_jit.1} parent=0 // loop_header_branch
    %26 = sbr.rel (%p24) target = $region8
  $region5: #{_encode_jit.1} parent=0 // loop_body
    %s28 = ssub.s32 %s23, 1
    %s29 = ssub.s32 %s23, 2
    %s30 = sadd.s32 %s23, 1
    %s31 = ssub.s32 %s23, %s30
    %p32 = scmp.eq.s32.totalorder %s31, 0
    %s34 = sadd.s32 %s33, 1
    %s35 = scalar_select %p32, %s33, %s34
    %p38 = pneg %p32
    %p39 = scmp.eq.s32.totalorder %s23, 1
    %p40 = por %p38, %p39
    %p41 = scmp.ne.s32.totalorder %s33, %s36
    %p42 = scmp.eq.s32.totalorder %s23, 0
    %p43 = por %p41, %p42
    %p44 = scmp.ne.s32.totalorder %s33, %s36
    %p45 = scmp.eq.s32.totalorder %s28, 1
    %p46 = por %p44, %p45
    %p47 = scmp.ne.s32.totalorder %s36, %s37
    %p48 = scmp.eq.s32.totalorder %s28, 0
    %p49 = por %p47, %p48
    %p50 = scmp.ne.s32.totalorder %s36, %s37
    %p51 = scmp.eq.s32.totalorder %s29, 1
    %p52 = por %p50, %p51
    %p54 = scmp.ne.s32.totalorder %s37, %s53
    %p55 = scmp.eq.s32.totalorder %s29, 0
    %p56 = por %p54, %p55
    %s57 = ssub.s32 %s23, %s30
    %p58 = scmp.eq.s32.totalorder %s57, 0
    %s60 = sadd.s32 %s59, 1
    %s61 = scalar_select %p58, %s59, %s60
    %p64 = pneg %p58
    %p65 = scmp.eq.s32.totalorder %s23, 1
    %p66 = por %p64, %p65
    %p67 = scmp.ne.s32.totalorder %s59, %s62
    %p68 = scmp.eq.s32.totalorder %s23, 0
    %p69 = por %p67, %p68
    %p70 = scmp.ne.s32.totalorder %s59, %s62
    %p71 = scmp.eq.s32.totalorder %s28, 1
    %p72 = por %p70, %p71
    %p73 = scmp.ne.s32.totalorder %s62, %s63
    %p74 = scmp.eq.s32.totalorder %s28, 0
    %p75 = por %p73, %p74
    %p76 = scmp.ne.s32.totalorder %s62, %s63
    %p77 = scmp.eq.s32.totalorder %s29, 1
    %p78 = por %p76, %p77
    %p80 = scmp.ne.s32.totalorder %s63, %s79
    %p81 = scmp.eq.s32.totalorder %s29, 0
    %p82 = por %p80, %p81
    %s84 = sadd.s32 %s83, 1
    %p87 = scmp.eq.s32.totalorder %s23, 1
    %p88 = scmp.ne.s32.totalorder %s83, %s85
    %p89 = scmp.eq.s32.totalorder %s23, 0
    %p90 = por %p88, %p89
    %p91 = scmp.ne.s32.totalorder %s83, %s85
    %p92 = scmp.eq.s32.totalorder %s28, 1
    %p93 = por %p91, %p92
    %p94 = scmp.ne.s32.totalorder %s85, %s86
    %p95 = scmp.eq.s32.totalorder %s28, 0
    %p96 = por %p94, %p95
    %p97 = scmp.ne.s32.totalorder %s85, %s86
    %p98 = scmp.eq.s32.totalorder %s29, 1
    %p99 = por %p97, %p98
    %p101 = scmp.ne.s32.totalorder %s86, %s100
    %p102 = scmp.eq.s32.totalorder %s29, 0
    %p103 = por %p101, %p102
    %s105 = sadd.s32 %s104, 1
    %p108 = scmp.eq.s32.totalorder %s23, 1
    %p109 = scmp.ne.s32.totalorder %s104, %s106
    %p110 = scmp.eq.s32.totalorder %s23, 0
    %p111 = por %p109, %p110
    %p112 = scmp.ne.s32.totalorder %s104, %s106
    %p113 = scmp.eq.s32.totalorder %s28, 1
    %p114 = por %p112, %p113
    %p115 = scmp.ne.s32.totalorder %s106, %s107
    %p116 = scmp.eq.s32.totalorder %s28, 0
    %p117 = por %p115, %p116
    %p118 = scmp.ne.s32.totalorder %s106, %s107
    %p119 = scmp.eq.s32.totalorder %s29, 1
    %p120 = por %p118, %p119
    %p122 = scmp.ne.s32.totalorder %s107, %s121
    %p123 = scmp.eq.s32.totalorder %s29, 0
    %p124 = por %p122, %p123
    %s126 = sadd.s32 %s125, 1
    %p129 = scmp.eq.s32.totalorder %s23, 1
    %p130 = scmp.ne.s32.totalorder %s125, %s127
    %p131 = scmp.eq.s32.totalorder %s23, 0
    %p132 = por %p130, %p131
    %p133 = scmp.ne.s32.totalorder %s125, %s127
    %p134 = scmp.eq.s32.totalorder %s28, 1
    %p135 = por %p133, %p134
    %p136 = scmp.ne.s32.totalorder %s127, %s128
    %p137 = scmp.eq.s32.totalorder %s28, 0
    %p138 = por %p136, %p137
    %p139 = scmp.ne.s32.totalorder %s127, %s128
    %p140 = scmp.eq.s32.totalorder %s29, 1
    %p141 = por %p139, %p140
    %p143 = scmp.ne.s32.totalorder %s128, %s142
    %p144 = scmp.eq.s32.totalorder %s29, 0
    %p145 = por %p143, %p144
    %s147 = sadd.s32 %s146, 1
    %p150 = scmp.eq.s32.totalorder %s23, 1
    %p151 = scmp.ne.s32.totalorder %s146, %s148
    %p152 = scmp.eq.s32.totalorder %s23, 0
    %p153 = por %p151, %p152
    %p154 = scmp.ne.s32.totalorder %s146, %s148
    %p155 = scmp.eq.s32.totalorder %s28, 1
    %p156 = por %p154, %p155
    %p157 = scmp.ne.s32.totalorder %s148, %s149
    %p158 = scmp.eq.s32.totalorder %s28, 0
    %p159 = por %p157, %p158
    %p160 = scmp.ne.s32.totalorder %s148, %s149
    %p161 = scmp.eq.s32.totalorder %s29, 1
    %p162 = por %p160, %p161
    %p164 = scmp.ne.s32.totalorder %s149, %s163
    %p165 = scmp.eq.s32.totalorder %s29, 0
    %p166 = por %p164, %p165
    %s168 = sadd.s32 %s167, 1
    %p171 = scmp.eq.s32.totalorder %s23, 1
    %p172 = scmp.ne.s32.totalorder %s167, %s169
    %p173 = scmp.eq.s32.totalorder %s23, 0
    %p174 = por %p172, %p173
    %p175 = scmp.ne.s32.totalorder %s167, %s169
    %p176 = scmp.eq.s32.totalorder %s28, 1
    %p177 = por %p175, %p176
    %p178 = scmp.ne.s32.totalorder %s169, %s170
    %p179 = scmp.eq.s32.totalorder %s28, 0
    %p180 = por %p178, %p179
    %p181 = scmp.ne.s32.totalorder %s169, %s170
    %p182 = scmp.eq.s32.totalorder %s29, 1
    %p183 = por %p181, %p182
    %p185 = scmp.ne.s32.totalorder %s170, %s184
    %p186 = scmp.eq.s32.totalorder %s29, 0
    %p187 = por %p185, %p186
    %s189 = sadd.s32 %s188, 1
    %p192 = scmp.eq.s32.totalorder %s23, 1
    %p193 = scmp.ne.s32.totalorder %s188, %s190
    %p194 = scmp.eq.s32.totalorder %s23, 0
    %p195 = por %p193, %p194
    %p196 = scmp.ne.s32.totalorder %s188, %s190
    %p197 = scmp.eq.s32.totalorder %s28, 1
    %p198 = por %p196, %p197
    %p199 = scmp.ne.s32.totalorder %s190, %s191
    %p200 = scmp.eq.s32.totalorder %s28, 0
    %p201 = por %p199, %p200
    %p202 = scmp.ne.s32.totalorder %s190, %s191
    %p203 = scmp.eq.s32.totalorder %s29, 1
    %p204 = por %p202, %p203
    %p206 = scmp.ne.s32.totalorder %s191, %s205
    %p207 = scmp.eq.s32.totalorder %s29, 0
    %p208 = por %p206, %p207
    %s210 = sadd.s32 %s209, 1
    %p213 = scmp.eq.s32.totalorder %s23, 1
    %p214 = scmp.ne.s32.totalorder %s209, %s211
    %p215 = scmp.eq.s32.totalorder %s23, 0
    %p216 = por %p214, %p215
    %p217 = scmp.ne.s32.totalorder %s209, %s211
    %p218 = scmp.eq.s32.totalorder %s28, 1
    %p219 = por %p217, %p218
    %p220 = scmp.ne.s32.totalorder %s211, %s212
    %p221 = scmp.eq.s32.totalorder %s28, 0
    %p222 = por %p220, %p221
    %p223 = scmp.ne.s32.totalorder %s211, %s212
    %p224 = scmp.eq.s32.totalorder %s29, 1
    %p225 = por %p223, %p224
    %p227 = scmp.ne.s32.totalorder %s212, %s226
    %p228 = scmp.eq.s32.totalorder %s29, 0
    %p229 = por %p227, %p228
    %s231 = sadd.s32 %s230, 1
    %p234 = scmp.eq.s32.totalorder %s23, 1
    %p235 = scmp.ne.s32.totalorder %s230, %s232
    %p236 = scmp.eq.s32.totalorder %s23, 0
    %p237 = por %p235, %p236
    %p238 = scmp.ne.s32.totalorder %s230, %s232
    %p239 = scmp.eq.s32.totalorder %s28, 1
    %p240 = por %p238, %p239
    %p241 = scmp.ne.s32.totalorder %s232, %s233
    %p242 = scmp.eq.s32.totalorder %s28, 0
    %p243 = por %p241, %p242
    %p244 = scmp.ne.s32.totalorder %s232, %s233
    %p245 = scmp.eq.s32.totalorder %s29, 1
    %p246 = por %p244, %p245
    %p248 = scmp.ne.s32.totalorder %s233, %s247
    %p249 = scmp.eq.s32.totalorder %s29, 0
    %p250 = por %p248, %p249
    %s252 = sadd.s32 %s251, 1
    %p255 = scmp.eq.s32.totalorder %s23, 1
    %p256 = scmp.ne.s32.totalorder %s251, %s253
    %p257 = scmp.eq.s32.totalorder %s23, 0
    %p258 = por %p256, %p257
    %p259 = scmp.ne.s32.totalorder %s251, %s253
    %p260 = scmp.eq.s32.totalorder %s28, 1
    %p261 = por %p259, %p260
    %p262 = scmp.ne.s32.totalorder %s253, %s254
    %p263 = scmp.eq.s32.totalorder %s28, 0
    %p264 = por %p262, %p263
    %p265 = scmp.ne.s32.totalorder %s253, %s254
    %p266 = scmp.eq.s32.totalorder %s29, 1
    %p267 = por %p265, %p266
    %p269 = scmp.ne.s32.totalorder %s254, %s268
    %p270 = scmp.eq.s32.totalorder %s29, 0
    %p271 = por %p269, %p270
    %s273 = sadd.s32 %s272, 1
    %p276 = scmp.eq.s32.totalorder %s23, 1
    %p277 = scmp.ne.s32.totalorder %s272, %s274
    %p278 = scmp.eq.s32.totalorder %s23, 0
    %p279 = por %p277, %p278
    %p280 = scmp.ne.s32.totalorder %s272, %s274
    %p281 = scmp.eq.s32.totalorder %s28, 1
    %p282 = por %p280, %p281
    %p283 = scmp.ne.s32.totalorder %s274, %s275
    %p284 = scmp.eq.s32.totalorder %s28, 0
    %p285 = por %p283, %p284
    %p286 = scmp.ne.s32.totalorder %s274, %s275
    %p287 = scmp.eq.s32.totalorder %s29, 1
    %p288 = por %p286, %p287
    %p290 = scmp.ne.s32.totalorder %s275, %s289
    %p291 = scmp.eq.s32.totalorder %s29, 0
    %p292 = por %p290, %p291
    %s294 = sadd.s32 %s293, 1
    %p297 = scmp.eq.s32.totalorder %s23, 1
    %p298 = scmp.ne.s32.totalorder %s293, %s295
    %p299 = scmp.eq.s32.totalorder %s23, 0
    %p300 = por %p298, %p299
    %p301 = scmp.ne.s32.totalorder %s293, %s295
    %p302 = scmp.eq.s32.totalorder %s28, 1
    %p303 = por %p301, %p302
    %p304 = scmp.ne.s32.totalorder %s295, %s296
    %p305 = scmp.eq.s32.totalorder %s28, 0
    %p306 = por %p304, %p305
    %p307 = scmp.ne.s32.totalorder %s295, %s296
    %p308 = scmp.eq.s32.totalorder %s29, 1
    %p309 = por %p307, %p308
    %p311 = scmp.ne.s32.totalorder %s296, %s310
    %p312 = scmp.eq.s32.totalorder %s29, 0
    %p313 = por %p311, %p312
    %s315 = sadd.s32 %s314, 1
    %p318 = scmp.eq.s32.totalorder %s23, 1
    %p319 = scmp.ne.s32.totalorder %s314, %s316
    %p320 = scmp.eq.s32.totalorder %s23, 0
    %p321 = por %p319, %p320
    %p322 = scmp.ne.s32.totalorder %s314, %s316
    %p323 = scmp.eq.s32.totalorder %s28, 1
    %p324 = por %p322, %p323
    %p325 = scmp.ne.s32.totalorder %s316, %s317
    %p326 = scmp.eq.s32.totalorder %s28, 0
    %p327 = por %p325, %p326
    %p328 = scmp.ne.s32.totalorder %s316, %s317
    %p329 = scmp.eq.s32.totalorder %s29, 1
    %p330 = por %p328, %p329
    %p332 = scmp.ne.s32.totalorder %s317, %s331
    %p333 = scmp.eq.s32.totalorder %s29, 0
    %p334 = por %p332, %p333
    %s336 = sadd.s32 %s335, 1
    %p339 = scmp.eq.s32.totalorder %s23, 1
    %p340 = scmp.ne.s32.totalorder %s335, %s337
    %p341 = scmp.eq.s32.totalorder %s23, 0
    %p342 = por %p340, %p341
    %p343 = scmp.ne.s32.totalorder %s335, %s337
    %p344 = scmp.eq.s32.totalorder %s28, 1
    %p345 = por %p343, %p344
    %p346 = scmp.ne.s32.totalorder %s337, %s338
    %p347 = scmp.eq.s32.totalorder %s28, 0
    %p348 = por %p346, %p347
    %p349 = scmp.ne.s32.totalorder %s337, %s338
    %p350 = scmp.eq.s32.totalorder %s29, 1
    %p351 = por %p349, %p350
    %p353 = scmp.ne.s32.totalorder %s338, %s352
    %p354 = scmp.eq.s32.totalorder %s29, 0
    %p355 = por %p353, %p354
    %s357 = sadd.s32 %s356, 1
    %p360 = scmp.eq.s32.totalorder %s23, 1
    %p361 = scmp.ne.s32.totalorder %s356, %s358
    %p362 = scmp.eq.s32.totalorder %s23, 0
    %p363 = por %p361, %p362
    %p364 = scmp.ne.s32.totalorder %s356, %s358
    %p365 = scmp.eq.s32.totalorder %s28, 1
    %p366 = por %p364, %p365
    %p367 = scmp.ne.s32.totalorder %s358, %s359
    %p368 = scmp.eq.s32.totalorder %s28, 0
    %p369 = por %p367, %p368
    %p370 = scmp.ne.s32.totalorder %s358, %s359
    %p371 = scmp.eq.s32.totalorder %s29, 1
    %p372 = por %p370, %p371
    %p374 = scmp.ne.s32.totalorder %s359, %s373
    %p375 = scmp.eq.s32.totalorder %s29, 0
    %p376 = por %p374, %p375
    %s378 = sadd.s32 %s377, 1
    %p381 = scmp.eq.s32.totalorder %s23, 1
    %p382 = scmp.ne.s32.totalorder %s377, %s379
    %p383 = scmp.eq.s32.totalorder %s23, 0
    %p384 = por %p382, %p383
    %p385 = scmp.ne.s32.totalorder %s377, %s379
    %p386 = scmp.eq.s32.totalorder %s28, 1
    %p387 = por %p385, %p386
    %p388 = scmp.ne.s32.totalorder %s379, %s380
    %p389 = scmp.eq.s32.totalorder %s28, 0
    %p390 = por %p388, %p389
    %p391 = scmp.ne.s32.totalorder %s379, %s380
    %p392 = scmp.eq.s32.totalorder %s29, 1
    %p393 = por %p391, %p392
    %p395 = scmp.ne.s32.totalorder %s380, %s394
    %p396 = scmp.eq.s32.totalorder %s29, 0
    %p397 = por %p395, %p396
    %s398 = ssub.s32 %s23, %s30
    %p399 = scmp.eq.s32.totalorder %s398, 0
    %s401 = sadd.s32 %s400, 1
    %s402 = scalar_select %p399, %s400, %s401
    %p405 = pneg %p399
    %p406 = scmp.eq.s32.totalorder %s23, 1
    %p407 = por %p405, %p406
    %p408 = scmp.ne.s32.totalorder %s400, %s403
    %p409 = scmp.eq.s32.totalorder %s23, 0
    %p410 = por %p408, %p409
    %p411 = scmp.ne.s32.totalorder %s400, %s403
    %p412 = scmp.eq.s32.totalorder %s28, 1
    %p413 = por %p411, %p412
    %p414 = scmp.ne.s32.totalorder %s403, %s404
    %p415 = scmp.eq.s32.totalorder %s28, 0
    %p416 = por %p414, %p415
    %p417 = scmp.ne.s32.totalorder %s403, %s404
    %p418 = scmp.eq.s32.totalorder %s29, 1
    %p419 = por %p417, %p418
    %p421 = scmp.ne.s32.totalorder %s404, %s420
    %p422 = scmp.eq.s32.totalorder %s29, 0
    %p423 = por %p421, %p422
    %p424 = scmp.le.s32.totalorder 1, %s23
    %p425 = scmp.lt.s32.totalorder %s23, 3
    %p426 = pnand %p424, %p425
    %p427 = pneg %p426
    // Predicated region
    $region9: #{_encode_jit.1} parent=5 // pred_check
      _
    $region10: #{_encode_jit.1} parent=5 // pred_check_branch
      %429 = sbr.rel (%p426) target = $region12
    $region11: #{_encode_jit.1} parent=5 // pred_region
      %s430 = ssub.s32 %s23, 1
      // Predicated region
      $region13: #{_encode_jit.1} parent=11 // pred_check
        %p431 = pneg %p96
      $region14: #{_encode_jit.1} parent=11 // pred_check_branch
        %433 = sbr.rel (%p431) target = $region16
      $region15: #{_encode_jit.1} parent=11 // pred_region
        _
      $region16: #{_encode_jit.1} parent=11 // pred_fallthru
        _
      // Predicated region
      $region17: #{_encode_jit.1} parent=11 // pred_check
        %p434 = pneg %p117
      $region18: #{_encode_jit.1} parent=11 // pred_check_branch
        %436 = sbr.rel (%p434) target = $region20
      $region19: #{_encode_jit.1} parent=11 // pred_region
        _
      $region20: #{_encode_jit.1} parent=11 // pred_fallthru
        _
      // Predicated region
      $region21: #{_encode_jit.1} parent=11 // pred_check
        %p437 = pneg %p138
      $region22: #{_encode_jit.1} parent=11 // pred_check_branch
        %439 = sbr.rel (%p437) target = $region24
      $region23: #{_encode_jit.1} parent=11 // pred_region
        _
      $region24: #{_encode_jit.1} parent=11 // pred_fallthru
        _
      // Predicated region
      $region25: #{_encode_jit.1} parent=11 // pred_check
        %p440 = pneg %p159
      $region26: #{_encode_jit.1} parent=11 // pred_check_branch
        %442 = sbr.rel (%p440) target = $region28
      $region27: #{_encode_jit.1} parent=11 // pred_region
        _
      $region28: #{_encode_jit.1} parent=11 // pred_fallthru
        _
      // Predicated region
      $region29: #{_encode_jit.1} parent=11 // pred_check
        %p443 = pneg %p180
      $region30: #{_encode_jit.1} parent=11 // pred_check_branch
        %445 = sbr.rel (%p443) target = $region32
      $region31: #{_encode_jit.1} parent=11 // pred_region
        _
      $region32: #{_encode_jit.1} parent=11 // pred_fallthru
        _
      // Predicated region
      $region33: #{_encode_jit.1} parent=11 // pred_check
        %p446 = pneg %p201
      $region34: #{_encode_jit.1} parent=11 // pred_check_branch
        %448 = sbr.rel (%p446) target = $region36
      $region35: #{_encode_jit.1} parent=11 // pred_region
        _
      $region36: #{_encode_jit.1} parent=11 // pred_fallthru
        _
      // Predicated region
      $region37: #{_encode_jit.1} parent=11 // pred_check
        %p449 = pneg %p222
      $region38: #{_encode_jit.1} parent=11 // pred_check_branch
        %451 = sbr.rel (%p449) target = $region40
      $region39: #{_encode_jit.1} parent=11 // pred_region
        _
      $region40: #{_encode_jit.1} parent=11 // pred_fallthru
        _
      // Predicated region
      $region41: #{_encode_jit.1} parent=11 // pred_check
        %p452 = pneg %p243
      $region42: #{_encode_jit.1} parent=11 // pred_check_branch
        %454 = sbr.rel (%p452) target = $region44
      $region43: #{_encode_jit.1} parent=11 // pred_region
        _
      $region44: #{_encode_jit.1} parent=11 // pred_fallthru
        _
      // Predicated region
      $region45: #{_encode_jit.1} parent=11 // pred_check
        %p455 = pneg %p264
      $region46: #{_encode_jit.1} parent=11 // pred_check_branch
        %457 = sbr.rel (%p455) target = $region48
      $region47: #{_encode_jit.1} parent=11 // pred_region
        _
      $region48: #{_encode_jit.1} parent=11 // pred_fallthru
        _
      // Predicated region
      $region49: #{_encode_jit.1} parent=11 // pred_check
        %p458 = pneg %p285
      $region50: #{_encode_jit.1} parent=11 // pred_check_branch
        %460 = sbr.rel (%p458) target = $region52
      $region51: #{_encode_jit.1} parent=11 // pred_region
        _
      $region52: #{_encode_jit.1} parent=11 // pred_fallthru
        _
      // Predicated region
      $region53: #{_encode_jit.1} parent=11 // pred_check
        %p461 = pneg %p306
      $region54: #{_encode_jit.1} parent=11 // pred_check_branch
        %463 = sbr.rel (%p461) target = $region56
      $region55: #{_encode_jit.1} parent=11 // pred_region
        _
      $region56: #{_encode_jit.1} parent=11 // pred_fallthru
        _
      // Predicated region
      $region57: #{_encode_jit.1} parent=11 // pred_check
        %p464 = pneg %p327
      $region58: #{_encode_jit.1} parent=11 // pred_check_branch
        %466 = sbr.rel (%p464) target = $region60
      $region59: #{_encode_jit.1} parent=11 // pred_region
        _
      $region60: #{_encode_jit.1} parent=11 // pred_fallthru
        _
      // Predicated region
      $region61: #{_encode_jit.1} parent=11 // pred_check
        %p467 = pneg %p348
      $region62: #{_encode_jit.1} parent=11 // pred_check_branch
        %469 = sbr.rel (%p467) target = $region64
      $region63: #{_encode_jit.1} parent=11 // pred_region
        _
      $region64: #{_encode_jit.1} parent=11 // pred_fallthru
        _
      // Predicated region
      $region65: #{_encode_jit.1} parent=11 // pred_check
        %p470 = pneg %p369
      $region66: #{_encode_jit.1} parent=11 // pred_check_branch
        %472 = sbr.rel (%p470) target = $region68
      $region67: #{_encode_jit.1} parent=11 // pred_region
        _
      $region68: #{_encode_jit.1} parent=11 // pred_fallthru
        _
      // Predicated region
      $region69: #{_encode_jit.1} parent=11 // pred_check
        %p473 = pneg %p390
      $region70: #{_encode_jit.1} parent=11 // pred_check_branch
        %475 = sbr.rel (%p473) target = $region72
      $region71: #{_encode_jit.1} parent=11 // pred_region
        _
      $region72: #{_encode_jit.1} parent=11 // pred_fallthru
        _
    $region12: #{_encode_jit.1} parent=5 // pred_fallthru
      _
    %p476 = scmp.lt.s32.totalorder %s23, 2
    // Predicated region
    $region73: #{_encode_jit.1} parent=5 // pred_check
      %p477 = pneg %p476
    $region74: #{_encode_jit.1} parent=5 // pred_check_branch
      %479 = sbr.rel (%p477) target = $region76
    $region75: #{_encode_jit.1} parent=5 // pred_region
      // Predicated region
      $region77: #{_encode_jit.1} parent=75 // pred_check
        %p480 = pneg %p43
      $region78: #{_encode_jit.1} parent=75 // pred_check_branch
        %482 = sbr.rel (%p480) target = $region80
      $region79: #{_encode_jit.1} parent=75 // pred_region
        %p483 = scmp.lt.s32.totalorder %s23, 1
        %s484 = scalar_select %p483, %s23, 1
        %s485 = smul.addr %s484, 8
        %s486 = smul.addr %s485, 8
        %s487 = scalar_lea.vmem %s0, %s486
      $region80: #{_encode_jit.1} parent=75 // pred_fallthru
        _
      // Predicated region
      $region81: #{_encode_jit.1} parent=75 // pred_check
        %p488 = pneg %p69
      $region82: #{_encode_jit.1} parent=75 // pred_check_branch
        %490 = sbr.rel (%p488) target = $region84
      $region83: #{_encode_jit.1} parent=75 // pred_region
        %p491 = scmp.lt.s32.totalorder %s23, 1
        %s492 = scalar_select %p491, %s23, 1
        %s493 = smul.addr %s492, 4
        %s494 = scalar_lea.vmem %s1, %s493
      $region84: #{_encode_jit.1} parent=75 // pred_fallthru
        _
    $region76: #{_encode_jit.1} parent=5 // pred_fallthru
      _
    %p495 = scmp.le.s32.totalorder 1, %s23
    %p496 = scmp.lt.s32.totalorder %s23, 3
    %p497 = pnand %p495, %p496
    %p498 = pneg %p497
    // Predicated region
    $region85: #{_encode_jit.1} parent=5 // pred_check
      _
    $region86: #{_encode_jit.1} parent=5 // pred_check_branch
      %500 = sbr.rel (%p497) target = $region88
    $region87: #{_encode_jit.1} parent=5 // pred_region
      %s501 = ssub.s32 %s23, 1
      %p502 = scmp.lt.s32.totalorder %s28, 1
      %s503 = scalar_select %p502, %s28, 1
      %s504 = smul.addr %s503, 8
      %s505 = smul.addr %s504, 8
      %s506 = scalar_lea.vmem %s0, %s505
      %p507 = pneg %p49
      %p508 = pneg %p46
      %p509 = scmp.lt.s32.totalorder %s28, 1
      %s510 = scalar_select %p509, %s28, 1
      %s511 = smul.addr %s510, 4
      %s512 = scalar_lea.vmem %s1, %s511
      %p513 = pneg %p75
      %p514 = pneg %p72
      %p515 = pneg %p96
      %p516 = pneg %p93
      %p517 = pneg %p117
      %p518 = pneg %p114
      %p519 = pneg %p138
      %p520 = pneg %p135
      %p521 = pneg %p159
      %p522 = pneg %p156
      %p523 = pneg %p180
      %p524 = pneg %p177
      %p525 = pneg %p201
      %p526 = pneg %p198
      %p527 = pneg %p222
      %p528 = pneg %p219
      %p529 = pneg %p243
      %p530 = pneg %p240
      %p531 = pneg %p264
      %p532 = pneg %p261
      %p533 = pneg %p285
      %p534 = pneg %p282
      %p535 = pneg %p306
      %p536 = pneg %p303
      %p537 = pneg %p327
      %p538 = pneg %p324
      %p539 = pneg %p348
      %p540 = pneg %p345
      %p541 = pneg %p369
      %p542 = pneg %p366
      %p543 = pneg %p390
      %p544 = pneg %p387
      %p545 = pneg %p416
      %p546 = pneg %p413
      %p547 = scmp.lt.s32.totalorder %s28, 1
      %s548 = scalar_select %p547, %s28, 1
      %s549 = smul.addr %s548, 4
      %s550 = scalar_lea.vmem %s17, %s549
      %p551 = scmp.lt.s32.totalorder %s28, 1
      %s552 = scalar_select %p551, %s28, 1
      %s553 = smul.addr %s552, 8
      %s554 = smul.addr %s553, 8
      %s555 = scalar_lea.vmem %s0, %s554
      %p556 = scmp.lt.s32.totalorder %s28, 1
      %s557 = scalar_select %p556, %s28, 1
      %s558 = smul.addr %s557, 4
      %s559 = scalar_lea.vmem %s1, %s558
      %p560 = scmp.lt.s32.totalorder %s28, 1
      %s561 = scalar_select %p560, %s28, 1
      %s562 = smul.addr %s561, 4
      %s563 = scalar_lea.vmem %s17, %s562
      %v565 = vld [vmem:[%s555] sm:$0xff]
      %v566 = vld [vmem:[%s555 + $0x8] sm:$0xff]
      %v567 = vld [vmem:[%s555 + $0x10] sm:$0xff]
      %v568 = vld [vmem:[%s555 + $0x18] sm:$0xff]
      %v569 = vld [vmem:[%s555 + $0x20] sm:$0xff]
      %v570 = vld [vmem:[%s555 + $0x28] sm:$0xff]
      %v571 = vld [vmem:[%s555 + $0x30] sm:$0xff]
      %v572 = vld [vmem:[%s555 + $0x38] sm:$0xff]
      %v573 = vld [vmem:[%s2] sm:$0xff]
      %v574 = vld [vmem:[%s2 + $0x8] sm:$0xf]
      %v575 = vld [vmem:[%s2 + $0xc] sm:$0xff]
      %v576 = vld [vmem:[%s2 + $0x14] sm:$0xf]
      %v577 = vld [vmem:[%s2 + $0x18] sm:$0xff]
      %v578 = vld [vmem:[%s2 + $0x20] sm:$0xf]
      %v579 = vld [vmem:[%s2 + $0x24] sm:$0xff]
      %v580 = vld [vmem:[%s2 + $0x2c] sm:$0xf]
      %v581 = vld [vmem:[%s3] sm:$0xff]
      %v582 = vld [vmem:[%s3 + $0x8] sm:$0xff]
      %v583 = vld [vmem:[%s3 + $0x10] sm:$0xff]
      %v584 = vld [vmem:[%s3 + $0x18] sm:$0xff]
      %v585 = vpack.c.bf16 %v567, %v565
      %v586 = vpack.c.bf16 %v568, %v566
      %v587 = vpack.c.bf16 %v571, %v569
      %v588 = vpack.c.bf16 %v572, %v570
      %591 = vrot.lane.b32.xlu0 %v586, 17
      %v592 = vpop.permute.xlu0 %591
      %593 = vrot.lane.b32.xlu0 %v588, 17
      %v594 = vpop.permute.xlu0 %593
      %597 = vrot.lane.b32.xlu0 %v585, 17
      %v598 = vpop.permute.xlu0 %597
      %599 = vrot.lane.b32.xlu0 %v587, 17
      %v600 = vpop.permute.xlu0 %599
      %vm601 = vcmask 138240
      %v602 = vsel %vm601, %v598, %v592
      %v603 = vsel %vm601, %v600, %v594
      %vm606 = vcmask 138240
      %v609 = vsel %vm606, %v592, %v598
      %v613 = vsel %vm606, %v594, %v600
      %v615 = vld [vmem:[%s13] sm:$0xff]
      %v616 = vld [vmem:[%s13 + $0x8] sm:$0xff]
      %v617 = vld [vmem:[%s13 + $0x10] sm:$0xff]
      %v618 = vld [vmem:[%s13 + $0x18] sm:$0xff]
      %v623 = vunpack.c.l.b16 %v615
      %v624 = vunpack.c.h.b16 %v615
      %v625 = vunpack.c.l.b16 %v616
      %v626 = vunpack.c.h.b16 %v616
      %v627 = vunpack.c.l.b16 %v617
      %v628 = vunpack.c.h.b16 %v617
      %v629 = vunpack.c.l.b16 %v618
      %v630 = vunpack.c.h.b16 %v618
      %v631 = vpack.c.b16 %v625, %v623
      %v632 = vpack.c.b16 %v626, %v624
      %v633 = vpack.c.b16 %v629, %v627
      %v634 = vpack.c.b16 %v630, %v628
      %v639 = vmul.bf16 %v609, %v631
      %v640 = vmul.bf16 %v602, %v632
      %v641 = vmul.bf16 %v613, %v633
      %v642 = vmul.bf16 %v603, %v634
      %643 = vst [vmem:[#allocation2] sm:$0xff] %v639
      %644 = vst [vmem:[#allocation2 + $0x8] sm:$0xff] %v640
      %645 = vst [vmem:[#allocation2 + $0x10] sm:$0xff] %v641
      %646 = vst [vmem:[#allocation2 + $0x18] sm:$0xff] %v642
      %647 = vrot.lane.b32.xlu0 %v586, 16
      %v648 = vpop.permute.xlu0 %647
      %649 = vrot.lane.b32.xlu0 %v588, 16
      %v650 = vpop.permute.xlu0 %649
      %651 = vrot.lane.b32.xlu0 %v585, 16
      %v652 = vpop.permute.xlu0 %651
      %653 = vrot.lane.b32.xlu0 %v587, 16
      %v654 = vpop.permute.xlu0 %653
      %vm655 = vcmask 130048
      %v656 = vsel %vm655, %v652, %v648
      %v657 = vsel %vm655, %v654, %v650
      %vm660 = vcmask 130048
      %v663 = vsel %vm660, %v648, %v652
      %v667 = vsel %vm660, %v650, %v654
      %s669 = scalar_lea.vmem %s13, 32
      %v670 = vld [vmem:[%s669] sm:$0xff]
      %v671 = vld [vmem:[%s669 + $0x8] sm:$0xff]
      %v672 = vld [vmem:[%s669 + $0x10] sm:$0xff]
      %v673 = vld [vmem:[%s669 + $0x18] sm:$0xff]
      %v678 = vunpack.c.l.b16 %v670
      %v679 = vunpack.c.h.b16 %v670
      %v680 = vunpack.c.l.b16 %v671
      %v681 = vunpack.c.h.b16 %v671
      %v682 = vunpack.c.l.b16 %v672
      %v683 = vunpack.c.h.b16 %v672
      %v684 = vunpack.c.l.b16 %v673
      %v685 = vunpack.c.h.b16 %v673
      %v686 = vpack.c.b16 %v680, %v678
      %v687 = vpack.c.b16 %v681, %v679
      %v688 = vpack.c.b16 %v684, %v682
      %v689 = vpack.c.b16 %v685, %v683
      %v694 = vmul.bf16 %v663, %v686
      %v695 = vmul.bf16 %v656, %v687
      %v696 = vmul.bf16 %v667, %v688
      %v697 = vmul.bf16 %v657, %v689
      %698 = vst [vmem:[#allocation2 + $0x20] sm:$0xff] %v694
      %699 = vst [vmem:[#allocation2 + $0x28] sm:$0xff] %v695
      %700 = vst [vmem:[#allocation2 + $0x30] sm:$0xff] %v696
      %701 = vst [vmem:[#allocation2 + $0x38] sm:$0xff] %v697
      %702 = vrot.lane.b32.xlu0 %v586, 15
      %v703 = vpop.permute.xlu0 %702
      %704 = vrot.lane.b32.xlu0 %v588, 15
      %v705 = vpop.permute.xlu0 %704
      %706 = vrot.lane.b32.xlu0 %v585, 15
      %v707 = vpop.permute.xlu0 %706
      %708 = vrot.lane.b32.xlu0 %v587, 15
      %v709 = vpop.permute.xlu0 %708
      %vm710 = vcmask 121856
      %v711 = vsel %vm710, %v707, %v703
      %v712 = vsel %vm710, %v709, %v705
      %vm715 = vcmask 121856
      %v718 = vsel %vm715, %v703, %v707
      %v722 = vsel %vm715, %v705, %v709
      %s724 = scalar_lea.vmem %s13, 64
      %v725 = vld [vmem:[%s724] sm:$0xff]
      %v726 = vld [vmem:[%s724 + $0x8] sm:$0xff]
      %v727 = vld [vmem:[%s724 + $0x10] sm:$0xff]
      %v728 = vld [vmem:[%s724 + $0x18] sm:$0xff]
      %v733 = vunpack.c.l.b16 %v725
      %v734 = vunpack.c.h.b16 %v725
      %v735 = vunpack.c.l.b16 %v726
      %v736 = vunpack.c.h.b16 %v726
      %v737 = vunpack.c.l.b16 %v727
      %v738 = vunpack.c.h.b16 %v727
      %v739 = vunpack.c.l.b16 %v728
      %v740 = vunpack.c.h.b16 %v728
      %v741 = vpack.c.b16 %v735, %v733
      %v742 = vpack.c.b16 %v736, %v734
      %v743 = vpack.c.b16 %v739, %v737
      %v744 = vpack.c.b16 %v740, %v738
      %v749 = vmul.bf16 %v718, %v741
      %v750 = vmul.bf16 %v711, %v742
      %v751 = vmul.bf16 %v722, %v743
      %v752 = vmul.bf16 %v712, %v744
      %753 = vst [vmem:[#allocation2 + $0x40] sm:$0xff] %v749
      %754 = vst [vmem:[#allocation2 + $0x48] sm:$0xff] %v750
      %755 = vst [vmem:[#allocation2 + $0x50] sm:$0xff] %v751
      %756 = vst [vmem:[#allocation2 + $0x58] sm:$0xff] %v752
      %757 = vrot.lane.b32.xlu0 %v586, 1
      %v758 = vpop.permute.xlu0 %757
      %759 = vrot.lane.b32.xlu0 %v588, 1
      %v760 = vpop.permute.xlu0 %759
      %761 = vrot.lane.b32.xlu0 %v585, 1
      %v762 = vpop.permute.xlu0 %761
      %763 = vrot.lane.b32.xlu0 %v587, 1
      %v764 = vpop.permute.xlu0 %763
      %vm765 = vcmask 7168
      %v766 = vsel %vm765, %v762, %v758
      %v767 = vsel %vm765, %v764, %v760
      %vm770 = vcmask 7168
      %v773 = vsel %vm770, %v758, %v762
      %v777 = vsel %vm770, %v760, %v764
      %s779 = scalar_lea.vmem %s13, 96
      %v780 = vld [vmem:[%s779] sm:$0xff]
      %v781 = vld [vmem:[%s779 + $0x8] sm:$0xff]
      %v782 = vld [vmem:[%s779 + $0x10] sm:$0xff]
      %v783 = vld [vmem:[%s779 + $0x18] sm:$0xff]
      %v788 = vunpack.c.l.b16 %v780
      %v789 = vunpack.c.h.b16 %v780
      %v790 = vunpack.c.l.b16 %v781
      %v791 = vunpack.c.h.b16 %v781
      %v792 = vunpack.c.l.b16 %v782
      %v793 = vunpack.c.h.b16 %v782
      %v794 = vunpack.c.l.b16 %v783
      %v795 = vunpack.c.h.b16 %v783
      %v796 = vpack.c.b16 %v790, %v788
      %v797 = vpack.c.b16 %v791, %v789
      %v798 = vpack.c.b16 %v794, %v792
      %v799 = vpack.c.b16 %v795, %v793
      %v804 = vmul.bf16 %v773, %v796
      %v805 = vmul.bf16 %v766, %v797
      %v806 = vmul.bf16 %v777, %v798
      %v807 = vmul.bf16 %v767, %v799
      %808 = vst [vmem:[#allocation2 + $0x60] sm:$0xff] %v804
      %809 = vst [vmem:[#allocation2 + $0x68] sm:$0xff] %v805
      %810 = vst [vmem:[#allocation2 + $0x70] sm:$0xff] %v806
      %811 = vst [vmem:[#allocation2 + $0x78] sm:$0xff] %v807
      %812 = vst [vmem:[#allocation2 + $0x80] sm:$0xff] %v585
      %813 = vst [vmem:[#allocation2 + $0x88] sm:$0xff] %v586
      %814 = vst [vmem:[#allocation2 + $0x90] sm:$0xff] %v587
      %815 = vst [vmem:[#allocation2 + $0x98] sm:$0xff] %v588
      %816 = vrot.lane.b32.xlu0 %v585, 127
      %v817 = vpop.permute.xlu0 %816
      %818 = vrot.lane.b32.xlu0 %v586, 127
      %v819 = vpop.permute.xlu0 %818
      %820 = vrot.lane.b32.xlu0 %v587, 127
      %v821 = vpop.permute.xlu0 %820
      %822 = vrot.lane.b32.xlu0 %v588, 127
      %v823 = vpop.permute.xlu0 %822
      %vm824 = vcmask 1039360
      %v825 = vsel %vm824, %v817, %v819
      %v826 = vsel %vm824, %v821, %v823
      %vm829 = vcmask 1039360
      %v832 = vsel %vm829, %v819, %v817
      %v836 = vsel %vm829, %v823, %v821
      %s838 = scalar_lea.vmem %s13, 160
      %v839 = vld [vmem:[%s838] sm:$0xff]
      %v840 = vld [vmem:[%s838 + $0x8] sm:$0xff]
      %v841 = vld [vmem:[%s838 + $0x10] sm:$0xff]
      %v842 = vld [vmem:[%s838 + $0x18] sm:$0xff]
      %v847 = vunpack.c.l.b16 %v839
      %v848 = vunpack.c.h.b16 %v839
      %v849 = vunpack.c.l.b16 %v840
      %v850 = vunpack.c.h.b16 %v840
      %v851 = vunpack.c.l.b16 %v841
      %v852 = vunpack.c.h.b16 %v841
      %v853 = vunpack.c.l.b16 %v842
      %v854 = vunpack.c.h.b16 %v842
      %v855 = vpack.c.b16 %v849, %v847
      %v856 = vpack.c.b16 %v850, %v848
      %v857 = vpack.c.b16 %v853, %v851
      %v858 = vpack.c.b16 %v854, %v852
      %v863 = vmul.bf16 %v825, %v855
      %v864 = vmul.bf16 %v832, %v856
      %v865 = vmul.bf16 %v826, %v857
      %v866 = vmul.bf16 %v836, %v858
      %867 = vst [vmem:[#allocation2 + $0xa0] sm:$0xff] %v863
      %868 = vst [vmem:[#allocation2 + $0xa8] sm:$0xff] %v864
      %869 = vst [vmem:[#allocation2 + $0xb0] sm:$0xff] %v865
      %870 = vst [vmem:[#allocation2 + $0xb8] sm:$0xff] %v866
      %871 = vrot.lane.b32.xlu0 %v585, 113
      %v872 = vpop.permute.xlu0 %871
      %873 = vrot.lane.b32.xlu0 %v586, 113
      %v874 = vpop.permute.xlu0 %873
      %875 = vrot.lane.b32.xlu0 %v587, 113
      %v876 = vpop.permute.xlu0 %875
      %877 = vrot.lane.b32.xlu0 %v588, 113
      %v878 = vpop.permute.xlu0 %877
      %vm879 = vcmask 924672
      %v880 = vsel %vm879, %v872, %v874
      %v881 = vsel %vm879, %v876, %v878
      %vm884 = vcmask 924672
      %v887 = vsel %vm884, %v874, %v872
      %v891 = vsel %vm884, %v878, %v876
      %s893 = scalar_lea.vmem %s13, 192
      %v894 = vld [vmem:[%s893] sm:$0xff]
      %v895 = vld [vmem:[%s893 + $0x8] sm:$0xff]
      %v896 = vld [vmem:[%s893 + $0x10] sm:$0xff]
      %v897 = vld [vmem:[%s893 + $0x18] sm:$0xff]
      %v902 = vunpack.c.l.b16 %v894
      %v903 = vunpack.c.h.b16 %v894
      %v904 = vunpack.c.l.b16 %v895
      %v905 = vunpack.c.h.b16 %v895
      %v906 = vunpack.c.l.b16 %v896
      %v907 = vunpack.c.h.b16 %v896
      %v908 = vunpack.c.l.b16 %v897
      %v909 = vunpack.c.h.b16 %v897
      %v910 = vpack.c.b16 %v904, %v902
      %v911 = vpack.c.b16 %v905, %v903
      %v912 = vpack.c.b16 %v908, %v906
      %v913 = vpack.c.b16 %v909, %v907
      %v918 = vmul.bf16 %v880, %v910
      %v919 = vmul.bf16 %v887, %v911
      %v920 = vmul.bf16 %v881, %v912
      %v921 = vmul.bf16 %v891, %v913
      %922 = vst [vmem:[#allocation2 + $0xc0] sm:$0xff] %v918
      %923 = vst [vmem:[#allocation2 + $0xc8] sm:$0xff] %v919
      %924 = vst [vmem:[#allocation2 + $0xd0] sm:$0xff] %v920
      %925 = vst [vmem:[#allocation2 + $0xd8] sm:$0xff] %v921
      %926 = vrot.lane.b32.xlu0 %v585, 112
      %v927 = vpop.permute.xlu0 %926
      %928 = vrot.lane.b32.xlu0 %v586, 112
      %v929 = vpop.permute.xlu0 %928
      %930 = vrot.lane.b32.xlu0 %v587, 112
      %v931 = vpop.permute.xlu0 %930
      %932 = vrot.lane.b32.xlu0 %v588, 112
      %v933 = vpop.permute.xlu0 %932
      %vm934 = vcmask 916480
      %v935 = vsel %vm934, %v927, %v929
      %v936 = vsel %vm934, %v931, %v933
      %vm939 = vcmask 916480
      %v942 = vsel %vm939, %v929, %v927
      %v946 = vsel %vm939, %v933, %v931
      %s948 = scalar_lea.vmem %s13, 224
      %v949 = vld [vmem:[%s948] sm:$0xff]
      %v950 = vld [vmem:[%s948 + $0x8] sm:$0xff]
      %v951 = vld [vmem:[%s948 + $0x10] sm:$0xff]
      %v952 = vld [vmem:[%s948 + $0x18] sm:$0xff]
      %v957 = vunpack.c.l.b16 %v949
      %v958 = vunpack.c.h.b16 %v949
      %v959 = vunpack.c.l.b16 %v950
      %v960 = vunpack.c.h.b16 %v950
      %v961 = vunpack.c.l.b16 %v951
      %v962 = vunpack.c.h.b16 %v951
      %v963 = vunpack.c.l.b16 %v952
      %v964 = vunpack.c.h.b16 %v952
      %v965 = vpack.c.b16 %v959, %v957
      %v966 = vpack.c.b16 %v960, %v958
      %v967 = vpack.c.b16 %v963, %v961
      %v968 = vpack.c.b16 %v964, %v962
      %v973 = vmul.bf16 %v935, %v965
      %v974 = vmul.bf16 %v942, %v966
      %v975 = vmul.bf16 %v936, %v967
      %v976 = vmul.bf16 %v946, %v968
      %977 = vst [vmem:[#allocation2 + $0xe0] sm:$0xff] %v973
      %978 = vst [vmem:[#allocation2 + $0xe8] sm:$0xff] %v974
      %979 = vst [vmem:[#allocation2 + $0xf0] sm:$0xff] %v975
      %980 = vst [vmem:[#allocation2 + $0xf8] sm:$0xff] %v976
      %981 = vrot.lane.b32.xlu0 %v585, 111
      %v982 = vpop.permute.xlu0 %981
      %983 = vrot.lane.b32.xlu0 %v586, 111
      %v984 = vpop.permute.xlu0 %983
      %985 = vrot.lane.b32.xlu0 %v587, 111
      %v986 = vpop.permute.xlu0 %985
      %987 = vrot.lane.b32.xlu0 %v588, 111
      %v988 = vpop.permute.xlu0 %987
      %vm989 = vcmask 908288
      %v990 = vsel %vm989, %v982, %v984
      %v991 = vsel %vm989, %v986, %v988
      %vm994 = vcmask 908288
      %v997 = vsel %vm994, %v984, %v982
      %v1001 = vsel %vm994, %v988, %v986
      %s1003 = scalar_lea.vmem %s13, 256
      %v1004 = vld [vmem:[%s1003] sm:$0xff]
      %v1005 = vld [vmem:[%s1003 + $0x8] sm:$0xff]
      %v1006 = vld [vmem:[%s1003 + $0x10] sm:$0xff]
      %v1007 = vld [vmem:[%s1003 + $0x18] sm:$0xff]
      %v1012 = vunpack.c.l.b16 %v1004
      %v1013 = vunpack.c.h.b16 %v1004
      %v1014 = vunpack.c.l.b16 %v1005
      %v1015 = vunpack.c.h.b16 %v1005
      %v1016 = vunpack.c.l.b16 %v1006
      %v1017 = vunpack.c.h.b16 %v1006
      %v1018 = vunpack.c.l.b16 %v1007
      %v1019 = vunpack.c.h.b16 %v1007
      %v1020 = vpack.c.b16 %v1014, %v1012
      %v1021 = vpack.c.b16 %v1015, %v1013
      %v1022 = vpack.c.b16 %v1018, %v1016
      %v1023 = vpack.c.b16 %v1019, %v1017
      %v1028 = vmul.bf16 %v990, %v1020
      %v1029 = vmul.bf16 %v997, %v1021
      %v1030 = vmul.bf16 %v991, %v1022
      %v1031 = vmul.bf16 %v1001, %v1023
      %1032 = vst [vmem:[#allocation2 + $0x100] sm:$0xff] %v1028
      %1033 = vst [vmem:[#allocation2 + $0x108] sm:$0xff] %v1029
      %1034 = vst [vmem:[#allocation2 + $0x110] sm:$0xff] %v1030
      %1035 = vst [vmem:[#allocation2 + $0x118] sm:$0xff] %v1031
      %v1036 = vld [vmem:[#allocation2] sm:$0xff]
      %v1037 = vld [vmem:[#allocation2 + $0x8] sm:$0xff]
      %v1038 = vld [vmem:[#allocation2 + $0x10] sm:$0xff]
      %v1039 = vld [vmem:[#allocation2 + $0x18] sm:$0xff]
      %v1040 = vld [vmem:[#allocation2 + $0x20] sm:$0xff]
      %v1041 = vld [vmem:[#allocation2 + $0x28] sm:$0xff]
      %v1042 = vld [vmem:[#allocation2 + $0x30] sm:$0xff]
      %v1043 = vld [vmem:[#allocation2 + $0x38] sm:$0xff]
      %v1044 = vld [vmem:[#allocation2 + $0x40] sm:$0xff]
      %v1045 = vld [vmem:[#allocation2 + $0x48] sm:$0xff]
      %v1046 = vld [vmem:[#allocation2 + $0x50] sm:$0xff]
      %v1047 = vld [vmem:[#allocation2 + $0x58] sm:$0xff]
      %v1048 = vld [vmem:[#allocation2 + $0x60] sm:$0xff]
      %v1049 = vld [vmem:[#allocation2 + $0x68] sm:$0xff]
      %v1050 = vld [vmem:[#allocation2 + $0x70] sm:$0xff]
      %v1051 = vld [vmem:[#allocation2 + $0x78] sm:$0xff]
      %v1052 = vld [vmem:[#allocation2 + $0x80] sm:$0xff]
      %v1053 = vld [vmem:[#allocation2 + $0x88] sm:$0xff]
      %v1054 = vld [vmem:[#allocation2 + $0x90] sm:$0xff]
      %v1055 = vld [vmem:[#allocation2 + $0x98] sm:$0xff]
      %v1056 = vld [vmem:[#allocation2 + $0xa0] sm:$0xff]
      %v1057 = vld [vmem:[#allocation2 + $0xa8] sm:$0xff]
      %v1058 = vld [vmem:[#allocation2 + $0xb0] sm:$0xff]
      %v1059 = vld [vmem:[#allocation2 + $0xb8] sm:$0xff]
      %v1060 = vld [vmem:[#allocation2 + $0xc0] sm:$0xff]
      %v1061 = vld [vmem:[#allocation2 + $0xc8] sm:$0xff]
      %v1062 = vld [vmem:[#allocation2 + $0xd0] sm:$0xff]
      %v1063 = vld [vmem:[#allocation2 + $0xd8] sm:$0xff]
      %v1064 = vld [vmem:[#allocation2 + $0xe0] sm:$0xff]
      %v1065 = vld [vmem:[#allocation2 + $0xe8] sm:$0xff]
      %v1066 = vld [vmem:[#allocation2 + $0xf0] sm:$0xff]
      %v1067 = vld [vmem:[#allocation2 + $0xf8] sm:$0xff]
      %v1068 = vld [vmem:[#allocation2 + $0x100] sm:$0xff]
      %v1069 = vld [vmem:[#allocation2 + $0x108] sm:$0xff]
      %v1070 = vld [vmem:[#allocation2 + $0x110] sm:$0xff]
      %v1071 = vld [vmem:[#allocation2 + $0x118] sm:$0xff]
      %1073 = vset.pattern.permute.xlu0 0
      %1074 = vperm.xlu0 %1073, %v581
      %v1075 = vpop.permute.xlu0 %1074
      %1078 = vset.pattern.permute.xlu0 0
      %1079 = vperm.xlu0 %1078, %v582
      %v1080 = vpop.permute.xlu0 %1079
      %1083 = vset.pattern.permute.xlu0 0
      %1084 = vperm.xlu0 %1083, %v583
      %v1085 = vpop.permute.xlu0 %1084
      %1088 = vset.pattern.permute.xlu0 0
      %1089 = vperm.xlu0 %1088, %v584
      %v1090 = vpop.permute.xlu0 %1089
      %v1100 = vunpack.c.l.b16 %v573
      %v1101 = vunpack.c.h.b16 %v573
      %v1102 = vunpack.c.l.b16 %v574
      %v1103 = vunpack.c.l.b16 %v575
      %v1104 = vunpack.c.h.b16 %v575
      %v1105 = vunpack.c.l.b16 %v576
      %v1106 = vunpack.c.l.b16 %v577
      %v1107 = vunpack.c.h.b16 %v577
      %v1108 = vunpack.c.l.b16 %v578
      %v1109 = vunpack.c.l.b16 %v579
      %v1110 = vunpack.c.h.b16 %v579
      %v1111 = vunpack.c.l.b16 %v580
      %v1112 = vpack.c.b16 %v1103, %v1100
      %v1113 = vpack.c.b16 %v1104, %v1101
      %v1114 = vpack.c.b16 %v1105, %v1102
      %v1115 = vpack.c.b16 %v1109, %v1106
      %v1116 = vpack.c.b16 %v1110, %v1107
      %v1117 = vpack.c.b16 %v1111, %v1108
      %vm1122 = vcmask 261120
      %v1124 = vsel %vm1122, %v1114, 0
      %v1127 = vsel %vm1122, %v1117, 0
      %1129 = vmatprep.subr.bf16.mxu0 %v1037
      %1130 = vmatpush1.bf16.msra.mxu0 %v1036
      %1131 = vmatprep.subr.bf16.mxu0 %v1039
      %1132 = vmatpush1.bf16.msra.mxu0 %v1038
      %1133 = vmatprep.subr.bf16.mxu0 %v1041
      %1134 = vmatpush1.bf16.msra.mxu0 %v1040
      %1135 = vmatprep.subr.bf16.mxu0 %v1043
      %1136 = vmatpush1.bf16.msra.mxu0 %v1042
      %1137 = vmatprep.subr.bf16.mxu0 %v1045
      %1138 = vmatpush1.bf16.msra.mxu0 %v1044
      %1139 = vmatprep.subr.bf16.mxu0 %v1047
      %1140 = vmatpush1.bf16.msra.mxu0 %v1046
      %1141 = vmatprep.subr.bf16.mxu0 %v1049
      %1142 = vmatpush1.bf16.msra.mxu0 %v1048
      %1143 = vmatprep.subr.bf16.mxu0 %v1051
      %1144 = vmatpush1.bf16.msra.mxu0 %v1050
      %1145 = vmatprep.subr.bf16.mxu0 %v1053
      %1146 = vmatpush1.bf16.msra.mxu0 %v1052
      %1147 = vmatprep.subr.bf16.mxu0 %v1055
      %1148 = vmatpush1.bf16.msra.mxu0 %v1054
      %1149 = vmatprep.subr.bf16.mxu0 %v1057
      %1150 = vmatpush1.bf16.msra.mxu0 %v1056
      %1151 = vmatprep.subr.bf16.mxu0 %v1059
      %1152 = vmatpush1.bf16.msra.mxu0 %v1058
      %1153 = vmatprep.subr.bf16.mxu0 %v1061
      %1154 = vmatpush1.bf16.msra.mxu0 %v1060
      %1155 = vmatprep.subr.bf16.mxu0 %v1063
      %1156 = vmatpush1.bf16.msra.mxu0 %v1062
      %1157 = vmatprep.subr.bf16.mxu0 %v1065
      %1158 = vmatpush1.bf16.msra.mxu0 %v1064
      %1159 = vmatprep.subr.bf16.mxu0 %v1067
      %1160 = vmatpush1.bf16.msra.mxu0 %v1066
      %1161 = vmatprep.mubr.bf16.mxu0 %v1113
      %1162 = vmatmul.mubr.bf16.gmra.mrb[0].mxu0 %v1112
      %v1163 = vpop.f32.mrb[0].mxu0
      %v1164 = vadd.f32 %v1075, %v1163
      %v1165 = vpop.f32.mrb[0].mxu0
      %v1166 = vadd.f32 %v1075, %v1165
      %v1167 = vpop.f32.mrb[0].mxu0
      %v1168 = vadd.f32 %v1080, %v1167
      %v1169 = vpop.f32.mrb[0].mxu0
      %v1170 = vadd.f32 %v1080, %v1169
      %1171 = vmatprep.mubr.bf16.mxu0 %v1116
      %1172 = vmatmul.mubr.bf16.gmra.mrb[0].mxu0 %v1115
      %v1173 = vpop.f32.mrb[0].mxu0
      %v1174 = vadd.f32 %v1085, %v1173
      %v1175 = vpop.f32.mrb[0].mxu0
      %v1176 = vadd.f32 %v1085, %v1175
      %v1177 = vpop.f32.mrb[0].mxu0
      %v1178 = vadd.f32 %v1090, %v1177
      %v1179 = vpop.f32.mrb[0].mxu0
      %v1180 = vadd.f32 %v1090, %v1179
      %1181 = vdwg.mxu0
      %1182 = vmatprep.subr.bf16.mxu0 %v1069
      %1183 = vmatpush1.bf16.msra.mxu0 %v1068
      %1184 = vmatprep.subr.bf16.mxu0 %v1071
      %1185 = vmatpush1.bf16.msra.mxu0 %v1070
      %1186 = vmatprep.subr.bf16.mxu0 0
      %1187 = vmatpush1.bf16.msra.mxu0 0
      %1188 = vmatprep.subr.bf16.mxu0 0
      %1189 = vmatpush1.bf16.msra.mxu0 0
      %1190 = vmatprep.subr.bf16.mxu0 0
      %1191 = vmatpush1.bf16.msra.mxu0 0
      %1192 = vmatprep.subr.bf16.mxu0 0
      %1193 = vmatpush1.bf16.msra.mxu0 0
      %1194 = vmatprep.subr.bf16.mxu0 0
      %1195 = vmatpush1.bf16.msra.mxu0 0
      %1196 = vmatprep.subr.bf16.mxu0 0
      %1197 = vmatpush1.bf16.msra.mxu0 0
      %1198 = vmatprep.subr.bf16.mxu0 0
      %1199 = vmatpush1.bf16.msra.mxu0 0
      %1200 = vmatprep.subr.bf16.mxu0 0
      %1201 = vmatpush1.bf16.msra.mxu0 0
      %1202 = vmatprep.subr.bf16.mxu0 0
      %1203 = vmatpush1.bf16.msra.mxu0 0
      %1204 = vmatprep.subr.bf16.mxu0 0
      %1205 = vmatpush1.bf16.msra.mxu0 0
      %1206 = vmatprep.subr.bf16.mxu0 0
      %1207 = vmatpush1.bf16.msra.mxu0 0
      %1208 = vmatprep.subr.bf16.mxu0 0
      %1209 = vmatpush1.bf16.msra.mxu0 0
      %1210 = vmatprep.subr.bf16.mxu0 0
      %1211 = vmatpush1.bf16.msra.mxu0 0
      %1212 = vmatprep.subr.bf16.mxu0 0
      %1213 = vmatpush1.bf16.msra.mxu0 0
      %1214 = vmatprep.mubr.bf16.mxu0 0
      %1215 = vmatmul.mubr.bf16.gmra.mrb[0].mxu0 %v1124
      %v1216 = vpop.f32.mrb[0].mxu0
      %v1217 = vadd.f32 %v1164, %v1216
      %v1218 = vpop.f32.mrb[0].mxu0
      %v1219 = vadd.f32 %v1166, %v1218
      %v1220 = vpop.f32.mrb[0].mxu0
      %v1221 = vadd.f32 %v1168, %v1220
      %v1222 = vpop.f32.mrb[0].mxu0
      %v1223 = vadd.f32 %v1170, %v1222
      %1224 = vmatprep.mubr.bf16.mxu0 0
      %1225 = vmatmul.mubr.bf16.gmra.mrb[0].mxu0 %v1127
      %v1226 = vpop.f32.mrb[0].mxu0
      %v1227 = vadd.f32 %v1174, %v1226
      %v1228 = vpop.f32.mrb[0].mxu0
      %v1229 = vadd.f32 %v1176, %v1228
      %v1230 = vpop.f32.mrb[0].mxu0
      %v1231 = vadd.f32 %v1178, %v1230
      %v1232 = vpop.f32.mrb[0].mxu0
      %v1233 = vadd.f32 %v1180, %v1232
      %1234 = vdwg.mxu0
      %v1235 = vld [vmem:[%s6] sm:$0xff]
      %v1236 = vld [vmem:[%s6 + $0x8] sm:$0xff]
      %v1237 = vld [vmem:[%s6 + $0x10] sm:$0xff]
      %v1238 = vld [vmem:[%s6 + $0x18] sm:$0xff]
      %v1239 = vld [vmem:[%s7] sm:$0xff]
      %v1240 = vld [vmem:[%s7 + $0x8] sm:$0xff]
      %v1241 = vld [vmem:[%s7 + $0x10] sm:$0xff]
      %v1242 = vld [vmem:[%s7 + $0x18] sm:$0xff]
      %v1243 = vld [vmem:[%s12] sm:$0xff]
      %v1244 = vld [vmem:[%s12 + $0x8] sm:$0xff]
      %v1245 = vld [vmem:[%s12 + $0x10] sm:$0xff]
      %v1246 = vld [vmem:[%s12 + $0x18] sm:$0xff]
      %v1248 = vsel %vm1122, %v1243, 0
      %v1251 = vsel %vm1122, %v1244, 0
      %v1254 = vsel %vm1122, %v1245, 0
      %v1257 = vsel %vm1122, %v1246, 0
      %1259 = vmatprep.subr.mxu0 %v1219
      %1260 = vmatpush1.msra.mxu0 %v1217
      %1261 = vmatprep.subr.mxu0 %v1223
      %1262 = vmatpush1.msra.mxu0 %v1221
      %1263 = vmatprep.subr.mxu0 %v1229
      %1264 = vmatpush1.msra.mxu0 %v1227
      %1265 = vmatprep.subr.mxu0 %v1233
      %1266 = vmatpush1.msra.mxu0 %v1231
      %1267 = vmatprep.subr.mxu0 0.0
      %1268 = vmatpush1.msra.mxu0 0.0
      %1269 = vmatprep.subr.mxu0 0.0
      %1270 = vmatpush1.msra.mxu0 0.0
      %1271 = vmatprep.subr.mxu0 0.0
      %1272 = vmatpush1.msra.mxu0 0.0
      %1273 = vmatprep.subr.mxu0 0.0
      %1274 = vmatpush1.msra.mxu0 0.0
      %1275 = vmatprep.subr.mxu0 0.0
      %1276 = vmatpush1.msra.mxu0 0.0
      %1277 = vmatprep.subr.mxu0 0.0
      %1278 = vmatpush1.msra.mxu0 0.0
      %1279 = vmatprep.subr.mxu0 0.0
      %1280 = vmatpush1.msra.mxu0 0.0
      %1281 = vmatprep.subr.mxu0 0.0
      %1282 = vmatpush1.msra.mxu0 0.0
      %1283 = vmatprep.subr.mxu0 0.0
      %1284 = vmatpush1.msra.mxu0 0.0
      %1285 = vmatprep.subr.mxu0 0.0
      %1286 = vmatpush1.msra.mxu0 0.0
      %1287 = vmatprep.subr.mxu0 0.0
      %1288 = vmatpush1.msra.mxu0 0.0
      %1289 = vmatprep.subr.mxu0 0.0
      %1290 = vmatpush1.msra.mxu0 0.0
      %1291 = vmatprep.subr.mxu0 0.0
      %1292 = vmatpush1.msra.mxu0 0.0
      %1293 = vmatprep.subr.mxu0 0.0
      %1294 = vmatpush1.msra.mxu0 0.0
      %1295 = vmatprep.subr.mxu0 0.0
      %1296 = vmatpush1.msra.mxu0 0.0
      %1297 = vmatprep.subr.mxu0 0.0
      %1298 = vmatpush1.msra.mxu0 0.0
      %1299 = vmatprep.subr.mxu0 0.0
      %1300 = vmatpush1.msra.mxu0 0.0
      %1301 = vmatprep.subr.mxu0 0.0
      %1302 = vmatpush1.msra.mxu0 0.0
      %1303 = vmatprep.subr.mxu0 0.0
      %1304 = vmatpush1.msra.mxu0 0.0
      %1305 = vmatprep.subr.mxu0 0.0
      %1306 = vmatpush1.msra.mxu0 0.0
      %1307 = vmatprep.subr.mxu0 0.0
      %1308 = vmatpush1.msra.mxu0 0.0
      %1309 = vmatprep.subr.mxu0 0.0
      %1310 = vmatpush1.msra.mxu0 0.0
      %1311 = vmatprep.subr.mxu0 0.0
      %1312 = vmatpush1.msra.mxu0 0.0
      %1313 = vmatprep.subr.mxu0 0.0
      %1314 = vmatpush1.msra.mxu0 0.0
      %1315 = vmatprep.subr.mxu0 0.0
      %1316 = vmatpush1.msra.mxu0 0.0
      %1317 = vmatprep.subr.mxu0 0.0
      %1318 = vmatpush1.msra.mxu0 0.0
      %1319 = vmatprep.subr.mxu0 0.0
      %1320 = vmatpush1.msra.mxu0 0.0
      %1321 = vmatprep.subr.mxu0 0.0
      %1322 = vmatpush1.msra.mxu0 0.0
      %1323 = vmatprep.mubr.f32.mxu0 0.0
      %1324 = vmatmul.mubr.f32.gmra.mrb[0].mxu0 %v1248
      %v1325 = vpop.f32.mrb[0].mxu0
      %v1326 = vadd.f32 0.0, %v1325
      %v1327 = vpop.f32.mrb[0].mxu0
      %v1328 = vadd.f32 0.0, %v1327
      %1329 = vmatprep.mubr.f32.mxu0 0.0
      %1330 = vmatmul.mubr.f32.gmra.mrb[0].mxu0 %v1251
      %v1331 = vpop.f32.mrb[0].mxu0
      %v1332 = vadd.f32 0.0, %v1331
      %v1333 = vpop.f32.mrb[0].mxu0
      %v1334 = vadd.f32 0.0, %v1333
      %1335 = vmatprep.mubr.f32.mxu0 0.0
      %1336 = vmatmul.mubr.f32.gmra.mrb[0].mxu0 %v1254
      %v1337 = vpop.f32.mrb[0].mxu0
      %v1338 = vadd.f32 0.0, %v1337
      %v1339 = vpop.f32.mrb[0].mxu0
      %v1340 = vadd.f32 0.0, %v1339
      %1341 = vmatprep.mubr.f32.mxu0 0.0
      %1342 = vmatmul.mubr.f32.gmra.mrb[0].mxu0 %v1257
      %v1343 = vpop.f32.mrb[0].mxu0
      %v1344 = vadd.f32 0.0, %v1343
      %v1345 = vpop.f32.mrb[0].mxu0
      %v1346 = vadd.f32 0.0, %v1345
      %1347 = vdwg.mxu0
      %v1348 = vadd.f32 %v1326, %v1328
      %1349 = vadd.xlane.f32.xlu0 %v1348
      %v1350 = vpop.xlane.xlu0 %1349
      %v1351 = vadd.f32 %v1332, %v1334
      %1352 = vadd.xlane.f32.xlu0 %v1351
      %v1353 = vpop.xlane.xlu0 %1352
      %v1354 = vadd.f32 %v1338, %v1340
      %1355 = vadd.xlane.f32.xlu0 %v1354
      %v1356 = vpop.xlane.xlu0 %1355
      %v1357 = vadd.f32 %v1344, %v1346
      %1358 = vadd.xlane.f32.xlu0 %v1357
      %v1359 = vpop.xlane.xlu0 %1358
      %v1360 = vrcp.pop 1024.0
      %v1361 = vmul.f32 %v1350, %v1360
      %v1362 = vmul.f32 %v1353, %v1360
      %v1363 = vmul.f32 %v1356, %v1360
      %v1364 = vmul.f32 %v1359, %v1360
      %v1365 = vsub.f32 %v1217, %v1361
      %v1366 = vsub.f32 %v1219, %v1361
      %v1367 = vsub.f32 %v1221, %v1362
      %v1368 = vsub.f32 %v1223, %v1362
      %v1369 = vsub.f32 %v1227, %v1363
      %v1370 = vsub.f32 %v1229, %v1363
      %v1371 = vsub.f32 %v1231, %v1364
      %v1372 = vsub.f32 %v1233, %v1364
      %v1373 = vmul.f32 %v1365, %v1365
      %v1374 = vmul.f32 %v1366, %v1366
      %v1375 = vmul.f32 %v1367, %v1367
      %v1376 = vmul.f32 %v1368, %v1368
      %v1377 = vmul.f32 %v1369, %v1369
      %v1378 = vmul.f32 %v1370, %v1370
      %v1379 = vmul.f32 %v1371, %v1371
      %v1380 = vmul.f32 %v1372, %v1372
      %1381 = vmatprep.subr.mxu0 %v1374
      %1382 = vmatpush1.msra.mxu0 %v1373
      %1383 = vmatprep.subr.mxu0 %v1376
      %1384 = vmatpush1.msra.mxu0 %v1375
      %1385 = vmatprep.subr.mxu0 %v1378
      %1386 = vmatpush1.msra.mxu0 %v1377
      %1387 = vmatprep.subr.mxu0 %v1380
      %1388 = vmatpush1.msra.mxu0 %v1379
      %1389 = vmatprep.subr.mxu0 0.0
      %1390 = vmatpush1.msra.mxu0 0.0
      %1391 = vmatprep.subr.mxu0 0.0
      %1392 = vmatpush1.msra.mxu0 0.0
      %1393 = vmatprep.subr.mxu0 0.0
      %1394 = vmatpush1.msra.mxu0 0.0
      %1395 = vmatprep.subr.mxu0 0.0
      %1396 = vmatpush1.msra.mxu0 0.0
      %1397 = vmatprep.subr.mxu0 0.0
      %1398 = vmatpush1.msra.mxu0 0.0
      %1399 = vmatprep.subr.mxu0 0.0
      %1400 = vmatpush1.msra.mxu0 0.0
      %1401 = vmatprep.subr.mxu0 0.0
      %1402 = vmatpush1.msra.mxu0 0.0
      %1403 = vmatprep.subr.mxu0 0.0
      %1404 = vmatpush1.msra.mxu0 0.0
      %1405 = vmatprep.subr.mxu0 0.0
      %1406 = vmatpush1.msra.mxu0 0.0
      %1407 = vmatprep.subr.mxu0 0.0
      %1408 = vmatpush1.msra.mxu0 0.0
      %1409 = vmatprep.subr.mxu0 0.0
      %1410 = vmatpush1.msra.mxu0 0.0
      %1411 = vmatprep.subr.mxu0 0.0
      %1412 = vmatpush1.msra.mxu0 0.0
      %1413 = vmatprep.subr.mxu0 0.0
      %1414 = vmatpush1.msra.mxu0 0.0
      %1415 = vmatprep.subr.mxu0 0.0
      %1416 = vmatpush1.msra.mxu0 0.0
      %1417 = vmatprep.subr.mxu0 0.0
      %1418 = vmatpush1.msra.mxu0 0.0
      %1419 = vmatprep.subr.mxu0 0.0
      %1420 = vmatpush1.msra.mxu0 0.0
      %1421 = vmatprep.subr.mxu0 0.0
      %1422 = vmatpush1.msra.mxu0 0.0
      %1423 = vmatprep.subr.mxu0 0.0
      %1424 = vmatpush1.msra.mxu0 0.0
      %1425 = vmatprep.subr.mxu0 0.0
      %1426 = vmatpush1.msra.mxu0 0.0
      %1427 = vmatprep.subr.mxu0 0.0
      %1428 = vmatpush1.msra.mxu0 0.0
      %1429 = vmatprep.subr.mxu0 0.0
      %1430 = vmatpush1.msra.mxu0 0.0
      %1431 = vmatprep.subr.mxu0 0.0
      %1432 = vmatpush1.msra.mxu0 0.0
      %1433 = vmatprep.subr.mxu0 0.0
      %1434 = vmatpush1.msra.mxu0 0.0
      %1435 = vmatprep.subr.mxu0 0.0
      %1436 = vmatpush1.msra.mxu0 0.0
      %1437 = vmatprep.subr.mxu0 0.0
      %1438 = vmatpush1.msra.mxu0 0.0
      %1439 = vmatprep.subr.mxu0 0.0
      %1440 = vmatpush1.msra.mxu0 0.0
      %1441 = vmatprep.subr.mxu0 0.0
      %1442 = vmatpush1.msra.mxu0 0.0
      %1443 = vmatprep.subr.mxu0 0.0
      %1444 = vmatpush1.msra.mxu0 0.0
      %1445 = vmatprep.mubr.f32.mxu0 0.0
      %1446 = vmatmul.mubr.f32.gmra.mrb[0].mxu0 %v1248
      %v1447 = vpop.f32.mrb[0].mxu0
      %v1448 = vadd.f32 0.0, %v1447
      %v1449 = vpop.f32.mrb[0].mxu0
      %v1450 = vadd.f32 0.0, %v1449
      %1451 = vmatprep.mubr.f32.mxu0 0.0
      %1452 = vmatmul.mubr.f32.gmra.mrb[0].mxu0 %v1251
      %v1453 = vpop.f32.mrb[0].mxu0
      %v1454 = vadd.f32 0.0, %v1453
      %v1455 = vpop.f32.mrb[0].mxu0
      %v1456 = vadd.f32 0.0, %v1455
      %1457 = vmatprep.mubr.f32.mxu0 0.0
      %1458 = vmatmul.mubr.f32.gmra.mrb[0].mxu0 %v1254
      %v1459 = vpop.f32.mrb[0].mxu0
      %v1460 = vadd.f32 0.0, %v1459
      %v1461 = vpop.f32.mrb[0].mxu0
      %v1462 = vadd.f32 0.0, %v1461
      %1463 = vmatprep.mubr.f32.mxu0 0.0
      %1464 = vmatmul.mubr.f32.gmra.mrb[0].mxu0 %v1257
      %v1465 = vpop.f32.mrb[0].mxu0
      %v1466 = vadd.f32 0.0, %v1465
      %v1467 = vpop.f32.mrb[0].mxu0
      %v1468 = vadd.f32 0.0, %v1467
      %1469 = vdwg.mxu0
      %v1470 = vadd.f32 %v1448, %v1450
      %1471 = vadd.xlane.f32.xlu0 %v1470
      %v1472 = vpop.xlane.xlu0 %1471
      %v1473 = vadd.f32 %v1454, %v1456
      %1474 = vadd.xlane.f32.xlu0 %v1473
      %v1475 = vpop.xlane.xlu0 %1474
      %v1476 = vadd.f32 %v1460, %v1462
      %1477 = vadd.xlane.f32.xlu0 %v1476
      %v1478 = vpop.xlane.xlu0 %1477
      %v1479 = vadd.f32 %v1466, %v1468
      %1480 = vadd.xlane.f32.xlu0 %v1479
      %v1481 = vpop.xlane.xlu0 %1480
      %v1482 = vmul.f32 %v1472, %v1360
      %v1483 = vmul.f32 %v1475, %v1360
      %v1484 = vmul.f32 %v1478, %v1360
      %v1485 = vmul.f32 %v1481, %v1360
      %v1486 = vadd.f32 %v1482, 1e-06
      %v1487 = vadd.f32 %v1483, 1e-06
      %v1488 = vadd.f32 %v1484, 1e-06
      %v1489 = vadd.f32 %v1485, 1e-06
      %v1490 = vrsqrt.pop %v1486
      %v1491 = vrsqrt.pop %v1487
      %v1492 = vrsqrt.pop %v1488
      %v1493 = vrsqrt.pop %v1489
      %v1494 = vmul.f32 %v1365, %v1490
      %v1495 = vmul.f32 %v1366, %v1490
      %v1496 = vmul.f32 %v1367, %v1491
      %v1497 = vmul.f32 %v1368, %v1491
      %v1498 = vmul.f32 %v1369, %v1492
      %v1499 = vmul.f32 %v1370, %v1492
      %v1500 = vmul.f32 %v1371, %v1493
      %v1501 = vmul.f32 %v1372, %v1493
      %1503 = vset.pattern.permute.xlu0 0
      %1504 = vperm.xlu0 %1503, %v1235
      %v1505 = vpop.permute.xlu0 %1504
      %1508 = vset.pattern.permute.xlu0 0
      %1509 = vperm.xlu0 %1508, %v1236
      %v1510 = vpop.permute.xlu0 %1509
      %1513 = vset.pattern.permute.xlu0 0
      %1514 = vperm.xlu0 %1513, %v1237
      %v1515 = vpop.permute.xlu0 %1514
      %1518 = vset.pattern.permute.xlu0 0
      %1519 = vperm.xlu0 %1518, %v1238
      %v1520 = vpop.permute.xlu0 %1519
      %v1522 = vmul.f32 %v1494, %v1505
      %v1523 = vmul.f32 %v1495, %v1505
      %v1524 = vmul.f32 %v1496, %v1510
      %v1525 = vmul.f32 %v1497, %v1510
      %v1526 = vmul.f32 %v1498, %v1515
      %v1527 = vmul.f32 %v1499, %v1515
      %v1528 = vmul.f32 %v1500, %v1520
      %v1529 = vmul.f32 %v1501, %v1520
      %1531 = vset.pattern.permute.xlu0 0
      %1532 = vperm.xlu0 %1531, %v1239
      %v1533 = vpop.permute.xlu0 %1532
      %1536 = vset.pattern.permute.xlu0 0
      %1537 = vperm.xlu0 %1536, %v1240
      %v1538 = vpop.permute.xlu0 %1537
      %1541 = vset.pattern.permute.xlu0 0
      %1542 = vperm.xlu0 %1541, %v1241
      %v1543 = vpop.permute.xlu0 %1542
      %1546 = vset.pattern.permute.xlu0 0
      %1547 = vperm.xlu0 %1546, %v1242
      %v1548 = vpop.permute.xlu0 %1547
      %v1550 = vadd.f32 %v1522, %v1533
      %v1551 = vadd.f32 %v1523, %v1533
      %v1552 = vadd.f32 %v1524, %v1538
      %v1553 = vadd.f32 %v1525, %v1538
      %v1554 = vadd.f32 %v1526, %v1543
      %v1555 = vadd.f32 %v1527, %v1543
      %v1556 = vadd.f32 %v1528, %v1548
      %v1557 = vadd.f32 %v1529, %v1548
      %v1558 = vxor.u32 %v1550, 2147483648
      %v1559 = vxor.u32 %v1551, 2147483648
      %v1560 = vxor.u32 %v1552, 2147483648
      %v1561 = vxor.u32 %v1553, 2147483648
      %v1562 = vxor.u32 %v1554, 2147483648
      %v1563 = vxor.u32 %v1555, 2147483648
      %v1564 = vxor.u32 %v1556, 2147483648
      %v1565 = vxor.u32 %v1557, 2147483648
      %v1566 = vmul.f32 %v1558, 1.442695
      %v1567 = vpow.pop %v1566
      %v1568 = vmul.f32 %v1559, 1.442695
      %v1569 = vpow.pop %v1568
      %v1570 = vmul.f32 %v1560, 1.442695
      %v1571 = vpow.pop %v1570
      %v1572 = vmul.f32 %v1561, 1.442695
      %v1573 = vpow.pop %v1572
      %v1574 = vmul.f32 %v1562, 1.442695
      %v1575 = vpow.pop %v1574
      %v1576 = vmul.f32 %v1563, 1.442695
      %v1577 = vpow.pop %v1576
      %v1578 = vmul.f32 %v1564, 1.442695
      %v1579 = vpow.pop %v1578
      %v1580 = vmul.f32 %v1565, 1.442695
      %v1581 = vpow.pop %v1580
      %v1582 = vadd.f32 %v1567, 1.0
      %v1583 = vadd.f32 %v1569, 1.0
      %v1584 = vadd.f32 %v1571, 1.0
      %v1585 = vadd.f32 %v1573, 1.0
      %v1586 = vadd.f32 %v1575, 1.0
      %v1587 = vadd.f32 %v1577, 1.0
      %v1588 = vadd.f32 %v1579, 1.0
      %v1589 = vadd.f32 %v1581, 1.0
      %v1590 = vrcp.pop %v1582
      %v1591 = vmul.f32 1.0, %v1590
      %v1592 = vrcp.pop %v1583
      %v1593 = vmul.f32 1.0, %v1592
      %v1594 = vrcp.pop %v1584
      %v1595 = vmul.f32 1.0, %v1594
      %v1596 = vrcp.pop %v1585
      %v1597 = vmul.f32 1.0, %v1596
      %v1598 = vrcp.pop %v1586
      %v1599 = vmul.f32 1.0, %v1598
      %v1600 = vrcp.pop %v1587
      %v1601 = vmul.f32 1.0, %v1600
      %v1602 = vrcp.pop %v1588
      %v1603 = vmul.f32 1.0, %v1602
      %v1604 = vrcp.pop %v1589
      %v1605 = vmul.f32 1.0, %v1604
      %v1606 = vmul.f32 %v1550, %v1591
      %v1607 = vmul.f32 %v1551, %v1593
      %v1608 = vmul.f32 %v1552, %v1595
      %v1609 = vmul.f32 %v1553, %v1597
      %v1610 = vmul.f32 %v1554, %v1599
      %v1611 = vmul.f32 %v1555, %v1601
      %v1612 = vmul.f32 %v1556, %v1603
      %v1613 = vmul.f32 %v1557, %v1605
      %v1614 = vld [vmem:[%s4] sm:$0xff]
      %v1615 = vld [vmem:[%s4 + $0x8] sm:$0xf]
      %v1616 = vld [vmem:[%s4 + $0xc] sm:$0xff]
      %v1617 = vld [vmem:[%s4 + $0x14] sm:$0xf]
      %v1618 = vld [vmem:[%s4 + $0x18] sm:$0xff]
      %v1619 = vld [vmem:[%s4 + $0x20] sm:$0xf]
      %v1620 = vld [vmem:[%s4 + $0x24] sm:$0xff]
      %v1621 = vld [vmem:[%s4 + $0x2c] sm:$0xf]
      %v1622 = vld [vmem:[%s5] sm:$0xff]
      %v1623 = vld [vmem:[%s5 + $0x8] sm:$0xff]
      %v1624 = vld [vmem:[%s5 + $0x10] sm:$0xff]
      %v1625 = vld [vmem:[%s5 + $0x18] sm:$0xff]
      %v1626 = vpack.c.bf16 %v1608, %v1606
      %v1627 = vpack.c.bf16 %v1609, %v1607
      %v1628 = vpack.c.bf16 %v1612, %v1610
      %v1629 = vpack.c.bf16 %v1613, %v1611
      %1632 = vrot.lane.b32.xlu0 %v1627, 17
      %v1633 = vpop.permute.xlu0 %1632
      %1634 = vrot.lane.b32.xlu0 %v1629, 17
      %v1635 = vpop.permute.xlu0 %1634
      %1638 = vrot.lane.b32.xlu0 %v1626, 17
      %v1639 = vpop.permute.xlu0 %1638
      %1640 = vrot.lane.b32.xlu0 %v1628, 17
      %v1641 = vpop.permute.xlu0 %1640
      %v1642 = vsel %vm601, %v1639, %v1633
      %v1643 = vsel %vm601, %v1641, %v1635
      %v1648 = vsel %vm606, %v1633, %v1639
      %v1652 = vsel %vm606, %v1635, %v1641
      %v1654 = vld [vmem:[%s13] sm:$0xff]
      %v1655 = vld [vmem:[%s13 + $0x8] sm:$0xff]
      %v1656 = vld [vmem:[%s13 + $0x10] sm:$0xff]
      %v1657 = vld [vmem:[%s13 + $0x18] sm:$0xff]
      %v1662 = vunpack.c.l.b16 %v1654
      %v1663 = vunpack.c.h.b16 %v1654
      %v1664 = vunpack.c.l.b16 %v1655
      %v1665 = vunpack.c.h.b16 %v1655
      %v1666 = vunpack.c.l.b16 %v1656
      %v1667 = vunpack.c.h.b16 %v1656
      %v1668 = vunpack.c.l.b16 %v1657
      %v1669 = vunpack.c.h.b16 %v1657
      %v1670 = vpack.c.b16 %v1664, %v1662
      %v1671 = vpack.c.b16 %v1665, %v1663
      %v1672 = vpack.c.b16 %v1668, %v1666
      %v1673 = vpack.c.b16 %v1669, %v1667
      %v1678 = vmul.bf16 %v1648, %v1670
      %v1679 = vmul.bf16 %v1642, %v1671
      %v1680 = vmul.bf16 %v1652, %v1672
      %v1681 = vmul.bf16 %v1643, %v1673
      %1682 = vst [vmem:[#allocation2] sm:$0xff] %v1678
      %1683 = vst [vmem:[#allocation2 + $0x8] sm:$0xff] %v1679
      %1684 = vst [vmem:[#allocation2 + $0x10] sm:$0xff] %v1680
      %1685 = vst [vmem:[#allocation2 + $0x18] sm:$0xff] %v1681
      %1686 = vrot.lane.b32.xlu0 %v1627, 16
      %v1687 = vpop.permute.xlu0 %1686
      %1688 = vrot.lane.b32.xlu0 %v1629, 16
      %v1689 = vpop.permute.xlu0 %1688
      %1690 = vrot.lane.b32.xlu0 %v1626, 16
      %v1691 = vpop.permute.xlu0 %1690
      %1692 = vrot.lane.b32.xlu0 %v1628, 16
      %v1693 = vpop.permute.xlu0 %1692
      %v1694 = vsel %vm655, %v1691, %v1687
      %v1695 = vsel %vm655, %v1693, %v1689
      %v1700 = vsel %vm660, %v1687, %v1691
      %v1704 = vsel %vm660, %v1689, %v1693
      %v1706 = vld [vmem:[%s669] sm:$0xff]
      %v1707 = vld [vmem:[%s669 + $0x8] sm:$0xff]
      %v1708 = vld [vmem:[%s669 + $0x10] sm:$0xff]
      %v1709 = vld [vmem:[%s669 + $0x18] sm:$0xff]
      %v1714 = vunpack.c.l.b16 %v1706
      %v1715 = vunpack.c.h.b16 %v1706
      %v1716 = vunpack.c.l.b16 %v1707
      %v1717 = vunpack.c.h.b16 %v1707
      %v1718 = vunpack.c.l.b16 %v1708
      %v1719 = vunpack.c.h.b16 %v1708
      %v1720 = vunpack.c.l.b16 %v1709
      %v1721 = vunpack.c.h.b16 %v1709
      %v1722 = vpack.c.b16 %v1716, %v1714
      %v1723 = vpack.c.b16 %v1717, %v1715
      %v1724 = vpack.c.b16 %v1720, %v1718
      %v1725 = vpack.c.b16 %v1721, %v1719
      %v1730 = vmul.bf16 %v1700, %v1722
      %v1731 = vmul.bf16 %v1694, %v1723
      %v1732 = vmul.bf16 %v1704, %v1724
      %v1733 = vmul.bf16 %v1695, %v1725
      %1734 = vst [vmem:[#allocation2 + $0x20] sm:$0xff] %v1730
      %1735 = vst [vmem:[#allocation2 + $0x28] sm:$0xff] %v1731
      %1736 = vst [vmem:[#allocation2 + $0x30] sm:$0xff] %v1732
      %1737 = vst [vmem:[#allocation2 + $0x38] sm:$0xff] %v1733
      %1738 = vrot.lane.b32.xlu0 %v1627, 15
      %v1739 = vpop.permute.xlu0 %1738
      %1740 = vrot.lane.b32.xlu0 %v1629, 15
      %v1741 = vpop.permute.xlu0 %1740
      %1742 = vrot.lane.b32.xlu0 %v1626, 15
      %v1743 = vpop.permute.xlu0 %1742
      %1744 = vrot.lane.b32.xlu0 %v1628, 15
      %v1745 = vpop.permute.xlu0 %1744
      %v1746 = vsel %vm710, %v1743, %v1739
      %v1747 = vsel %vm710, %v1745, %v1741
      %v1752 = vsel %vm715, %v1739, %v1743
      %v1756 = vsel %vm715, %v1741, %v1745
      %v1758 = vld [vmem:[%s724] sm:$0xff]
      %v1759 = vld [vmem:[%s724 + $0x8] sm:$0xff]
      %v1760 = vld [vmem:[%s724 + $0x10] sm:$0xff]
      %v1761 = vld [vmem:[%s724 + $0x18] sm:$0xff]
      %v1766 = vunpack.c.l.b16 %v1758
      %v1767 = vunpack.c.h.b16 %v1758
      %v1768 = vunpack.c.l.b16 %v1759
      %v1769 = vunpack.c.h.b16 %v1759
      %v1770 = vunpack.c.l.b16 %v1760
      %v1771 = vunpack.c.h.b16 %v1760
      %v1772 = vunpack.c.l.b16 %v1761
      %v1773 = vunpack.c.h.b16 %v1761
      %v1774 = vpack.c.b16 %v1768, %v1766
      %v1775 = vpack.c.b16 %v1769, %v1767
      %v1776 = vpack.c.b16 %v1772, %v1770
      %v1777 = vpack.c.b16 %v1773, %v1771
      %v1782 = vmul.bf16 %v1752, %v1774
      %v1783 = vmul.bf16 %v1746, %v1775
      %v1784 = vmul.bf16 %v1756, %v1776
      %v1785 = vmul.bf16 %v1747, %v1777
      %1786 = vst [vmem:[#allocation2 + $0x40] sm:$0xff] %v1782
      %1787 = vst [vmem:[#allocation2 + $0x48] sm:$0xff] %v1783
      %1788 = vst [vmem:[#allocation2 + $0x50] sm:$0xff] %v1784
      %1789 = vst [vmem:[#allocation2 + $0x58] sm:$0xff] %v1785
      %1790 = vrot.lane.b32.xlu0 %v1627, 1
      %v1791 = vpop.permute.xlu0 %1790
      %1792 = vrot.lane.b32.xlu0 %v1629, 1
      %v1793 = vpop.permute.xlu0 %1792
      %1794 = vrot.lane.b32.xlu0 %v1626, 1
      %v1795 = vpop.permute.xlu0 %1794
      %1796 = vrot.lane.b32.xlu0 %v1628, 1
      %v1797 = vpop.permute.xlu0 %1796
      %v1798 = vsel %vm765, %v1795, %v1791
      %v1799 = vsel %vm765, %v1797, %v1793
      %v1804 = vsel %vm770, %v1791, %v1795
      %v1808 = vsel %vm770, %v1793, %v1797
      %v1810 = vld [vmem:[%s779] sm:$0xff]
      %v1811 = vld [vmem:[%s779 + $0x8] sm:$0xff]
      %v1812 = vld [vmem:[%s779 + $0x10] sm:$0xff]
      %v1813 = vld [vmem:[%s779 + $0x18] sm:$0xff]
      %v1818 = vunpack.c.l.b16 %v1810
      %v1819 = vunpack.c.h.b16 %v1810
      %v1820 = vunpack.c.l.b16 %v1811
      %v1821 = vunpack.c.h.b16 %v1811
      %v1822 = vunpack.c.l.b16 %v1812
      %v1823 = vunpack.c.h.b16 %v1812
      %v1824 = vunpack.c.l.b16 %v1813
      %v1825 = vunpack.c.h.b16 %v1813
      %v1826 = vpack.c.b16 %v1820, %v1818
      %v1827 = vpack.c.b16 %v1821, %v1819
      %v1828 = vpack.c.b16 %v1824, %v1822
      %v1829 = vpack.c.b16 %v1825, %v1823
      %v1834 = vmul.bf16 %v1804, %v1826
      %v1835 = vmul.bf16 %v1798, %v1827
      %v1836 = vmul.bf16 %v1808, %v1828
      %v1837 = vmul.bf16 %v1799, %v1829
      %1838 = vst [vmem:[#allocation2 + $0x60] sm:$0xff] %v1834
      %1839 = vst [vmem:[#allocation2 + $0x68] sm:$0xff] %v1835
      %1840 = vst [vmem:[#allocation2 + $0x70] sm:$0xff] %v1836
      %1841 = vst [vmem:[#allocation2 + $0x78] sm:$0xff] %v1837
      %1842 = vst [vmem:[#allocation2 + $0x80] sm:$0xff] %v1626
      %1843 = vst [vmem:[#allocation2 + $0x88] sm:$0xff] %v1627
      %1844 = vst [vmem:[#allocation2 + $0x90] sm:$0xff] %v1628
      %1845 = vst [vmem:[#allocation2 + $0x98] sm:$0xff] %v1629
      %1846 = vrot.lane.b32.xlu0 %v1626, 127
      %v1847 = vpop.permute.xlu0 %1846
      %1848 = vrot.lane.b32.xlu0 %v1627, 127
      %v1849 = vpop.permute.xlu0 %1848
      %1850 = vrot.lane.b32.xlu0 %v1628, 127
      %v1851 = vpop.permute.xlu0 %1850
      %1852 = vrot.lane.b32.xlu0 %v1629, 127
      %v1853 = vpop.permute.xlu0 %1852
      %v1854 = vsel %vm824, %v1847, %v1849
      %v1855 = vsel %vm824, %v1851, %v1853
      %v1860 = vsel %vm829, %v1849, %v1847
      %v1864 = vsel %vm829, %v1853, %v1851
      %v1866 = vld [vmem:[%s838] sm:$0xff]
      %v1867 = vld [vmem:[%s838 + $0x8] sm:$0xff]
      %v1868 = vld [vmem:[%s838 + $0x10] sm:$0xff]
      %v1869 = vld [vmem:[%s838 + $0x18] sm:$0xff]
      %v1874 = vunpack.c.l.b16 %v1866
      %v1875 = vunpack.c.h.b16 %v1866
      %v1876 = vunpack.c.l.b16 %v1867
      %v1877 = vunpack.c.h.b16 %v1867
      %v1878 = vunpack.c.l.b16 %v1868
      %v1879 = vunpack.c.h.b16 %v1868
      %v1880 = vunpack.c.l.b16 %v1869
      %v1881 = vunpack.c.h.b16 %v1869
      %v1882 = vpack.c.b16 %v1876, %v1874
      %v1883 = vpack.c.b16 %v1877, %v1875
      %v1884 = vpack.c.b16 %v1880, %v1878
      %v1885 = vpack.c.b16 %v1881, %v1879
      %v1890 = vmul.bf16 %v1854, %v1882
      %v1891 = vmul.bf16 %v1860, %v1883
      %v1892 = vmul.bf16 %v1855, %v1884
      %v1893 = vmul.bf16 %v1864, %v1885
      %1894 = vst [vmem:[#allocation2 + $0xa0] sm:$0xff] %v1890
      %1895 = vst [vmem:[#allocation2 + $0xa8] sm:$0xff] %v1891
      %1896 = vst [vmem:[#allocation2 + $0xb0] sm:$0xff] %v1892
      %1897 = vst [vmem:[#allocation2 + $0xb8] sm:$0xff] %v1893
      %1898 = vrot.lane.b32.xlu0 %v1626, 113
      %v1899 = vpop.permute.xlu0 %1898
      %1900 = vrot.lane.b32.xlu0 %v1627, 113
      %v1901 = vpop.permute.xlu0 %1900
      %1902 = vrot.lane.b32.xlu0 %v1628, 113
      %v1903 = vpop.permute.xlu0 %1902
      %1904 = vrot.lane.b32.xlu0 %v1629, 113
      %v1905 = vpop.permute.xlu0 %1904
      %v1906 = vsel %vm879, %v1899, %v1901
      %v1907 = vsel %vm879, %v1903, %v1905
      %v1912 = vsel %vm884, %v1901, %v1899
      %v1916 = vsel %vm884, %v1905, %v1903
      %v1918 = vld [vmem:[%s893] sm:$0xff]
      %v1919 = vld [vmem:[%s893 + $0x8] sm:$0xff]
      %v1920 = vld [vmem:[%s893 + $0x10] sm:$0xff]
      %v1921 = vld [vmem:[%s893 + $0x18] sm:$0xff]
      %v1926 = vunpack.c.l.b16 %v1918
      %v1927 = vunpack.c.h.b16 %v1918
      %v1928 = vunpack.c.l.b16 %v1919
      %v1929 = vunpack.c.h.b16 %v1919
      %v1930 = vunpack.c.l.b16 %v1920
      %v1931 = vunpack.c.h.b16 %v1920
      %v1932 = vunpack.c.l.b16 %v1921
      %v1933 = vunpack.c.h.b16 %v1921
      %v1934 = vpack.c.b16 %v1928, %v1926
      %v1935 = vpack.c.b16 %v1929, %v1927
      %v1936 = vpack.c.b16 %v1932, %v1930
      %v1937 = vpack.c.b16 %v1933, %v1931
      %v1942 = vmul.bf16 %v1906, %v1934
      %v1943 = vmul.bf16 %v1912, %v1935
      %v1944 = vmul.bf16 %v1907, %v1936
      %v1945 = vmul.bf16 %v1916, %v1937
      %1946 = vst [vmem:[#allocation2 + $0xc0] sm:$0xff] %v1942
      %1947 = vst [vmem:[#allocation2 + $0xc8] sm:$0xff] %v1943
      %1948 = vst [vmem:[#allocation2 + $0xd0] sm:$0xff] %v1944
      %1949 = vst [vmem:[#allocation2 + $0xd8] sm:$0xff] %v1945
      %1950 = vrot.lane.b32.xlu0 %v1626, 112
      %v1951 = vpop.permute.xlu0 %1950
      %1952 = vrot.lane.b32.xlu0 %v1627, 112
      %v1953 = vpop.permute.xlu0 %1952
      %1954 = vrot.lane.b32.xlu0 %v1628, 112
      %v1955 = vpop.permute.xlu0 %1954
      %1956 = vrot.lane.b32.xlu0 %v1629, 112
      %v1957 = vpop.permute.xlu0 %1956
      %v1958 = vsel %vm934, %v1951, %v1953
      %v1959 = vsel %vm934, %v1955, %v1957
      %v1964 = vsel %vm939, %v1953, %v1951
      %v1968 = vsel %vm939, %v1957, %v1955
      %v1970 = vld [vmem:[%s948] sm:$0xff]
      %v1971 = vld [vmem:[%s948 + $0x8] sm:$0xff]
      %v1972 = vld [vmem:[%s948 + $0x10] sm:$0xff]
      %v1973 = vld [vmem:[%s948 + $0x18] sm:$0xff]
      %v1978 = vunpack.c.l.b16 %v1970
      %v1979 = vunpack.c.h.b16 %v1970
      %v1980 = vunpack.c.l.b16 %v1971
      %v1981 = vunpack.c.h.b16 %v1971
      %v1982 = vunpack.c.l.b16 %v1972
      %v1983 = vunpack.c.h.b16 %v1972
      %v1984 = vunpack.c.l.b16 %v1973
      %v1985 = vunpack.c.h.b16 %v1973
      %v1986 = vpack.c.b16 %v1980, %v1978
      %v1987 = vpack.c.b16 %v1981, %v1979
      %v1988 = vpack.c.b16 %v1984, %v1982
      %v1989 = vpack.c.b16 %v1985, %v1983
      %v1994 = vmul.bf16 %v1958, %v1986
      %v1995 = vmul.bf16 %v1964, %v1987
      %v1996 = vmul.bf16 %v1959, %v1988
      %v1997 = vmul.bf16 %v1968, %v1989
      %1998 = vst [vmem:[#allocation2 + $0xe0] sm:$0xff] %v1994
      %1999 = vst [vmem:[#allocation2 + $0xe8] sm:$0xff] %v1995
      %2000 = vst [vmem:[#allocation2 + $0xf0] sm:$0xff] %v1996
      %2001 = vst [vmem:[#allocation2 + $0xf8] sm:$0xff] %v1997
      %2002 = vrot.lane.b32.xlu0 %v1626, 111
      %v2003 = vpop.permute.xlu0 %2002
      %2004 = vrot.lane.b32.xlu0 %v1627, 111
      %v2005 = vpop.permute.xlu0 %2004
      %2006 = vrot.lane.b32.xlu0 %v1628, 111
      %v2007 = vpop.permute.xlu0 %2006
      %2008 = vrot.lane.b32.xlu0 %v1629, 111
      %v2009 = vpop.permute.xlu0 %2008
      %v2010 = vsel %vm989, %v2003, %v2005
      %v2011 = vsel %vm989, %v2007, %v2009
      %v2016 = vsel %vm994, %v2005, %v2003
      %v2020 = vsel %vm994, %v2009, %v2007
      %v2022 = vld [vmem:[%s1003] sm:$0xff]
      %v2023 = vld [vmem:[%s1003 + $0x8] sm:$0xff]
      %v2024 = vld [vmem:[%s1003 + $0x10] sm:$0xff]
      %v2025 = vld [vmem:[%s1003 + $0x18] sm:$0xff]
      %v2030 = vunpack.c.l.b16 %v2022
      %v2031 = vunpack.c.h.b16 %v2022
      %v2032 = vunpack.c.l.b16 %v2023
      %v2033 = vunpack.c.h.b16 %v2023
      %v2034 = vunpack.c.l.b16 %v2024
      %v2035 = vunpack.c.h.b16 %v2024
      %v2036 = vunpack.c.l.b16 %v2025
      %v2037 = vunpack.c.h.b16 %v2025
      %v2038 = vpack.c.b16 %v2032, %v2030
      %v2039 = vpack.c.b16 %v2033, %v2031
      %v2040 = vpack.c.b16 %v2036, %v2034
      %v2041 = vpack.c.b16 %v2037, %v2035
      %v2046 = vmul.bf16 %v2010, %v2038
      %v2047 = vmul.bf16 %v2016, %v2039
      %v2048 = vmul.bf16 %v2011, %v2040
      %v2049 = vmul.bf16 %v2020, %v2041
      %2050 = vst [vmem:[#allocation2 + $0x100] sm:$0xff] %v2046
      %2051 = vst [vmem:[#allocation2 + $0x108] sm:$0xff] %v2047
      %2052 = vst [vmem:[#allocation2 + $0x110] sm:$0xff] %v2048
      %2053 = vst [vmem:[#allocation2 + $0x118] sm:$0xff] %v2049
      %v2054 = vld [vmem:[#allocation2] sm:$0xff]
      %v2055 = vld [vmem:[#allocation2 + $0x8] sm:$0xff]
      %v2056 = vld [vmem:[#allocation2 + $0x10] sm:$0xff]
      %v2057 = vld [vmem:[#allocation2 + $0x18] sm:$0xff]
      %v2058 = vld [vmem:[#allocation2 + $0x20] sm:$0xff]
      %v2059 = vld [vmem:[#allocation2 + $0x28] sm:$0xff]
      %v2060 = vld [vmem:[#allocation2 + $0x30] sm:$0xff]
      %v2061 = vld [vmem:[#allocation2 + $0x38] sm:$0xff]
      %v2062 = vld [vmem:[#allocation2 + $0x40] sm:$0xff]
      %v2063 = vld [vmem:[#allocation2 + $0x48] sm:$0xff]
      %v2064 = vld [vmem:[#allocation2 + $0x50] sm:$0xff]
      %v2065 = vld [vmem:[#allocation2 + $0x58] sm:$0xff]
      %v2066 = vld [vmem:[#allocation2 + $0x60] sm:$0xff]
      %v2067 = vld [vmem:[#allocation2 + $0x68] sm:$0xff]
      %v2068 = vld [vmem:[#allocation2 + $0x70] sm:$0xff]
      %v2069 = vld [vmem:[#allocation2 + $0x78] sm:$0xff]
      %v2070 = vld [vmem:[#allocation2 + $0x80] sm:$0xff]
      %v2071 = vld [vmem:[#allocation2 + $0x88] sm:$0xff]
      %v2072 = vld [vmem:[#allocation2 + $0x90] sm:$0xff]
      %v2073 = vld [vmem:[#allocation2 + $0x98] sm:$0xff]
      %v2074 = vld [vmem:[#allocation2 + $0xa0] sm:$0xff]
      %v2075 = vld [vmem:[#allocation2 + $0xa8] sm:$0xff]
      %v2076 = vld [vmem:[#allocation2 + $0xb0] sm:$0xff]
      %v2077 = vld [vmem:[#allocation2 + $0xb8] sm:$0xff]
      %v2078 = vld [vmem:[#allocation2 + $0xc0] sm:$0xff]
      %v2079 = vld [vmem:[#allocation2 + $0xc8] sm:$0xff]
      %v2080 = vld [vmem:[#allocation2 + $0xd0] sm:$0xff]
      %v2081 = vld [vmem:[#allocation2 + $0xd8] sm:$0xff]
      %v2082 = vld [vmem:[#allocation2 + $0xe0] sm:$0xff]
      %v2083 = vld [vmem:[#allocation2 + $0xe8] sm:$0xff]
      %v2084 = vld [vmem:[#allocation2 + $0xf0] sm:$0xff]
      %v2085 = vld [vmem:[#allocation2 + $0xf8] sm:$0xff]
      %v2086 = vld [vmem:[#allocation2 + $0x100] sm:$0xff]
      %v2087 = vld [vmem:[#allocation2 + $0x108] sm:$0xff]
      %v2088 = vld [vmem:[#allocation2 + $0x110] sm:$0xff]
      %v2089 = vld [vmem:[#allocation2 + $0x118] sm:$0xff]
      %2091 = vset.pattern.permute.xlu0 0
      %2092 = vperm.xlu0 %2091, %v1622
      %v2093 = vpop.permute.xlu0 %2092
      %2096 = vset.pattern.permute.xlu0 0
      %2097 = vperm.xlu0 %2096, %v1623
      %v2098 = vpop.permute.xlu0 %2097
      %2101 = vset.pattern.permute.xlu0 0
      %2102 = vperm.xlu0 %2101, %v1624
      %v2103 = vpop.permute.xlu0 %2102
      %2106 = vset.pattern.permute.xlu0 0
      %2107 = vperm.xlu0 %2106, %v1625
      %v2108 = vpop.permute.xlu0 %2107
      %v2118 = vunpack.c.l.b16 %v1614
      %v2119 = vunpack.c.h.b16 %v1614
      %v2120 = vunpack.c.l.b16 %v1615
      %v2121 = vunpack.c.l.b16 %v1616
      %v2122 = vunpack.c.h.b16 %v1616
      %v2123 = vunpack.c.l.b16 %v1617
      %v2124 = vunpack.c.l.b16 %v1618
      %v2125 = vunpack.c.h.b16 %v1618
      %v2126 = vunpack.c.l.b16 %v1619
      %v2127 = vunpack.c.l.b16 %v1620
      %v2128 = vunpack.c.h.b16 %v1620
      %v2129 = vunpack.c.l.b16 %v1621
      %v2130 = vpack.c.b16 %v2121, %v2118
      %v2131 = vpack.c.b16 %v2122, %v2119
      %v2132 = vpack.c.b16 %v2123, %v2120
      %v2133 = vpack.c.b16 %v2127, %v2124
      %v2134 = vpack.c.b16 %v2128, %v2125
      %v2135 = vpack.c.b16 %v2129, %v2126
      %v2141 = vsel %vm1122, %v2132, 0
      %v2144 = vsel %vm1122, %v2135, 0
      %2146 = vmatprep.subr.bf16.mxu0 %v2055
      %2147 = vmatpush1.bf16.msra.mxu0 %v2054
      %2148 = vmatprep.subr.bf16.mxu0 %v2057
      %2149 = vmatpush1.bf16.msra.mxu0 %v2056
      %2150 = vmatprep.subr.bf16.mxu0 %v2059
      %2151 = vmatpush1.bf16.msra.mxu0 %v2058
      %2152 = vmatprep.subr.bf16.mxu0 %v2061
      %2153 = vmatpush1.bf16.msra.mxu0 %v2060
      %2154 = vmatprep.subr.bf16.mxu0 %v2063
      %2155 = vmatpush1.bf16.msra.mxu0 %v2062
      %2156 = vmatprep.subr.bf16.mxu0 %v2065
      %2157 = vmatpush1.bf16.msra.mxu0 %v2064
      %2158 = vmatprep.subr.bf16.mxu0 %v2067
      %2159 = vmatpush1.bf16.msra.mxu0 %v2066
      %2160 = vmatprep.subr.bf16.mxu0 %v2069
      %2161 = vmatpush1.bf16.msra.mxu0 %v2068
      %2162 = vmatprep.subr.bf16.mxu0 %v2071
      %2163 = vmatpush1.bf16.msra.mxu0 %v2070
      %2164 = vmatprep.subr.bf16.mxu0 %v2073
      %2165 = vmatpush1.bf16.msra.mxu0 %v2072
      %2166 = vmatprep.subr.bf16.mxu0 %v2075
      %2167 = vmatpush1.bf16.msra.mxu0 %v2074
      %2168 = vmatprep.subr.bf16.mxu0 %v2077
      %2169 = vmatpush1.bf16.msra.mxu0 %v2076
      %2170 = vmatprep.subr.bf16.mxu0 %v2079
      %2171 = vmatpush1.bf16.msra.mxu0 %v2078
      %2172 = vmatprep.subr.bf16.mxu0 %v2081
      %2173 = vmatpush1.bf16.msra.mxu0 %v2080
      %2174 = vmatprep.subr.bf16.mxu0 %v2083
      %2175 = vmatpush1.bf16.msra.mxu0 %v2082
      %2176 = vmatprep.subr.bf16.mxu0 %v2085
      %2177 = vmatpush1.bf16.msra.mxu0 %v2084
      %2178 = vmatprep.mubr.bf16.mxu0 %v2131
      %2179 = vmatmul.mubr.bf16.gmra.mrb[0].mxu0 %v2130
      %v2180 = vpop.f32.mrb[0].mxu0
      %v2181 = vadd.f32 %v2093, %v2180
      %v2182 = vpop.f32.mrb[0].mxu0
      %v2183 = vadd.f32 %v2093, %v2182
      %v2184 = vpop.f32.mrb[0].mxu0
      %v2185 = vadd.f32 %v2098, %v2184
      %v2186 = vpop.f32.mrb[0].mxu0
      %v2187 = vadd.f32 %v2098, %v2186
      %2188 = vmatprep.mubr.bf16.mxu0 %v2134
      %2189 = vmatmul.mubr.bf16.gmra.mrb[0].mxu0 %v2133
      %v2190 = vpop.f32.mrb[0].mxu0
      %v2191 = vadd.f32 %v2103, %v2190
      %v2192 = vpop.f32.mrb[0].mxu0
      %v2193 = vadd.f32 %v2103, %v2192
      %v2194 = vpop.f32.mrb[0].mxu0
      %v2195 = vadd.f32 %v2108, %v2194
      %v2196 = vpop.f32.mrb[0].mxu0
      %v2197 = vadd.f32 %v2108, %v2196
      %2198 = vdwg.mxu0
      %2199 = vmatprep.subr.bf16.mxu0 %v2087
      %2200 = vmatpush1.bf16.msra.mxu0 %v2086
      %2201 = vmatprep.subr.bf16.mxu0 %v2089
      %2202 = vmatpush1.bf16.msra.mxu0 %v2088
      %2203 = vmatprep.subr.bf16.mxu0 0
      %2204 = vmatpush1.bf16.msra.mxu0 0
      %2205 = vmatprep.subr.bf16.mxu0 0
      %2206 = vmatpush1.bf16.msra.mxu0 0
      %2207 = vmatprep.subr.bf16.mxu0 0
      %2208 = vmatpush1.bf16.msra.mxu0 0
      %2209 = vmatprep.subr.bf16.mxu0 0
      %2210 = vmatpush1.bf16.msra.mxu0 0
      %2211 = vmatprep.subr.bf16.mxu0 0
      %2212 = vmatpush1.bf16.msra.mxu0 0
      %2213 = vmatprep.subr.bf16.mxu0 0
      %2214 = vmatpush1.bf16.msra.mxu0 0
      %2215 = vmatprep.subr.bf16.mxu0 0
      %2216 = vmatpush1.bf16.msra.mxu0 0
      %2217 = vmatprep.subr.bf16.mxu0 0
      %2218 = vmatpush1.bf16.msra.mxu0 0
      %2219 = vmatprep.subr.bf16.mxu0 0
      %2220 = vmatpush1.bf16.msra.mxu0 0
      %2221 = vmatprep.subr.bf16.mxu0 0
      %2222 = vmatpush1.bf16.msra.mxu0 0
      %2223 = vmatprep.subr.bf16.mxu0 0
      %2224 = vmatpush1.bf16.msra.mxu0 0
      %2225 = vmatprep.subr.bf16.mxu0 0
      %2226 = vmatpush1.bf16.msra.mxu0 0
      %2227 = vmatprep.subr.bf16.mxu0 0
      %2228 = vmatpush1.bf16.msra.mxu0 0
      %2229 = vmatprep.subr.bf16.mxu0 0
      %2230 = vmatpush1.bf16.msra.mxu0 0
      %2231 = vmatprep.mubr.bf16.mxu0 0
      %2232 = vmatmul.mubr.bf16.gmra.mrb[0].mxu0 %v2141
      %v2233 = vpop.f32.mrb[0].mxu0
      %v2234 = vadd.f32 %v2181, %v2233
      %v2235 = vpop.f32.mrb[0].mxu0
      %v2236 = vadd.f32 %v2183, %v2235
      %v2237 = vpop.f32.mrb[0].mxu0
      %v2238 = vadd.f32 %v2185, %v2237
      %v2239 = vpop.f32.mrb[0].mxu0
      %v2240 = vadd.f32 %v2187, %v2239
      %2241 = vmatprep.mubr.bf16.mxu0 0
      %2242 = vmatmul.mubr.bf16.gmra.mrb[0].mxu0 %v2144
      %v2243 = vpop.f32.mrb[0].mxu0
      %v2244 = vadd.f32 %v2191, %v2243
      %v2245 = vpop.f32.mrb[0].mxu0
      %v2246 = vadd.f32 %v2193, %v2245
      %v2247 = vpop.f32.mrb[0].mxu0
      %v2248 = vadd.f32 %v2195, %v2247
      %v2249 = vpop.f32.mrb[0].mxu0
      %v2250 = vadd.f32 %v2197, %v2249
      %2251 = vdwg.mxu0
      %s2252 = scalar_lea.vmem %s6, 32
      %v2253 = vld [vmem:[%s2252] sm:$0xff]
      %v2254 = vld [vmem:[%s2252 + $0x8] sm:$0xff]
      %v2255 = vld [vmem:[%s2252 + $0x10] sm:$0xff]
      %v2256 = vld [vmem:[%s2252 + $0x18] sm:$0xff]
      %s2257 = scalar_lea.vmem %s7, 32
      %v2258 = vld [vmem:[%s2257] sm:$0xff]
      %v2259 = vld [vmem:[%s2257 + $0x8] sm:$0xff]
      %v2260 = vld [vmem:[%s2257 + $0x10] sm:$0xff]
      %v2261 = vld [vmem:[%s2257 + $0x18] sm:$0xff]
      %v2262 = vld [vmem:[%s12] sm:$0xff]
      %v2263 = vld [vmem:[%s12 + $0x8] sm:$0xff]
      %v2264 = vld [vmem:[%s12 + $0x10] sm:$0xff]
      %v2265 = vld [vmem:[%s12 + $0x18] sm:$0xff]
      %v2267 = vsel %vm1122, %v2262, 0
      %v2270 = vsel %vm1122, %v2263, 0
      %v2273 = vsel %vm1122, %v2264, 0
      %v2276 = vsel %vm1122, %v2265, 0
      %2278 = vmatprep.subr.mxu0 %v2236
      %2279 = vmatpush1.msra.mxu0 %v2234
      %2280 = vmatprep.subr.mxu0 %v2240
      %2281 = vmatpush1.msra.mxu0 %v2238
      %2282 = vmatprep.subr.mxu0 %v2246
      %2283 = vmatpush1.msra.mxu0 %v2244
      %2284 = vmatprep.subr.mxu0 %v2250
      %2285 = vmatpush1.msra.mxu0 %v2248
      %2286 = vmatprep.subr.mxu0 0.0
      %2287 = vmatpush1.msra.mxu0 0.0
      %2288 = vmatprep.subr.mxu0 0.0
      %2289 = vmatpush1.msra.mxu0 0.0
      %2290 = vmatprep.subr.mxu0 0.0
      %2291 = vmatpush1.msra.mxu0 0.0
      %2292 = vmatprep.subr.mxu0 0.0
      %2293 = vmatpush1.msra.mxu0 0.0
      %2294 = vmatprep.subr.mxu0 0.0
      %2295 = vmatpush1.msra.mxu0 0.0
      %2296 = vmatprep.subr.mxu0 0.0
      %2297 = vmatpush1.msra.mxu0 0.0
      %2298 = vmatprep.subr.mxu0 0.0
      %2299 = vmatpush1.msra.mxu0 0.0
      %2300 = vmatprep.subr.mxu0 0.0
      %2301 = vmatpush1.msra.mxu0 0.0
      %2302 = vmatprep.subr.mxu0 0.0
      %2303 = vmatpush1.msra.mxu0 0.0
      %2304 = vmatprep.subr.mxu0 0.0
      %2305 = vmatpush1.msra.mxu0 0.0
      %2306 = vmatprep.subr.mxu0 0.0
      %2307 = vmatpush1.msra.mxu0 0.0
      %2308 = vmatprep.subr.mxu0 0.0
      %2309 = vmatpush1.msra.mxu0 0.0
      %2310 = vmatprep.subr.mxu0 0.0
      %2311 = vmatpush1.msra.mxu0 0.0
      %2312 = vmatprep.subr.mxu0 0.0
      %2313 = vmatpush1.msra.mxu0 0.0
      %2314 = vmatprep.subr.mxu0 0.0
      %2315 = vmatpush1.msra.mxu0 0.0
      %2316 = vmatprep.subr.mxu0 0.0
      %2317 = vmatpush1.msra.mxu0 0.0
      %2318 = vmatprep.subr.mxu0 0.0
      %2319 = vmatpush1.msra.mxu0 0.0
      %2320 = vmatprep.subr.mxu0 0.0
      %2321 = vmatpush1.msra.mxu0 0.0
      %2322 = vmatprep.subr.mxu0 0.0
      %2323 = vmatpush1.msra.mxu0 0.0
      %2324 = vmatprep.subr.mxu0 0.0
      %2325 = vmatpush1.msra.mxu0 0.0
      %2326 = vmatprep.subr.mxu0 0.0
      %2327 = vmatpush1.msra.mxu0 0.0
      %2328 = vmatprep.subr.mxu0 0.0
      %2329 = vmatpush1.msra.mxu0 0.0
      %2330 = vmatprep.subr.mxu0 0.0
      %2331 = vmatpush1.msra.mxu0 0.0
      %2332 = vmatprep.subr.mxu0 0.0
      %2333 = vmatpush1.msra.mxu0 0.0
      %2334 = vmatprep.subr.mxu0 0.0
      %2335 = vmatpush1.msra.mxu0 0.0
      %2336 = vmatprep.subr.mxu0 0.0
      %2337 = vmatpush1.msra.mxu0 0.0
      %2338 = vmatprep.subr.mxu0 0.0
      %2339 = vmatpush1.msra.mxu0 0.0
      %2340 = vmatprep.subr.mxu0 0.0
      %2341 = vmatpush1.msra.mxu0 0.0
      %2342 = vmatprep.mubr.f32.mxu0 0.0
      %2343 = vmatmul.mubr.f32.gmra.mrb[0].mxu0 %v2267
      %v2344 = vpop.f32.mrb[0].mxu0
      %v2345 = vadd.f32 0.0, %v2344
      %v2346 = vpop.f32.mrb[0].mxu0
      %v2347 = vadd.f32 0.0, %v2346
      %2348 = vmatprep.mubr.f32.mxu0 0.0
      %2349 = vmatmul.mubr.f32.gmra.mrb[0].mxu0 %v2270
      %v2350 = vpop.f32.mrb[0].mxu0
      %v2351 = vadd.f32 0.0, %v2350
      %v2352 = vpop.f32.mrb[0].mxu0
      %v2353 = vadd.f32 0.0, %v2352
      %2354 = vmatprep.mubr.f32.mxu0 0.0
      %2355 = vmatmul.mubr.f32.gmra.mrb[0].mxu0 %v2273
      %v2356 = vpop.f32.mrb[0].mxu0
      %v2357 = vadd.f32 0.0, %v2356
      %v2358 = vpop.f32.mrb[0].mxu0
      %v2359 = vadd.f32 0.0, %v2358
      %2360 = vmatprep.mubr.f32.mxu0 0.0
      %2361 = vmatmul.mubr.f32.gmra.mrb[0].mxu0 %v2276
      %v2362 = vpop.f32.mrb[0].mxu0
      %v2363 = vadd.f32 0.0, %v2362
      %v2364 = vpop.f32.mrb[0].mxu0
      %v2365 = vadd.f32 0.0, %v2364
      %2366 = vdwg.mxu0
      %v2367 = vadd.f32 %v2345, %v2347
      %2368 = vadd.xlane.f32.xlu0 %v2367
      %v2369 = vpop.xlane.xlu0 %2368
      %v2370 = vadd.f32 %v2351, %v2353
      %2371 = vadd.xlane.f32.xlu0 %v2370
      %v2372 = vpop.xlane.xlu0 %2371
      %v2373 = vadd.f32 %v2357, %v2359
      %2374 = vadd.xlane.f32.xlu0 %v2373
      %v2375 = vpop.xlane.xlu0 %2374
      %v2376 = vadd.f32 %v2363, %v2365
      %2377 = vadd.xlane.f32.xlu0 %v2376
      %v2378 = vpop.xlane.xlu0 %2377
      %v2379 = vmul.f32 %v2369, %v1360
      %v2380 = vmul.f32 %v2372, %v1360
      %v2381 = vmul.f32 %v2375, %v1360
      %v2382 = vmul.f32 %v2378, %v1360
      %v2383 = vsub.f32 %v2234, %v2379
      %v2384 = vsub.f32 %v2236, %v2379
      %v2385 = vsub.f32 %v2238, %v2380
      %v2386 = vsub.f32 %v2240, %v2380
      %v2387 = vsub.f32 %v2244, %v2381
      %v2388 = vsub.f32 %v2246, %v2381
      %v2389 = vsub.f32 %v2248, %v2382
      %v2390 = vsub.f32 %v2250, %v2382
      %v2391 = vmul.f32 %v2383, %v2383
      %v2392 = vmul.f32 %v2384, %v2384
      %v2393 = vmul.f32 %v2385, %v2385
      %v2394 = vmul.f32 %v2386, %v2386
      %v2395 = vmul.f32 %v2387, %v2387
      %v2396 = vmul.f32 %v2388, %v2388
      %v2397 = vmul.f32 %v2389, %v2389
      %v2398 = vmul.f32 %v2390, %v2390
      %2399 = vmatprep.subr.mxu0 %v2392
      %2400 = vmatpush1.msra.mxu0 %v2391
      %2401 = vmatprep.subr.mxu0 %v2394
      %2402 = vmatpush1.msra.mxu0 %v2393
      %2403 = vmatprep.subr.mxu0 %v2396
      %2404 = vmatpush1.msra.mxu0 %v2395
      %2405 = vmatprep.subr.mxu0 %v2398
      %2406 = vmatpush1.msra.mxu0 %v2397
      %2407 = vmatprep.subr.mxu0 0.0
      %2408 = vmatpush1.msra.mxu0 0.0
      %2409 = vmatprep.subr.mxu0 0.0
      %2410 = vmatpush1.msra.mxu0 0.0
      %2411 = vmatprep.subr.mxu0 0.0
      %2412 = vmatpush1.msra.mxu0 0.0
      %2413 = vmatprep.subr.mxu0 0.0
      %2414 = vmatpush1.msra.mxu0 0.0
      %2415 = vmatprep.subr.mxu0 0.0
      %2416 = vmatpush1.msra.mxu0 0.0
      %2417 = vmatprep.subr.mxu0 0.0
      %2418 = vmatpush1.msra.mxu0 0.0
      %2419 = vmatprep.subr.mxu0 0.0
      %2420 = vmatpush1.msra.mxu0 0.0
      %2421 = vmatprep.subr.mxu0 0.0
      %2422 = vmatpush1.msra.mxu0 0.0
      %2423 = vmatprep.subr.mxu0 0.0
      %2424 = vmatpush1.msra.mxu0 0.0
      %2425 = vmatprep.subr.mxu0 0.0
      %2426 = vmatpush1.msra.mxu0 0.0
      %2427 = vmatprep.subr.mxu0 0.0
      %2428 = vmatpush1.msra.mxu0 0.0
      %2429 = vmatprep.subr.mxu0 0.0
      %2430 = vmatpush1.msra.mxu0 0.0
      %2431 = vmatprep.subr.mxu0 0.0
      %2432 = vmatpush1.msra.mxu0 0.0
      %2433 = vmatprep.subr.mxu0 0.0
      %2434 = vmatpush1.msra.mxu0 0.0
      %2435 = vmatprep.subr.mxu0 0.0
      %2436 = vmatpush1.msra.mxu0 0.0
      %2437 = vmatprep.subr.mxu0 0.0
      %2438 = vmatpush1.msra.mxu0 0.0
      %2439 = vmatprep.subr.mxu0 0.0
      %2440 = vmatpush1.msra.mxu0 0.0
      %2441 = vmatprep.subr.mxu0 0.0
      %2442 = vmatpush1.msra.mxu0 0.0
      %2443 = vmatprep.subr.mxu0 0.0
      %2444 = vmatpush1.msra.mxu0 0.0
      %2445 = vmatprep.subr.mxu0 0.0
      %2446 = vmatpush1.msra.mxu0 0.0
      %2447 = vmatprep.subr.mxu0 0.0
      %2448 = vmatpush1.msra.mxu0 0.0
      %2449 = vmatprep.subr.mxu0 0.0
      %2450 = vmatpush1.msra.mxu0 0.0
      %2451 = vmatprep.subr.mxu0 0.0
      %2452 = vmatpush1.msra.mxu0 0.0
      %2453 = vmatprep.subr.mxu0 0.0
      %2454 = vmatpush1.msra.mxu0 0.0
      %2455 = vmatprep.subr.mxu0 0.0
      %2456 = vmatpush1.msra.mxu0 0.0
      %2457 = vmatprep.subr.mxu0 0.0
      %2458 = vmatpush1.msra.mxu0 0.0
      %2459 = vmatprep.subr.mxu0 0.0
      %2460 = vmatpush1.msra.mxu0 0.0
      %2461 = vmatprep.subr.mxu0 0.0
      %2462 = vmatpush1.msra.mxu0 0.0
      %2463 = vmatprep.mubr.f32.mxu0 0.0
      %2464 = vmatmul.mubr.f32.gmra.mrb[0].mxu0 %v2267
      %v2465 = vpop.f32.mrb[0].mxu0
      %v2466 = vadd.f32 0.0, %v2465
      %v2467 = vpop.f32.mrb[0].mxu0
      %v2468 = vadd.f32 0.0, %v2467
      %2469 = vmatprep.mubr.f32.mxu0 0.0
      %2470 = vmatmul.mubr.f32.gmra.mrb[0].mxu0 %v2270
      %v2471 = vpop.f32.mrb[0].mxu0
      %v2472 = vadd.f32 0.0, %v2471
      %v2473 = vpop.f32.mrb[0].mxu0
      %v2474 = vadd.f32 0.0, %v2473
      %2475 = vmatprep.mubr.f32.mxu0 0.0
      %2476 = vmatmul.mubr.f32.gmra.mrb[0].mxu0 %v2273
      %v2477 = vpop.f32.mrb[0].mxu0
      %v2478 = vadd.f32 0.0, %v2477
      %v2479 = vpop.f32.mrb[0].mxu0
      %v2480 = vadd.f32 0.0, %v2479
      %2481 = vmatprep.mubr.f32.mxu0 0.0
      %2482 = vmatmul.mubr.f32.gmra.mrb[0].mxu0 %v2276
      %v2483 = vpop.f32.mrb[0].mxu0
      %v2484 = vadd.f32 0.0, %v2483
      %v2485 = vpop.f32.mrb[0].mxu0
      %v2486 = vadd.f32 0.0, %v2485
      %2487 = vdwg.mxu0
      %v2488 = vadd.f32 %v2466, %v2468
      %2489 = vadd.xlane.f32.xlu0 %v2488
      %v2490 = vpop.xlane.xlu0 %2489
      %v2491 = vadd.f32 %v2472, %v2474
      %2492 = vadd.xlane.f32.xlu0 %v2491
      %v2493 = vpop.xlane.xlu0 %2492
      %v2494 = vadd.f32 %v2478, %v2480
      %2495 = vadd.xlane.f32.xlu0 %v2494
      %v2496 = vpop.xlane.xlu0 %2495
      %v2497 = vadd.f32 %v2484, %v2486
      %2498 = vadd.xlane.f32.xlu0 %v2497
      %v2499 = vpop.xlane.xlu0 %2498
      %v2500 = vmul.f32 %v2490, %v1360
      %v2501 = vmul.f32 %v2493, %v1360
      %v2502 = vmul.f32 %v2496, %v1360
      %v2503 = vmul.f32 %v2499, %v1360
      %v2504 = vadd.f32 %v2500, 1e-06
      %v2505 = vadd.f32 %v2501, 1e-06
      %v2506 = vadd.f32 %v2502, 1e-06
      %v2507 = vadd.f32 %v2503, 1e-06
      %v2508 = vrsqrt.pop %v2504
      %v2509 = vrsqrt.pop %v2505
      %v2510 = vrsqrt.pop %v2506
      %v2511 = vrsqrt.pop %v2507
      %v2512 = vmul.f32 %v2383, %v2508
      %v2513 = vmul.f32 %v2384, %v2508
      %v2514 = vmul.f32 %v2385, %v2509
      %v2515 = vmul.f32 %v2386, %v2509
      %v2516 = vmul.f32 %v2387, %v2510
      %v2517 = vmul.f32 %v2388, %v2510
      %v2518 = vmul.f32 %v2389, %v2511
      %v2519 = vmul.f32 %v2390, %v2511
      %2521 = vset.pattern.permute.xlu0 0
      %2522 = vperm.xlu0 %2521, %v2253
      %v2523 = vpop.permute.xlu0 %2522
      %2526 = vset.pattern.permute.xlu0 0
      %2527 = vperm.xlu0 %2526, %v2254
      %v2528 = vpop.permute.xlu0 %2527
      %2531 = vset.pattern.permute.xlu0 0
      %2532 = vperm.xlu0 %2531, %v2255
      %v2533 = vpop.permute.xlu0 %2532
      %2536 = vset.pattern.permute.xlu0 0
      %2537 = vperm.xlu0 %2536, %v2256
      %v2538 = vpop.permute.xlu0 %2537
      %v2540 = vmul.f32 %v2512, %v2523
      %v2541 = vmul.f32 %v2513, %v2523
      %v2542 = vmul.f32 %v2514, %v2528
      %v2543 = vmul.f32 %v2515, %v2528
      %v2544 = vmul.f32 %v2516, %v2533
      %v2545 = vmul.f32 %v2517, %v2533
      %v2546 = vmul.f32 %v2518, %v2538
      %v2547 = vmul.f32 %v2519, %v2538
      %2549 = vset.pattern.permute.xlu0 0
      %2550 = vperm.xlu0 %2549, %v2258
      %v2551 = vpop.permute.xlu0 %2550
      %2554 = vset.pattern.permute.xlu0 0
      %2555 = vperm.xlu0 %2554, %v2259
      %v2556 = vpop.permute.xlu0 %2555
      %2559 = vset.pattern.permute.xlu0 0
      %2560 = vperm.xlu0 %2559, %v2260
      %v2561 = vpop.permute.xlu0 %2560
      %2564 = vset.pattern.permute.xlu0 0
      %2565 = vperm.xlu0 %2564, %v2261
      %v2566 = vpop.permute.xlu0 %2565
      %v2568 = vadd.f32 %v2540, %v2551
      %v2569 = vadd.f32 %v2541, %v2551
      %v2570 = vadd.f32 %v2542, %v2556
      %v2571 = vadd.f32 %v2543, %v2556
      %v2572 = vadd.f32 %v2544, %v2561
      %v2573 = vadd.f32 %v2545, %v2561
      %v2574 = vadd.f32 %v2546, %v2566
      %v2575 = vadd.f32 %v2547, %v2566
      %v2576 = vxor.u32 %v2568, 2147483648
      %v2577 = vxor.u32 %v2569, 2147483648
      %v2578 = vxor.u32 %v2570, 2147483648
      %v2579 = vxor.u32 %v2571, 2147483648
      %v2580 = vxor.u32 %v2572, 2147483648
      %v2581 = vxor.u32 %v2573, 2147483648
      %v2582 = vxor.u32 %v2574, 2147483648
      %v2583 = vxor.u32 %v2575, 2147483648
      %v2584 = vmul.f32 %v2576, 1.442695
      %v2585 = vpow.pop %v2584
      %v2586 = vmul.f32 %v2577, 1.442695
      %v2587 = vpow.pop %v2586
      %v2588 = vmul.f32 %v2578, 1.442695
      %v2589 = vpow.pop %v2588
      %v2590 = vmul.f32 %v2579, 1.442695
      %v2591 = vpow.pop %v2590
      %v2592 = vmul.f32 %v2580, 1.442695
      %v2593 = vpow.pop %v2592
      %v2594 = vmul.f32 %v2581, 1.442695
      %v2595 = vpow.pop %v2594
      %v2596 = vmul.f32 %v2582, 1.442695
      %v2597 = vpow.pop %v2596
      %v2598 = vmul.f32 %v2583, 1.442695
      %v2599 = vpow.pop %v2598
      %v2600 = vadd.f32 %v2585, 1.0
      %v2601 = vadd.f32 %v2587, 1.0
      %v2602 = vadd.f32 %v2589, 1.0
      %v2603 = vadd.f32 %v2591, 1.0
      %v2604 = vadd.f32 %v2593, 1.0
      %v2605 = vadd.f32 %v2595, 1.0
      %v2606 = vadd.f32 %v2597, 1.0
      %v2607 = vadd.f32 %v2599, 1.0
      %v2608 = vrcp.pop %v2600
      %v2609 = vmul.f32 1.0, %v2608
      %v2610 = vrcp.pop %v2601
      %v2611 = vmul.f32 1.0, %v2610
      %v2612 = vrcp.pop %v2602
      %v2613 = vmul.f32 1.0, %v2612
      %v2614 = vrcp.pop %v2603
      %v2615 = vmul.f32 1.0, %v2614
      %v2616 = vrcp.pop %v2604
      %v2617 = vmul.f32 1.0, %v2616
      %v2618 = vrcp.pop %v2605
      %v2619 = vmul.f32 1.0, %v2618
      %v2620 = vrcp.pop %v2606
      %v2621 = vmul.f32 1.0, %v2620
      %v2622 = vrcp.pop %v2607
      %v2623 = vmul.f32 1.0, %v2622
      %v2624 = vmul.f32 %v2568, %v2609
      %v2625 = vmul.f32 %v2569, %v2611
      %v2626 = vmul.f32 %v2570, %v2613
      %v2627 = vmul.f32 %v2571, %v2615
      %v2628 = vmul.f32 %v2572, %v2617
      %v2629 = vmul.f32 %v2573, %v2619
      %v2630 = vmul.f32 %v2574, %v2621
      %v2631 = vmul.f32 %v2575, %v2623
      %s2632 = scalar_lea.vmem %s4, 48
      %v2633 = vld [vmem:[%s2632] sm:$0xff]
      %v2634 = vld [vmem:[%s2632 + $0x8] sm:$0xf]
      %v2635 = vld [vmem:[%s2632 + $0xc] sm:$0xff]
      %v2636 = vld [vmem:[%s2632 + $0x14] sm:$0xf]
      %v2637 = vld [vmem:[%s2632 + $0x18] sm:$0xff]
      %v2638 = vld [vmem:[%s2632 + $0x20] sm:$0xf]
      %v2639 = vld [vmem:[%s2632 + $0x24] sm:$0xff]
      %v2640 = vld [vmem:[%s2632 + $0x2c] sm:$0xf]
      %s2641 = scalar_lea.vmem %s5, 32
      %v2642 = vld [vmem:[%s2641] sm:$0xff]
      %v2643 = vld [vmem:[%s2641 + $0x8] sm:$0xff]
      %v2644 = vld [vmem:[%s2641 + $0x10] sm:$0xff]
      %v2645 = vld [vmem:[%s2641 + $0x18] sm:$0xff]
      %v2646 = vpack.c.bf16 %v2626, %v2624
      %v2647 = vpack.c.bf16 %v2627, %v2625
      %v2648 = vpack.c.bf16 %v2630, %v2628
      %v2649 = vpack.c.bf16 %v2631, %v2629
      %2652 = vrot.lane.b32.xlu0 %v2647, 17
      %v2653 = vpop.permute.xlu0 %2652
      %2654 = vrot.lane.b32.xlu0 %v2649, 17
      %v2655 = vpop.permute.xlu0 %2654
      %2658 = vrot.lane.b32.xlu0 %v2646, 17
      %v2659 = vpop.permute.xlu0 %2658
      %2660 = vrot.lane.b32.xlu0 %v2648, 17
      %v2661 = vpop.permute.xlu0 %2660
      %v2662 = vsel %vm601, %v2659, %v2653
      %v2663 = vsel %vm601, %v2661, %v2655
      %v2668 = vsel %vm606, %v2653, %v2659
      %v2672 = vsel %vm606, %v2655, %v2661
      %v2674 = vld [vmem:[%s13] sm:$0xff]
      %v2675 = vld [vmem:[%s13 + $0x8] sm:$0xff]
      %v2676 = vld [vmem:[%s13 + $0x10] sm:$0xff]
      %v2677 = vld [vmem:[%s13 + $0x18] sm:$0xff]
      %v2682 = vunpack.c.l.b16 %v2674
      %v2683 = vunpack.c.h.b16 %v2674
      %v2684 = vunpack.c.l.b16 %v2675
      %v2685 = vunpack.c.h.b16 %v2675
      %v2686 = vunpack.c.l.b16 %v2676
      %v2687 = vunpack.c.h.b16 %v2676
      %v2688 = vunpack.c.l.b16 %v2677
      %v2689 = vunpack.c.h.b16 %v2677
      %v2690 = vpack.c.b16 %v2684, %v2682
      %v2691 = vpack.c.b16 %v2685, %v2683
      %v2692 = vpack.c.b16 %v2688, %v2686
      %v2693 = vpack.c.b16 %v2689, %v2687
      %v2698 = vmul.bf16 %v2668, %v2690
      %v2699 = vmul.bf16 %v2662, %v2691
      %v2700 = vmul.bf16 %v2672, %v2692
      %v2701 = vmul.bf16 %v2663, %v2693
      %2702 = vst [vmem:[#allocation2] sm:$0xff] %v2698
      %2703 = vst [vmem:[#allocation2 + $0x8] sm:$0xff] %v2699
      %2704 = vst [vmem:[#allocation2 + $0x10] sm:$0xff] %v2700
      %2705 = vst [vmem:[#allocation2 + $0x18] sm:$0xff] %v2701
      %2706 = vrot.lane.b32.xlu0 %v2647, 16
      %v2707 = vpop.permute.xlu0 %2706
      %2708 = vrot.lane.b32.xlu0 %v2649, 16
      %v2709 = vpop.permute.xlu0 %2708
      %2710 = vrot.lane.b32.xlu0 %v2646, 16
      %v2711 = vpop.permute.xlu0 %2710
      %2712 = vrot.lane.b32.xlu0 %v2648, 16
      %v2713 = vpop.permute.xlu0 %2712
      %v2714 = vsel %vm655, %v2711, %v2707
      %v2715 = vsel %vm655, %v2713, %v2709
      %v2720 = vsel %vm660, %v2707, %v2711
      %v2724 = vsel %vm660, %v2709, %v2713
      %v2726 = vld [vmem:[%s669] sm:$0xff]
      %v2727 = vld [vmem:[%s669 + $0x8] sm:$0xff]
      %v2728 = vld [vmem:[%s669 + $0x10] sm:$0xff]
      %v2729 = vld [vmem:[%s669 + $0x18] sm:$0xff]
      %v2734 = vunpack.c.l.b16 %v2726
      %v2735 = vunpack.c.h.b16 %v2726
      %v2736 = vunpack.c.l.b16 %v2727
      %v2737 = vunpack.c.h.b16 %v2727
      %v2738 = vunpack.c.l.b16 %v2728
      %v2739 = vunpack.c.h.b16 %v2728
      %v2740 = vunpack.c.l.b16 %v2729
      %v2741 = vunpack.c.h.b16 %v2729
      %v2742 = vpack.c.b16 %v2736, %v2734
      %v2743 = vpack.c.b16 %v2737, %v2735
      %v2744 = vpack.c.b16 %v2740, %v2738
      %v2745 = vpack.c.b16 %v2741, %v2739
      %v2750 = vmul.bf16 %v2720, %v2742
      %v2751 = vmul.bf16 %v2714, %v2743
      %v2752 = vmul.bf16 %v2724, %v2744
      %v2753 = vmul.bf16 %v2715, %v2745
      %2754 = vst [vmem:[#allocation2 + $0x20] sm:$0xff] %v2750
      %2755 = vst [vmem:[#allocation2 + $0x28] sm:$0xff] %v2751
      %2756 = vst [vmem:[#allocation2 + $0x30] sm:$0xff] %v2752
      %2757 = vst [vmem:[#allocation2 + $0x38] sm:$0xff] %v2753
      %2758 = vrot.lane.b32.xlu0 %v2647, 15
      %v2759 = vpop.permute.xlu0 %2758
      %2760 = vrot.lane.b32.xlu0 %v2649, 15
      %v2761 = vpop.permute.xlu0 %2760
      %2762 = vrot.lane.b32.xlu0 %v2646, 15
      %v2763 = vpop.permute.xlu0 %2762
      %2764 = vrot.lane.b32.xlu0 %v2648, 15
      %v2765 = vpop.permute.xlu0 %2764
      %v2766 = vsel %vm710, %v2763, %v2759
      %v2767 = vsel %vm710, %v2765, %v2761
      %v2772 = vsel %vm715, %v2759, %v2763
      %v2776 = vsel %vm715, %v2761, %v2765
      %v2778 = vld [vmem:[%s724] sm:$0xff]
      %v2779 = vld [vmem:[%s724 + $0x8] sm:$0xff]
      %v2780 = vld [vmem:[%s724 + $0x10] sm:$0xff]
      %v2781 = vld [vmem:[%s724 + $0x18] sm:$0xff]
      %v2786 = vunpack.c.l.b16 %v2778
      %v2787 = vunpack.c.h.b16 %v2778
      %v2788 = vunpack.c.l.b16 %v2779
      %v2789 = vunpack.c.h.b16 %v2779
      %v2790 = vunpack.c.l.b16 %v2780
      %v2791 = vunpack.c.h.b16 %v2780
      %v2792 = vunpack.c.l.b16 %v2781
      %v2793 = vunpack.c.h.b16 %v2781
      %v2794 = vpack.c.b16 %v2788, %v2786
      %v2795 = vpack.c.b16 %v2789, %v2787
      %v2796 = vpack.c.b16 %v2792, %v2790
      %v2797 = vpack.c.b16 %v2793, %v2791
      %v2802 = vmul.bf16 %v2772, %v2794
      %v2803 = vmul.bf16 %v2766, %v2795
      %v2804 = vmul.bf16 %v2776, %v2796
      %v2805 = vmul.bf16 %v2767, %v2797
      %2806 = vst [vmem:[#allocation2 + $0x40] sm:$0xff] %v2802
      %2807 = vst [vmem:[#allocation2 + $0x48] sm:$0xff] %v2803
      %2808 = vst [vmem:[#allocation2 + $0x50] sm:$0xff] %v2804
      %2809 = vst [vmem:[#allocation2 + $0x58] sm:$0xff] %v2805
      %2810 = vrot.lane.b32.xlu0 %v2647, 1
      %v2811 = vpop.permute.xlu0 %2810
      %2812 = vrot.lane.b32.xlu0 %v2649, 1
      %v2813 = vpop.permute.xlu0 %2812
      %2814 = vrot.lane.b32.xlu0 %v2646, 1
      %v2815 = vpop.permute.xlu0 %2814
      %2816 = vrot.lane.b32.xlu0 %v2648, 1
      %v2817 = vpop.permute.xlu0 %2816
      %v2818 = vsel %vm765, %v2815, %v2811
      %v2819 = vsel %vm765, %v2817, %v2813
      %v2824 = vsel %vm770, %v2811, %v2815
      %v2828 = vsel %vm770, %v2813, %v2817
      %v2830 = vld [vmem:[%s779] sm:$0xff]
      %v2831 = vld [vmem:[%s779 + $0x8] sm:$0xff]
      %v2832 = vld [vmem:[%s779 + $0x10] sm:$0xff]
      %v2833 = vld [vmem:[%s779 + $0x18] sm:$0xff]
      %v2838 = vunpack.c.l.b16 %v2830
      %v2839 = vunpack.c.h.b16 %v2830
      %v2840 = vunpack.c.l.b16 %v2831
      %v2841 = vunpack.c.h.b16 %v2831
      %v2842 = vunpack.c.l.b16 %v2832
      %v2843 = vunpack.c.h.b16 %v2832
      %v2844 = vunpack.c.l.b16 %v2833
      %v2845 = vunpack.c.h.b16 %v2833
      %v2846 = vpack.c.b16 %v2840, %v2838
      %v2847 = vpack.c.b16 %v2841, %v2839
      %v2848 = vpack.c.b16 %v2844, %v2842
      %v2849 = vpack.c.b16 %v2845, %v2843
      %v2854 = vmul.bf16 %v2824, %v2846
      %v2855 = vmul.bf16 %v2818, %v2847
      %v2856 = vmul.bf16 %v2828, %v2848
      %v2857 = vmul.bf16 %v2819, %v2849
      %2858 = vst [vmem:[#allocation2 + $0x60] sm:$0xff] %v2854
      %2859 = vst [vmem:[#allocation2 + $0x68] sm:$0xff] %v2855
      %2860 = vst [vmem:[#allocation2 + $0x70] sm:$0xff] %v2856
      %2861 = vst [vmem:[#allocation2 + $0x78] sm:$0xff] %v2857
      %2862 = vst [vmem:[#allocation2 + $0x80] sm:$0xff] %v2646
      %2863 = vst [vmem:[#allocation2 + $0x88] sm:$0xff] %v2647
      %2864 = vst [vmem:[#allocation2 + $0x90] sm:$0xff] %v2648
      %2865 = vst [vmem:[#allocation2 + $0x98] sm:$0xff] %v2649
      %2866 = vrot.lane.b32.xlu0 %v2646, 127
      %v2867 = vpop.permute.xlu0 %2866
      %2868 = vrot.lane.b32.xlu0 %v2647, 127
      %v2869 = vpop.permute.xlu0 %2868
      %2870 = vrot.lane.b32.xlu0 %v2648, 127
      %v2871 = vpop.permute.xlu0 %2870
      %2872 = vrot.lane.b32.xlu0 %v2649, 127
      %v2873 = vpop.permute.xlu0 %2872
      %v2874 = vsel %vm824, %v2867, %v2869
      %v2875 = vsel %vm824, %v2871, %v2873
      %v2880 = vsel %vm829, %v2869, %v2867
      %v2884 = vsel %vm829, %v2873, %v2871
      %v2886 = vld [vmem:[%s838] sm:$0xff]
      %v2887 = vld [vmem:[%s838 + $0x8] sm:$0xff]
      %v2888 = vld [vmem:[%s838 + $0x10] sm:$0xff]
      %v2889 = vld [vmem:[%s838 + $0x18] sm:$0xff]
      %v2894 = vunpack.c.l.b16 %v2886
      %v2895 = vunpack.c.h.b16 %v2886
      %v2896 = vunpack.c.l.b16 %v2887
      %v2897 = vunpack.c.h.b16 %v2887
      %v2898 = vunpack.c.l.b16 %v2888
      %v2899 = vunpack.c.h.b16 %v2888
      %v2900 = vunpack.c.l.b16 %v2889
      %v2901 = vunpack.c.h.b16 %v2889
      %v2902 = vpack.c.b16 %v2896, %v2894
      %v2903 = vpack.c.b16 %v2897, %v2895
      %v2904 = vpack.c.b16 %v2900, %v2898
      %v2905 = vpack.c.b16 %v2901, %v2899
      %v2910 = vmul.bf16 %v2874, %v2902
      %v2911 = vmul.bf16 %v2880, %v2903
      %v2912 = vmul.bf16 %v2875, %v2904
      %v2913 = vmul.bf16 %v2884, %v2905
      %2914 = vst [vmem:[#allocation2 + $0xa0] sm:$0xff] %v2910
      %2915 = vst [vmem:[#allocation2 + $0xa8] sm:$0xff] %v2911
      %2916 = vst [vmem:[#allocation2 + $0xb0] sm:$0xff] %v2912
      %2917 = vst [vmem:[#allocation2 + $0xb8] sm:$0xff] %v2913
      %2918 = vrot.lane.b32.xlu0 %v2646, 113
      %v2919 = vpop.permute.xlu0 %2918
      %2920 = vrot.lane.b32.xlu0 %v2647, 113
      %v2921 = vpop.permute.xlu0 %2920
      %2922 = vrot.lane.b32.xlu0 %v2648, 113
      %v2923 = vpop.permute.xlu0 %2922
      %2924 = vrot.lane.b32.xlu0 %v2649, 113
      %v2925 = vpop.permute.xlu0 %2924
      %v2926 = vsel %vm879, %v2919, %v2921
      %v2927 = vsel %vm879, %v2923, %v2925
      %v2932 = vsel %vm884, %v2921, %v2919
      %v2936 = vsel %vm884, %v2925, %v2923
      %v2938 = vld [vmem:[%s893] sm:$0xff]
      %v2939 = vld [vmem:[%s893 + $0x8] sm:$0xff]
      %v2940 = vld [vmem:[%s893 + $0x10] sm:$0xff]
      %v2941 = vld [vmem:[%s893 + $0x18] sm:$0xff]
      %v2946 = vunpack.c.l.b16 %v2938
      %v2947 = vunpack.c.h.b16 %v2938
      %v2948 = vunpack.c.l.b16 %v2939
      %v2949 = vunpack.c.h.b16 %v2939
      %v2950 = vunpack.c.l.b16 %v2940
      %v2951 = vunpack.c.h.b16 %v2940
      %v2952 = vunpack.c.l.b16 %v2941
      %v2953 = vunpack.c.h.b16 %v2941
      %v2954 = vpack.c.b16 %v2948, %v2946
      %v2955 = vpack.c.b16 %v2949, %v2947
      %v2956 = vpack.c.b16 %v2952, %v2950
      %v2957 = vpack.c.b16 %v2953, %v2951
      %v2962 = vmul.bf16 %v2926, %v2954
      %v2963 = vmul.bf16 %v2932, %v2955
      %v2964 = vmul.bf16 %v2927, %v2956
      %v2965 = vmul.bf16 %v2936, %v2957
      %2966 = vst [vmem:[#allocation2 + $0xc0] sm:$0xff] %v2962
      %2967 = vst [vmem:[#allocation2 + $0xc8] sm:$0xff] %v2963
      %2968 = vst [vmem:[#allocation2 + $0xd0] sm:$0xff] %v2964
      %2969 = vst [vmem:[#allocation2 + $0xd8] sm:$0xff] %v2965
      %2970 = vrot.lane.b32.xlu0 %v2646, 112
      %v2971 = vpop.permute.xlu0 %2970
      %2972 = vrot.lane.b32.xlu0 %v2647, 112
      %v2973 = vpop.permute.xlu0 %2972
      %2974 = vrot.lane.b32.xlu0 %v2648, 112
      %v2975 = vpop.permute.xlu0 %2974
      %2976 = vrot.lane.b32.xlu0 %v2649, 112
      %v2977 = vpop.permute.xlu0 %2976
      %v2978 = vsel %vm934, %v2971, %v2973
      %v2979 = vsel %vm934, %v2975, %v2977
      %v2984 = vsel %vm939, %v2973, %v2971
      %v2988 = vsel %vm939, %v2977, %v2975
      %v2990 = vld [vmem:[%s948] sm:$0xff]
      %v2991 = vld [vmem:[%s948 + $0x8] sm:$0xff]
      %v2992 = vld [vmem:[%s948 + $0x10] sm:$0xff]
      %v2993 = vld [vmem:[%s948 + $0x18] sm:$0xff]
      %v2998 = vunpack.c.l.b16 %v2990
      %v2999 = vunpack.c.h.b16 %v2990
      %v3000 = vunpack.c.l.b16 %v2991
      %v3001 = vunpack.c.h.b16 %v2991
      %v3002 = vunpack.c.l.b16 %v2992
      %v3003 = vunpack.c.h.b16 %v2992
      %v3004 = vunpack.c.l.b16 %v2993
      %v3005 = vunpack.c.h.b16 %v2993
      %v3006 = vpack.c.b16 %v3000, %v2998
      %v3007 = vpack.c.b16 %v3001, %v2999
      %v3008 = vpack.c.b16 %v3004, %v3002
      %v3009 = vpack.c.b16 %v3005, %v3003
      %v3014 = vmul.bf16 %v2978, %v3006
      %v3015 = vmul.bf16 %v2984, %v3007
      %v3016 = vmul.bf16 %v2979, %v3008
      %v3017 = vmul.bf16 %v2988, %v3009
      %3018 = vst [vmem:[#allocation2 + $0xe0] sm:$0xff] %v3014
      %3019 = vst [vmem:[#allocation2 + $0xe8] sm:$0xff] %v3015
      %3020 = vst [vmem:[#allocation2 + $0xf0] sm:$0xff] %v3016
      %3021 = vst [vmem:[#allocation2 + $0xf8] sm:$0xff] %v3017
      %3022 = vrot.lane.b32.xlu0 %v2646, 111
      %v3023 = vpop.permute.xlu0 %3022
      %3024 = vrot.lane.b32.xlu0 %v2647, 111
      %v3025 = vpop.permute.xlu0 %3024
      %3026 = vrot.lane.b32.xlu0 %v2648, 111
      %v3027 = vpop.permute.xlu0 %3026
      %3028 = vrot.lane.b32.xlu0 %v2649, 111
      %v3029 = vpop.permute.xlu0 %3028
      %v3030 = vsel %vm989, %v3023, %v3025
      %v3031 = vsel %vm989, %v3027, %v3029
      %v3036 = vsel %vm994, %v3025, %v3023
      %v3040 = vsel %vm994, %v3029, %v3027
      %v3042 = vld [vmem:[%s1003] sm:$0xff]
      %v3043 = vld [vmem:[%s1003 + $0x8] sm:$0xff]
      %v3044 = vld [vmem:[%s1003 + $0x10] sm:$0xff]
      %v3045 = vld [vmem:[%s1003 + $0x18] sm:$0xff]
      %v3050 = vunpack.c.l.b16 %v3042
      %v3051 = vunpack.c.h.b16 %v3042
      %v3052 = vunpack.c.l.b16 %v3043
      %v3053 = vunpack.c.h.b16 %v3043
      %v3054 = vunpack.c.l.b16 %v3044
      %v3055 = vunpack.c.h.b16 %v3044
      %v3056 = vunpack.c.l.b16 %v3045
      %v3057 = vunpack.c.h.b16 %v3045
      %v3058 = vpack.c.b16 %v3052, %v3050
      %v3059 = vpack.c.b16 %v3053, %v3051
      %v3060 = vpack.c.b16 %v3056, %v3054
      %v3061 = vpack.c.b16 %v3057, %v3055
      %v3066 = vmul.bf16 %v3030, %v3058
      %v3067 = vmul.bf16 %v3036, %v3059
      %v3068 = vmul.bf16 %v3031, %v3060
      %v3069 = vmul.bf16 %v3040, %v3061
      %3070 = vst [vmem:[#allocation2 + $0x100] sm:$0xff] %v3066
      %3071 = vst [vmem:[#allocation2 + $0x108] sm:$0xff] %v3067
      %3072 = vst [vmem:[#allocation2 + $0x110] sm:$0xff] %v3068
      %3073 = vst [vmem:[#allocation2 + $0x118] sm:$0xff] %v3069
      %v3074 = vld [vmem:[#allocation2] sm:$0xff]
      %v3075 = vld [vmem:[#allocation2 + $0x8] sm:$0xff]
      %v3076 = vld [vmem:[#allocation2 + $0x10] sm:$0xff]
      %v3077 = vld [vmem:[#allocation2 + $0x18] sm:$0xff]
      %v3078 = vld [vmem:[#allocation2 + $0x20] sm:$0xff]
      %v3079 = vld [vmem:[#allocation2 + $0x28] sm:$0xff]
      %v3080 = vld [vmem:[#allocation2 + $0x30] sm:$0xff]
      %v3081 = vld [vmem:[#allocation2 + $0x38] sm:$0xff]
      %v3082 = vld [vmem:[#allocation2 + $0x40] sm:$0xff]
      %v3083 = vld [vmem:[#allocation2 + $0x48] sm:$0xff]
      %v3084 = vld [vmem:[#allocation2 + $0x50] sm:$0xff]
      %v3085 = vld [vmem:[#allocation2 + $0x58] sm:$0xff]
      %v3086 = vld [vmem:[#allocation2 + $0x60] sm:$0xff]
      %v3087 = vld [vmem:[#allocation2 + $0x68] sm:$0xff]
      %v3088 = vld [vmem:[#allocation2 + $0x70] sm:$0xff]
      %v3089 = vld [vmem:[#allocation2 + $0x78] sm:$0xff]
      %v3090 = vld [vmem:[#allocation2 + $0x80] sm:$0xff]
      %v3091 = vld [vmem:[#allocation2 + $0x88] sm:$0xff]
      %v3092 = vld [vmem:[#allocation2 + $0x90] sm:$0xff]
      %v3093 = vld [vmem:[#allocation2 + $0x98] sm:$0xff]
      %v3094 = vld [vmem:[#allocation2 + $0xa0] sm:$0xff]
      %v3095 = vld [vmem:[#allocation2 + $0xa8] sm:$0xff]
      %v3096 = vld [vmem:[#allocation2 + $0xb0] sm:$0xff]
      %v3097 = vld [vmem:[#allocation2 + $0xb8] sm:$0xff]
      %v3098 = vld [vmem:[#allocation2 + $0xc0] sm:$0xff]
      %v3099 = vld [vmem:[#allocation2 + $0xc8] sm:$0xff]
      %v3100 = vld [vmem:[#allocation2 + $0xd0] sm:$0xff]
      %v3101 = vld [vmem:[#allocation2 + $0xd8] sm:$0xff]
      %v3102 = vld [vmem:[#allocation2 + $0xe0] sm:$0xff]
      %v3103 = vld [vmem:[#allocation2 + $0xe8] sm:$0xff]
      %v3104 = vld [vmem:[#allocation2 + $0xf0] sm:$0xff]
      %v3105 = vld [vmem:[#allocation2 + $0xf8] sm:$0xff]
      %v3106 = vld [vmem:[#allocation2 + $0x100] sm:$0xff]
      %v3107 = vld [vmem:[#allocation2 + $0x108] sm:$0xff]
      %v3108 = vld [vmem:[#allocation2 + $0x110] sm:$0xff]
      %v3109 = vld [vmem:[#allocation2 + $0x118] sm:$0xff]
      %3111 = vset.pattern.permute.xlu0 0
      %3112 = vperm.xlu0 %3111, %v2642
      %v3113 = vpop.permute.xlu0 %3112
      %3116 = vset.pattern.permute.xlu0 0
      %3117 = vperm.xlu0 %3116, %v2643
      %v3118 = vpop.permute.xlu0 %3117
      %3121 = vset.pattern.permute.xlu0 0
      %3122 = vperm.xlu0 %3121, %v2644
      %v3123 = vpop.permute.xlu0 %3122
      %3126 = vset.pattern.permute.xlu0 0
      %3127 = vperm.xlu0 %3126, %v2645
      %v3128 = vpop.permute.xlu0 %3127
      %v3138 = vunpack.c.l.b16 %v2633
      %v3139 = vunpack.c.h.b16 %v2633
      %v3140 = vunpack.c.l.b16 %v2634
      %v3141 = vunpack.c.l.b16 %v2635
      %v3142 = vunpack.c.h.b16 %v2635
      %v3143 = vunpack.c.l.b16 %v2636
      %v3144 = vunpack.c.l.b16 %v2637
      %v3145 = vunpack.c.h.b16 %v2637
      %v3146 = vunpack.c.l.b16 %v2638
      %v3147 = vunpack.c.l.b16 %v2639
      %v3148 = vunpack.c.h.b16 %v2639
      %v3149 = vunpack.c.l.b16 %v2640
      %v3150 = vpack.c.b16 %v3141, %v3138
      %v3151 = vpack.c.b16 %v3142, %v3139
      %v3152 = vpack.c.b16 %v3143, %v3140
      %v3153 = vpack.c.b16 %v3147, %v3144
      %v3154 = vpack.c.b16 %v3148, %v3145
      %v3155 = vpack.c.b16 %v3149, %v3146
      %v3161 = vsel %vm1122, %v3152, 0
      %v3164 = vsel %vm1122, %v3155, 0
      %3166 = vmatprep.subr.bf16.mxu0 %v3075
      %3167 = vmatpush1.bf16.msra.mxu0 %v3074
      %3168 = vmatprep.subr.bf16.mxu0 %v3077
      %3169 = vmatpush1.bf16.msra.mxu0 %v3076
      %3170 = vmatprep.subr.bf16.mxu0 %v3079
      %3171 = vmatpush1.bf16.msra.mxu0 %v3078
      %3172 = vmatprep.subr.bf16.mxu0 %v3081
      %3173 = vmatpush1.bf16.msra.mxu0 %v3080
      %3174 = vmatprep.subr.bf16.mxu0 %v3083
      %3175 = vmatpush1.bf16.msra.mxu0 %v3082
      %3176 = vmatprep.subr.bf16.mxu0 %v3085
      %3177 = vmatpush1.bf16.msra.mxu0 %v3084
      %3178 = vmatprep.subr.bf16.mxu0 %v3087
      %3179 = vmatpush1.bf16.msra.mxu0 %v3086
      %3180 = vmatprep.subr.bf16.mxu0 %v3089
      %3181 = vmatpush1.bf16.msra.mxu0 %v3088
      %3182 = vmatprep.subr.bf16.mxu0 %v3091
      %3183 = vmatpush1.bf16.msra.mxu0 %v3090
      %3184 = vmatprep.subr.bf16.mxu0 %v3093
      %3185 = vmatpush1.bf16.msra.mxu0 %v3092
      %3186 = vmatprep.subr.bf16.mxu0 %v3095
      %3187 = vmatpush1.bf16.msra.mxu0 %v3094
      %3188 = vmatprep.subr.bf16.mxu0 %v3097
      %3189 = vmatpush1.bf16.msra.mxu0 %v3096
      %3190 = vmatprep.subr.bf16.mxu0 %v3099
      %3191 = vmatpush1.bf16.msra.mxu0 %v3098
      %3192 = vmatprep.subr.bf16.mxu0 %v3101
      %3193 = vmatpush1.bf16.msra.mxu0 %v3100
      %3194 = vmatprep.subr.bf16.mxu0 %v3103
      %3195 = vmatpush1.bf16.msra.mxu0 %v3102
      %3196 = vmatprep.subr.bf16.mxu0 %v3105
      %3197 = vmatpush1.bf16.msra.mxu0 %v3104
      %3198 = vmatprep.mubr.bf16.mxu0 %v3151
      %3199 = vmatmul.mubr.bf16.gmra.mrb[0].mxu0 %v3150
      %v3200 = vpop.f32.mrb[0].mxu0
      %v3201 = vadd.f32 %v3113, %v3200
      %v3202 = vpop.f32.mrb[0].mxu0
      %v3203 = vadd.f32 %v3113, %v3202
      %v3204 = vpop.f32.mrb[0].mxu0
      %v3205 = vadd.f32 %v3118, %v3204
      %v3206 = vpop.f32.mrb[0].mxu0
      %v3207 = vadd.f32 %v3118, %v3206
      %3208 = vmatprep.mubr.bf16.mxu0 %v3154
      %3209 = vmatmul.mubr.bf16.gmra.mrb[0].mxu0 %v3153
      %v3210 = vpop.f32.mrb[0].mxu0
      %v3211 = vadd.f32 %v3123, %v3210
      %v3212 = vpop.f32.mrb[0].mxu0
      %v3213 = vadd.f32 %v3123, %v3212
      %v3214 = vpop.f32.mrb[0].mxu0
      %v3215 = vadd.f32 %v3128, %v3214
      %v3216 = vpop.f32.mrb[0].mxu0
      %v3217 = vadd.f32 %v3128, %v3216
      %3218 = vdwg.mxu0
      %3219 = vmatprep.subr.bf16.mxu0 %v3107
      %3220 = vmatpush1.bf16.msra.mxu0 %v3106
      %3221 = vmatprep.subr.bf16.mxu0 %v3109
      %3222 = vmatpush1.bf16.msra.mxu0 %v3108
      %3223 = vmatprep.subr.bf16.mxu0 0
      %3224 = vmatpush1.bf16.msra.mxu0 0
      %3225 = vmatprep.subr.bf16.mxu0 0
      %3226 = vmatpush1.bf16.msra.mxu0 0
      %3227 = vmatprep.subr.bf16.mxu0 0
      %3228 = vmatpush1.bf16.msra.mxu0 0
      %3229 = vmatprep.subr.bf16.mxu0 0
      %3230 = vmatpush1.bf16.msra.mxu0 0
      %3231 = vmatprep.subr.bf16.mxu0 0
      %3232 = vmatpush1.bf16.msra.mxu0 0
      %3233 = vmatprep.subr.bf16.mxu0 0
      %3234 = vmatpush1.bf16.msra.mxu0 0
      %3235 = vmatprep.subr.bf16.mxu0 0
      %3236 = vmatpush1.bf16.msra.mxu0 0
      %3237 = vmatprep.subr.bf16.mxu0 0
      %3238 = vmatpush1.bf16.msra.mxu0 0
      %3239 = vmatprep.subr.bf16.mxu0 0
      %3240 = vmatpush1.bf16.msra.mxu0 0
      %3241 = vmatprep.subr.bf16.mxu0 0
      %3242 = vmatpush1.bf16.msra.mxu0 0
      %3243 = vmatprep.subr.bf16.mxu0 0
      %3244 = vmatpush1.bf16.msra.mxu0 0
      %3245 = vmatprep.subr.bf16.mxu0 0
      %3246 = vmatpush1.bf16.msra.mxu0 0
      %3247 = vmatprep.subr.bf16.mxu0 0
      %3248 = vmatpush1.bf16.msra.mxu0 0
      %3249 = vmatprep.subr.bf16.mxu0 0
      %3250 = vmatpush1.bf16.msra.mxu0 0
      %3251 = vmatprep.mubr.bf16.mxu0 0
      %3252 = vmatmul.mubr.bf16.gmra.mrb[0].mxu0 %v3161
      %v3253 = vpop.f32.mrb[0].mxu0
      %v3254 = vadd.f32 %v3201, %v3253
      %v3255 = vpop.f32.mrb[0].mxu0
      %v3256 = vadd.f32 %v3203, %v3255
      %v3257 = vpop.f32.mrb[0].mxu0
      %v3258 = vadd.f32 %v3205, %v3257
      %v3259 = vpop.f32.mrb[0].mxu0
      %v3260 = vadd.f32 %v3207, %v3259
      %3261 = vmatprep.mubr.bf16.mxu0 0
      %3262 = vmatmul.mubr.bf16.gmra.mrb[0].mxu0 %v3164
      %v3263 = vpop.f32.mrb[0].mxu0
      %v3264 = vadd.f32 %v3211, %v3263
      %v3265 = vpop.f32.mrb[0].mxu0
      %v3266 = vadd.f32 %v3213, %v3265
      %v3267 = vpop.f32.mrb[0].mxu0
      %v3268 = vadd.f32 %v3215, %v3267
      %v3269 = vpop.f32.mrb[0].mxu0
      %v3270 = vadd.f32 %v3217, %v3269
      %3271 = vdwg.mxu0
      %v3272 = vadd.f32 %v1217, %v3254
      %v3273 = vadd.f32 %v1219, %v3256
      %v3274 = vadd.f32 %v1221, %v3258
      %v3275 = vadd.f32 %v1223, %v3260
      %v3276 = vadd.f32 %v1227, %v3264
      %v3277 = vadd.f32 %v1229, %v3266
      %v3278 = vadd.f32 %v1231, %v3268
      %v3279 = vadd.f32 %v1233, %v3270
      %s3280 = scalar_lea.vmem %s4, 96
      %v3281 = vld [vmem:[%s3280] sm:$0xff]
      %v3282 = vld [vmem:[%s3280 + $0x8] sm:$0xf]
      %v3283 = vld [vmem:[%s3280 + $0xc] sm:$0xff]
      %v3284 = vld [vmem:[%s3280 + $0x14] sm:$0xf]
      %v3285 = vld [vmem:[%s3280 + $0x18] sm:$0xff]
      %v3286 = vld [vmem:[%s3280 + $0x20] sm:$0xf]
      %v3287 = vld [vmem:[%s3280 + $0x24] sm:$0xff]
      %v3288 = vld [vmem:[%s3280 + $0x2c] sm:$0xf]
      %s3289 = scalar_lea.vmem %s5, 64
      %v3290 = vld [vmem:[%s3289] sm:$0xff]
      %v3291 = vld [vmem:[%s3289 + $0x8] sm:$0xff]
      %v3292 = vld [vmem:[%s3289 + $0x10] sm:$0xff]
      %v3293 = vld [vmem:[%s3289 + $0x18] sm:$0xff]
      %v3294 = vpack.c.bf16 %v3274, %v3272
      %v3295 = vpack.c.bf16 %v3275, %v3273
      %v3296 = vpack.c.bf16 %v3278, %v3276
      %v3297 = vpack.c.bf16 %v3279, %v3277
      %3298 = vst [vmem:[#allocation2] sm:$0xff] %v3294
      %3299 = vst [vmem:[#allocation2 + $0x8] sm:$0xff] %v3295
      %3300 = vst [vmem:[#allocation2 + $0x10] sm:$0xff] %v3296
      %3301 = vst [vmem:[#allocation2 + $0x18] sm:$0xff] %v3297
      %3306 = vrot.lane.b32.xlu0 %v3294, 127
      %v3307 = vpop.permute.xlu0 %3306
      %3308 = vrot.lane.b32.xlu0 %v3295, 127
      %v3309 = vpop.permute.xlu0 %3308
      %3310 = vrot.lane.b32.xlu0 %v3296, 127
      %v3311 = vpop.permute.xlu0 %3310
      %3312 = vrot.lane.b32.xlu0 %v3297, 127
      %v3313 = vpop.permute.xlu0 %3312
      %v3314 = vsel %vm824, %v3307, %v3309
      %v3315 = vsel %vm824, %v3311, %v3313
      %v3320 = vsel %vm829, %v3309, %v3307
      %v3324 = vsel %vm829, %v3313, %v3311
      %s3326 = scalar_lea.vmem %s14, 32
      %v3327 = vld [vmem:[%s3326] sm:$0xff]
      %v3328 = vld [vmem:[%s3326 + $0x8] sm:$0xff]
      %v3329 = vld [vmem:[%s3326 + $0x10] sm:$0xff]
      %v3330 = vld [vmem:[%s3326 + $0x18] sm:$0xff]
      %v3335 = vunpack.c.l.b16 %v3327
      %v3336 = vunpack.c.h.b16 %v3327
      %v3337 = vunpack.c.l.b16 %v3328
      %v3338 = vunpack.c.h.b16 %v3328
      %v3339 = vunpack.c.l.b16 %v3329
      %v3340 = vunpack.c.h.b16 %v3329
      %v3341 = vunpack.c.l.b16 %v3330
      %v3342 = vunpack.c.h.b16 %v3330
      %v3343 = vpack.c.b16 %v3337, %v3335
      %v3344 = vpack.c.b16 %v3338, %v3336
      %v3345 = vpack.c.b16 %v3341, %v3339
      %v3346 = vpack.c.b16 %v3342, %v3340
      %v3351 = vmul.bf16 %v3314, %v3343
      %v3352 = vmul.bf16 %v3320, %v3344
      %v3353 = vmul.bf16 %v3315, %v3345
      %v3354 = vmul.bf16 %v3324, %v3346
      %3355 = vst [vmem:[#allocation2 + $0x20] sm:$0xff] %v3351
      %3356 = vst [vmem:[#allocation2 + $0x28] sm:$0xff] %v3352
      %3357 = vst [vmem:[#allocation2 + $0x30] sm:$0xff] %v3353
      %3358 = vst [vmem:[#allocation2 + $0x38] sm:$0xff] %v3354
      %3359 = vrot.lane.b32.xlu0 %v3294, 126
      %v3360 = vpop.permute.xlu0 %3359
      %3361 = vrot.lane.b32.xlu0 %v3295, 126
      %v3362 = vpop.permute.xlu0 %3361
      %3363 = vrot.lane.b32.xlu0 %v3296, 126
      %v3364 = vpop.permute.xlu0 %3363
      %3365 = vrot.lane.b32.xlu0 %v3297, 126
      %v3366 = vpop.permute.xlu0 %3365
      %vm3367 = vcmask 1031168
      %v3368 = vsel %vm3367, %v3360, %v3362
      %v3369 = vsel %vm3367, %v3364, %v3366
      %vm3372 = vcmask 1031168
      %v3375 = vsel %vm3372, %v3362, %v3360
      %v3379 = vsel %vm3372, %v3366, %v3364
      %s3381 = scalar_lea.vmem %s14, 64
      %v3382 = vld [vmem:[%s3381] sm:$0xff]
      %v3383 = vld [vmem:[%s3381 + $0x8] sm:$0xff]
      %v3384 = vld [vmem:[%s3381 + $0x10] sm:$0xff]
      %v3385 = vld [vmem:[%s3381 + $0x18] sm:$0xff]
      %v3390 = vunpack.c.l.b16 %v3382
      %v3391 = vunpack.c.h.b16 %v3382
      %v3392 = vunpack.c.l.b16 %v3383
      %v3393 = vunpack.c.h.b16 %v3383
      %v3394 = vunpack.c.l.b16 %v3384
      %v3395 = vunpack.c.h.b16 %v3384
      %v3396 = vunpack.c.l.b16 %v3385
      %v3397 = vunpack.c.h.b16 %v3385
      %v3398 = vpack.c.b16 %v3392, %v3390
      %v3399 = vpack.c.b16 %v3393, %v3391
      %v3400 = vpack.c.b16 %v3396, %v3394
      %v3401 = vpack.c.b16 %v3397, %v3395
      %v3406 = vmul.bf16 %v3368, %v3398
      %v3407 = vmul.bf16 %v3375, %v3399
      %v3408 = vmul.bf16 %v3369, %v3400
      %v3409 = vmul.bf16 %v3379, %v3401
      %3410 = vst [vmem:[#allocation2 + $0x40] sm:$0xff] %v3406
      %3411 = vst [vmem:[#allocation2 + $0x48] sm:$0xff] %v3407
      %3412 = vst [vmem:[#allocation2 + $0x50] sm:$0xff] %v3408
      %3413 = vst [vmem:[#allocation2 + $0x58] sm:$0xff] %v3409
      %3414 = vrot.lane.b32.xlu0 %v3294, 112
      %v3415 = vpop.permute.xlu0 %3414
      %3416 = vrot.lane.b32.xlu0 %v3295, 112
      %v3417 = vpop.permute.xlu0 %3416
      %3418 = vrot.lane.b32.xlu0 %v3296, 112
      %v3419 = vpop.permute.xlu0 %3418
      %3420 = vrot.lane.b32.xlu0 %v3297, 112
      %v3421 = vpop.permute.xlu0 %3420
      %v3422 = vsel %vm934, %v3415, %v3417
      %v3423 = vsel %vm934, %v3419, %v3421
      %v3428 = vsel %vm939, %v3417, %v3415
      %v3432 = vsel %vm939, %v3421, %v3419
      %s3434 = scalar_lea.vmem %s14, 96
      %v3435 = vld [vmem:[%s3434] sm:$0xff]
      %v3436 = vld [vmem:[%s3434 + $0x8] sm:$0xff]
      %v3437 = vld [vmem:[%s3434 + $0x10] sm:$0xff]
      %v3438 = vld [vmem:[%s3434 + $0x18] sm:$0xff]
      %v3443 = vunpack.c.l.b16 %v3435
      %v3444 = vunpack.c.h.b16 %v3435
      %v3445 = vunpack.c.l.b16 %v3436
      %v3446 = vunpack.c.h.b16 %v3436
      %v3447 = vunpack.c.l.b16 %v3437
      %v3448 = vunpack.c.h.b16 %v3437
      %v3449 = vunpack.c.l.b16 %v3438
      %v3450 = vunpack.c.h.b16 %v3438
      %v3451 = vpack.c.b16 %v3445, %v3443
      %v3452 = vpack.c.b16 %v3446, %v3444
      %v3453 = vpack.c.b16 %v3449, %v3447
      %v3454 = vpack.c.b16 %v3450, %v3448
      %v3459 = vmul.bf16 %v3422, %v3451
      %v3460 = vmul.bf16 %v3428, %v3452
      %v3461 = vmul.bf16 %v3423, %v3453
      %v3462 = vmul.bf16 %v3432, %v3454
      %3463 = vst [vmem:[#allocation2 + $0x60] sm:$0xff] %v3459
      %3464 = vst [vmem:[#allocation2 + $0x68] sm:$0xff] %v3460
      %3465 = vst [vmem:[#allocation2 + $0x70] sm:$0xff] %v3461
      %3466 = vst [vmem:[#allocation2 + $0x78] sm:$0xff] %v3462
      %3467 = vrot.lane.b32.xlu0 %v3294, 111
      %v3468 = vpop.permute.xlu0 %3467
      %3469 = vrot.lane.b32.xlu0 %v3295, 111
      %v3470 = vpop.permute.xlu0 %3469
      %3471 = vrot.lane.b32.xlu0 %v3296, 111
      %v3472 = vpop.permute.xlu0 %3471
      %3473 = vrot.lane.b32.xlu0 %v3297, 111
      %v3474 = vpop.permute.xlu0 %3473
      %v3475 = vsel %vm989, %v3468, %v3470
      %v3476 = vsel %vm989, %v3472, %v3474
      %v3481 = vsel %vm994, %v3470, %v3468
      %v3485 = vsel %vm994, %v3474, %v3472
      %s3487 = scalar_lea.vmem %s14, 128
      %v3488 = vld [vmem:[%s3487] sm:$0xff]
      %v3489 = vld [vmem:[%s3487 + $0x8] sm:$0xff]
      %v3490 = vld [vmem:[%s3487 + $0x10] sm:$0xff]
      %v3491 = vld [vmem:[%s3487 + $0x18] sm:$0xff]
      %v3496 = vunpack.c.l.b16 %v3488
      %v3497 = vunpack.c.h.b16 %v3488
      %v3498 = vunpack.c.l.b16 %v3489
      %v3499 = vunpack.c.h.b16 %v3489
      %v3500 = vunpack.c.l.b16 %v3490
      %v3501 = vunpack.c.h.b16 %v3490
      %v3502 = vunpack.c.l.b16 %v3491
      %v3503 = vunpack.c.h.b16 %v3491
      %v3504 = vpack.c.b16 %v3498, %v3496
      %v3505 = vpack.c.b16 %v3499, %v3497
      %v3506 = vpack.c.b16 %v3502, %v3500
      %v3507 = vpack.c.b16 %v3503, %v3501
      %v3512 = vmul.bf16 %v3475, %v3504
      %v3513 = vmul.bf16 %v3481, %v3505
      %v3514 = vmul.bf16 %v3476, %v3506
      %v3515 = vmul.bf16 %v3485, %v3507
      %3516 = vst [vmem:[#allocation2 + $0x80] sm:$0xff] %v3512
      %3517 = vst [vmem:[#allocation2 + $0x88] sm:$0xff] %v3513
      %3518 = vst [vmem:[#allocation2 + $0x90] sm:$0xff] %v3514
      %3519 = vst [vmem:[#allocation2 + $0x98] sm:$0xff] %v3515
      %3520 = vrot.lane.b32.xlu0 %v3294, 110
      %v3521 = vpop.permute.xlu0 %3520
      %3522 = vrot.lane.b32.xlu0 %v3295, 110
      %v3523 = vpop.permute.xlu0 %3522
      %3524 = vrot.lane.b32.xlu0 %v3296, 110
      %v3525 = vpop.permute.xlu0 %3524
      %3526 = vrot.lane.b32.xlu0 %v3297, 110
      %v3527 = vpop.permute.xlu0 %3526
      %vm3528 = vcmask 900096
      %v3529 = vsel %vm3528, %v3521, %v3523
      %v3530 = vsel %vm3528, %v3525, %v3527
      %vm3533 = vcmask 900096
      %v3536 = vsel %vm3533, %v3523, %v3521
      %v3540 = vsel %vm3533, %v3527, %v3525
      %s3542 = scalar_lea.vmem %s14, 160
      %v3543 = vld [vmem:[%s3542] sm:$0xff]
      %v3544 = vld [vmem:[%s3542 + $0x8] sm:$0xff]
      %v3545 = vld [vmem:[%s3542 + $0x10] sm:$0xff]
      %v3546 = vld [vmem:[%s3542 + $0x18] sm:$0xff]
      %v3551 = vunpack.c.l.b16 %v3543
      %v3552 = vunpack.c.h.b16 %v3543
      %v3553 = vunpack.c.l.b16 %v3544
      %v3554 = vunpack.c.h.b16 %v3544
      %v3555 = vunpack.c.l.b16 %v3545
      %v3556 = vunpack.c.h.b16 %v3545
      %v3557 = vunpack.c.l.b16 %v3546
      %v3558 = vunpack.c.h.b16 %v3546
      %v3559 = vpack.c.b16 %v3553, %v3551
      %v3560 = vpack.c.b16 %v3554, %v3552
      %v3561 = vpack.c.b16 %v3557, %v3555
      %v3562 = vpack.c.b16 %v3558, %v3556
      %v3567 = vmul.bf16 %v3529, %v3559
      %v3568 = vmul.bf16 %v3536, %v3560
      %v3569 = vmul.bf16 %v3530, %v3561
      %v3570 = vmul.bf16 %v3540, %v3562
      %3571 = vst [vmem:[#allocation2 + $0xa0] sm:$0xff] %v3567
      %3572 = vst [vmem:[#allocation2 + $0xa8] sm:$0xff] %v3568
      %3573 = vst [vmem:[#allocation2 + $0xb0] sm:$0xff] %v3569
      %3574 = vst [vmem:[#allocation2 + $0xb8] sm:$0xff] %v3570
      %3575 = vrot.lane.b32.xlu0 %v3294, 96
      %v3576 = vpop.permute.xlu0 %3575
      %3577 = vrot.lane.b32.xlu0 %v3295, 96
      %v3578 = vpop.permute.xlu0 %3577
      %3579 = vrot.lane.b32.xlu0 %v3296, 96
      %v3580 = vpop.permute.xlu0 %3579
      %3581 = vrot.lane.b32.xlu0 %v3297, 96
      %v3582 = vpop.permute.xlu0 %3581
      %vm3583 = vcmask 785408
      %v3584 = vsel %vm3583, %v3576, %v3578
      %v3585 = vsel %vm3583, %v3580, %v3582
      %vm3588 = vcmask 785408
      %v3591 = vsel %vm3588, %v3578, %v3576
      %v3595 = vsel %vm3588, %v3582, %v3580
      %s3597 = scalar_lea.vmem %s14, 192
      %v3598 = vld [vmem:[%s3597] sm:$0xff]
      %v3599 = vld [vmem:[%s3597 + $0x8] sm:$0xff]
      %v3600 = vld [vmem:[%s3597 + $0x10] sm:$0xff]
      %v3601 = vld [vmem:[%s3597 + $0x18] sm:$0xff]
      %v3606 = vunpack.c.l.b16 %v3598
      %v3607 = vunpack.c.h.b16 %v3598
      %v3608 = vunpack.c.l.b16 %v3599
      %v3609 = vunpack.c.h.b16 %v3599
      %v3610 = vunpack.c.l.b16 %v3600
      %v3611 = vunpack.c.h.b16 %v3600
      %v3612 = vunpack.c.l.b16 %v3601
      %v3613 = vunpack.c.h.b16 %v3601
      %v3614 = vpack.c.b16 %v3608, %v3606
      %v3615 = vpack.c.b16 %v3609, %v3607
      %v3616 = vpack.c.b16 %v3612, %v3610
      %v3617 = vpack.c.b16 %v3613, %v3611
      %v3622 = vmul.bf16 %v3584, %v3614
      %v3623 = vmul.bf16 %v3591, %v3615
      %v3624 = vmul.bf16 %v3585, %v3616
      %v3625 = vmul.bf16 %v3595, %v3617
      %3626 = vst [vmem:[#allocation2 + $0xc0] sm:$0xff] %v3622
      %3627 = vst [vmem:[#allocation2 + $0xc8] sm:$0xff] %v3623
      %3628 = vst [vmem:[#allocation2 + $0xd0] sm:$0xff] %v3624
      %3629 = vst [vmem:[#allocation2 + $0xd8] sm:$0xff] %v3625
      %3630 = vrot.lane.b32.xlu0 %v3294, 95
      %v3631 = vpop.permute.xlu0 %3630
      %3632 = vrot.lane.b32.xlu0 %v3295, 95
      %v3633 = vpop.permute.xlu0 %3632
      %3634 = vrot.lane.b32.xlu0 %v3296, 95
      %v3635 = vpop.permute.xlu0 %3634
      %3636 = vrot.lane.b32.xlu0 %v3297, 95
      %v3637 = vpop.permute.xlu0 %3636
      %vm3638 = vcmask 777216
      %v3639 = vsel %vm3638, %v3631, %v3633
      %v3640 = vsel %vm3638, %v3635, %v3637
      %vm3643 = vcmask 777216
      %v3646 = vsel %vm3643, %v3633, %v3631
      %v3650 = vsel %vm3643, %v3637, %v3635
      %s3652 = scalar_lea.vmem %s14, 224
      %v3653 = vld [vmem:[%s3652] sm:$0xff]
      %v3654 = vld [vmem:[%s3652 + $0x8] sm:$0xff]
      %v3655 = vld [vmem:[%s3652 + $0x10] sm:$0xff]
      %v3656 = vld [vmem:[%s3652 + $0x18] sm:$0xff]
      %v3661 = vunpack.c.l.b16 %v3653
      %v3662 = vunpack.c.h.b16 %v3653
      %v3663 = vunpack.c.l.b16 %v3654
      %v3664 = vunpack.c.h.b16 %v3654
      %v3665 = vunpack.c.l.b16 %v3655
      %v3666 = vunpack.c.h.b16 %v3655
      %v3667 = vunpack.c.l.b16 %v3656
      %v3668 = vunpack.c.h.b16 %v3656
      %v3669 = vpack.c.b16 %v3663, %v3661
      %v3670 = vpack.c.b16 %v3664, %v3662
      %v3671 = vpack.c.b16 %v3667, %v3665
      %v3672 = vpack.c.b16 %v3668, %v3666
      %v3677 = vmul.bf16 %v3639, %v3669
      %v3678 = vmul.bf16 %v3646, %v3670
      %v3679 = vmul.bf16 %v3640, %v3671
      %v3680 = vmul.bf16 %v3650, %v3672
      %3681 = vst [vmem:[#allocation2 + $0xe0] sm:$0xff] %v3677
      %3682 = vst [vmem:[#allocation2 + $0xe8] sm:$0xff] %v3678
      %3683 = vst [vmem:[#allocation2 + $0xf0] sm:$0xff] %v3679
      %3684 = vst [vmem:[#allocation2 + $0xf8] sm:$0xff] %v3680
      %3685 = vrot.lane.b32.xlu0 %v3294, 94
      %v3686 = vpop.permute.xlu0 %3685
      %3687 = vrot.lane.b32.xlu0 %v3295, 94
      %v3688 = vpop.permute.xlu0 %3687
      %3689 = vrot.lane.b32.xlu0 %v3296, 94
      %v3690 = vpop.permute.xlu0 %3689
      %3691 = vrot.lane.b32.xlu0 %v3297, 94
      %v3692 = vpop.permute.xlu0 %3691
      %vm3693 = vcmask 769024
      %v3694 = vsel %vm3693, %v3686, %v3688
      %v3695 = vsel %vm3693, %v3690, %v3692
      %vm3698 = vcmask 769024
      %v3701 = vsel %vm3698, %v3688, %v3686
      %v3705 = vsel %vm3698, %v3692, %v3690
      %s3707 = scalar_lea.vmem %s14, 256
      %v3708 = vld [vmem:[%s3707] sm:$0xff]
      %v3709 = vld [vmem:[%s3707 + $0x8] sm:$0xff]
      %v3710 = vld [vmem:[%s3707 + $0x10] sm:$0xff]
      %v3711 = vld [vmem:[%s3707 + $0x18] sm:$0xff]
      %v3716 = vunpack.c.l.b16 %v3708
      %v3717 = vunpack.c.h.b16 %v3708
      %v3718 = vunpack.c.l.b16 %v3709
      %v3719 = vunpack.c.h.b16 %v3709
      %v3720 = vunpack.c.l.b16 %v3710
      %v3721 = vunpack.c.h.b16 %v3710
      %v3722 = vunpack.c.l.b16 %v3711
      %v3723 = vunpack.c.h.b16 %v3711
      %v3724 = vpack.c.b16 %v3718, %v3716
      %v3725 = vpack.c.b16 %v3719, %v3717
      %v3726 = vpack.c.b16 %v3722, %v3720
      %v3727 = vpack.c.b16 %v3723, %v3721
      %v3732 = vmul.bf16 %v3694, %v3724
      %v3733 = vmul.bf16 %v3701, %v3725
      %v3734 = vmul.bf16 %v3695, %v3726
      %v3735 = vmul.bf16 %v3705, %v3727
      %3736 = vst [vmem:[#allocation2 + $0x100] sm:$0xff] %v3732
      %3737 = vst [vmem:[#allocation2 + $0x108] sm:$0xff] %v3733
      %3738 = vst [vmem:[#allocation2 + $0x110] sm:$0xff] %v3734
      %3739 = vst [vmem:[#allocation2 + $0x118] sm:$0xff] %v3735
      %v3740 = vld [vmem:[#allocation2] sm:$0xff]
      %v3741 = vld [vmem:[#allocation2 + $0x8] sm:$0xff]
      %v3742 = vld [vmem:[#allocation2 + $0x10] sm:$0xff]
      %v3743 = vld [vmem:[#allocation2 + $0x18] sm:$0xff]
      %v3744 = vld [vmem:[#allocation2 + $0x20] sm:$0xff]
      %v3745 = vld [vmem:[#allocation2 + $0x28] sm:$0xff]
      %v3746 = vld [vmem:[#allocation2 + $0x30] sm:$0xff]
      %v3747 = vld [vmem:[#allocation2 + $0x38] sm:$0xff]
      %v3748 = vld [vmem:[#allocation2 + $0x40] sm:$0xff]
      %v3749 = vld [vmem:[#allocation2 + $0x48] sm:$0xff]
      %v3750 = vld [vmem:[#allocation2 + $0x50] sm:$0xff]
      %v3751 = vld [vmem:[#allocation2 + $0x58] sm:$0xff]
      %v3752 = vld [vmem:[#allocation2 + $0x60] sm:$0xff]
      %v3753 = vld [vmem:[#allocation2 + $0x68] sm:$0xff]
      %v3754 = vld [vmem:[#allocation2 + $0x70] sm:$0xff]
      %v3755 = vld [vmem:[#allocation2 + $0x78] sm:$0xff]
      %v3756 = vld [vmem:[#allocation2 + $0x80] sm:$0xff]
      %v3757 = vld [vmem:[#allocation2 + $0x88] sm:$0xff]
      %v3758 = vld [vmem:[#allocation2 + $0x90] sm:$0xff]
      %v3759 = vld [vmem:[#allocation2 + $0x98] sm:$0xff]
      %v3760 = vld [vmem:[#allocation2 + $0xa0] sm:$0xff]
      %v3761 = vld [vmem:[#allocation2 + $0xa8] sm:$0xff]
      %v3762 = vld [vmem:[#allocation2 + $0xb0] sm:$0xff]
      %v3763 = vld [vmem:[#allocation2 + $0xb8] sm:$0xff]
      %v3764 = vld [vmem:[#allocation2 + $0xc0] sm:$0xff]
      %v3765 = vld [vmem:[#allocation2 + $0xc8] sm:$0xff]
      %v3766 = vld [vmem:[#allocation2 + $0xd0] sm:$0xff]
      %v3767 = vld [vmem:[#allocation2 + $0xd8] sm:$0xff]
      %v3768 = vld [vmem:[#allocation2 + $0xe0] sm:$0xff]
      %v3769 = vld [vmem:[#allocation2 + $0xe8] sm:$0xff]
      %v3770 = vld [vmem:[#allocation2 + $0xf0] sm:$0xff]
      %v3771 = vld [vmem:[#allocation2 + $0xf8] sm:$0xff]
      %v3772 = vld [vmem:[#allocation2 + $0x100] sm:$0xff]
      %v3773 = vld [vmem:[#allocation2 + $0x108] sm:$0xff]
      %v3774 = vld [vmem:[#allocation2 + $0x110] sm:$0xff]
      %v3775 = vld [vmem:[#allocation2 + $0x118] sm:$0xff]
      %3777 = vset.pattern.permute.xlu0 0
      %3778 = vperm.xlu0 %3777, %v3290
      %v3779 = vpop.permute.xlu0 %3778
      %3782 = vset.pattern.permute.xlu0 0
      %3783 = vperm.xlu0 %3782, %v3291
      %v3784 = vpop.permute.xlu0 %3783
      %3787 = vset.pattern.permute.xlu0 0
      %3788 = vperm.xlu0 %3787, %v3292
      %v3789 = vpop.permute.xlu0 %3788
      %3792 = vset.pattern.permute.xlu0 0
      %3793 = vperm.xlu0 %3792, %v3293
      %v3794 = vpop.permute.xlu0 %3793
      %v3804 = vunpack.c.l.b16 %v3281
      %v3805 = vunpack.c.h.b16 %v3281
      %v3806 = vunpack.c.l.b16 %v3282
      %v3807 = vunpack.c.l.b16 %v3283
      %v3808 = vunpack.c.h.b16 %v3283
      %v3809 = vunpack.c.l.b16 %v3284
      %v3810 = vunpack.c.l.b16 %v3285
      %v3811 = vunpack.c.h.b16 %v3285
      %v3812 = vunpack.c.l.b16 %v3286
      %v3813 = vunpack.c.l.b16 %v3287
      %v3814 = vunpack.c.h.b16 %v3287
      %v3815 = vunpack.c.l.b16 %v3288
      %v3816 = vpack.c.b16 %v3807, %v3804
      %v3817 = vpack.c.b16 %v3808, %v3805
      %v3818 = vpack.c.b16 %v3809, %v3806
      %v3819 = vpack.c.b16 %v3813, %v3810
      %v3820 = vpack.c.b16 %v3814, %v3811
      %v3821 = vpack.c.b16 %v3815, %v3812
      %v3827 = vsel %vm1122, %v3818, 0
      %v3830 = vsel %vm1122, %v3821, 0
      %3832 = vmatprep.subr.bf16.mxu0 %v3741
      %3833 = vmatpush1.bf16.msra.mxu0 %v3740
      %3834 = vmatprep.subr.bf16.mxu0 %v3743
      %3835 = vmatpush1.bf16.msra.mxu0 %v3742
      %3836 = vmatprep.subr.bf16.mxu0 %v3745
      %3837 = vmatpush1.bf16.msra.mxu0 %v3744
      %3838 = vmatprep.subr.bf16.mxu0 %v3747
      %3839 = vmatpush1.bf16.msra.mxu0 %v3746
      %3840 = vmatprep.subr.bf16.mxu0 %v3749
      %3841 = vmatpush1.bf16.msra.mxu0 %v3748
      %3842 = vmatprep.subr.bf16.mxu0 %v3751
      %3843 = vmatpush1.bf16.msra.mxu0 %v3750
      %3844 = vmatprep.subr.bf16.mxu0 %v3753
      %3845 = vmatpush1.bf16.msra.mxu0 %v3752
      %3846 = vmatprep.subr.bf16.mxu0 %v3755
      %3847 = vmatpush1.bf16.msra.mxu0 %v3754
      %3848 = vmatprep.subr.bf16.mxu0 %v3757
      %3849 = vmatpush1.bf16.msra.mxu0 %v3756
      %3850 = vmatprep.subr.bf16.mxu0 %v3759
      %3851 = vmatpush1.bf16.msra.mxu0 %v3758
      %3852 = vmatprep.subr.bf16.mxu0 %v3761
      %3853 = vmatpush1.bf16.msra.mxu0 %v3760
      %3854 = vmatprep.subr.bf16.mxu0 %v3763
      %3855 = vmatpush1.bf16.msra.mxu0 %v3762
      %3856 = vmatprep.subr.bf16.mxu0 %v3765
      %3857 = vmatpush1.bf16.msra.mxu0 %v3764
      %3858 = vmatprep.subr.bf16.mxu0 %v3767
      %3859 = vmatpush1.bf16.msra.mxu0 %v3766
      %3860 = vmatprep.subr.bf16.mxu0 %v3769
      %3861 = vmatpush1.bf16.msra.mxu0 %v3768
      %3862 = vmatprep.subr.bf16.mxu0 %v3771
      %3863 = vmatpush1.bf16.msra.mxu0 %v3770
      %3864 = vmatprep.mubr.bf16.mxu0 %v3817
      %3865 = vmatmul.mubr.bf16.gmra.mrb[0].mxu0 %v3816
      %v3866 = vpop.f32.mrb[0].mxu0
      %v3867 = vadd.f32 %v3779, %v3866
      %v3868 = vpop.f32.mrb[0].mxu0
      %v3869 = vadd.f32 %v3779, %v3868
      %v3870 = vpop.f32.mrb[0].mxu0
      %v3871 = vadd.f32 %v3784, %v3870
      %v3872 = vpop.f32.mrb[0].mxu0
      %v3873 = vadd.f32 %v3784, %v3872
      %3874 = vmatprep.mubr.bf16.mxu0 %v3820
      %3875 = vmatmul.mubr.bf16.gmra.mrb[0].mxu0 %v3819
      %v3876 = vpop.f32.mrb[0].mxu0
      %v3877 = vadd.f32 %v3789, %v3876
      %v3878 = vpop.f32.mrb[0].mxu0
      %v3879 = vadd.f32 %v3789, %v3878
      %v3880 = vpop.f32.mrb[0].mxu0
      %v3881 = vadd.f32 %v3794, %v3880
      %v3882 = vpop.f32.mrb[0].mxu0
      %v3883 = vadd.f32 %v3794, %v3882
      %3884 = vdwg.mxu0
      %3885 = vmatprep.subr.bf16.mxu0 %v3773
      %3886 = vmatpush1.bf16.msra.mxu0 %v3772
      %3887 = vmatprep.subr.bf16.mxu0 %v3775
      %3888 = vmatpush1.bf16.msra.mxu0 %v3774
      %3889 = vmatprep.subr.bf16.mxu0 0
      %3890 = vmatpush1.bf16.msra.mxu0 0
      %3891 = vmatprep.subr.bf16.mxu0 0
      %3892 = vmatpush1.bf16.msra.mxu0 0
      %3893 = vmatprep.subr.bf16.mxu0 0
      %3894 = vmatpush1.bf16.msra.mxu0 0
      %3895 = vmatprep.subr.bf16.mxu0 0
      %3896 = vmatpush1.bf16.msra.mxu0 0
      %3897 = vmatprep.subr.bf16.mxu0 0
      %3898 = vmatpush1.bf16.msra.mxu0 0
      %3899 = vmatprep.subr.bf16.mxu0 0
      %3900 = vmatpush1.bf16.msra.mxu0 0
      %3901 = vmatprep.subr.bf16.mxu0 0
      %3902 = vmatpush1.bf16.msra.mxu0 0
      %3903 = vmatprep.subr.bf16.mxu0 0
      %3904 = vmatpush1.bf16.msra.mxu0 0
      %3905 = vmatprep.subr.bf16.mxu0 0
      %3906 = vmatpush1.bf16.msra.mxu0 0
      %3907 = vmatprep.subr.bf16.mxu0 0
      %3908 = vmatpush1.bf16.msra.mxu0 0
      %3909 = vmatprep.subr.bf16.mxu0 0
      %3910 = vmatpush1.bf16.msra.mxu0 0
      %3911 = vmatprep.subr.bf16.mxu0 0
      %3912 = vmatpush1.bf16.msra.mxu0 0
      %3913 = vmatprep.subr.bf16.mxu0 0
      %3914 = vmatpush1.bf16.msra.mxu0 0
      %3915 = vmatprep.subr.bf16.mxu0 0
      %3916 = vmatpush1.bf16.msra.mxu0 0
      %3917 = vmatprep.mubr.bf16.mxu0 0
      %3918 = vmatmul.mubr.bf16.gmra.mrb[0].mxu0 %v3827
      %v3919 = vpop.f32.mrb[0].mxu0
      %v3920 = vadd.f32 %v3867, %v3919
      %v3921 = vpop.f32.mrb[0].mxu0
      %v3922 = vadd.f32 %v3869, %v3921
      %v3923 = vpop.f32.mrb[0].mxu0
      %v3924 = vadd.f32 %v3871, %v3923
      %v3925 = vpop.f32.mrb[0].mxu0
      %v3926 = vadd.f32 %v3873, %v3925
      %3927 = vmatprep.mubr.bf16.mxu0 0
      %3928 = vmatmul.mubr.bf16.gmra.mrb[0].mxu0 %v3830
      %v3929 = vpop.f32.mrb[0].mxu0
      %v3930 = vadd.f32 %v3877, %v3929
      %v3931 = vpop.f32.mrb[0].mxu0
      %v3932 = vadd.f32 %v3879, %v3931
      %v3933 = vpop.f32.mrb[0].mxu0
      %v3934 = vadd.f32 %v3881, %v3933
      %v3935 = vpop.f32.mrb[0].mxu0
      %v3936 = vadd.f32 %v3883, %v3935
      %3937 = vdwg.mxu0
      %v3938 = vld [vmem:[%s16] sm:$0xff]
      %v3939 = vld [vmem:[%s16 + $0x8] sm:$0xff]
      %v3940 = vld [vmem:[%s16 + $0x10] sm:$0xff]
      %v3941 = vld [vmem:[%s16 + $0x18] sm:$0xff]
      %v3942 = vld [vmem:[%s16 + $0x20] sm:$0xff]
      %v3943 = vld [vmem:[%s16 + $0x28] sm:$0xff]
      %v3944 = vld [vmem:[%s16 + $0x30] sm:$0xff]
      %v3945 = vld [vmem:[%s16 + $0x38] sm:$0xff]
      %v3946 = vld [vmem:[%s16 + $0x40] sm:$0xff]
      %v3947 = vld [vmem:[%s16 + $0x48] sm:$0xff]
      %v3948 = vld [vmem:[%s16 + $0x50] sm:$0xff]
      %v3949 = vld [vmem:[%s16 + $0x58] sm:$0xff]
      %v3950 = vld [vmem:[%s16 + $0x60] sm:$0xff]
      %v3951 = vld [vmem:[%s16 + $0x68] sm:$0xff]
      %v3952 = vld [vmem:[%s16 + $0x70] sm:$0xff]
      %v3953 = vld [vmem:[%s16 + $0x78] sm:$0xff]
      %v3954 = vld [vmem:[%s16 + $0x80] sm:$0xff]
      %v3955 = vld [vmem:[%s16 + $0x88] sm:$0xff]
      %v3956 = vld [vmem:[%s16 + $0x90] sm:$0xff]
      %v3957 = vld [vmem:[%s16 + $0x98] sm:$0xff]
      %v3958 = vld [vmem:[%s16 + $0xa0] sm:$0xff]
      %v3959 = vld [vmem:[%s16 + $0xa8] sm:$0xff]
      %v3960 = vld [vmem:[%s16 + $0xb0] sm:$0xff]
      %v3961 = vld [vmem:[%s16 + $0xb8] sm:$0xff]
      %v3962 = vld [vmem:[%s16 + $0xc0] sm:$0xff]
      %v3963 = vld [vmem:[%s16 + $0xc8] sm:$0xff]
      %v3964 = vld [vmem:[%s16 + $0xd0] sm:$0xff]
      %v3965 = vld [vmem:[%s16 + $0xd8] sm:$0xff]
      %v3966 = vld [vmem:[%s16 + $0xe0] sm:$0xff]
      %v3967 = vld [vmem:[%s16 + $0xe8] sm:$0xff]
      %v3968 = vld [vmem:[%s16 + $0xf0] sm:$0xff]
      %v3969 = vld [vmem:[%s16 + $0xf8] sm:$0xff]
      %3970 = vmatprep.subr.mxu0 0.0
      %3971 = vmatpush1.msra.mxu0 %v3938
      %3972 = vmatprep.subr.mxu0 0.0
      %3973 = vmatpush1.msra.mxu0 %v3939
      %3974 = vmatprep.subr.mxu0 0.0
      %3975 = vmatpush1.msra.mxu0 %v3940
      %3976 = vmatprep.subr.mxu0 0.0
      %3977 = vmatpush1.msra.mxu0 %v3941
      %3978 = vmatprep.subr.mxu0 0.0
      %3979 = vmatpush1.msra.mxu0 %v3942
      %3980 = vmatprep.subr.mxu0 0.0
      %3981 = vmatpush1.msra.mxu0 %v3943
      %3982 = vmatprep.subr.mxu0 0.0
      %3983 = vmatpush1.msra.mxu0 %v3944
      %3984 = vmatprep.subr.mxu0 0.0
      %3985 = vmatpush1.msra.mxu0 %v3945
      %3986 = vmatprep.subr.mxu0 0.0
      %3987 = vmatpush1.msra.mxu0 %v3946
      %3988 = vmatprep.subr.mxu0 0.0
      %3989 = vmatpush1.msra.mxu0 %v3947
      %3990 = vmatprep.subr.mxu0 0.0
      %3991 = vmatpush1.msra.mxu0 %v3948
      %3992 = vmatprep.subr.mxu0 0.0
      %3993 = vmatpush1.msra.mxu0 %v3949
      %3994 = vmatprep.subr.mxu0 0.0
      %3995 = vmatpush1.msra.mxu0 %v3950
      %3996 = vmatprep.subr.mxu0 0.0
      %3997 = vmatpush1.msra.mxu0 %v3951
      %3998 = vmatprep.subr.mxu0 0.0
      %3999 = vmatpush1.msra.mxu0 %v3952
      %4000 = vmatprep.subr.mxu0 0.0
      %4001 = vmatpush1.msra.mxu0 %v3953
      %4002 = vmatprep.subr.mxu0 0.0
      %4003 = vmatpush1.msra.mxu0 %v3954
      %4004 = vmatprep.subr.mxu0 0.0
      %4005 = vmatpush1.msra.mxu0 %v3955
      %4006 = vmatprep.subr.mxu0 0.0
      %4007 = vmatpush1.msra.mxu0 %v3956
      %4008 = vmatprep.subr.mxu0 0.0
      %4009 = vmatpush1.msra.mxu0 %v3957
      %4010 = vmatprep.subr.mxu0 0.0
      %4011 = vmatpush1.msra.mxu0 %v3958
      %4012 = vmatprep.subr.mxu0 0.0
      %4013 = vmatpush1.msra.mxu0 %v3959
      %4014 = vmatprep.subr.mxu0 0.0
      %4015 = vmatpush1.msra.mxu0 %v3960
      %4016 = vmatprep.subr.mxu0 0.0
      %4017 = vmatpush1.msra.mxu0 %v3961
      %4018 = vmatprep.subr.mxu0 0.0
      %4019 = vmatpush1.msra.mxu0 %v3962
      %4020 = vmatprep.subr.mxu0 0.0
      %4021 = vmatpush1.msra.mxu0 %v3963
      %4022 = vmatprep.subr.mxu0 0.0
      %4023 = vmatpush1.msra.mxu0 %v3964
      %4024 = vmatprep.subr.mxu0 0.0
      %4025 = vmatpush1.msra.mxu0 %v3965
      %4026 = vmatprep.subr.mxu0 0.0
      %4027 = vmatpush1.msra.mxu0 %v3966
      %4028 = vmatprep.subr.mxu0 0.0
      %4029 = vmatpush1.msra.mxu0 %v3967
      %4030 = vmatprep.subr.mxu0 0.0
      %4031 = vmatpush1.msra.mxu0 %v3968
      %4032 = vmatprep.subr.mxu0 0.0
      %4033 = vmatpush1.msra.mxu0 %v3969
      %4034 = vmatprep.mubr.f32.mxu0 %v3922
      %4035 = vmatmul.mubr.f32.gmra.mrb[0].mxu0 %v3920
      %v4036 = vpop.f32.mrb[0].mxu0
      %v4037 = vadd.f32 0.0, %v4036
      %v4038 = vpop.f32.mrb[0].mxu0
      %4039 = vmatprep.mubr.f32.mxu0 %v3926
      %4040 = vmatmul.mubr.f32.gmra.mrb[0].mxu0 %v3924
      %v4041 = vpop.f32.mrb[0].mxu0
      %v4042 = vadd.f32 0.0, %v4041
      %v4043 = vpop.f32.mrb[0].mxu0
      %4044 = vmatprep.mubr.f32.mxu0 %v3932
      %4045 = vmatmul.mubr.f32.gmra.mrb[0].mxu0 %v3930
      %v4046 = vpop.f32.mrb[0].mxu0
      %v4047 = vadd.f32 0.0, %v4046
      %v4048 = vpop.f32.mrb[0].mxu0
      %4049 = vmatprep.mubr.f32.mxu0 %v3936
      %4050 = vmatmul.mubr.f32.gmra.mrb[0].mxu0 %v3934
      %v4051 = vpop.f32.mrb[0].mxu0
      %v4052 = vadd.f32 0.0, %v4051
      %v4053 = vpop.f32.mrb[0].mxu0
      %4054 = vdwg.mxu0
      %s4055 = scalar_lea.vmem %s6, 64
      %v4056 = vld [vmem:[%s4055] sm:$0xff]
      %v4057 = vld [vmem:[%s4055 + $0x8] sm:$0xff]
      %v4058 = vld [vmem:[%s4055 + $0x10] sm:$0xff]
      %v4059 = vld [vmem:[%s4055 + $0x18] sm:$0xff]
      %s4060 = scalar_lea.vmem %s7, 64
      %v4061 = vld [vmem:[%s4060] sm:$0xff]
      %v4062 = vld [vmem:[%s4060 + $0x8] sm:$0xff]
      %v4063 = vld [vmem:[%s4060 + $0x10] sm:$0xff]
      %v4064 = vld [vmem:[%s4060 + $0x18] sm:$0xff]
      %v4065 = vld [vmem:[%s12] sm:$0xff]
      %v4066 = vld [vmem:[%s12 + $0x8] sm:$0xff]
      %v4067 = vld [vmem:[%s12 + $0x10] sm:$0xff]
      %v4068 = vld [vmem:[%s12 + $0x18] sm:$0xff]
      %v4070 = vsel %vm1122, %v4065, 0
      %v4073 = vsel %vm1122, %v4066, 0
      %v4076 = vsel %vm1122, %v4067, 0
      %v4079 = vsel %vm1122, %v4068, 0
      %4081 = vmatprep.subr.mxu0 0.0
      %4082 = vmatpush1.msra.mxu0 %v4037
      %4083 = vmatprep.subr.mxu0 0.0
      %4084 = vmatpush1.msra.mxu0 %v4042
      %4085 = vmatprep.subr.mxu0 0.0
      %4086 = vmatpush1.msra.mxu0 %v4047
      %4087 = vmatprep.subr.mxu0 0.0
      %4088 = vmatpush1.msra.mxu0 %v4052
      %4089 = vmatprep.subr.mxu0 0.0
      %4090 = vmatpush1.msra.mxu0 0.0
      %4091 = vmatprep.subr.mxu0 0.0
      %4092 = vmatpush1.msra.mxu0 0.0
      %4093 = vmatprep.subr.mxu0 0.0
      %4094 = vmatpush1.msra.mxu0 0.0
      %4095 = vmatprep.subr.mxu0 0.0
      %4096 = vmatpush1.msra.mxu0 0.0
      %4097 = vmatprep.subr.mxu0 0.0
      %4098 = vmatpush1.msra.mxu0 0.0
      %4099 = vmatprep.subr.mxu0 0.0
      %4100 = vmatpush1.msra.mxu0 0.0
      %4101 = vmatprep.subr.mxu0 0.0
      %4102 = vmatpush1.msra.mxu0 0.0
      %4103 = vmatprep.subr.mxu0 0.0
      %4104 = vmatpush1.msra.mxu0 0.0
      %4105 = vmatprep.subr.mxu0 0.0
      %4106 = vmatpush1.msra.mxu0 0.0
      %4107 = vmatprep.subr.mxu0 0.0
      %4108 = vmatpush1.msra.mxu0 0.0
      %4109 = vmatprep.subr.mxu0 0.0
      %4110 = vmatpush1.msra.mxu0 0.0
      %4111 = vmatprep.subr.mxu0 0.0
      %4112 = vmatpush1.msra.mxu0 0.0
      %4113 = vmatprep.subr.mxu0 0.0
      %4114 = vmatpush1.msra.mxu0 0.0
      %4115 = vmatprep.subr.mxu0 0.0
      %4116 = vmatpush1.msra.mxu0 0.0
      %4117 = vmatprep.subr.mxu0 0.0
      %4118 = vmatpush1.msra.mxu0 0.0
      %4119 = vmatprep.subr.mxu0 0.0
      %4120 = vmatpush1.msra.mxu0 0.0
      %4121 = vmatprep.subr.mxu0 0.0
      %4122 = vmatpush1.msra.mxu0 0.0
      %4123 = vmatprep.subr.mxu0 0.0
      %4124 = vmatpush1.msra.mxu0 0.0
      %4125 = vmatprep.subr.mxu0 0.0
      %4126 = vmatpush1.msra.mxu0 0.0
      %4127 = vmatprep.subr.mxu0 0.0
      %4128 = vmatpush1.msra.mxu0 0.0
      %4129 = vmatprep.subr.mxu0 0.0
      %4130 = vmatpush1.msra.mxu0 0.0
      %4131 = vmatprep.subr.mxu0 0.0
      %4132 = vmatpush1.msra.mxu0 0.0
      %4133 = vmatprep.subr.mxu0 0.0
      %4134 = vmatpush1.msra.mxu0 0.0
      %4135 = vmatprep.subr.mxu0 0.0
      %4136 = vmatpush1.msra.mxu0 0.0
      %4137 = vmatprep.subr.mxu0 0.0
      %4138 = vmatpush1.msra.mxu0 0.0
      %4139 = vmatprep.subr.mxu0 0.0
      %4140 = vmatpush1.msra.mxu0 0.0
      %4141 = vmatprep.subr.mxu0 0.0
      %4142 = vmatpush1.msra.mxu0 0.0
      %4143 = vmatprep.subr.mxu0 0.0
      %4144 = vmatpush1.msra.mxu0 0.0
      %4145 = vmatprep.mubr.f32.mxu0 0.0
      %4146 = vmatmul.mubr.f32.gmra.mrb[0].mxu0 %v4070
      %v4147 = vpop.f32.mrb[0].mxu0
      %v4148 = vadd.f32 0.0, %v4147
      %v4149 = vpop.f32.mrb[0].mxu0
      %4150 = vmatprep.mubr.f32.mxu0 0.0
      %4151 = vmatmul.mubr.f32.gmra.mrb[0].mxu0 %v4073
      %v4152 = vpop.f32.mrb[0].mxu0
      %v4153 = vadd.f32 0.0, %v4152
      %v4154 = vpop.f32.mrb[0].mxu0
      %4155 = vmatprep.mubr.f32.mxu0 0.0
      %4156 = vmatmul.mubr.f32.gmra.mrb[0].mxu0 %v4076
      %v4157 = vpop.f32.mrb[0].mxu0
      %v4158 = vadd.f32 0.0, %v4157
      %v4159 = vpop.f32.mrb[0].mxu0
      %4160 = vmatprep.mubr.f32.mxu0 0.0
      %4161 = vmatmul.mubr.f32.gmra.mrb[0].mxu0 %v4079
      %v4162 = vpop.f32.mrb[0].mxu0
      %v4163 = vadd.f32 0.0, %v4162
      %v4164 = vpop.f32.mrb[0].mxu0
      %4165 = vdwg.mxu0
      %vm4166 = vcmask 523264
      %v4167 = vsel %vm4166, %v4148, 0.0
      %4168 = vadd.xlane.f32.xlu0 %v4167
      %v4169 = vpop.xlane.xlu0 %4168
      %v4170 = vsel %vm4166, %v4153, 0.0
      %4171 = vadd.xlane.f32.xlu0 %v4170
      %v4172 = vpop.xlane.xlu0 %4171
      %v4173 = vsel %vm4166, %v4158, 0.0
      %4174 = vadd.xlane.f32.xlu0 %v4173
      %v4175 = vpop.xlane.xlu0 %4174
      %v4176 = vsel %vm4166, %v4163, 0.0
      %4177 = vadd.xlane.f32.xlu0 %v4176
      %v4178 = vpop.xlane.xlu0 %4177
      %v4179 = vrcp.pop 256.0
      %v4180 = vmul.f32 %v4169, %v4179
      %v4181 = vmul.f32 %v4172, %v4179
      %v4182 = vmul.f32 %v4175, %v4179
      %v4183 = vmul.f32 %v4178, %v4179
      %v4184 = vsub.f32 %v4037, %v4180
      %v4185 = vsub.f32 %v4042, %v4181
      %v4186 = vsub.f32 %v4047, %v4182
      %v4187 = vsub.f32 %v4052, %v4183
      %v4188 = vmul.f32 %v4184, %v4184
      %v4189 = vmul.f32 %v4185, %v4185
      %v4190 = vmul.f32 %v4186, %v4186
      %v4191 = vmul.f32 %v4187, %v4187
      %4192 = vmatprep.subr.mxu0 0.0
      %4193 = vmatpush1.msra.mxu0 %v4188
      %4194 = vmatprep.subr.mxu0 0.0
      %4195 = vmatpush1.msra.mxu0 %v4189
      %4196 = vmatprep.subr.mxu0 0.0
      %4197 = vmatpush1.msra.mxu0 %v4190
      %4198 = vmatprep.subr.mxu0 0.0
      %4199 = vmatpush1.msra.mxu0 %v4191
      %4200 = vmatprep.subr.mxu0 0.0
      %4201 = vmatpush1.msra.mxu0 0.0
      %4202 = vmatprep.subr.mxu0 0.0
      %4203 = vmatpush1.msra.mxu0 0.0
      %4204 = vmatprep.subr.mxu0 0.0
      %4205 = vmatpush1.msra.mxu0 0.0
      %4206 = vmatprep.subr.mxu0 0.0
      %4207 = vmatpush1.msra.mxu0 0.0
      %4208 = vmatprep.subr.mxu0 0.0
      %4209 = vmatpush1.msra.mxu0 0.0
      %4210 = vmatprep.subr.mxu0 0.0
      %4211 = vmatpush1.msra.mxu0 0.0
      %4212 = vmatprep.subr.mxu0 0.0
      %4213 = vmatpush1.msra.mxu0 0.0
      %4214 = vmatprep.subr.mxu0 0.0
      %4215 = vmatpush1.msra.mxu0 0.0
      %4216 = vmatprep.subr.mxu0 0.0
      %4217 = vmatpush1.msra.mxu0 0.0
      %4218 = vmatprep.subr.mxu0 0.0
      %4219 = vmatpush1.msra.mxu0 0.0
      %4220 = vmatprep.subr.mxu0 0.0
      %4221 = vmatpush1.msra.mxu0 0.0
      %4222 = vmatprep.subr.mxu0 0.0
      %4223 = vmatpush1.msra.mxu0 0.0
      %4224 = vmatprep.subr.mxu0 0.0
      %4225 = vmatpush1.msra.mxu0 0.0
      %4226 = vmatprep.subr.mxu0 0.0
      %4227 = vmatpush1.msra.mxu0 0.0
      %4228 = vmatprep.subr.mxu0 0.0
      %4229 = vmatpush1.msra.mxu0 0.0
      %4230 = vmatprep.subr.mxu0 0.0
      %4231 = vmatpush1.msra.mxu0 0.0
      %4232 = vmatprep.subr.mxu0 0.0
      %4233 = vmatpush1.msra.mxu0 0.0
      %4234 = vmatprep.subr.mxu0 0.0
      %4235 = vmatpush1.msra.mxu0 0.0
      %4236 = vmatprep.subr.mxu0 0.0
      %4237 = vmatpush1.msra.mxu0 0.0
      %4238 = vmatprep.subr.mxu0 0.0
      %4239 = vmatpush1.msra.mxu0 0.0
      %4240 = vmatprep.subr.mxu0 0.0
      %4241 = vmatpush1.msra.mxu0 0.0
      %4242 = vmatprep.subr.mxu0 0.0
      %4243 = vmatpush1.msra.mxu0 0.0
      %4244 = vmatprep.subr.mxu0 0.0
      %4245 = vmatpush1.msra.mxu0 0.0
      %4246 = vmatprep.subr.mxu0 0.0
      %4247 = vmatpush1.msra.mxu0 0.0
      %4248 = vmatprep.subr.mxu0 0.0
      %4249 = vmatpush1.msra.mxu0 0.0
      %4250 = vmatprep.subr.mxu0 0.0
      %4251 = vmatpush1.msra.mxu0 0.0
      %4252 = vmatprep.subr.mxu0 0.0
      %4253 = vmatpush1.msra.mxu0 0.0
      %4254 = vmatprep.subr.mxu0 0.0
      %4255 = vmatpush1.msra.mxu0 0.0
      %4256 = vmatprep.mubr.f32.mxu0 0.0
      %4257 = vmatmul.mubr.f32.gmra.mrb[0].mxu0 %v4070
      %v4258 = vpop.f32.mrb[0].mxu0
      %v4259 = vadd.f32 0.0, %v4258
      %v4260 = vpop.f32.mrb[0].mxu0
      %4261 = vmatprep.mubr.f32.mxu0 0.0
      %4262 = vmatmul.mubr.f32.gmra.mrb[0].mxu0 %v4073
      %v4263 = vpop.f32.mrb[0].mxu0
      %v4264 = vadd.f32 0.0, %v4263
      %v4265 = vpop.f32.mrb[0].mxu0
      %4266 = vmatprep.mubr.f32.mxu0 0.0
      %4267 = vmatmul.mubr.f32.gmra.mrb[0].mxu0 %v4076
      %v4268 = vpop.f32.mrb[0].mxu0
      %v4269 = vadd.f32 0.0, %v4268
      %v4270 = vpop.f32.mrb[0].mxu0
      %4271 = vmatprep.mubr.f32.mxu0 0.0
      %4272 = vmatmul.mubr.f32.gmra.mrb[0].mxu0 %v4079
      %v4273 = vpop.f32.mrb[0].mxu0
      %v4274 = vadd.f32 0.0, %v4273
      %v4275 = vpop.f32.mrb[0].mxu0
      %4276 = vdwg.mxu0
      %v4277 = vsel %vm4166, %v4259, 0.0
      %4278 = vadd.xlane.f32.xlu0 %v4277
      %v4279 = vpop.xlane.xlu0 %4278
      %v4280 = vsel %vm4166, %v4264, 0.0
      %4281 = vadd.xlane.f32.xlu0 %v4280
      %v4282 = vpop.xlane.xlu0 %4281
      %v4283 = vsel %vm4166, %v4269, 0.0
      %4284 = vadd.xlane.f32.xlu0 %v4283
      %v4285 = vpop.xlane.xlu0 %4284
      %v4286 = vsel %vm4166, %v4274, 0.0
      %4287 = vadd.xlane.f32.xlu0 %v4286
      %v4288 = vpop.xlane.xlu0 %4287
      %v4289 = vmul.f32 %v4279, %v4179
      %v4290 = vmul.f32 %v4282, %v4179
      %v4291 = vmul.f32 %v4285, %v4179
      %v4292 = vmul.f32 %v4288, %v4179
      %v4293 = vadd.f32 %v4289, 1e-06
      %v4294 = vadd.f32 %v4290, 1e-06
      %v4295 = vadd.f32 %v4291, 1e-06
      %v4296 = vadd.f32 %v4292, 1e-06
      %v4297 = vrsqrt.pop %v4293
      %v4298 = vrsqrt.pop %v4294
      %v4299 = vrsqrt.pop %v4295
      %v4300 = vrsqrt.pop %v4296
      %v4301 = vmul.f32 %v4184, %v4297
      %v4302 = vmul.f32 %v4185, %v4298
      %v4303 = vmul.f32 %v4186, %v4299
      %v4304 = vmul.f32 %v4187, %v4300
      %4306 = vset.pattern.permute.xlu0 0
      %4307 = vperm.xlu0 %4306, %v4056
      %v4308 = vpop.permute.xlu0 %4307
      %4311 = vset.pattern.permute.xlu0 0
      %4312 = vperm.xlu0 %4311, %v4057
      %v4313 = vpop.permute.xlu0 %4312
      %4316 = vset.pattern.permute.xlu0 0
      %4317 = vperm.xlu0 %4316, %v4058
      %v4318 = vpop.permute.xlu0 %4317
      %4321 = vset.pattern.permute.xlu0 0
      %4322 = vperm.xlu0 %4321, %v4059
      %v4323 = vpop.permute.xlu0 %4322
      %v4325 = vmul.f32 %v4301, %v4308
      %v4326 = vmul.f32 %v4302, %v4313
      %v4327 = vmul.f32 %v4303, %v4318
      %v4328 = vmul.f32 %v4304, %v4323
      %4330 = vset.pattern.permute.xlu0 0
      %4331 = vperm.xlu0 %4330, %v4061
      %v4332 = vpop.permute.xlu0 %4331
      %4335 = vset.pattern.permute.xlu0 0
      %4336 = vperm.xlu0 %4335, %v4062
      %v4337 = vpop.permute.xlu0 %4336
      %4340 = vset.pattern.permute.xlu0 0
      %4341 = vperm.xlu0 %4340, %v4063
      %v4342 = vpop.permute.xlu0 %4341
      %4345 = vset.pattern.permute.xlu0 0
      %4346 = vperm.xlu0 %4345, %v4064
      %v4347 = vpop.permute.xlu0 %4346
      %v4349 = vadd.f32 %v4325, %v4332
      %v4350 = vadd.f32 %v4326, %v4337
      %v4351 = vadd.f32 %v4327, %v4342
      %v4352 = vadd.f32 %v4328, %v4347
      %v4353 = vxor.u32 %v4349, 2147483648
      %v4354 = vxor.u32 %v4350, 2147483648
      %v4355 = vxor.u32 %v4351, 2147483648
      %v4356 = vxor.u32 %v4352, 2147483648
      %v4357 = vmul.f32 %v4353, 1.442695
      %v4358 = vpow.pop %v4357
      %v4359 = vmul.f32 %v4354, 1.442695
      %v4360 = vpow.pop %v4359
      %v4361 = vmul.f32 %v4355, 1.442695
      %v4362 = vpow.pop %v4361
      %v4363 = vmul.f32 %v4356, 1.442695
      %v4364 = vpow.pop %v4363
      %v4365 = vadd.f32 %v4358, 1.0
      %v4366 = vadd.f32 %v4360, 1.0
      %v4367 = vadd.f32 %v4362, 1.0
      %v4368 = vadd.f32 %v4364, 1.0
      %v4369 = vrcp.pop %v4365
      %v4370 = vmul.f32 1.0, %v4369
      %v4371 = vrcp.pop %v4366
      %v4372 = vmul.f32 1.0, %v4371
      %v4373 = vrcp.pop %v4367
      %v4374 = vmul.f32 1.0, %v4373
      %v4375 = vrcp.pop %v4368
      %v4376 = vmul.f32 1.0, %v4375
      %v4377 = vmul.f32 %v4349, %v4370
      %v4378 = vmul.f32 %v4350, %v4372
      %v4379 = vmul.f32 %v4351, %v4374
      %v4380 = vmul.f32 %v4352, %v4376
      %s4381 = scalar_lea.vmem %s4, 144
      %v4382 = vld [vmem:[%s4381] sm:$0xff]
      %v4383 = vld [vmem:[%s4381 + $0x8] sm:$0xf]
      %v4384 = vld [vmem:[%s4381 + $0xc] sm:$0xff]
      %v4385 = vld [vmem:[%s4381 + $0x14] sm:$0xf]
      %v4386 = vld [vmem:[%s4381 + $0x18] sm:$0xff]
      %v4387 = vld [vmem:[%s4381 + $0x20] sm:$0xf]
      %v4388 = vld [vmem:[%s4381 + $0x24] sm:$0xff]
      %v4389 = vld [vmem:[%s4381 + $0x2c] sm:$0xf]
      %s4390 = scalar_lea.vmem %s5, 96
      %v4391 = vld [vmem:[%s4390] sm:$0xff]
      %v4392 = vld [vmem:[%s4390 + $0x8] sm:$0xff]
      %v4393 = vld [vmem:[%s4390 + $0x10] sm:$0xff]
      %v4394 = vld [vmem:[%s4390 + $0x18] sm:$0xff]
      %v4395 = vpack.c.bf16 %v4378, %v4377
      %v4396 = vpack.c.bf16 %v4380, %v4379
      %4399 = vrot.lane.b32.xlu0 %v4395, 73
      %v4400 = vpop.permute.xlu0 %4399
      %4401 = vrot.lane.b32.xlu0 %v4396, 73
      %v4402 = vpop.permute.xlu0 %4401
      %4403 = vrot.lane.b32.xlu0 %v4395, 9
      %v4404 = vpop.permute.xlu0 %4403
      %4405 = vrot.lane.b32.xlu0 %v4396, 9
      %v4406 = vpop.permute.xlu0 %4405
      %vm4407 = vcmask 72704
      %v4410 = vsel %vm4407, %v4400, %v4404
      %v4414 = vsel %vm4407, %v4402, %v4406
      %v4416 = vld [vmem:[%s15] sm:$0xf]
      %v4417 = vld [vmem:[%s15 + $0x4] sm:$0xf]
      %v4418 = vld [vmem:[%s15 + $0x8] sm:$0xf]
      %v4419 = vld [vmem:[%s15 + $0xc] sm:$0xf]
      %v4424 = vunpack.c.l.b16 %v4416
      %v4425 = vunpack.c.l.b16 %v4417
      %v4426 = vunpack.c.l.b16 %v4418
      %v4427 = vunpack.c.l.b16 %v4419
      %v4428 = vpack.c.b16 %v4425, %v4424
      %v4429 = vpack.c.b16 %v4427, %v4426
      %v4432 = vmul.bf16 %v4410, %v4428
      %v4433 = vmul.bf16 %v4414, %v4429
      %4434 = vst.msk [vmem:[#allocation3] sm:$0xff] %vm4166, %v4432
      %4435 = vst.msk [vmem:[#allocation3 + $0x8] sm:$0xff] %vm4166, %v4433
      %4436 = vrot.lane.b32.xlu0 %v4395, 72
      %v4437 = vpop.permute.xlu0 %4436
      %4438 = vrot.lane.b32.xlu0 %v4396, 72
      %v4439 = vpop.permute.xlu0 %4438
      %4440 = vrot.lane.b32.xlu0 %v4395, 8
      %v4441 = vpop.permute.xlu0 %4440
      %4442 = vrot.lane.b32.xlu0 %v4396, 8
      %v4443 = vpop.permute.xlu0 %4442
      %vm4444 = vcmask 64512
      %v4447 = vsel %vm4444, %v4437, %v4441
      %v4451 = vsel %vm4444, %v4439, %v4443
      %s4453 = scalar_lea.vmem %s15, 16
      %v4454 = vld [vmem:[%s4453] sm:$0xf]
      %v4455 = vld [vmem:[%s4453 + $0x4] sm:$0xf]
      %v4456 = vld [vmem:[%s4453 + $0x8] sm:$0xf]
      %v4457 = vld [vmem:[%s4453 + $0xc] sm:$0xf]
      %v4462 = vunpack.c.l.b16 %v4454
      %v4463 = vunpack.c.l.b16 %v4455
      %v4464 = vunpack.c.l.b16 %v4456
      %v4465 = vunpack.c.l.b16 %v4457
      %v4466 = vpack.c.b16 %v4463, %v4462
      %v4467 = vpack.c.b16 %v4465, %v4464
      %v4470 = vmul.bf16 %v4447, %v4466
      %v4471 = vmul.bf16 %v4451, %v4467
      %4472 = vst.msk [vmem:[#allocation3 + $0x10] sm:$0xff] %vm4166, %v4470
      %4473 = vst.msk [vmem:[#allocation3 + $0x18] sm:$0xff] %vm4166, %v4471
      %4474 = vrot.lane.b32.xlu0 %v4395, 71
      %v4475 = vpop.permute.xlu0 %4474
      %4476 = vrot.lane.b32.xlu0 %v4396, 71
      %v4477 = vpop.permute.xlu0 %4476
      %4478 = vrot.lane.b32.xlu0 %v4395, 7
      %v4479 = vpop.permute.xlu0 %4478
      %4480 = vrot.lane.b32.xlu0 %v4396, 7
      %v4481 = vpop.permute.xlu0 %4480
      %vm4482 = vcmask 56320
      %v4485 = vsel %vm4482, %v4475, %v4479
      %v4489 = vsel %vm4482, %v4477, %v4481
      %s4491 = scalar_lea.vmem %s15, 32
      %v4492 = vld [vmem:[%s4491] sm:$0xf]
      %v4493 = vld [vmem:[%s4491 + $0x4] sm:$0xf]
      %v4494 = vld [vmem:[%s4491 + $0x8] sm:$0xf]
      %v4495 = vld [vmem:[%s4491 + $0xc] sm:$0xf]
      %v4500 = vunpack.c.l.b16 %v4492
      %v4501 = vunpack.c.l.b16 %v4493
      %v4502 = vunpack.c.l.b16 %v4494
      %v4503 = vunpack.c.l.b16 %v4495
      %v4504 = vpack.c.b16 %v4501, %v4500
      %v4505 = vpack.c.b16 %v4503, %v4502
      %v4508 = vmul.bf16 %v4485, %v4504
      %v4509 = vmul.bf16 %v4489, %v4505
      %4510 = vst.msk [vmem:[#allocation3 + $0x20] sm:$0xff] %vm4166, %v4508
      %4511 = vst.msk [vmem:[#allocation3 + $0x28] sm:$0xff] %vm4166, %v4509
      %4512 = vrot.lane.b32.xlu0 %v4395, 65
      %v4513 = vpop.permute.xlu0 %4512
      %4514 = vrot.lane.b32.xlu0 %v4396, 65
      %v4515 = vpop.permute.xlu0 %4514
      %4516 = vrot.lane.b32.xlu0 %v4395, 1
      %v4517 = vpop.permute.xlu0 %4516
      %4518 = vrot.lane.b32.xlu0 %v4396, 1
      %v4519 = vpop.permute.xlu0 %4518
      %v4522 = vsel %vm770, %v4513, %v4517
      %v4526 = vsel %vm770, %v4515, %v4519
      %s4528 = scalar_lea.vmem %s15, 48
      %v4529 = vld [vmem:[%s4528] sm:$0xf]
      %v4530 = vld [vmem:[%s4528 + $0x4] sm:$0xf]
      %v4531 = vld [vmem:[%s4528 + $0x8] sm:$0xf]
      %v4532 = vld [vmem:[%s4528 + $0xc] sm:$0xf]
      %v4537 = vunpack.c.l.b16 %v4529
      %v4538 = vunpack.c.l.b16 %v4530
      %v4539 = vunpack.c.l.b16 %v4531
      %v4540 = vunpack.c.l.b16 %v4532
      %v4541 = vpack.c.b16 %v4538, %v4537
      %v4542 = vpack.c.b16 %v4540, %v4539
      %v4545 = vmul.bf16 %v4522, %v4541
      %v4546 = vmul.bf16 %v4526, %v4542
      %4547 = vst.msk [vmem:[#allocation3 + $0x30] sm:$0xff] %vm4166, %v4545
      %4548 = vst.msk [vmem:[#allocation3 + $0x38] sm:$0xff] %vm4166, %v4546
      %4549 = vst.msk [vmem:[#allocation3 + $0x40] sm:$0xff] %vm4166, %v4395
      %4550 = vst.msk [vmem:[#allocation3 + $0x48] sm:$0xff] %vm4166, %v4396
      %4551 = vrot.lane.b32.xlu0 %v4395, 127
      %v4552 = vpop.permute.xlu0 %4551
      %4553 = vrot.lane.b32.xlu0 %v4396, 127
      %v4554 = vpop.permute.xlu0 %4553
      %4555 = vrot.lane.b32.xlu0 %v4395, 63
      %v4556 = vpop.permute.xlu0 %4555
      %4557 = vrot.lane.b32.xlu0 %v4396, 63
      %v4558 = vpop.permute.xlu0 %4557
      %vm4559 = vcmask 515072
      %v4562 = vsel %vm4559, %v4552, %v4556
      %v4566 = vsel %vm4559, %v4554, %v4558
      %s4568 = scalar_lea.vmem %s15, 80
      %v4569 = vld [vmem:[%s4568] sm:$0xf]
      %v4570 = vld [vmem:[%s4568 + $0x4] sm:$0xf]
      %v4571 = vld [vmem:[%s4568 + $0x8] sm:$0xf]
      %v4572 = vld [vmem:[%s4568 + $0xc] sm:$0xf]
      %v4577 = vunpack.c.l.b16 %v4569
      %v4578 = vunpack.c.l.b16 %v4570
      %v4579 = vunpack.c.l.b16 %v4571
      %v4580 = vunpack.c.l.b16 %v4572
      %v4581 = vpack.c.b16 %v4578, %v4577
      %v4582 = vpack.c.b16 %v4580, %v4579
      %v4585 = vmul.bf16 %v4562, %v4581
      %v4586 = vmul.bf16 %v4566, %v4582
      %4587 = vst.msk [vmem:[#allocation3 + $0x50] sm:$0xff] %vm4166, %v4585
      %4588 = vst.msk [vmem:[#allocation3 + $0x58] sm:$0xff] %vm4166, %v4586
      %4589 = vrot.lane.b32.xlu0 %v4395, 121
      %v4590 = vpop.permute.xlu0 %4589
      %4591 = vrot.lane.b32.xlu0 %v4396, 121
      %v4592 = vpop.permute.xlu0 %4591
      %4593 = vrot.lane.b32.xlu0 %v4395, 57
      %v4594 = vpop.permute.xlu0 %4593
      %4595 = vrot.lane.b32.xlu0 %v4396, 57
      %v4596 = vpop.permute.xlu0 %4595
      %vm4597 = vcmask 465920
      %v4600 = vsel %vm4597, %v4590, %v4594
      %v4604 = vsel %vm4597, %v4592, %v4596
      %s4606 = scalar_lea.vmem %s15, 96
      %v4607 = vld [vmem:[%s4606] sm:$0xf]
      %v4608 = vld [vmem:[%s4606 + $0x4] sm:$0xf]
      %v4609 = vld [vmem:[%s4606 + $0x8] sm:$0xf]
      %v4610 = vld [vmem:[%s4606 + $0xc] sm:$0xf]
      %v4615 = vunpack.c.l.b16 %v4607
      %v4616 = vunpack.c.l.b16 %v4608
      %v4617 = vunpack.c.l.b16 %v4609
      %v4618 = vunpack.c.l.b16 %v4610
      %v4619 = vpack.c.b16 %v4616, %v4615
      %v4620 = vpack.c.b16 %v4618, %v4617
      %v4623 = vmul.bf16 %v4600, %v4619
      %v4624 = vmul.bf16 %v4604, %v4620
      %4625 = vst.msk [vmem:[#allocation3 + $0x60] sm:$0xff] %vm4166, %v4623
      %4626 = vst.msk [vmem:[#allocation3 + $0x68] sm:$0xff] %vm4166, %v4624
      %4627 = vrot.lane.b32.xlu0 %v4395, 120
      %v4628 = vpop.permute.xlu0 %4627
      %4629 = vrot.lane.b32.xlu0 %v4396, 120
      %v4630 = vpop.permute.xlu0 %4629
      %4631 = vrot.lane.b32.xlu0 %v4395, 56
      %v4632 = vpop.permute.xlu0 %4631
      %4633 = vrot.lane.b32.xlu0 %v4396, 56
      %v4634 = vpop.permute.xlu0 %4633
      %vm4635 = vcmask 457728
      %v4638 = vsel %vm4635, %v4628, %v4632
      %v4642 = vsel %vm4635, %v4630, %v4634
      %s4644 = scalar_lea.vmem %s15, 112
      %v4645 = vld [vmem:[%s4644] sm:$0xf]
      %v4646 = vld [vmem:[%s4644 + $0x4] sm:$0xf]
      %v4647 = vld [vmem:[%s4644 + $0x8] sm:$0xf]
      %v4648 = vld [vmem:[%s4644 + $0xc] sm:$0xf]
      %v4653 = vunpack.c.l.b16 %v4645
      %v4654 = vunpack.c.l.b16 %v4646
      %v4655 = vunpack.c.l.b16 %v4647
      %v4656 = vunpack.c.l.b16 %v4648
      %v4657 = vpack.c.b16 %v4654, %v4653
      %v4658 = vpack.c.b16 %v4656, %v4655
      %v4661 = vmul.bf16 %v4638, %v4657
      %v4662 = vmul.bf16 %v4642, %v4658
      %4663 = vst.msk [vmem:[#allocation3 + $0x70] sm:$0xff] %vm4166, %v4661
      %4664 = vst.msk [vmem:[#allocation3 + $0x78] sm:$0xff] %vm4166, %v4662
      %4665 = vrot.lane.b32.xlu0 %v4395, 119
      %v4666 = vpop.permute.xlu0 %4665
      %4667 = vrot.lane.b32.xlu0 %v4396, 119
      %v4668 = vpop.permute.xlu0 %4667
      %4669 = vrot.lane.b32.xlu0 %v4395, 55
      %v4670 = vpop.permute.xlu0 %4669
      %4671 = vrot.lane.b32.xlu0 %v4396, 55
      %v4672 = vpop.permute.xlu0 %4671
      %vm4673 = vcmask 449536
      %v4676 = vsel %vm4673, %v4666, %v4670
      %v4680 = vsel %vm4673, %v4668, %v4672
      %s4682 = scalar_lea.vmem %s15, 128
      %v4683 = vld [vmem:[%s4682] sm:$0xf]
      %v4684 = vld [vmem:[%s4682 + $0x4] sm:$0xf]
      %v4685 = vld [vmem:[%s4682 + $0x8] sm:$0xf]
      %v4686 = vld [vmem:[%s4682 + $0xc] sm:$0xf]
      %v4691 = vunpack.c.l.b16 %v4683
      %v4692 = vunpack.c.l.b16 %v4684
      %v4693 = vunpack.c.l.b16 %v4685
      %v4694 = vunpack.c.l.b16 %v4686
      %v4695 = vpack.c.b16 %v4692, %v4691
      %v4696 = vpack.c.b16 %v4694, %v4693
      %v4699 = vmul.bf16 %v4676, %v4695
      %v4700 = vmul.bf16 %v4680, %v4696
      %4701 = vst.msk [vmem:[#allocation3 + $0x80] sm:$0xff] %vm4166, %v4699
      %4702 = vst.msk [vmem:[#allocation3 + $0x88] sm:$0xff] %vm4166, %v4700
      %v4703 = vld [vmem:[#allocation3] sm:$0xff]
      %v4704 = vld [vmem:[#allocation3 + $0x8] sm:$0xff]
      %v4705 = vld [vmem:[#allocation3 + $0x10] sm:$0xff]
      %v4706 = vld [vmem:[#allocation3 + $0x18] sm:$0xff]
      %v4707 = vld [vmem:[#allocation3 + $0x20] sm:$0xff]
      %v4708 = vld [vmem:[#allocation3 + $0x28] sm:$0xff]
      %v4709 = vld [vmem:[#allocation3 + $0x30] sm:$0xff]
      %v4710 = vld [vmem:[#allocation3 + $0x38] sm:$0xff]
      %v4711 = vld [vmem:[#allocation3 + $0x40] sm:$0xff]
      %v4712 = vld [vmem:[#allocation3 + $0x48] sm:$0xff]
      %v4713 = vld [vmem:[#allocation3 + $0x50] sm:$0xff]
      %v4714 = vld [vmem:[#allocation3 + $0x58] sm:$0xff]
      %v4715 = vld [vmem:[#allocation3 + $0x60] sm:$0xff]
      %v4716 = vld [vmem:[#allocation3 + $0x68] sm:$0xff]
      %v4717 = vld [vmem:[#allocation3 + $0x70] sm:$0xff]
      %v4718 = vld [vmem:[#allocation3 + $0x78] sm:$0xff]
      %v4719 = vld [vmem:[#allocation3 + $0x80] sm:$0xff]
      %v4720 = vld [vmem:[#allocation3 + $0x88] sm:$0xff]
      %4722 = vset.pattern.permute.xlu0 0
      %4723 = vperm.xlu0 %4722, %v4391
      %v4724 = vpop.permute.xlu0 %4723
      %4727 = vset.pattern.permute.xlu0 0
      %4728 = vperm.xlu0 %4727, %v4392
      %v4729 = vpop.permute.xlu0 %4728
      %4732 = vset.pattern.permute.xlu0 0
      %4733 = vperm.xlu0 %4732, %v4393
      %v4734 = vpop.permute.xlu0 %4733
      %4737 = vset.pattern.permute.xlu0 0
      %4738 = vperm.xlu0 %4737, %v4394
      %v4739 = vpop.permute.xlu0 %4738
      %v4749 = vunpack.c.l.b16 %v4382
      %v4750 = vunpack.c.h.b16 %v4382
      %v4751 = vunpack.c.l.b16 %v4383
      %v4752 = vunpack.c.l.b16 %v4384
      %v4753 = vunpack.c.h.b16 %v4384
      %v4754 = vunpack.c.l.b16 %v4385
      %v4755 = vunpack.c.l.b16 %v4386
      %v4756 = vunpack.c.h.b16 %v4386
      %v4757 = vunpack.c.l.b16 %v4387
      %v4758 = vunpack.c.l.b16 %v4388
      %v4759 = vunpack.c.h.b16 %v4388
      %v4760 = vunpack.c.l.b16 %v4389
      %v4761 = vpack.c.b16 %v4752, %v4749
      %v4762 = vpack.c.b16 %v4753, %v4750
      %v4763 = vpack.c.b16 %v4754, %v4751
      %v4764 = vpack.c.b16 %v4758, %v4755
      %v4765 = vpack.c.b16 %v4759, %v4756
      %v4766 = vpack.c.b16 %v4760, %v4757
      %v4772 = vsel %vm1122, %v4763, 0
      %v4775 = vsel %vm1122, %v4766, 0
      %4777 = vmatprep.subr.bf16.mxu0 0
      %4778 = vmatpush1.bf16.msra.mxu0 %v4703
      %4779 = vmatprep.subr.bf16.mxu0 0
      %4780 = vmatpush1.bf16.msra.mxu0 %v4704
      %4781 = vmatprep.subr.bf16.mxu0 0
      %4782 = vmatpush1.bf16.msra.mxu0 %v4705
      %4783 = vmatprep.subr.bf16.mxu0 0
      %4784 = vmatpush1.bf16.msra.mxu0 %v4706
      %4785 = vmatprep.subr.bf16.mxu0 0
      %4786 = vmatpush1.bf16.msra.mxu0 %v4707
      %4787 = vmatprep.subr.bf16.mxu0 0
      %4788 = vmatpush1.bf16.msra.mxu0 %v4708
      %4789 = vmatprep.subr.bf16.mxu0 0
      %4790 = vmatpush1.bf16.msra.mxu0 %v4709
      %4791 = vmatprep.subr.bf16.mxu0 0
      %4792 = vmatpush1.bf16.msra.mxu0 %v4710
      %4793 = vmatprep.subr.bf16.mxu0 0
      %4794 = vmatpush1.bf16.msra.mxu0 %v4711
      %4795 = vmatprep.subr.bf16.mxu0 0
      %4796 = vmatpush1.bf16.msra.mxu0 %v4712
      %4797 = vmatprep.subr.bf16.mxu0 0
      %4798 = vmatpush1.bf16.msra.mxu0 %v4713
      %4799 = vmatprep.subr.bf16.mxu0 0
      %4800 = vmatpush1.bf16.msra.mxu0 %v4714
      %4801 = vmatprep.subr.bf16.mxu0 0
      %4802 = vmatpush1.bf16.msra.mxu0 %v4715
      %4803 = vmatprep.subr.bf16.mxu0 0
      %4804 = vmatpush1.bf16.msra.mxu0 %v4716
      %4805 = vmatprep.subr.bf16.mxu0 0
      %4806 = vmatpush1.bf16.msra.mxu0 %v4717
      %4807 = vmatprep.subr.bf16.mxu0 0
      %4808 = vmatpush1.bf16.msra.mxu0 %v4718
      %4809 = vmatprep.mubr.bf16.mxu0 %v4762
      %4810 = vmatmul.mubr.bf16.gmra.mrb[0].mxu0 %v4761
      %v4811 = vpop.f32.mrb[0].mxu0
      %v4812 = vadd.f32 %v4724, %v4811
      %v4813 = vpop.f32.mrb[0].mxu0
      %v4814 = vpop.f32.mrb[0].mxu0
      %v4815 = vadd.f32 %v4729, %v4814
      %v4816 = vpop.f32.mrb[0].mxu0
      %4817 = vmatprep.mubr.bf16.mxu0 %v4765
      %4818 = vmatmul.mubr.bf16.gmra.mrb[0].mxu0 %v4764
      %v4819 = vpop.f32.mrb[0].mxu0
      %v4820 = vadd.f32 %v4734, %v4819
      %v4821 = vpop.f32.mrb[0].mxu0
      %v4822 = vpop.f32.mrb[0].mxu0
      %v4823 = vadd.f32 %v4739, %v4822
      %v4824 = vpop.f32.mrb[0].mxu0
      %4825 = vdwg.mxu0
      %4826 = vmatprep.subr.bf16.mxu0 0
      %4827 = vmatpush1.bf16.msra.mxu0 %v4719
      %4828 = vmatprep.subr.bf16.mxu0 0
      %4829 = vmatpush1.bf16.msra.mxu0 %v4720
      %4830 = vmatprep.subr.bf16.mxu0 0
      %4831 = vmatpush1.bf16.msra.mxu0 0
      %4832 = vmatprep.subr.bf16.mxu0 0
      %4833 = vmatpush1.bf16.msra.mxu0 0
      %4834 = vmatprep.subr.bf16.mxu0 0
      %4835 = vmatpush1.bf16.msra.mxu0 0
      %4836 = vmatprep.subr.bf16.mxu0 0
      %4837 = vmatpush1.bf16.msra.mxu0 0
      %4838 = vmatprep.subr.bf16.mxu0 0
      %4839 = vmatpush1.bf16.msra.mxu0 0
      %4840 = vmatprep.subr.bf16.mxu0 0
      %4841 = vmatpush1.bf16.msra.mxu0 0
      %4842 = vmatprep.subr.bf16.mxu0 0
      %4843 = vmatpush1.bf16.msra.mxu0 0
      %4844 = vmatprep.subr.bf16.mxu0 0
      %4845 = vmatpush1.bf16.msra.mxu0 0
      %4846 = vmatprep.subr.bf16.mxu0 0
      %4847 = vmatpush1.bf16.msra.mxu0 0
      %4848 = vmatprep.subr.bf16.mxu0 0
      %4849 = vmatpush1.bf16.msra.mxu0 0
      %4850 = vmatprep.subr.bf16.mxu0 0
      %4851 = vmatpush1.bf16.msra.mxu0 0
      %4852 = vmatprep.subr.bf16.mxu0 0
      %4853 = vmatpush1.bf16.msra.mxu0 0
      %4854 = vmatprep.subr.bf16.mxu0 0
      %4855 = vmatpush1.bf16.msra.mxu0 0
      %4856 = vmatprep.subr.bf16.mxu0 0
      %4857 = vmatpush1.bf16.msra.mxu0 0
      %4858 = vmatprep.mubr.bf16.mxu0 0
      %4859 = vmatmul.mubr.bf16.gmra.mrb[0].mxu0 %v4772
      %v4860 = vpop.f32.mrb[0].mxu0
      %v4861 = vadd.f32 %v4812, %v4860
      %v4862 = vpop.f32.mrb[0].mxu0
      %v4863 = vpop.f32.mrb[0].mxu0
      %v4864 = vadd.f32 %v4815, %v4863
      %v4865 = vpop.f32.mrb[0].mxu0
      %4866 = vmatprep.mubr.bf16.mxu0 0
      %4867 = vmatmul.mubr.bf16.gmra.mrb[0].mxu0 %v4775
      %v4868 = vpop.f32.mrb[0].mxu0
      %v4869 = vadd.f32 %v4820, %v4868
      %v4870 = vpop.f32.mrb[0].mxu0
      %v4871 = vpop.f32.mrb[0].mxu0
      %v4872 = vadd.f32 %v4823, %v4871
      %v4873 = vpop.f32.mrb[0].mxu0
      %4874 = vdwg.mxu0
      %s4875 = scalar_lea.vmem %s6, 96
      %v4876 = vld [vmem:[%s4875] sm:$0xff]
      %v4877 = vld [vmem:[%s4875 + $0x8] sm:$0xff]
      %v4878 = vld [vmem:[%s4875 + $0x10] sm:$0xff]
      %v4879 = vld [vmem:[%s4875 + $0x18] sm:$0xff]
      %s4880 = scalar_lea.vmem %s7, 96
      %v4881 = vld [vmem:[%s4880] sm:$0xff]
      %v4882 = vld [vmem:[%s4880 + $0x8] sm:$0xff]
      %v4883 = vld [vmem:[%s4880 + $0x10] sm:$0xff]
      %v4884 = vld [vmem:[%s4880 + $0x18] sm:$0xff]
      %v4885 = vld [vmem:[%s12] sm:$0xff]
      %v4886 = vld [vmem:[%s12 + $0x8] sm:$0xff]
      %v4887 = vld [vmem:[%s12 + $0x10] sm:$0xff]
      %v4888 = vld [vmem:[%s12 + $0x18] sm:$0xff]
      %v4890 = vsel %vm1122, %v4885, 0
      %v4893 = vsel %vm1122, %v4886, 0
      %v4896 = vsel %vm1122, %v4887, 0
      %v4899 = vsel %vm1122, %v4888, 0
      %4901 = vmatprep.subr.mxu0 0.0
      %4902 = vmatpush1.msra.mxu0 %v4861
      %4903 = vmatprep.subr.mxu0 0.0
      %4904 = vmatpush1.msra.mxu0 %v4864
      %4905 = vmatprep.subr.mxu0 0.0
      %4906 = vmatpush1.msra.mxu0 %v4869
      %4907 = vmatprep.subr.mxu0 0.0
      %4908 = vmatpush1.msra.mxu0 %v4872
      %4909 = vmatprep.subr.mxu0 0.0
      %4910 = vmatpush1.msra.mxu0 0.0
      %4911 = vmatprep.subr.mxu0 0.0
      %4912 = vmatpush1.msra.mxu0 0.0
      %4913 = vmatprep.subr.mxu0 0.0
      %4914 = vmatpush1.msra.mxu0 0.0
      %4915 = vmatprep.subr.mxu0 0.0
      %4916 = vmatpush1.msra.mxu0 0.0
      %4917 = vmatprep.subr.mxu0 0.0
      %4918 = vmatpush1.msra.mxu0 0.0
      %4919 = vmatprep.subr.mxu0 0.0
      %4920 = vmatpush1.msra.mxu0 0.0
      %4921 = vmatprep.subr.mxu0 0.0
      %4922 = vmatpush1.msra.mxu0 0.0
      %4923 = vmatprep.subr.mxu0 0.0
      %4924 = vmatpush1.msra.mxu0 0.0
      %4925 = vmatprep.subr.mxu0 0.0
      %4926 = vmatpush1.msra.mxu0 0.0
      %4927 = vmatprep.subr.mxu0 0.0
      %4928 = vmatpush1.msra.mxu0 0.0
      %4929 = vmatprep.subr.mxu0 0.0
      %4930 = vmatpush1.msra.mxu0 0.0
      %4931 = vmatprep.subr.mxu0 0.0
      %4932 = vmatpush1.msra.mxu0 0.0
      %4933 = vmatprep.subr.mxu0 0.0
      %4934 = vmatpush1.msra.mxu0 0.0
      %4935 = vmatprep.subr.mxu0 0.0
      %4936 = vmatpush1.msra.mxu0 0.0
      %4937 = vmatprep.subr.mxu0 0.0
      %4938 = vmatpush1.msra.mxu0 0.0
      %4939 = vmatprep.subr.mxu0 0.0
      %4940 = vmatpush1.msra.mxu0 0.0
      %4941 = vmatprep.subr.mxu0 0.0
      %4942 = vmatpush1.msra.mxu0 0.0
      %4943 = vmatprep.subr.mxu0 0.0
      %4944 = vmatpush1.msra.mxu0 0.0
      %4945 = vmatprep.subr.mxu0 0.0
      %4946 = vmatpush1.msra.mxu0 0.0
      %4947 = vmatprep.subr.mxu0 0.0
      %4948 = vmatpush1.msra.mxu0 0.0
      %4949 = vmatprep.subr.mxu0 0.0
      %4950 = vmatpush1.msra.mxu0 0.0
      %4951 = vmatprep.subr.mxu0 0.0
      %4952 = vmatpush1.msra.mxu0 0.0
      %4953 = vmatprep.subr.mxu0 0.0
      %4954 = vmatpush1.msra.mxu0 0.0
      %4955 = vmatprep.subr.mxu0 0.0
      %4956 = vmatpush1.msra.mxu0 0.0
      %4957 = vmatprep.subr.mxu0 0.0
      %4958 = vmatpush1.msra.mxu0 0.0
      %4959 = vmatprep.subr.mxu0 0.0
      %4960 = vmatpush1.msra.mxu0 0.0
      %4961 = vmatprep.subr.mxu0 0.0
      %4962 = vmatpush1.msra.mxu0 0.0
      %4963 = vmatprep.subr.mxu0 0.0
      %4964 = vmatpush1.msra.mxu0 0.0
      %4965 = vmatprep.mubr.f32.mxu0 0.0
      %4966 = vmatmul.mubr.f32.gmra.mrb[0].mxu0 %v4890
      %v4967 = vpop.f32.mrb[0].mxu0
      %v4968 = vadd.f32 0.0, %v4967
      %v4969 = vpop.f32.mrb[0].mxu0
      %4970 = vmatprep.mubr.f32.mxu0 0.0
      %4971 = vmatmul.mubr.f32.gmra.mrb[0].mxu0 %v4893
      %v4972 = vpop.f32.mrb[0].mxu0
      %v4973 = vadd.f32 0.0, %v4972
      %v4974 = vpop.f32.mrb[0].mxu0
      %4975 = vmatprep.mubr.f32.mxu0 0.0
      %4976 = vmatmul.mubr.f32.gmra.mrb[0].mxu0 %v4896
      %v4977 = vpop.f32.mrb[0].mxu0
      %v4978 = vadd.f32 0.0, %v4977
      %v4979 = vpop.f32.mrb[0].mxu0
      %4980 = vmatprep.mubr.f32.mxu0 0.0
      %4981 = vmatmul.mubr.f32.gmra.mrb[0].mxu0 %v4899
      %v4982 = vpop.f32.mrb[0].mxu0
      %v4983 = vadd.f32 0.0, %v4982
      %v4984 = vpop.f32.mrb[0].mxu0
      %4985 = vdwg.mxu0
      %v4986 = vsel %vm4166, %v4968, 0.0
      %4987 = vadd.xlane.f32.xlu0 %v4986
      %v4988 = vpop.xlane.xlu0 %4987
      %v4989 = vsel %vm4166, %v4973, 0.0
      %4990 = vadd.xlane.f32.xlu0 %v4989
      %v4991 = vpop.xlane.xlu0 %4990
      %v4992 = vsel %vm4166, %v4978, 0.0
      %4993 = vadd.xlane.f32.xlu0 %v4992
      %v4994 = vpop.xlane.xlu0 %4993
      %v4995 = vsel %vm4166, %v4983, 0.0
      %4996 = vadd.xlane.f32.xlu0 %v4995
      %v4997 = vpop.xlane.xlu0 %4996
      %v4998 = vmul.f32 %v4988, %v4179
      %v4999 = vmul.f32 %v4991, %v4179
      %v5000 = vmul.f32 %v4994, %v4179
      %v5001 = vmul.f32 %v4997, %v4179
      %v5002 = vsub.f32 %v4861, %v4998
      %v5003 = vsub.f32 %v4864, %v4999
      %v5004 = vsub.f32 %v4869, %v5000
      %v5005 = vsub.f32 %v4872, %v5001
      %v5006 = vmul.f32 %v5002, %v5002
      %v5007 = vmul.f32 %v5003, %v5003
      %v5008 = vmul.f32 %v5004, %v5004
      %v5009 = vmul.f32 %v5005, %v5005
      %5010 = vmatprep.subr.mxu0 0.0
      %5011 = vmatpush1.msra.mxu0 %v5006
      %5012 = vmatprep.subr.mxu0 0.0
      %5013 = vmatpush1.msra.mxu0 %v5007
      %5014 = vmatprep.subr.mxu0 0.0
      %5015 = vmatpush1.msra.mxu0 %v5008
      %5016 = vmatprep.subr.mxu0 0.0
      %5017 = vmatpush1.msra.mxu0 %v5009
      %5018 = vmatprep.subr.mxu0 0.0
      %5019 = vmatpush1.msra.mxu0 0.0
      %5020 = vmatprep.subr.mxu0 0.0
      %5021 = vmatpush1.msra.mxu0 0.0
      %5022 = vmatprep.subr.mxu0 0.0
      %5023 = vmatpush1.msra.mxu0 0.0
      %5024 = vmatprep.subr.mxu0 0.0
      %5025 = vmatpush1.msra.mxu0 0.0
      %5026 = vmatprep.subr.mxu0 0.0
      %5027 = vmatpush1.msra.mxu0 0.0
      %5028 = vmatprep.subr.mxu0 0.0
      %5029 = vmatpush1.msra.mxu0 0.0
      %5030 = vmatprep.subr.mxu0 0.0
      %5031 = vmatpush1.msra.mxu0 0.0
      %5032 = vmatprep.subr.mxu0 0.0
      %5033 = vmatpush1.msra.mxu0 0.0
      %5034 = vmatprep.subr.mxu0 0.0
      %5035 = vmatpush1.msra.mxu0 0.0
      %5036 = vmatprep.subr.mxu0 0.0
      %5037 = vmatpush1.msra.mxu0 0.0
      %5038 = vmatprep.subr.mxu0 0.0
      %5039 = vmatpush1.msra.mxu0 0.0
      %5040 = vmatprep.subr.mxu0 0.0
      %5041 = vmatpush1.msra.mxu0 0.0
      %5042 = vmatprep.subr.mxu0 0.0
      %5043 = vmatpush1.msra.mxu0 0.0
      %5044 = vmatprep.subr.mxu0 0.0
      %5045 = vmatpush1.msra.mxu0 0.0
      %5046 = vmatprep.subr.mxu0 0.0
      %5047 = vmatpush1.msra.mxu0 0.0
      %5048 = vmatprep.subr.mxu0 0.0
      %5049 = vmatpush1.msra.mxu0 0.0
      %5050 = vmatprep.subr.mxu0 0.0
      %5051 = vmatpush1.msra.mxu0 0.0
      %5052 = vmatprep.subr.mxu0 0.0
      %5053 = vmatpush1.msra.mxu0 0.0
      %5054 = vmatprep.subr.mxu0 0.0
      %5055 = vmatpush1.msra.mxu0 0.0
      %5056 = vmatprep.subr.mxu0 0.0
      %5057 = vmatpush1.msra.mxu0 0.0
      %5058 = vmatprep.subr.mxu0 0.0
      %5059 = vmatpush1.msra.mxu0 0.0
      %5060 = vmatprep.subr.mxu0 0.0
      %5061 = vmatpush1.msra.mxu0 0.0
      %5062 = vmatprep.subr.mxu0 0.0
      %5063 = vmatpush1.msra.mxu0 0.0
      %5064 = vmatprep.subr.mxu0 0.0
      %5065 = vmatpush1.msra.mxu0 0.0
      %5066 = vmatprep.subr.mxu0 0.0
      %5067 = vmatpush1.msra.mxu0 0.0
      %5068 = vmatprep.subr.mxu0 0.0
      %5069 = vmatpush1.msra.mxu0 0.0
      %5070 = vmatprep.subr.mxu0 0.0
      %5071 = vmatpush1.msra.mxu0 0.0
      %5072 = vmatprep.subr.mxu0 0.0
      %5073 = vmatpush1.msra.mxu0 0.0
      %5074 = vmatprep.mubr.f32.mxu0 0.0
      %5075 = vmatmul.mubr.f32.gmra.mrb[0].mxu0 %v4890
      %v5076 = vpop.f32.mrb[0].mxu0
      %v5077 = vadd.f32 0.0, %v5076
      %v5078 = vpop.f32.mrb[0].mxu0
      %5079 = vmatprep.mubr.f32.mxu0 0.0
      %5080 = vmatmul.mubr.f32.gmra.mrb[0].mxu0 %v4893
      %v5081 = vpop.f32.mrb[0].mxu0
      %v5082 = vadd.f32 0.0, %v5081
      %v5083 = vpop.f32.mrb[0].mxu0
      %5084 = vmatprep.mubr.f32.mxu0 0.0
      %5085 = vmatmul.mubr.f32.gmra.mrb[0].mxu0 %v4896
      %v5086 = vpop.f32.mrb[0].mxu0
      %v5087 = vadd.f32 0.0, %v5086
      %v5088 = vpop.f32.mrb[0].mxu0
      %5089 = vmatprep.mubr.f32.mxu0 0.0
      %5090 = vmatmul.mubr.f32.gmra.mrb[0].mxu0 %v4899
      %v5091 = vpop.f32.mrb[0].mxu0
      %v5092 = vadd.f32 0.0, %v5091
      %v5093 = vpop.f32.mrb[0].mxu0
      %5094 = vdwg.mxu0
      %v5095 = vsel %vm4166, %v5077, 0.0
      %5096 = vadd.xlane.f32.xlu0 %v5095
      %v5097 = vpop.xlane.xlu0 %5096
      %v5098 = vsel %vm4166, %v5082, 0.0
      %5099 = vadd.xlane.f32.xlu0 %v5098
      %v5100 = vpop.xlane.xlu0 %5099
      %v5101 = vsel %vm4166, %v5087, 0.0
      %5102 = vadd.xlane.f32.xlu0 %v5101
      %v5103 = vpop.xlane.xlu0 %5102
      %v5104 = vsel %vm4166, %v5092, 0.0
      %5105 = vadd.xlane.f32.xlu0 %v5104
      %v5106 = vpop.xlane.xlu0 %5105
      %v5107 = vmul.f32 %v5097, %v4179
      %v5108 = vmul.f32 %v5100, %v4179
      %v5109 = vmul.f32 %v5103, %v4179
      %v5110 = vmul.f32 %v5106, %v4179
      %v5111 = vadd.f32 %v5107, 1e-06
      %v5112 = vadd.f32 %v5108, 1e-06
      %v5113 = vadd.f32 %v5109, 1e-06
      %v5114 = vadd.f32 %v5110, 1e-06
      %v5115 = vrsqrt.pop %v5111
      %v5116 = vrsqrt.pop %v5112
      %v5117 = vrsqrt.pop %v5113
      %v5118 = vrsqrt.pop %v5114
      %v5119 = vmul.f32 %v5002, %v5115
      %v5120 = vmul.f32 %v5003, %v5116
      %v5121 = vmul.f32 %v5004, %v5117
      %v5122 = vmul.f32 %v5005, %v5118
      %5124 = vset.pattern.permute.xlu0 0
      %5125 = vperm.xlu0 %5124, %v4876
      %v5126 = vpop.permute.xlu0 %5125
      %5129 = vset.pattern.permute.xlu0 0
      %5130 = vperm.xlu0 %5129, %v4877
      %v5131 = vpop.permute.xlu0 %5130
      %5134 = vset.pattern.permute.xlu0 0
      %5135 = vperm.xlu0 %5134, %v4878
      %v5136 = vpop.permute.xlu0 %5135
      %5139 = vset.pattern.permute.xlu0 0
      %5140 = vperm.xlu0 %5139, %v4879
      %v5141 = vpop.permute.xlu0 %5140
      %v5143 = vmul.f32 %v5119, %v5126
      %v5144 = vmul.f32 %v5120, %v5131
      %v5145 = vmul.f32 %v5121, %v5136
      %v5146 = vmul.f32 %v5122, %v5141
      %5148 = vset.pattern.permute.xlu0 0
      %5149 = vperm.xlu0 %5148, %v4881
      %v5150 = vpop.permute.xlu0 %5149
      %5153 = vset.pattern.permute.xlu0 0
      %5154 = vperm.xlu0 %5153, %v4882
      %v5155 = vpop.permute.xlu0 %5154
      %5158 = vset.pattern.permute.xlu0 0
      %5159 = vperm.xlu0 %5158, %v4883
      %v5160 = vpop.permute.xlu0 %5159
      %5163 = vset.pattern.permute.xlu0 0
      %5164 = vperm.xlu0 %5163, %v4884
      %v5165 = vpop.permute.xlu0 %5164
      %v5167 = vadd.f32 %v5143, %v5150
      %v5168 = vadd.f32 %v5144, %v5155
      %v5169 = vadd.f32 %v5145, %v5160
      %v5170 = vadd.f32 %v5146, %v5165
      %v5171 = vxor.u32 %v5167, 2147483648
      %v5172 = vxor.u32 %v5168, 2147483648
      %v5173 = vxor.u32 %v5169, 2147483648
      %v5174 = vxor.u32 %v5170, 2147483648
      %v5175 = vmul.f32 %v5171, 1.442695
      %v5176 = vpow.pop %v5175
      %v5177 = vmul.f32 %v5172, 1.442695
      %v5178 = vpow.pop %v5177
      %v5179 = vmul.f32 %v5173, 1.442695
      %v5180 = vpow.pop %v5179
      %v5181 = vmul.f32 %v5174, 1.442695
      %v5182 = vpow.pop %v5181
      %v5183 = vadd.f32 %v5176, 1.0
      %v5184 = vadd.f32 %v5178, 1.0
      %v5185 = vadd.f32 %v5180, 1.0
      %v5186 = vadd.f32 %v5182, 1.0
      %v5187 = vrcp.pop %v5183
      %v5188 = vmul.f32 1.0, %v5187
      %v5189 = vrcp.pop %v5184
      %v5190 = vmul.f32 1.0, %v5189
      %v5191 = vrcp.pop %v5185
      %v5192 = vmul.f32 1.0, %v5191
      %v5193 = vrcp.pop %v5186
      %v5194 = vmul.f32 1.0, %v5193
      %v5195 = vmul.f32 %v5167, %v5188
      %v5196 = vmul.f32 %v5168, %v5190
      %v5197 = vmul.f32 %v5169, %v5192
      %v5198 = vmul.f32 %v5170, %v5194
      %s5199 = scalar_lea.vmem %s4, 192
      %v5200 = vld [vmem:[%s5199] sm:$0xff]
      %v5201 = vld [vmem:[%s5199 + $0x8] sm:$0xf]
      %v5202 = vld [vmem:[%s5199 + $0xc] sm:$0xff]
      %v5203 = vld [vmem:[%s5199 + $0x14] sm:$0xf]
      %v5204 = vld [vmem:[%s5199 + $0x18] sm:$0xff]
      %v5205 = vld [vmem:[%s5199 + $0x20] sm:$0xf]
      %v5206 = vld [vmem:[%s5199 + $0x24] sm:$0xff]
      %v5207 = vld [vmem:[%s5199 + $0x2c] sm:$0xf]
      %s5208 = scalar_lea.vmem %s5, 128
      %v5209 = vld [vmem:[%s5208] sm:$0xff]
      %v5210 = vld [vmem:[%s5208 + $0x8] sm:$0xff]
      %v5211 = vld [vmem:[%s5208 + $0x10] sm:$0xff]
      %v5212 = vld [vmem:[%s5208 + $0x18] sm:$0xff]
      %v5213 = vpack.c.bf16 %v5196, %v5195
      %v5214 = vpack.c.bf16 %v5198, %v5197
      %5217 = vrot.lane.b32.xlu0 %v5213, 73
      %v5218 = vpop.permute.xlu0 %5217
      %5219 = vrot.lane.b32.xlu0 %v5214, 73
      %v5220 = vpop.permute.xlu0 %5219
      %5221 = vrot.lane.b32.xlu0 %v5213, 9
      %v5222 = vpop.permute.xlu0 %5221
      %5223 = vrot.lane.b32.xlu0 %v5214, 9
      %v5224 = vpop.permute.xlu0 %5223
      %v5227 = vsel %vm4407, %v5218, %v5222
      %v5231 = vsel %vm4407, %v5220, %v5224
      %v5233 = vld [vmem:[%s15] sm:$0xf]
      %v5234 = vld [vmem:[%s15 + $0x4] sm:$0xf]
      %v5235 = vld [vmem:[%s15 + $0x8] sm:$0xf]
      %v5236 = vld [vmem:[%s15 + $0xc] sm:$0xf]
      %v5241 = vunpack.c.l.b16 %v5233
      %v5242 = vunpack.c.l.b16 %v5234
      %v5243 = vunpack.c.l.b16 %v5235
      %v5244 = vunpack.c.l.b16 %v5236
      %v5245 = vpack.c.b16 %v5242, %v5241
      %v5246 = vpack.c.b16 %v5244, %v5243
      %v5249 = vmul.bf16 %v5227, %v5245
      %v5250 = vmul.bf16 %v5231, %v5246
      %5251 = vst.msk [vmem:[#allocation3] sm:$0xff] %vm4166, %v5249
      %5252 = vst.msk [vmem:[#allocation3 + $0x8] sm:$0xff] %vm4166, %v5250
      %5253 = vrot.lane.b32.xlu0 %v5213, 72
      %v5254 = vpop.permute.xlu0 %5253
      %5255 = vrot.lane.b32.xlu0 %v5214, 72
      %v5256 = vpop.permute.xlu0 %5255
      %5257 = vrot.lane.b32.xlu0 %v5213, 8
      %v5258 = vpop.permute.xlu0 %5257
      %5259 = vrot.lane.b32.xlu0 %v5214, 8
      %v5260 = vpop.permute.xlu0 %5259
      %v5263 = vsel %vm4444, %v5254, %v5258
      %v5267 = vsel %vm4444, %v5256, %v5260
      %v5269 = vld [vmem:[%s4453] sm:$0xf]
      %v5270 = vld [vmem:[%s4453 + $0x4] sm:$0xf]
      %v5271 = vld [vmem:[%s4453 + $0x8] sm:$0xf]
      %v5272 = vld [vmem:[%s4453 + $0xc] sm:$0xf]
      %v5277 = vunpack.c.l.b16 %v5269
      %v5278 = vunpack.c.l.b16 %v5270
      %v5279 = vunpack.c.l.b16 %v5271
      %v5280 = vunpack.c.l.b16 %v5272
      %v5281 = vpack.c.b16 %v5278, %v5277
      %v5282 = vpack.c.b16 %v5280, %v5279
      %v5285 = vmul.bf16 %v5263, %v5281
      %v5286 = vmul.bf16 %v5267, %v5282
      %5287 = vst.msk [vmem:[#allocation3 + $0x10] sm:$0xff] %vm4166, %v5285
      %5288 = vst.msk [vmem:[#allocation3 + $0x18] sm:$0xff] %vm4166, %v5286
      %5289 = vrot.lane.b32.xlu0 %v5213, 71
      %v5290 = vpop.permute.xlu0 %5289
      %5291 = vrot.lane.b32.xlu0 %v5214, 71
      %v5292 = vpop.permute.xlu0 %5291
      %5293 = vrot.lane.b32.xlu0 %v5213, 7
      %v5294 = vpop.permute.xlu0 %5293
      %5295 = vrot.lane.b32.xlu0 %v5214, 7
      %v5296 = vpop.permute.xlu0 %5295
      %v5299 = vsel %vm4482, %v5290, %v5294
      %v5303 = vsel %vm4482, %v5292, %v5296
      %v5305 = vld [vmem:[%s4491] sm:$0xf]
      %v5306 = vld [vmem:[%s4491 + $0x4] sm:$0xf]
      %v5307 = vld [vmem:[%s4491 + $0x8] sm:$0xf]
      %v5308 = vld [vmem:[%s4491 + $0xc] sm:$0xf]
      %v5313 = vunpack.c.l.b16 %v5305
      %v5314 = vunpack.c.l.b16 %v5306
      %v5315 = vunpack.c.l.b16 %v5307
      %v5316 = vunpack.c.l.b16 %v5308
      %v5317 = vpack.c.b16 %v5314, %v5313
      %v5318 = vpack.c.b16 %v5316, %v5315
      %v5321 = vmul.bf16 %v5299, %v5317
      %v5322 = vmul.bf16 %v5303, %v5318
      %5323 = vst.msk [vmem:[#allocation3 + $0x20] sm:$0xff] %vm4166, %v5321
      %5324 = vst.msk [vmem:[#allocation3 + $0x28] sm:$0xff] %vm4166, %v5322
      %5325 = vrot.lane.b32.xlu0 %v5213, 65
      %v5326 = vpop.permute.xlu0 %5325
      %5327 = vrot.lane.b32.xlu0 %v5214, 65
      %v5328 = vpop.permute.xlu0 %5327
      %5329 = vrot.lane.b32.xlu0 %v5213, 1
      %v5330 = vpop.permute.xlu0 %5329
      %5331 = vrot.lane.b32.xlu0 %v5214, 1
      %v5332 = vpop.permute.xlu0 %5331
      %v5335 = vsel %vm770, %v5326, %v5330
      %v5339 = vsel %vm770, %v5328, %v5332
      %v5341 = vld [vmem:[%s4528] sm:$0xf]
      %v5342 = vld [vmem:[%s4528 + $0x4] sm:$0xf]
      %v5343 = vld [vmem:[%s4528 + $0x8] sm:$0xf]
      %v5344 = vld [vmem:[%s4528 + $0xc] sm:$0xf]
      %v5349 = vunpack.c.l.b16 %v5341
      %v5350 = vunpack.c.l.b16 %v5342
      %v5351 = vunpack.c.l.b16 %v5343
      %v5352 = vunpack.c.l.b16 %v5344
      %v5353 = vpack.c.b16 %v5350, %v5349
      %v5354 = vpack.c.b16 %v5352, %v5351
      %v5357 = vmul.bf16 %v5335, %v5353
      %v5358 = vmul.bf16 %v5339, %v5354
      %5359 = vst.msk [vmem:[#allocation3 + $0x30] sm:$0xff] %vm4166, %v5357
      %5360 = vst.msk [vmem:[#allocation3 + $0x38] sm:$0xff] %vm4166, %v5358
      %5361 = vst.msk [vmem:[#allocation3 + $0x40] sm:$0xff] %vm4166, %v5213
      %5362 = vst.msk [vmem:[#allocation3 + $0x48] sm:$0xff] %vm4166, %v5214
      %5363 = vrot.lane.b32.xlu0 %v5213, 127
      %v5364 = vpop.permute.xlu0 %5363
      %5365 = vrot.lane.b32.xlu0 %v5214, 127
      %v5366 = vpop.permute.xlu0 %5365
      %5367 = vrot.lane.b32.xlu0 %v5213, 63
      %v5368 = vpop.permute.xlu0 %5367
      %5369 = vrot.lane.b32.xlu0 %v5214, 63
      %v5370 = vpop.permute.xlu0 %5369
      %v5373 = vsel %vm4559, %v5364, %v5368
      %v5377 = vsel %vm4559, %v5366, %v5370
      %v5379 = vld [vmem:[%s4568] sm:$0xf]
      %v5380 = vld [vmem:[%s4568 + $0x4] sm:$0xf]
      %v5381 = vld [vmem:[%s4568 + $0x8] sm:$0xf]
      %v5382 = vld [vmem:[%s4568 + $0xc] sm:$0xf]
      %v5387 = vunpack.c.l.b16 %v5379
      %v5388 = vunpack.c.l.b16 %v5380
      %v5389 = vunpack.c.l.b16 %v5381
      %v5390 = vunpack.c.l.b16 %v5382
      %v5391 = vpack.c.b16 %v5388, %v5387
      %v5392 = vpack.c.b16 %v5390, %v5389
      %v5395 = vmul.bf16 %v5373, %v5391
      %v5396 = vmul.bf16 %v5377, %v5392
      %5397 = vst.msk [vmem:[#allocation3 + $0x50] sm:$0xff] %vm4166, %v5395
      %5398 = vst.msk [vmem:[#allocation3 + $0x58] sm:$0xff] %vm4166, %v5396
      %5399 = vrot.lane.b32.xlu0 %v5213, 121
      %v5400 = vpop.permute.xlu0 %5399
      %5401 = vrot.lane.b32.xlu0 %v5214, 121
      %v5402 = vpop.permute.xlu0 %5401
      %5403 = vrot.lane.b32.xlu0 %v5213, 57
      %v5404 = vpop.permute.xlu0 %5403
      %5405 = vrot.lane.b32.xlu0 %v5214, 57
      %v5406 = vpop.permute.xlu0 %5405
      %v5409 = vsel %vm4597, %v5400, %v5404
      %v5413 = vsel %vm4597, %v5402, %v5406
      %v5415 = vld [vmem:[%s4606] sm:$0xf]
      %v5416 = vld [vmem:[%s4606 + $0x4] sm:$0xf]
      %v5417 = vld [vmem:[%s4606 + $0x8] sm:$0xf]
      %v5418 = vld [vmem:[%s4606 + $0xc] sm:$0xf]
      %v5423 = vunpack.c.l.b16 %v5415
      %v5424 = vunpack.c.l.b16 %v5416
      %v5425 = vunpack.c.l.b16 %v5417
      %v5426 = vunpack.c.l.b16 %v5418
      %v5427 = vpack.c.b16 %v5424, %v5423
      %v5428 = vpack.c.b16 %v5426, %v5425
      %v5431 = vmul.bf16 %v5409, %v5427
      %v5432 = vmul.bf16 %v5413, %v5428
      %5433 = vst.msk [vmem:[#allocation3 + $0x60] sm:$0xff] %vm4166, %v5431
      %5434 = vst.msk [vmem:[#allocation3 + $0x68] sm:$0xff] %vm4166, %v5432
      %5435 = vrot.lane.b32.xlu0 %v5213, 120
      %v5436 = vpop.permute.xlu0 %5435
      %5437 = vrot.lane.b32.xlu0 %v5214, 120
      %v5438 = vpop.permute.xlu0 %5437
      %5439 = vrot.lane.b32.xlu0 %v5213, 56
      %v5440 = vpop.permute.xlu0 %5439
      %5441 = vrot.lane.b32.xlu0 %v5214, 56
      %v5442 = vpop.permute.xlu0 %5441
      %v5445 = vsel %vm4635, %v5436, %v5440
      %v5449 = vsel %vm4635, %v5438, %v5442
      %v5451 = vld [vmem:[%s4644] sm:$0xf]
      %v5452 = vld [vmem:[%s4644 + $0x4] sm:$0xf]
      %v5453 = vld [vmem:[%s4644 + $0x8] sm:$0xf]
      %v5454 = vld [vmem:[%s4644 + $0xc] sm:$0xf]
      %v5459 = vunpack.c.l.b16 %v5451
      %v5460 = vunpack.c.l.b16 %v5452
      %v5461 = vunpack.c.l.b16 %v5453
      %v5462 = vunpack.c.l.b16 %v5454
      %v5463 = vpack.c.b16 %v5460, %v5459
      %v5464 = vpack.c.b16 %v5462, %v5461
      %v5467 = vmul.bf16 %v5445, %v5463
      %v5468 = vmul.bf16 %v5449, %v5464
      %5469 = vst.msk [vmem:[#allocation3 + $0x70] sm:$0xff] %vm4166, %v5467
      %5470 = vst.msk [vmem:[#allocation3 + $0x78] sm:$0xff] %vm4166, %v5468
      %5471 = vrot.lane.b32.xlu0 %v5213, 119
      %v5472 = vpop.permute.xlu0 %5471
      %5473 = vrot.lane.b32.xlu0 %v5214, 119
      %v5474 = vpop.permute.xlu0 %5473
      %5475 = vrot.lane.b32.xlu0 %v5213, 55
      %v5476 = vpop.permute.xlu0 %5475
      %5477 = vrot.lane.b32.xlu0 %v5214, 55
      %v5478 = vpop.permute.xlu0 %5477
      %v5481 = vsel %vm4673, %v5472, %v5476
      %v5485 = vsel %vm4673, %v5474, %v5478
      %v5487 = vld [vmem:[%s4682] sm:$0xf]
      %v5488 = vld [vmem:[%s4682 + $0x4] sm:$0xf]
      %v5489 = vld [vmem:[%s4682 + $0x8] sm:$0xf]
      %v5490 = vld [vmem:[%s4682 + $0xc] sm:$0xf]
      %v5495 = vunpack.c.l.b16 %v5487
      %v5496 = vunpack.c.l.b16 %v5488
      %v5497 = vunpack.c.l.b16 %v5489
      %v5498 = vunpack.c.l.b16 %v5490
      %v5499 = vpack.c.b16 %v5496, %v5495
      %v5500 = vpack.c.b16 %v5498, %v5497
      %v5503 = vmul.bf16 %v5481, %v5499
      %v5504 = vmul.bf16 %v5485, %v5500
      %5505 = vst.msk [vmem:[#allocation3 + $0x80] sm:$0xff] %vm4166, %v5503
      %5506 = vst.msk [vmem:[#allocation3 + $0x88] sm:$0xff] %vm4166, %v5504
      %v5507 = vld [vmem:[#allocation3] sm:$0xff]
      %v5508 = vld [vmem:[#allocation3 + $0x8] sm:$0xff]
      %v5509 = vld [vmem:[#allocation3 + $0x10] sm:$0xff]
      %v5510 = vld [vmem:[#allocation3 + $0x18] sm:$0xff]
      %v5511 = vld [vmem:[#allocation3 + $0x20] sm:$0xff]
      %v5512 = vld [vmem:[#allocation3 + $0x28] sm:$0xff]
      %v5513 = vld [vmem:[#allocation3 + $0x30] sm:$0xff]
      %v5514 = vld [vmem:[#allocation3 + $0x38] sm:$0xff]
      %v5515 = vld [vmem:[#allocation3 + $0x40] sm:$0xff]
      %v5516 = vld [vmem:[#allocation3 + $0x48] sm:$0xff]
      %v5517 = vld [vmem:[#allocation3 + $0x50] sm:$0xff]
      %v5518 = vld [vmem:[#allocation3 + $0x58] sm:$0xff]
      %v5519 = vld [vmem:[#allocation3 + $0x60] sm:$0xff]
      %v5520 = vld [vmem:[#allocation3 + $0x68] sm:$0xff]
      %v5521 = vld [vmem:[#allocation3 + $0x70] sm:$0xff]
      %v5522 = vld [vmem:[#allocation3 + $0x78] sm:$0xff]
      %v5523 = vld [vmem:[#allocation3 + $0x80] sm:$0xff]
      %v5524 = vld [vmem:[#allocation3 + $0x88] sm:$0xff]
      %5526 = vset.pattern.permute.xlu0 0
      %5527 = vperm.xlu0 %5526, %v5209
      %v5528 = vpop.permute.xlu0 %5527
      %5531 = vset.pattern.permute.xlu0 0
      %5532 = vperm.xlu0 %5531, %v5210
      %v5533 = vpop.permute.xlu0 %5532
      %5536 = vset.pattern.permute.xlu0 0
      %5537 = vperm.xlu0 %5536, %v5211
      %v5538 = vpop.permute.xlu0 %5537
      %5541 = vset.pattern.permute.xlu0 0
      %5542 = vperm.xlu0 %5541, %v5212
      %v5543 = vpop.permute.xlu0 %5542
      %v5553 = vunpack.c.l.b16 %v5200
      %v5554 = vunpack.c.h.b16 %v5200
      %v5555 = vunpack.c.l.b16 %v5201
      %v5556 = vunpack.c.l.b16 %v5202
      %v5557 = vunpack.c.h.b16 %v5202
      %v5558 = vunpack.c.l.b16 %v5203
      %v5559 = vunpack.c.l.b16 %v5204
      %v5560 = vunpack.c.h.b16 %v5204
      %v5561 = vunpack.c.l.b16 %v5205
      %v5562 = vunpack.c.l.b16 %v5206
      %v5563 = vunpack.c.h.b16 %v5206
      %v5564 = vunpack.c.l.b16 %v5207
      %v5565 = vpack.c.b16 %v5556, %v5553
      %v5566 = vpack.c.b16 %v5557, %v5554
      %v5567 = vpack.c.b16 %v5558, %v5555
      %v5568 = vpack.c.b16 %v5562, %v5559
      %v5569 = vpack.c.b16 %v5563, %v5560
      %v5570 = vpack.c.b16 %v5564, %v5561
      %v5576 = vsel %vm1122, %v5567, 0
      %v5579 = vsel %vm1122, %v5570, 0
      %5581 = vmatprep.subr.bf16.mxu0 0
      %5582 = vmatpush1.bf16.msra.mxu0 %v5507
      %5583 = vmatprep.subr.bf16.mxu0 0
      %5584 = vmatpush1.bf16.msra.mxu0 %v5508
      %5585 = vmatprep.subr.bf16.mxu0 0
      %5586 = vmatpush1.bf16.msra.mxu0 %v5509
      %5587 = vmatprep.subr.bf16.mxu0 0
      %5588 = vmatpush1.bf16.msra.mxu0 %v5510
      %5589 = vmatprep.subr.bf16.mxu0 0
      %5590 = vmatpush1.bf16.msra.mxu0 %v5511
      %5591 = vmatprep.subr.bf16.mxu0 0
      %5592 = vmatpush1.bf16.msra.mxu0 %v5512
      %5593 = vmatprep.subr.bf16.mxu0 0
      %5594 = vmatpush1.bf16.msra.mxu0 %v5513
      %5595 = vmatprep.subr.bf16.mxu0 0
      %5596 = vmatpush1.bf16.msra.mxu0 %v5514
      %5597 = vmatprep.subr.bf16.mxu0 0
      %5598 = vmatpush1.bf16.msra.mxu0 %v5515
      %5599 = vmatprep.subr.bf16.mxu0 0
      %5600 = vmatpush1.bf16.msra.mxu0 %v5516
      %5601 = vmatprep.subr.bf16.mxu0 0
      %5602 = vmatpush1.bf16.msra.mxu0 %v5517
      %5603 = vmatprep.subr.bf16.mxu0 0
      %5604 = vmatpush1.bf16.msra.mxu0 %v5518
      %5605 = vmatprep.subr.bf16.mxu0 0
      %5606 = vmatpush1.bf16.msra.mxu0 %v5519
      %5607 = vmatprep.subr.bf16.mxu0 0
      %5608 = vmatpush1.bf16.msra.mxu0 %v5520
      %5609 = vmatprep.subr.bf16.mxu0 0
      %5610 = vmatpush1.bf16.msra.mxu0 %v5521
      %5611 = vmatprep.subr.bf16.mxu0 0
      %5612 = vmatpush1.bf16.msra.mxu0 %v5522
      %5613 = vmatprep.mubr.bf16.mxu0 %v5566
      %5614 = vmatmul.mubr.bf16.gmra.mrb[0].mxu0 %v5565
      %v5615 = vpop.f32.mrb[0].mxu0
      %v5616 = vadd.f32 %v5528, %v5615
      %v5617 = vpop.f32.mrb[0].mxu0
      %v5618 = vpop.f32.mrb[0].mxu0
      %v5619 = vadd.f32 %v5533, %v5618
      %v5620 = vpop.f32.mrb[0].mxu0
      %5621 = vmatprep.mubr.bf16.mxu0 %v5569
      %5622 = vmatmul.mubr.bf16.gmra.mrb[0].mxu0 %v5568
      %v5623 = vpop.f32.mrb[0].mxu0
      %v5624 = vadd.f32 %v5538, %v5623
      %v5625 = vpop.f32.mrb[0].mxu0
      %v5626 = vpop.f32.mrb[0].mxu0
      %v5627 = vadd.f32 %v5543, %v5626
      %v5628 = vpop.f32.mrb[0].mxu0
      %5629 = vdwg.mxu0
      %5630 = vmatprep.subr.bf16.mxu0 0
      %5631 = vmatpush1.bf16.msra.mxu0 %v5523
      %5632 = vmatprep.subr.bf16.mxu0 0
      %5633 = vmatpush1.bf16.msra.mxu0 %v5524
      %5634 = vmatprep.subr.bf16.mxu0 0
      %5635 = vmatpush1.bf16.msra.mxu0 0
      %5636 = vmatprep.subr.bf16.mxu0 0
      %5637 = vmatpush1.bf16.msra.mxu0 0
      %5638 = vmatprep.subr.bf16.mxu0 0
      %5639 = vmatpush1.bf16.msra.mxu0 0
      %5640 = vmatprep.subr.bf16.mxu0 0
      %5641 = vmatpush1.bf16.msra.mxu0 0
      %5642 = vmatprep.subr.bf16.mxu0 0
      %5643 = vmatpush1.bf16.msra.mxu0 0
      %5644 = vmatprep.subr.bf16.mxu0 0
      %5645 = vmatpush1.bf16.msra.mxu0 0
      %5646 = vmatprep.subr.bf16.mxu0 0
      %5647 = vmatpush1.bf16.msra.mxu0 0
      %5648 = vmatprep.subr.bf16.mxu0 0
      %5649 = vmatpush1.bf16.msra.mxu0 0
      %5650 = vmatprep.subr.bf16.mxu0 0
      %5651 = vmatpush1.bf16.msra.mxu0 0
      %5652 = vmatprep.subr.bf16.mxu0 0
      %5653 = vmatpush1.bf16.msra.mxu0 0
      %5654 = vmatprep.subr.bf16.mxu0 0
      %5655 = vmatpush1.bf16.msra.mxu0 0
      %5656 = vmatprep.subr.bf16.mxu0 0
      %5657 = vmatpush1.bf16.msra.mxu0 0
      %5658 = vmatprep.subr.bf16.mxu0 0
      %5659 = vmatpush1.bf16.msra.mxu0 0
      %5660 = vmatprep.subr.bf16.mxu0 0
      %5661 = vmatpush1.bf16.msra.mxu0 0
      %5662 = vmatprep.mubr.bf16.mxu0 0
      %5663 = vmatmul.mubr.bf16.gmra.mrb[0].mxu0 %v5576
      %v5664 = vpop.f32.mrb[0].mxu0
      %v5665 = vadd.f32 %v5616, %v5664
      %v5666 = vpop.f32.mrb[0].mxu0
      %v5667 = vpop.f32.mrb[0].mxu0
      %v5668 = vadd.f32 %v5619, %v5667
      %v5669 = vpop.f32.mrb[0].mxu0
      %5670 = vmatprep.mubr.bf16.mxu0 0
      %5671 = vmatmul.mubr.bf16.gmra.mrb[0].mxu0 %v5579
      %v5672 = vpop.f32.mrb[0].mxu0
      %v5673 = vadd.f32 %v5624, %v5672
      %v5674 = vpop.f32.mrb[0].mxu0
      %v5675 = vpop.f32.mrb[0].mxu0
      %v5676 = vadd.f32 %v5627, %v5675
      %v5677 = vpop.f32.mrb[0].mxu0
      %5678 = vdwg.mxu0
      %v5679 = vadd.f32 %v4037, %v5665
      %v5680 = vadd.f32 %v4042, %v5668
      %v5681 = vadd.f32 %v4047, %v5673
      %v5682 = vadd.f32 %v4052, %v5676
      %s5683 = scalar_lea.vmem %s6, 128
      %v5684 = vld [vmem:[%s5683] sm:$0xff]
      %v5685 = vld [vmem:[%s5683 + $0x8] sm:$0xff]
      %v5686 = vld [vmem:[%s5683 + $0x10] sm:$0xff]
      %v5687 = vld [vmem:[%s5683 + $0x18] sm:$0xff]
      %s5688 = scalar_lea.vmem %s7, 128
      %v5689 = vld [vmem:[%s5688] sm:$0xff]
      %v5690 = vld [vmem:[%s5688 + $0x8] sm:$0xff]
      %v5691 = vld [vmem:[%s5688 + $0x10] sm:$0xff]
      %v5692 = vld [vmem:[%s5688 + $0x18] sm:$0xff]
      %v5693 = vld [vmem:[%s12] sm:$0xff]
      %v5694 = vld [vmem:[%s12 + $0x8] sm:$0xff]
      %v5695 = vld [vmem:[%s12 + $0x10] sm:$0xff]
      %v5696 = vld [vmem:[%s12 + $0x18] sm:$0xff]
      %v5698 = vsel %vm1122, %v5693, 0
      %v5701 = vsel %vm1122, %v5694, 0
      %v5704 = vsel %vm1122, %v5695, 0
      %v5707 = vsel %vm1122, %v5696, 0
      %5709 = vmatprep.subr.mxu0 0.0
      %5710 = vmatpush1.msra.mxu0 %v5679
      %5711 = vmatprep.subr.mxu0 0.0
      %5712 = vmatpush1.msra.mxu0 %v5680
      %5713 = vmatprep.subr.mxu0 0.0
      %5714 = vmatpush1.msra.mxu0 %v5681
      %5715 = vmatprep.subr.mxu0 0.0
      %5716 = vmatpush1.msra.mxu0 %v5682
      %5717 = vmatprep.subr.mxu0 0.0
      %5718 = vmatpush1.msra.mxu0 0.0
      %5719 = vmatprep.subr.mxu0 0.0
      %5720 = vmatpush1.msra.mxu0 0.0
      %5721 = vmatprep.subr.mxu0 0.0
      %5722 = vmatpush1.msra.mxu0 0.0
      %5723 = vmatprep.subr.mxu0 0.0
      %5724 = vmatpush1.msra.mxu0 0.0
      %5725 = vmatprep.subr.mxu0 0.0
      %5726 = vmatpush1.msra.mxu0 0.0
      %5727 = vmatprep.subr.mxu0 0.0
      %5728 = vmatpush1.msra.mxu0 0.0
      %5729 = vmatprep.subr.mxu0 0.0
      %5730 = vmatpush1.msra.mxu0 0.0
      %5731 = vmatprep.subr.mxu0 0.0
      %5732 = vmatpush1.msra.mxu0 0.0
      %5733 = vmatprep.subr.mxu0 0.0
      %5734 = vmatpush1.msra.mxu0 0.0
      %5735 = vmatprep.subr.mxu0 0.0
      %5736 = vmatpush1.msra.mxu0 0.0
      %5737 = vmatprep.subr.mxu0 0.0
      %5738 = vmatpush1.msra.mxu0 0.0
      %5739 = vmatprep.subr.mxu0 0.0
      %5740 = vmatpush1.msra.mxu0 0.0
      %5741 = vmatprep.subr.mxu0 0.0
      %5742 = vmatpush1.msra.mxu0 0.0
      %5743 = vmatprep.subr.mxu0 0.0
      %5744 = vmatpush1.msra.mxu0 0.0
      %5745 = vmatprep.subr.mxu0 0.0
      %5746 = vmatpush1.msra.mxu0 0.0
      %5747 = vmatprep.subr.mxu0 0.0
      %5748 = vmatpush1.msra.mxu0 0.0
      %5749 = vmatprep.subr.mxu0 0.0
      %5750 = vmatpush1.msra.mxu0 0.0
      %5751 = vmatprep.subr.mxu0 0.0
      %5752 = vmatpush1.msra.mxu0 0.0
      %5753 = vmatprep.subr.mxu0 0.0
      %5754 = vmatpush1.msra.mxu0 0.0
      %5755 = vmatprep.subr.mxu0 0.0
      %5756 = vmatpush1.msra.mxu0 0.0
      %5757 = vmatprep.subr.mxu0 0.0
      %5758 = vmatpush1.msra.mxu0 0.0
      %5759 = vmatprep.subr.mxu0 0.0
      %5760 = vmatpush1.msra.mxu0 0.0
      %5761 = vmatprep.subr.mxu0 0.0
      %5762 = vmatpush1.msra.mxu0 0.0
      %5763 = vmatprep.subr.mxu0 0.0
      %5764 = vmatpush1.msra.mxu0 0.0
      %5765 = vmatprep.subr.mxu0 0.0
      %5766 = vmatpush1.msra.mxu0 0.0
      %5767 = vmatprep.subr.mxu0 0.0
      %5768 = vmatpush1.msra.mxu0 0.0
      %5769 = vmatprep.subr.mxu0 0.0
      %5770 = vmatpush1.msra.mxu0 0.0
      %5771 = vmatprep.subr.mxu0 0.0
      %5772 = vmatpush1.msra.mxu0 0.0
      %5773 = vmatprep.mubr.f32.mxu0 0.0
      %5774 = vmatmul.mubr.f32.gmra.mrb[0].mxu0 %v5698
      %v5775 = vpop.f32.mrb[0].mxu0
      %v5776 = vadd.f32 0.0, %v5775
      %v5777 = vpop.f32.mrb[0].mxu0
      %5778 = vmatprep.mubr.f32.mxu0 0.0
      %5779 = vmatmul.mubr.f32.gmra.mrb[0].mxu0 %v5701
      %v5780 = vpop.f32.mrb[0].mxu0
      %v5781 = vadd.f32 0.0, %v5780
      %v5782 = vpop.f32.mrb[0].mxu0
      %5783 = vmatprep.mubr.f32.mxu0 0.0
      %5784 = vmatmul.mubr.f32.gmra.mrb[0].mxu0 %v5704
      %v5785 = vpop.f32.mrb[0].mxu0
      %v5786 = vadd.f32 0.0, %v5785
      %v5787 = vpop.f32.mrb[0].mxu0
      %5788 = vmatprep.mubr.f32.mxu0 0.0
      %5789 = vmatmul.mubr.f32.gmra.mrb[0].mxu0 %v5707
      %v5790 = vpop.f32.mrb[0].mxu0
      %v5791 = vadd.f32 0.0, %v5790
      %v5792 = vpop.f32.mrb[0].mxu0
      %5793 = vdwg.mxu0
      %v5794 = vsel %vm4166, %v5776, 0.0
      %5795 = vadd.xlane.f32.xlu0 %v5794
      %v5796 = vpop.xlane.xlu0 %5795
      %v5797 = vsel %vm4166, %v5781, 0.0
      %5798 = vadd.xlane.f32.xlu0 %v5797
      %v5799 = vpop.xlane.xlu0 %5798
      %v5800 = vsel %vm4166, %v5786, 0.0
      %5801 = vadd.xlane.f32.xlu0 %v5800
      %v5802 = vpop.xlane.xlu0 %5801
      %v5803 = vsel %vm4166, %v5791, 0.0
      %5804 = vadd.xlane.f32.xlu0 %v5803
      %v5805 = vpop.xlane.xlu0 %5804
      %v5806 = vmul.f32 %v5796, %v4179
      %v5807 = vmul.f32 %v5799, %v4179
      %v5808 = vmul.f32 %v5802, %v4179
      %v5809 = vmul.f32 %v5805, %v4179
      %v5810 = vsub.f32 %v5679, %v5806
      %v5811 = vsub.f32 %v5680, %v5807
      %v5812 = vsub.f32 %v5681, %v5808
      %v5813 = vsub.f32 %v5682, %v5809
      %v5814 = vmul.f32 %v5810, %v5810
      %v5815 = vmul.f32 %v5811, %v5811
      %v5816 = vmul.f32 %v5812, %v5812
      %v5817 = vmul.f32 %v5813, %v5813
      %5818 = vmatprep.subr.mxu0 0.0
      %5819 = vmatpush1.msra.mxu0 %v5814
      %5820 = vmatprep.subr.mxu0 0.0
      %5821 = vmatpush1.msra.mxu0 %v5815
      %5822 = vmatprep.subr.mxu0 0.0
      %5823 = vmatpush1.msra.mxu0 %v5816
      %5824 = vmatprep.subr.mxu0 0.0
      %5825 = vmatpush1.msra.mxu0 %v5817
      %5826 = vmatprep.subr.mxu0 0.0
      %5827 = vmatpush1.msra.mxu0 0.0
      %5828 = vmatprep.subr.mxu0 0.0
      %5829 = vmatpush1.msra.mxu0 0.0
      %5830 = vmatprep.subr.mxu0 0.0
      %5831 = vmatpush1.msra.mxu0 0.0
      %5832 = vmatprep.subr.mxu0 0.0
      %5833 = vmatpush1.msra.mxu0 0.0
      %5834 = vmatprep.subr.mxu0 0.0
      %5835 = vmatpush1.msra.mxu0 0.0
      %5836 = vmatprep.subr.mxu0 0.0
      %5837 = vmatpush1.msra.mxu0 0.0
      %5838 = vmatprep.subr.mxu0 0.0
      %5839 = vmatpush1.msra.mxu0 0.0
      %5840 = vmatprep.subr.mxu0 0.0
      %5841 = vmatpush1.msra.mxu0 0.0
      %5842 = vmatprep.subr.mxu0 0.0
      %5843 = vmatpush1.msra.mxu0 0.0
      %5844 = vmatprep.subr.mxu0 0.0
      %5845 = vmatpush1.msra.mxu0 0.0
      %5846 = vmatprep.subr.mxu0 0.0
      %5847 = vmatpush1.msra.mxu0 0.0
      %5848 = vmatprep.subr.mxu0 0.0
      %5849 = vmatpush1.msra.mxu0 0.0
      %5850 = vmatprep.subr.mxu0 0.0
      %5851 = vmatpush1.msra.mxu0 0.0
      %5852 = vmatprep.subr.mxu0 0.0
      %5853 = vmatpush1.msra.mxu0 0.0
      %5854 = vmatprep.subr.mxu0 0.0
      %5855 = vmatpush1.msra.mxu0 0.0
      %5856 = vmatprep.subr.mxu0 0.0
      %5857 = vmatpush1.msra.mxu0 0.0
      %5858 = vmatprep.subr.mxu0 0.0
      %5859 = vmatpush1.msra.mxu0 0.0
      %5860 = vmatprep.subr.mxu0 0.0
      %5861 = vmatpush1.msra.mxu0 0.0
      %5862 = vmatprep.subr.mxu0 0.0
      %5863 = vmatpush1.msra.mxu0 0.0
      %5864 = vmatprep.subr.mxu0 0.0
      %5865 = vmatpush1.msra.mxu0 0.0
      %5866 = vmatprep.subr.mxu0 0.0
      %5867 = vmatpush1.msra.mxu0 0.0
      %5868 = vmatprep.subr.mxu0 0.0
      %5869 = vmatpush1.msra.mxu0 0.0
      %5870 = vmatprep.subr.mxu0 0.0
      %5871 = vmatpush1.msra.mxu0 0.0
      %5872 = vmatprep.subr.mxu0 0.0
      %5873 = vmatpush1.msra.mxu0 0.0
      %5874 = vmatprep.subr.mxu0 0.0
      %5875 = vmatpush1.msra.mxu0 0.0
      %5876 = vmatprep.subr.mxu0 0.0
      %5877 = vmatpush1.msra.mxu0 0.0
      %5878 = vmatprep.subr.mxu0 0.0
      %5879 = vmatpush1.msra.mxu0 0.0
      %5880 = vmatprep.subr.mxu0 0.0
      %5881 = vmatpush1.msra.mxu0 0.0
      %5882 = vmatprep.mubr.f32.mxu0 0.0
      %5883 = vmatmul.mubr.f32.gmra.mrb[0].mxu0 %v5698
      %v5884 = vpop.f32.mrb[0].mxu0
      %v5885 = vadd.f32 0.0, %v5884
      %v5886 = vpop.f32.mrb[0].mxu0
      %5887 = vmatprep.mubr.f32.mxu0 0.0
      %5888 = vmatmul.mubr.f32.gmra.mrb[0].mxu0 %v5701
      %v5889 = vpop.f32.mrb[0].mxu0
      %v5890 = vadd.f32 0.0, %v5889
      %v5891 = vpop.f32.mrb[0].mxu0
      %5892 = vmatprep.mubr.f32.mxu0 0.0
      %5893 = vmatmul.mubr.f32.gmra.mrb[0].mxu0 %v5704
      %v5894 = vpop.f32.mrb[0].mxu0
      %v5895 = vadd.f32 0.0, %v5894
      %v5896 = vpop.f32.mrb[0].mxu0
      %5897 = vmatprep.mubr.f32.mxu0 0.0
      %5898 = vmatmul.mubr.f32.gmra.mrb[0].mxu0 %v5707
      %v5899 = vpop.f32.mrb[0].mxu0
      %v5900 = vadd.f32 0.0, %v5899
      %v5901 = vpop.f32.mrb[0].mxu0
      %5902 = vdwg.mxu0
      %v5903 = vsel %vm4166, %v5885, 0.0
      %5904 = vadd.xlane.f32.xlu0 %v5903
      %v5905 = vpop.xlane.xlu0 %5904
      %v5906 = vsel %vm4166, %v5890, 0.0
      %5907 = vadd.xlane.f32.xlu0 %v5906
      %v5908 = vpop.xlane.xlu0 %5907
      %v5909 = vsel %vm4166, %v5895, 0.0
      %5910 = vadd.xlane.f32.xlu0 %v5909
      %v5911 = vpop.xlane.xlu0 %5910
      %v5912 = vsel %vm4166, %v5900, 0.0
      %5913 = vadd.xlane.f32.xlu0 %v5912
      %v5914 = vpop.xlane.xlu0 %5913
      %v5915 = vmul.f32 %v5905, %v4179
      %v5916 = vmul.f32 %v5908, %v4179
      %v5917 = vmul.f32 %v5911, %v4179
      %v5918 = vmul.f32 %v5914, %v4179
      %v5919 = vadd.f32 %v5915, 1e-06
      %v5920 = vadd.f32 %v5916, 1e-06
      %v5921 = vadd.f32 %v5917, 1e-06
      %v5922 = vadd.f32 %v5918, 1e-06
      %v5923 = vrsqrt.pop %v5919
      %v5924 = vrsqrt.pop %v5920
      %v5925 = vrsqrt.pop %v5921
      %v5926 = vrsqrt.pop %v5922
      %v5927 = vmul.f32 %v5810, %v5923
      %v5928 = vmul.f32 %v5811, %v5924
      %v5929 = vmul.f32 %v5812, %v5925
      %v5930 = vmul.f32 %v5813, %v5926
      %5932 = vset.pattern.permute.xlu0 0
      %5933 = vperm.xlu0 %5932, %v5684
      %v5934 = vpop.permute.xlu0 %5933
      %5937 = vset.pattern.permute.xlu0 0
      %5938 = vperm.xlu0 %5937, %v5685
      %v5939 = vpop.permute.xlu0 %5938
      %5942 = vset.pattern.permute.xlu0 0
      %5943 = vperm.xlu0 %5942, %v5686
      %v5944 = vpop.permute.xlu0 %5943
      %5947 = vset.pattern.permute.xlu0 0
      %5948 = vperm.xlu0 %5947, %v5687
      %v5949 = vpop.permute.xlu0 %5948
      %v5951 = vmul.f32 %v5927, %v5934
      %v5952 = vmul.f32 %v5928, %v5939
      %v5953 = vmul.f32 %v5929, %v5944
      %v5954 = vmul.f32 %v5930, %v5949
      %5956 = vset.pattern.permute.xlu0 0
      %5957 = vperm.xlu0 %5956, %v5689
      %v5958 = vpop.permute.xlu0 %5957
      %5961 = vset.pattern.permute.xlu0 0
      %5962 = vperm.xlu0 %5961, %v5690
      %v5963 = vpop.permute.xlu0 %5962
      %5966 = vset.pattern.permute.xlu0 0
      %5967 = vperm.xlu0 %5966, %v5691
      %v5968 = vpop.permute.xlu0 %5967
      %5971 = vset.pattern.permute.xlu0 0
      %5972 = vperm.xlu0 %5971, %v5692
      %v5973 = vpop.permute.xlu0 %5972
      %v5975 = vadd.f32 %v5951, %v5958
      %v5976 = vadd.f32 %v5952, %v5963
      %v5977 = vadd.f32 %v5953, %v5968
      %v5978 = vadd.f32 %v5954, %v5973
      %v5979 = vxor.u32 %v5975, 2147483648
      %v5980 = vxor.u32 %v5976, 2147483648
      %v5981 = vxor.u32 %v5977, 2147483648
      %v5982 = vxor.u32 %v5978, 2147483648
      %v5983 = vmul.f32 %v5979, 1.442695
      %v5984 = vpow.pop %v5983
      %v5985 = vmul.f32 %v5980, 1.442695
      %v5986 = vpow.pop %v5985
      %v5987 = vmul.f32 %v5981, 1.442695
      %v5988 = vpow.pop %v5987
      %v5989 = vmul.f32 %v5982, 1.442695
      %v5990 = vpow.pop %v5989
      %v5991 = vadd.f32 %v5984, 1.0
      %v5992 = vadd.f32 %v5986, 1.0
      %v5993 = vadd.f32 %v5988, 1.0
      %v5994 = vadd.f32 %v5990, 1.0
      %v5995 = vrcp.pop %v5991
      %v5996 = vmul.f32 1.0, %v5995
      %v5997 = vrcp.pop %v5992
      %v5998 = vmul.f32 1.0, %v5997
      %v5999 = vrcp.pop %v5993
      %v6000 = vmul.f32 1.0, %v5999
      %v6001 = vrcp.pop %v5994
      %v6002 = vmul.f32 1.0, %v6001
      %v6003 = vmul.f32 %v5975, %v5996
      %v6004 = vmul.f32 %v5976, %v5998
      %v6005 = vmul.f32 %v5977, %v6000
      %v6006 = vmul.f32 %v5978, %v6002
      %v6007 = vld [vmem:[%s8] sm:$0xff]
      %v6008 = vld [vmem:[%s8 + $0x8] sm:$0xf]
      %v6009 = vld [vmem:[%s9] sm:$0xff]
      %v6010 = vpack.c.bf16 %v6004, %v6003
      %v6011 = vpack.c.bf16 %v6006, %v6005
      %6014 = vrot.lane.b32.xlu0 %v6010, 73
      %v6015 = vpop.permute.xlu0 %6014
      %6016 = vrot.lane.b32.xlu0 %v6011, 73
      %v6017 = vpop.permute.xlu0 %6016
      %6018 = vrot.lane.b32.xlu0 %v6010, 9
      %v6019 = vpop.permute.xlu0 %6018
      %6020 = vrot.lane.b32.xlu0 %v6011, 9
      %v6021 = vpop.permute.xlu0 %6020
      %v6024 = vsel %vm4407, %v6015, %v6019
      %v6028 = vsel %vm4407, %v6017, %v6021
      %v6030 = vld [vmem:[%s15] sm:$0xf]
      %v6031 = vld [vmem:[%s15 + $0x4] sm:$0xf]
      %v6032 = vld [vmem:[%s15 + $0x8] sm:$0xf]
      %v6033 = vld [vmem:[%s15 + $0xc] sm:$0xf]
      %v6038 = vunpack.c.l.b16 %v6030
      %v6039 = vunpack.c.l.b16 %v6031
      %v6040 = vunpack.c.l.b16 %v6032
      %v6041 = vunpack.c.l.b16 %v6033
      %v6042 = vpack.c.b16 %v6039, %v6038
      %v6043 = vpack.c.b16 %v6041, %v6040
      %v6046 = vmul.bf16 %v6024, %v6042
      %v6047 = vmul.bf16 %v6028, %v6043
      %6048 = vst.msk [vmem:[#allocation3] sm:$0xff] %vm4166, %v6046
      %6049 = vst.msk [vmem:[#allocation3 + $0x8] sm:$0xff] %vm4166, %v6047
      %6050 = vrot.lane.b32.xlu0 %v6010, 72
      %v6051 = vpop.permute.xlu0 %6050
      %6052 = vrot.lane.b32.xlu0 %v6011, 72
      %v6053 = vpop.permute.xlu0 %6052
      %6054 = vrot.lane.b32.xlu0 %v6010, 8
      %v6055 = vpop.permute.xlu0 %6054
      %6056 = vrot.lane.b32.xlu0 %v6011, 8
      %v6057 = vpop.permute.xlu0 %6056
      %v6060 = vsel %vm4444, %v6051, %v6055
      %v6064 = vsel %vm4444, %v6053, %v6057
      %v6066 = vld [vmem:[%s4453] sm:$0xf]
      %v6067 = vld [vmem:[%s4453 + $0x4] sm:$0xf]
      %v6068 = vld [vmem:[%s4453 + $0x8] sm:$0xf]
      %v6069 = vld [vmem:[%s4453 + $0xc] sm:$0xf]
      %v6074 = vunpack.c.l.b16 %v6066
      %v6075 = vunpack.c.l.b16 %v6067
      %v6076 = vunpack.c.l.b16 %v6068
      %v6077 = vunpack.c.l.b16 %v6069
      %v6078 = vpack.c.b16 %v6075, %v6074
      %v6079 = vpack.c.b16 %v6077, %v6076
      %v6082 = vmul.bf16 %v6060, %v6078
      %v6083 = vmul.bf16 %v6064, %v6079
      %6084 = vst.msk [vmem:[#allocation3 + $0x10] sm:$0xff] %vm4166, %v6082
      %6085 = vst.msk [vmem:[#allocation3 + $0x18] sm:$0xff] %vm4166, %v6083
      %6086 = vrot.lane.b32.xlu0 %v6010, 71
      %v6087 = vpop.permute.xlu0 %6086
      %6088 = vrot.lane.b32.xlu0 %v6011, 71
      %v6089 = vpop.permute.xlu0 %6088
      %6090 = vrot.lane.b32.xlu0 %v6010, 7
      %v6091 = vpop.permute.xlu0 %6090
      %6092 = vrot.lane.b32.xlu0 %v6011, 7
      %v6093 = vpop.permute.xlu0 %6092
      %v6096 = vsel %vm4482, %v6087, %v6091
      %v6100 = vsel %vm4482, %v6089, %v6093
      %v6102 = vld [vmem:[%s4491] sm:$0xf]
      %v6103 = vld [vmem:[%s4491 + $0x4] sm:$0xf]
      %v6104 = vld [vmem:[%s4491 + $0x8] sm:$0xf]
      %v6105 = vld [vmem:[%s4491 + $0xc] sm:$0xf]
      %v6110 = vunpack.c.l.b16 %v6102
      %v6111 = vunpack.c.l.b16 %v6103
      %v6112 = vunpack.c.l.b16 %v6104
      %v6113 = vunpack.c.l.b16 %v6105
      %v6114 = vpack.c.b16 %v6111, %v6110
      %v6115 = vpack.c.b16 %v6113, %v6112
      %v6118 = vmul.bf16 %v6096, %v6114
      %v6119 = vmul.bf16 %v6100, %v6115
      %6120 = vst.msk [vmem:[#allocation3 + $0x20] sm:$0xff] %vm4166, %v6118
      %6121 = vst.msk [vmem:[#allocation3 + $0x28] sm:$0xff] %vm4166, %v6119
      %6122 = vrot.lane.b32.xlu0 %v6010, 65
      %v6123 = vpop.permute.xlu0 %6122
      %6124 = vrot.lane.b32.xlu0 %v6011, 65
      %v6125 = vpop.permute.xlu0 %6124
      %6126 = vrot.lane.b32.xlu0 %v6010, 1
      %v6127 = vpop.permute.xlu0 %6126
      %6128 = vrot.lane.b32.xlu0 %v6011, 1
      %v6129 = vpop.permute.xlu0 %6128
      %v6132 = vsel %vm770, %v6123, %v6127
      %v6136 = vsel %vm770, %v6125, %v6129
      %v6138 = vld [vmem:[%s4528] sm:$0xf]
      %v6139 = vld [vmem:[%s4528 + $0x4] sm:$0xf]
      %v6140 = vld [vmem:[%s4528 + $0x8] sm:$0xf]
      %v6141 = vld [vmem:[%s4528 + $0xc] sm:$0xf]
      %v6146 = vunpack.c.l.b16 %v6138
      %v6147 = vunpack.c.l.b16 %v6139
      %v6148 = vunpack.c.l.b16 %v6140
      %v6149 = vunpack.c.l.b16 %v6141
      %v6150 = vpack.c.b16 %v6147, %v6146
      %v6151 = vpack.c.b16 %v6149, %v6148
      %v6154 = vmul.bf16 %v6132, %v6150
      %v6155 = vmul.bf16 %v6136, %v6151
      %6156 = vst.msk [vmem:[#allocation3 + $0x30] sm:$0xff] %vm4166, %v6154
      %6157 = vst.msk [vmem:[#allocation3 + $0x38] sm:$0xff] %vm4166, %v6155
      %6158 = vst.msk [vmem:[#allocation3 + $0x40] sm:$0xff] %vm4166, %v6010
      %6159 = vst.msk [vmem:[#allocation3 + $0x48] sm:$0xff] %vm4166, %v6011
      %6160 = vrot.lane.b32.xlu0 %v6010, 127
      %v6161 = vpop.permute.xlu0 %6160
      %6162 = vrot.lane.b32.xlu0 %v6011, 127
      %v6163 = vpop.permute.xlu0 %6162
      %6164 = vrot.lane.b32.xlu0 %v6010, 63
      %v6165 = vpop.permute.xlu0 %6164
      %6166 = vrot.lane.b32.xlu0 %v6011, 63
      %v6167 = vpop.permute.xlu0 %6166
      %v6170 = vsel %vm4559, %v6161, %v6165
      %v6174 = vsel %vm4559, %v6163, %v6167
      %v6176 = vld [vmem:[%s4568] sm:$0xf]
      %v6177 = vld [vmem:[%s4568 + $0x4] sm:$0xf]
      %v6178 = vld [vmem:[%s4568 + $0x8] sm:$0xf]
      %v6179 = vld [vmem:[%s4568 + $0xc] sm:$0xf]
      %v6184 = vunpack.c.l.b16 %v6176
      %v6185 = vunpack.c.l.b16 %v6177
      %v6186 = vunpack.c.l.b16 %v6178
      %v6187 = vunpack.c.l.b16 %v6179
      %v6188 = vpack.c.b16 %v6185, %v6184
      %v6189 = vpack.c.b16 %v6187, %v6186
      %v6192 = vmul.bf16 %v6170, %v6188
      %v6193 = vmul.bf16 %v6174, %v6189
      %6194 = vst.msk [vmem:[#allocation3 + $0x50] sm:$0xff] %vm4166, %v6192
      %6195 = vst.msk [vmem:[#allocation3 + $0x58] sm:$0xff] %vm4166, %v6193
      %6196 = vrot.lane.b32.xlu0 %v6010, 121
      %v6197 = vpop.permute.xlu0 %6196
      %6198 = vrot.lane.b32.xlu0 %v6011, 121
      %v6199 = vpop.permute.xlu0 %6198
      %6200 = vrot.lane.b32.xlu0 %v6010, 57
      %v6201 = vpop.permute.xlu0 %6200
      %6202 = vrot.lane.b32.xlu0 %v6011, 57
      %v6203 = vpop.permute.xlu0 %6202
      %v6206 = vsel %vm4597, %v6197, %v6201
      %v6210 = vsel %vm4597, %v6199, %v6203
      %v6212 = vld [vmem:[%s4606] sm:$0xf]
      %v6213 = vld [vmem:[%s4606 + $0x4] sm:$0xf]
      %v6214 = vld [vmem:[%s4606 + $0x8] sm:$0xf]
      %v6215 = vld [vmem:[%s4606 + $0xc] sm:$0xf]
      %v6220 = vunpack.c.l.b16 %v6212
      %v6221 = vunpack.c.l.b16 %v6213
      %v6222 = vunpack.c.l.b16 %v6214
      %v6223 = vunpack.c.l.b16 %v6215
      %v6224 = vpack.c.b16 %v6221, %v6220
      %v6225 = vpack.c.b16 %v6223, %v6222
      %v6228 = vmul.bf16 %v6206, %v6224
      %v6229 = vmul.bf16 %v6210, %v6225
      %6230 = vst.msk [vmem:[#allocation3 + $0x60] sm:$0xff] %vm4166, %v6228
      %6231 = vst.msk [vmem:[#allocation3 + $0x68] sm:$0xff] %vm4166, %v6229
      %6232 = vrot.lane.b32.xlu0 %v6010, 120
      %v6233 = vpop.permute.xlu0 %6232
      %6234 = vrot.lane.b32.xlu0 %v6011, 120
      %v6235 = vpop.permute.xlu0 %6234
      %6236 = vrot.lane.b32.xlu0 %v6010, 56
      %v6237 = vpop.permute.xlu0 %6236
      %6238 = vrot.lane.b32.xlu0 %v6011, 56
      %v6239 = vpop.permute.xlu0 %6238
      %v6242 = vsel %vm4635, %v6233, %v6237
      %v6246 = vsel %vm4635, %v6235, %v6239
      %v6248 = vld [vmem:[%s4644] sm:$0xf]
      %v6249 = vld [vmem:[%s4644 + $0x4] sm:$0xf]
      %v6250 = vld [vmem:[%s4644 + $0x8] sm:$0xf]
      %v6251 = vld [vmem:[%s4644 + $0xc] sm:$0xf]
      %v6256 = vunpack.c.l.b16 %v6248
      %v6257 = vunpack.c.l.b16 %v6249
      %v6258 = vunpack.c.l.b16 %v6250
      %v6259 = vunpack.c.l.b16 %v6251
      %v6260 = vpack.c.b16 %v6257, %v6256
      %v6261 = vpack.c.b16 %v6259, %v6258
      %v6264 = vmul.bf16 %v6242, %v6260
      %v6265 = vmul.bf16 %v6246, %v6261
      %6266 = vst.msk [vmem:[#allocation3 + $0x70] sm:$0xff] %vm4166, %v6264
      %6267 = vst.msk [vmem:[#allocation3 + $0x78] sm:$0xff] %vm4166, %v6265
      %6268 = vrot.lane.b32.xlu0 %v6010, 119
      %v6269 = vpop.permute.xlu0 %6268
      %6270 = vrot.lane.b32.xlu0 %v6011, 119
      %v6271 = vpop.permute.xlu0 %6270
      %6272 = vrot.lane.b32.xlu0 %v6010, 55
      %v6273 = vpop.permute.xlu0 %6272
      %6274 = vrot.lane.b32.xlu0 %v6011, 55
      %v6275 = vpop.permute.xlu0 %6274
      %v6278 = vsel %vm4673, %v6269, %v6273
      %v6282 = vsel %vm4673, %v6271, %v6275
      %v6284 = vld [vmem:[%s4682] sm:$0xf]
      %v6285 = vld [vmem:[%s4682 + $0x4] sm:$0xf]
      %v6286 = vld [vmem:[%s4682 + $0x8] sm:$0xf]
      %v6287 = vld [vmem:[%s4682 + $0xc] sm:$0xf]
      %v6292 = vunpack.c.l.b16 %v6284
      %v6293 = vunpack.c.l.b16 %v6285
      %v6294 = vunpack.c.l.b16 %v6286
      %v6295 = vunpack.c.l.b16 %v6287
      %v6296 = vpack.c.b16 %v6293, %v6292
      %v6297 = vpack.c.b16 %v6295, %v6294
      %v6300 = vmul.bf16 %v6278, %v6296
      %v6301 = vmul.bf16 %v6282, %v6297
      %6302 = vst.msk [vmem:[#allocation3 + $0x80] sm:$0xff] %vm4166, %v6300
      %6303 = vst.msk [vmem:[#allocation3 + $0x88] sm:$0xff] %vm4166, %v6301
      %v6304 = vld [vmem:[#allocation3] sm:$0xff]
      %v6305 = vld [vmem:[#allocation3 + $0x8] sm:$0xff]
      %v6306 = vld [vmem:[#allocation3 + $0x10] sm:$0xff]
      %v6307 = vld [vmem:[#allocation3 + $0x18] sm:$0xff]
      %v6308 = vld [vmem:[#allocation3 + $0x20] sm:$0xff]
      %v6309 = vld [vmem:[#allocation3 + $0x28] sm:$0xff]
      %v6310 = vld [vmem:[#allocation3 + $0x30] sm:$0xff]
      %v6311 = vld [vmem:[#allocation3 + $0x38] sm:$0xff]
      %v6312 = vld [vmem:[#allocation3 + $0x40] sm:$0xff]
      %v6313 = vld [vmem:[#allocation3 + $0x48] sm:$0xff]
      %v6314 = vld [vmem:[#allocation3 + $0x50] sm:$0xff]
      %v6315 = vld [vmem:[#allocation3 + $0x58] sm:$0xff]
      %v6316 = vld [vmem:[#allocation3 + $0x60] sm:$0xff]
      %v6317 = vld [vmem:[#allocation3 + $0x68] sm:$0xff]
      %v6318 = vld [vmem:[#allocation3 + $0x70] sm:$0xff]
      %v6319 = vld [vmem:[#allocation3 + $0x78] sm:$0xff]
      %v6320 = vld [vmem:[#allocation3 + $0x80] sm:$0xff]
      %v6321 = vld [vmem:[#allocation3 + $0x88] sm:$0xff]
      %6323 = vset.pattern.permute.xlu0 0
      %6324 = vperm.xlu0 %6323, %v6009
      %v6325 = vpop.permute.xlu0 %6324
      %v6329 = vunpack.c.l.b16 %v6007
      %v6330 = vunpack.c.h.b16 %v6007
      %v6331 = vunpack.c.l.b16 %v6008
      %v6332 = vpack.c.b16 %v6329, %v6329
      %v6333 = vpack.c.b16 %v6330, %v6330
      %v6334 = vpack.c.b16 %v6331, %v6331
      %v6338 = vsel %vm1122, %v6334, 0
      %6340 = vmatprep.subr.bf16.mxu0 0
      %6341 = vmatpush1.bf16.msra.mxu0 %v6304
      %6342 = vmatprep.subr.bf16.mxu0 0
      %6343 = vmatpush1.bf16.msra.mxu0 %v6305
      %6344 = vmatprep.subr.bf16.mxu0 0
      %6345 = vmatpush1.bf16.msra.mxu0 %v6306
      %6346 = vmatprep.subr.bf16.mxu0 0
      %6347 = vmatpush1.bf16.msra.mxu0 %v6307
      %6348 = vmatprep.subr.bf16.mxu0 0
      %6349 = vmatpush1.bf16.msra.mxu0 %v6308
      %6350 = vmatprep.subr.bf16.mxu0 0
      %6351 = vmatpush1.bf16.msra.mxu0 %v6309
      %6352 = vmatprep.subr.bf16.mxu0 0
      %6353 = vmatpush1.bf16.msra.mxu0 %v6310
      %6354 = vmatprep.subr.bf16.mxu0 0
      %6355 = vmatpush1.bf16.msra.mxu0 %v6311
      %6356 = vmatprep.subr.bf16.mxu0 0
      %6357 = vmatpush1.bf16.msra.mxu0 %v6312
      %6358 = vmatprep.subr.bf16.mxu0 0
      %6359 = vmatpush1.bf16.msra.mxu0 %v6313
      %6360 = vmatprep.subr.bf16.mxu0 0
      %6361 = vmatpush1.bf16.msra.mxu0 %v6314
      %6362 = vmatprep.subr.bf16.mxu0 0
      %6363 = vmatpush1.bf16.msra.mxu0 %v6315
      %6364 = vmatprep.subr.bf16.mxu0 0
      %6365 = vmatpush1.bf16.msra.mxu0 %v6316
      %6366 = vmatprep.subr.bf16.mxu0 0
      %6367 = vmatpush1.bf16.msra.mxu0 %v6317
      %6368 = vmatprep.subr.bf16.mxu0 0
      %6369 = vmatpush1.bf16.msra.mxu0 %v6318
      %6370 = vmatprep.subr.bf16.mxu0 0
      %6371 = vmatpush1.bf16.msra.mxu0 %v6319
      %6372 = vmatprep.mubr.bf16.mxu0 %v6333
      %6373 = vmatmul.mubr.bf16.gmra.mrb[0].mxu0 %v6332
      %v6374 = vpop.f32.mrb[0].mxu0
      %v6375 = vadd.f32 %v6325, %v6374
      %v6376 = vpop.f32.mrb[0].mxu0
      %v6377 = vpop.f32.mrb[0].mxu0
      %v6378 = vpop.f32.mrb[0].mxu0
      %6379 = vdwg.mxu0
      %6380 = vmatprep.subr.bf16.mxu0 0
      %6381 = vmatpush1.bf16.msra.mxu0 %v6320
      %6382 = vmatprep.subr.bf16.mxu0 0
      %6383 = vmatpush1.bf16.msra.mxu0 %v6321
      %6384 = vmatprep.subr.bf16.mxu0 0
      %6385 = vmatpush1.bf16.msra.mxu0 0
      %6386 = vmatprep.subr.bf16.mxu0 0
      %6387 = vmatpush1.bf16.msra.mxu0 0
      %6388 = vmatprep.subr.bf16.mxu0 0
      %6389 = vmatpush1.bf16.msra.mxu0 0
      %6390 = vmatprep.subr.bf16.mxu0 0
      %6391 = vmatpush1.bf16.msra.mxu0 0
      %6392 = vmatprep.subr.bf16.mxu0 0
      %6393 = vmatpush1.bf16.msra.mxu0 0
      %6394 = vmatprep.subr.bf16.mxu0 0
      %6395 = vmatpush1.bf16.msra.mxu0 0
      %6396 = vmatprep.subr.bf16.mxu0 0
      %6397 = vmatpush1.bf16.msra.mxu0 0
      %6398 = vmatprep.subr.bf16.mxu0 0
      %6399 = vmatpush1.bf16.msra.mxu0 0
      %6400 = vmatprep.subr.bf16.mxu0 0
      %6401 = vmatpush1.bf16.msra.mxu0 0
      %6402 = vmatprep.subr.bf16.mxu0 0
      %6403 = vmatpush1.bf16.msra.mxu0 0
      %6404 = vmatprep.subr.bf16.mxu0 0
      %6405 = vmatpush1.bf16.msra.mxu0 0
      %6406 = vmatprep.subr.bf16.mxu0 0
      %6407 = vmatpush1.bf16.msra.mxu0 0
      %6408 = vmatprep.subr.bf16.mxu0 0
      %6409 = vmatpush1.bf16.msra.mxu0 0
      %6410 = vmatprep.subr.bf16.mxu0 0
      %6411 = vmatpush1.bf16.msra.mxu0 0
      %6412 = vmatprep.mubr.bf16.mxu0 0
      %6413 = vmatmul.mubr.bf16.gmra.mrb[0].mxu0 %v6338
      %v6414 = vpop.f32.mrb[0].mxu0
      %v6415 = vadd.f32 %v6375, %v6414
      %v6416 = vpop.f32.mrb[0].mxu0
      %v6417 = vpop.f32.mrb[0].mxu0
      %v6418 = vpop.f32.mrb[0].mxu0
      %6419 = vdwg.mxu0
      %v6420 = vld [vmem:[%s10] sm:$0xff]
      %v6421 = vld [vmem:[%s11] sm:$0xff]
      %6423 = vset.pattern.permute.xlu0 0
      %6424 = vperm.xlu0 %6423, %v6421
      %v6425 = vpop.permute.xlu0 %6424
      %v6428 = vsel %vm4444, %v6420, 0
      %6430 = vmatprep.subr.mxu0 0.0
      %6431 = vmatpush1.msra.mxu0 %v6415
      %6432 = vmatprep.subr.mxu0 0.0
      %6433 = vmatpush1.msra.mxu0 0.0
      %6434 = vmatprep.subr.mxu0 0.0
      %6435 = vmatpush1.msra.mxu0 0.0
      %6436 = vmatprep.subr.mxu0 0.0
      %6437 = vmatpush1.msra.mxu0 0.0
      %6438 = vmatprep.subr.mxu0 0.0
      %6439 = vmatpush1.msra.mxu0 0.0
      %6440 = vmatprep.subr.mxu0 0.0
      %6441 = vmatpush1.msra.mxu0 0.0
      %6442 = vmatprep.subr.mxu0 0.0
      %6443 = vmatpush1.msra.mxu0 0.0
      %6444 = vmatprep.subr.mxu0 0.0
      %6445 = vmatpush1.msra.mxu0 0.0
      %6446 = vmatprep.subr.mxu0 0.0
      %6447 = vmatpush1.msra.mxu0 0.0
      %6448 = vmatprep.subr.mxu0 0.0
      %6449 = vmatpush1.msra.mxu0 0.0
      %6450 = vmatprep.subr.mxu0 0.0
      %6451 = vmatpush1.msra.mxu0 0.0
      %6452 = vmatprep.subr.mxu0 0.0
      %6453 = vmatpush1.msra.mxu0 0.0
      %6454 = vmatprep.subr.mxu0 0.0
      %6455 = vmatpush1.msra.mxu0 0.0
      %6456 = vmatprep.subr.mxu0 0.0
      %6457 = vmatpush1.msra.mxu0 0.0
      %6458 = vmatprep.subr.mxu0 0.0
      %6459 = vmatpush1.msra.mxu0 0.0
      %6460 = vmatprep.subr.mxu0 0.0
      %6461 = vmatpush1.msra.mxu0 0.0
      %6462 = vmatprep.subr.mxu0 0.0
      %6463 = vmatpush1.msra.mxu0 0.0
      %6464 = vmatprep.subr.mxu0 0.0
      %6465 = vmatpush1.msra.mxu0 0.0
      %6466 = vmatprep.subr.mxu0 0.0
      %6467 = vmatpush1.msra.mxu0 0.0
      %6468 = vmatprep.subr.mxu0 0.0
      %6469 = vmatpush1.msra.mxu0 0.0
      %6470 = vmatprep.subr.mxu0 0.0
      %6471 = vmatpush1.msra.mxu0 0.0
      %6472 = vmatprep.subr.mxu0 0.0
      %6473 = vmatpush1.msra.mxu0 0.0
      %6474 = vmatprep.subr.mxu0 0.0
      %6475 = vmatpush1.msra.mxu0 0.0
      %6476 = vmatprep.subr.mxu0 0.0
      %6477 = vmatpush1.msra.mxu0 0.0
      %6478 = vmatprep.subr.mxu0 0.0
      %6479 = vmatpush1.msra.mxu0 0.0
      %6480 = vmatprep.subr.mxu0 0.0
      %6481 = vmatpush1.msra.mxu0 0.0
      %6482 = vmatprep.subr.mxu0 0.0
      %6483 = vmatpush1.msra.mxu0 0.0
      %6484 = vmatprep.subr.mxu0 0.0
      %6485 = vmatpush1.msra.mxu0 0.0
      %6486 = vmatprep.subr.mxu0 0.0
      %6487 = vmatpush1.msra.mxu0 0.0
      %6488 = vmatprep.subr.mxu0 0.0
      %6489 = vmatpush1.msra.mxu0 0.0
      %6490 = vmatprep.subr.mxu0 0.0
      %6491 = vmatpush1.msra.mxu0 0.0
      %6492 = vmatprep.subr.mxu0 0.0
      %6493 = vmatpush1.msra.mxu0 0.0
      %6494 = vmatprep.mubr.f32.mxu0 0.0
      %6495 = vmatmul.mubr.f32.gmra.mrb[0].mxu0 %v6428
      %v6496 = vpop.f32.mrb[0].mxu0
      %v6497 = vadd.f32 %v6425, %v6496
      %v6498 = vpop.f32.mrb[0].mxu0
      %6499 = vdwg.mxu0
      %v6500 = vmax.f32 %v6497, -30.0
      %v6501 = vmin.f32 %v6500, 20.0
      %v6502 = vmul.f32 %v6501, 0.5
      %v6503 = vmul.f32 %v6502, 1.442695
      %v6504 = vpow.pop %v6503
      %v6505 = vld [vmem:[%s559] sm:$0xf]
      %v6507 = vrot.slane %v6505, 4
      %v6509 = vmul.f32 %v6504, %v6507
      %v6511 = vrot.slane %v6509, 4
      %v6513 = vadd.f32 %v6497, %v6511
      %v6514 = vmul.f32 %v6513, 0.18215
      %vm6515 = vcmask 519168
      %6516 = vst.msk [vmem:[%s563] sm:$0xf] %vm6515, %v6514
      %p6517 = scmp.lt.s32.totalorder %s28, 1
      %s6518 = scalar_select %p6517, %s28, 1
      %s6519 = smul.addr %s6518, 4
      %s6520 = scalar_lea.vmem %s17, %s6519
      // Predicated region
      $region89: #{_encode_jit.1} parent=87 // pred_check
        %p6521 = pneg %p413
      $region90: #{_encode_jit.1} parent=87 // pred_check_branch
        %6523 = sbr.rel (%p6521) target = $region92
      $region91: #{_encode_jit.1} parent=87 // pred_region
        _
      $region92: #{_encode_jit.1} parent=87 // pred_fallthru
        _
    $region88: #{_encode_jit.1} parent=5 // pred_fallthru
      _
    %p6524 = scmp.le.s32.totalorder 2, %s23
    // Predicated region
    $region93: #{_encode_jit.1} parent=5 // pred_check
      %p6525 = pneg %p6524
    $region94: #{_encode_jit.1} parent=5 // pred_check_branch
      %6527 = sbr.rel (%p6525) target = $region96
    $region95: #{_encode_jit.1} parent=5 // pred_region
      %s6528 = ssub.s32 %s23, 2
      // Predicated region
      $region97: #{_encode_jit.1} parent=95 // pred_check
        %p6529 = pneg %p419
      $region98: #{_encode_jit.1} parent=95 // pred_check_branch
        %6531 = sbr.rel (%p6529) target = $region100
      $region99: #{_encode_jit.1} parent=95 // pred_region
        %p6532 = scmp.lt.s32.totalorder %s29, 1
        %s6533 = scalar_select %p6532, %s29, 1
        %s6534 = smul.addr %s6533, 4
        %s6535 = scalar_lea.vmem %s17, %s6534
      $region100: #{_encode_jit.1} parent=95 // pred_fallthru
        _
    $region96: #{_encode_jit.1} parent=5 // pred_fallthru
      _
  $region6: #{_encode_jit.1} parent=0 // loop_footer
    %s27 = sadd.s32 1, %s23
  $region7: #{_encode_jit.1} parent=0 // loop_footer_branch
    %22 = sbr.rel target = $region3
  $region8: #{_encode_jit.1} parent=0 // loop_exit
    _

</llo_original>
